<compile_context>
chip_gen: v5e
topology: v5e:2x2
jax: 0.10.0
libtpu: 0.0.40
codegen_flags: <defaults>
</compile_context>

<pallas_src>
import jax
import jax.numpy as jnp
from jax.experimental import pallas as pl
from jax.experimental.pallas import tpu as pltpu


def ghost_bottleneck(x, packed_params, *, b_tile=2):
    """x: (N, H, W, C1) float32 NHWC, with C1 == C2 (identity shortcut)."""
    N, H, W, C1 = x.shape
    (W1b, b1e, m1, dw1t, db1t, W2b, b2e, m2, dw2t, db2t) = packed_params
    Lx = W * C1
    L1 = W1b.shape[1]          # W * c_
    L2 = W2b.shape[1]          # W * C2
    c_ = L1 // W               # GhostConv#1 output channels per pixel
    C2 = L2 // W
    BT = b_tile
    assert W1b.shape[0] == Lx and W2b.shape[0] == L1
    assert C1 == C2, "s == 1 identity shortcut requires c1 == c2"
    assert N % BT == 0
    # lane-dense layout: unmasked full-width vector stores and cheap reshapes
    assert H % 8 == 0 and Lx % 128 == 0 and L1 % 128 == 0 and L2 % 128 == 0

    x_packed = x.reshape(N, H, Lx)

    def dwconv5(z2d, wt_ref, db_ref, pad_ref, cb):
        """Depthwise 5x5, stride 1, 'same' pad, on lane-packed z2d:(BT*H, W*cb).

        W-direction taps are pltpu.roll lane rotations; the wrap-around pixels are
        already zeroed in the packed tap weights.  H direction uses a per-image
        2-row-halo scratch; only the halo rows are re-zeroed each step.
        """
        L = z2d.shape[-1]
        zeros2 = jnp.zeros((BT, 2, L), jnp.float32)
        pad_ref[:, 0:2, :] = zeros2
        pad_ref[:, 2 + H:4 + H, :] = zeros2
        pad_ref[:, 2:2 + H, :] = z2d.reshape(BT, H, L)

        # hoist all 25 per-lane tap-weight rows out of the accumulation loops
        w_rows = [wt_ref[t:t + 1, :] for t in range(25)]

        # 5 independent per-di partial accumulators (restores VALU ILP)
        partials = []
        for di in range(-2, 3):
            zi = pad_ref[:, 2 + di:2 + di + H, :].reshape(BT * H, L)
            part = None
            for dj in range(-2, 3):
                t = (di + 2) * 5 + (dj + 2)
                src = zi if dj == 0 else pltpu.roll(zi, (-dj * cb) % L, axis=1)
                term = src * w_rows[t]
                part = term if part is None else part + term
            partials.append(part)
        return ((partials[0] + partials[1]) + (partials[2] + partials[3])
                + partials[4]) + db_ref[...]

    def kernel(x_ref, w1_ref, b1_ref, m1_ref, dw1_ref, db1_ref,
               w2_ref, b2_ref, m2_ref, dw2_ref, db2_ref,
               out_ref, pad1_ref, pad2_ref):
        x3 = x_ref[...]                               # (BT, H, W*C1)
        x2 = x3.reshape(BT * H, Lx)

        # --- GhostConv #1 (act=ReLU) ---
        # cv1: block-diagonal 1x1 conv on the MXU; the packed weights write 'a' into BOTH
        # the low and high channel slots of each c_-block (slots that used to multiply 0).
        a = jnp.dot(x2, w1_ref[...], preferred_element_type=jnp.float32) + b1_ref[...]
        a = jnp.maximum(a, 0.0)                       # (BT*H, W*c_)
        # cv2: depthwise 5x5 reads the high-slot copy (low-slot tap weights are 0).
        b = jnp.maximum(dwconv5(a, dw1_ref, db1_ref, pad1_ref, c_), 0.0)
        # per-pixel concat([a, b]): keep 'a' in low slots (mask), 'b' already sits high.
        y1 = a * m1_ref[...] + b

        # --- GhostConv #2 (act=False) ---
        a2 = jnp.dot(y1, w2_ref[...], preferred_element_type=jnp.float32) + b2_ref[...]
        b2 = dwconv5(a2, dw2_ref, db2_ref, pad2_ref, C2)

        # --- concat([a2, b2], ch) + identity shortcut: one lane-dense full-width store ---
        out_ref[...] = (a2 * m2_ref[...] + b2).reshape(BT, H, L2) + x3

    weights = (W1b, b1e, m1, dw1t, db1t, W2b, b2e, m2, dw2t, db2t)

    def build(weight_pipeline_mode):
        extra = ({} if weight_pipeline_mode is None
                 else {"pipeline_mode": weight_pipeline_mode})

        def wfull(a):
            nd = a.ndim
            return pl.BlockSpec(a.shape, lambda n, _nd=nd: (0,) * _nd, **extra)

        return pl.pallas_call(
            kernel,
            out_shape=jax.ShapeDtypeStruct((N, H, L2), jnp.float32),
            grid=(N // BT,),
            in_specs=[pl.BlockSpec((BT, H, Lx), lambda n: (n, 0, 0))]
                     + [wfull(w) for w in weights],
            out_specs=pl.BlockSpec((BT, H, L2), lambda n: (n, 0, 0)),
            scratch_shapes=[pltpu.VMEM((BT, H + 4, L1), jnp.float32),
                            pltpu.VMEM((BT, H + 4, L2), jnp.float32)],
            compiler_params=pltpu.CompilerParams(
                dimension_semantics=("parallel",),
                vmem_limit_bytes=32 * 1024 * 1024),
        )

    try:
        # Grid-invariant weights don't need double-buffering; single-buffer them to halve
        # their VMEM footprint (matters on v7x's 64 MiB / v5e's 16 MiB-scoped budgets).
        out_packed = jax.block_until_ready(build(pl.Buffered(1))(x_packed, *weights))
    except Exception:
        # pipeline_mode / Buffered(1) unsupported on this build -> default buffering.
        out_packed = build(None)(x_packed, *weights)

    return out_packed.reshape(N, H, W, C2)


def make_params(key, c1, c2):
    """Folded (BN -> scale/bias) params in plain per-channel form, PyTorch-equivalent."""
    c_ = c2 // 2
    h1 = c_ // 2
    h2 = c2 // 2
    keys = jax.random.split(key, 8)
    eps = 1e-5

    def bn_fold(k, c):
        kg, kb, km, kv = jax.random.split(k, 4)
        gamma = 1.0 + 0.1 * jax.random.normal(kg, (c,))
        beta = 0.1 * jax.random.normal(kb, (c,))
        mean = 0.1 * jax.random.normal(km, (c,))
        var = 0.1 * jnp.abs(jax.random.normal(kv, (c,))) + 0.5
        scale = gamma / jnp.sqrt(var + eps)
        bias = beta - mean * scale
        return scale, bias

    # GhostConv1.cv1: Conv2d(c1, h1, 1) + BN + ReLU
    w = 0.2 * jax.random.normal(keys[0], (h1, c1, 1, 1))
    s, bi = bn_fold(keys[1], h1)
    w1 = (w[:, :, 0, 0] * s[:, None]).T                 # (c1, h1)
    b1 = bi

    # GhostConv1.cv2: Conv2d(h1, h1, 5, groups=h1, pad=2) + BN + ReLU
    wd = 0.2 * jax.random.normal(keys[2], (h1, 1, 5, 5))
    s, bi = bn_fold(keys[3], h1)
    dw1 = (wd[:, 0] * s[:, None, None]).transpose(1, 2, 0).reshape(25, h1)
    db1 = bi

    # GhostConv2.cv1: Conv2d(c_, h2, 1) + BN  (no act)
    w = 0.2 * jax.random.normal(keys[4], (h2, c_, 1, 1))
    s, bi = bn_fold(keys[5], h2)
    w2 = (w[:, :, 0, 0] * s[:, None]).T                 # (c_, h2)
    b2 = bi

    # GhostConv2.cv2: Conv2d(h2, h2, 5, groups=h2, pad=2) + BN  (no act)
    wd = 0.2 * jax.random.normal(keys[6], (h2, 1, 5, 5))
    s, bi = bn_fold(keys[7], h2)
    dw2 = (wd[:, 0] * s[:, None, None]).transpose(1, 2, 0).reshape(25, h2)
    db2 = bi

    return tuple(jnp.asarray(p, jnp.float32)
                 for p in (w1, b1, dw1, db1, w2, b2, dw2, db2))


def pack_params(params, W):
    """Repack folded params into the lane-packed kernel layout.

    1x1-conv columns/bias are duplicated into BOTH the low and high channel slots of each
    output block (so the MXU emits the depthwise-branch input copy for free), then embedded
    block-diagonally over W.  Depthwise tap weights act on the high slots only and have the
    |dj| wrap-around pixel blocks of each tap zeroed so in-kernel pltpu.roll (circular)
    exactly reproduces zero 'same' padding.
    """
    w1, b1, dw1, db1, w2, b2, dw2, db2 = params
    c1, h1 = w1.shape
    c_, h2 = w2.shape
    c2 = 2 * h2
    assert c_ == 2 * h1

    def block_diag(mat, w):
        i, o = mat.shape
        eye = jnp.eye(w, dtype=mat.dtype)
        return jnp.einsum('wv,io->wivo', eye, mat).reshape(w * i, w * o)

    def pack_pw(wmat, bvec, cb, hb):
        wp = jnp.zeros((wmat.shape[0], cb), jnp.float32)
        wp = wp.at[:, :hb].set(wmat).at[:, hb:].set(wmat)
        bp = jnp.zeros((1, cb), jnp.float32)
        bp = bp.at[:, :hb].set(bvec[None, :]).at[:, hb:].set(bvec[None, :])
        mask = jnp.zeros((1, cb), jnp.float32).at[:, :hb].set(1.0)    # keep-low-slot mask
        return block_diag(wp, W), jnp.tile(bp, (1, W)), jnp.tile(mask, (1, W))

    def pack_dw(dwt, dbv, cb, hb):
        base = jnp.zeros((25, cb), jnp.float32).at[:, hb:].set(dwt)
        tiled = jnp.tile(base, (1, W))                                # (25, W*cb)
        pixel = jnp.arange(W * cb) // cb                              # pixel id per lane
        rows = []
        for di in range(-2, 3):
            for dj in range(-2, 3):
                valid = ((pixel + dj >= 0) & (pixel + dj < W)).astype(jnp.float32)
                rows.append(tiled[(di + 2) * 5 + (dj + 2)] * valid)
        wt = jnp.stack(rows, axis=0)
        bt = jnp.tile(jnp.zeros((1, cb), jnp.float32).at[:, hb:].set(dbv[None, :]), (1, W))
        return wt, bt

    W1b, b1e, m1 = pack_pw(w1, b1, c_, h1)
    dw1t, db1t = pack_dw(dw1, db1, c_, h1)
    W2b, b2e, m2 = pack_pw(w2, b2, c2, h2)
    dw2t, db2t = pack_dw(dw2, db2, c2, h2)
    return (W1b, b1e, m1, dw1t, db1t, W2b, b2e, m2, dw2t, db2t)


def ref_forward(x, params):
    """Pure-JAX NHWC reference, same math as the PyTorch module in eval mode."""
    w1, b1, dw1, db1, w2, b2, dw2, db2 = params
    hi = jax.lax.Precision.HIGHEST

    def pw(v, w, b, relu):
        y = jnp.einsum('nhwc,cd->nhwd', v, w, precision=hi) + b.reshape(1, 1, 1, -1)
        return jnp.maximum(y, 0.0) if relu else y

    def dw(v, w25, b, relu):
        C = v.shape[-1]
        wk = w25.reshape(5, 5, 1, C)
        y = jax.lax.conv_general_dilated(
            v, wk, (1, 1), [(2, 2), (2, 2)],
            dimension_numbers=('NHWC', 'HWIO', 'NHWC'),
            feature_group_count=C, precision=hi) + b.reshape(1, 1, 1, -1)
        return jnp.maximum(y, 0.0) if relu else y

    a = pw(x, w1, b1, True)
    bb = dw(a, dw1, db1, True)
    a2 = pw(jnp.concatenate([a, bb], -1), w2, b2, False)
    b2v = dw(a2, dw2, db2, False)
    return jnp.concatenate([a2, b2v], -1) + x


if __name__ == "__main__":
    key = jax.random.PRNGKey(0)
    kx, kp = jax.random.split(key)

    N, H, W = 4, 16, 16
    C1 = C2 = 16                           # s=1 residual => c1 must equal c2

    x = jax.random.normal(kx, (N, H, W, C1), jnp.float32)
    params = make_params(kp, C1, C2)
    packed = pack_params(params, W)

    out = ghost_bottleneck(x, packed, b_tile=2)   # grid=(2,) so both v7x cores get work
    out = jax.block_until_ready(out)

    ref = ref_forward(x, params)
    assert out.shape == (N, H, W, C2), out.shape
    assert jnp.allclose(out, ref, atol=2e-4, rtol=2e-4), float(jnp.max(jnp.abs(out - ref)))

    print("KERNEL_OK")
</pallas_src>

<mosaic_0001>
module attributes {stable_mosaic.version = 11 : i64} {
  func.func @kernel(%arg0: i32, %arg1: memref<2x16x256xf32, #tpu.memory_space<vmem>>, %arg2: memref<256x128xf32, #tpu.memory_space<vmem>>, %arg3: memref<1x128xf32, #tpu.memory_space<vmem>>, %arg4: memref<1x128xf32, #tpu.memory_space<vmem>>, %arg5: memref<25x128xf32, #tpu.memory_space<vmem>>, %arg6: memref<1x128xf32, #tpu.memory_space<vmem>>, %arg7: memref<128x256xf32, #tpu.memory_space<vmem>>, %arg8: memref<1x256xf32, #tpu.memory_space<vmem>>, %arg9: memref<1x256xf32, #tpu.memory_space<vmem>>, %arg10: memref<25x256xf32, #tpu.memory_space<vmem>>, %arg11: memref<1x256xf32, #tpu.memory_space<vmem>>, %arg12: memref<2x16x256xf32, #tpu.memory_space<vmem>>, %arg13: memref<2x20x128xf32, #tpu.memory_space<vmem>>, %arg14: memref<2x20x256xf32, #tpu.memory_space<vmem>>) attributes {dimension_semantics = [#tpu.dimension_semantics<parallel>], iteration_bounds = array<i64: 2>, scalar_prefetch = 0 : i64, scratch_operands = 2 : i64, tpu.core_type = #tpu.core_type<tc>, window_params = [{transform_indices = @transform_0, window_bounds = array<i64: 2, 16, 256>}, {pipeline_mode = #tpu.pipeline_mode<synchronous>, transform_indices = @transform_1, window_bounds = array<i64: 256, 128>}, {pipeline_mode = #tpu.pipeline_mode<synchronous>, transform_indices = @transform_2, window_bounds = array<i64: 1, 128>}, {pipeline_mode = #tpu.pipeline_mode<synchronous>, transform_indices = @transform_3, window_bounds = array<i64: 1, 128>}, {pipeline_mode = #tpu.pipeline_mode<synchronous>, transform_indices = @transform_4, window_bounds = array<i64: 25, 128>}, {pipeline_mode = #tpu.pipeline_mode<synchronous>, transform_indices = @transform_5, window_bounds = array<i64: 1, 128>}, {pipeline_mode = #tpu.pipeline_mode<synchronous>, transform_indices = @transform_6, window_bounds = array<i64: 128, 256>}, {pipeline_mode = #tpu.pipeline_mode<synchronous>, transform_indices = @transform_7, window_bounds = array<i64: 1, 256>}, {pipeline_mode = #tpu.pipeline_mode<synchronous>, transform_indices = @transform_8, window_bounds = array<i64: 1, 256>}, {pipeline_mode = #tpu.pipeline_mode<synchronous>, transform_indices = @transform_9, window_bounds = array<i64: 25, 256>}, {pipeline_mode = #tpu.pipeline_mode<synchronous>, transform_indices = @transform_10, window_bounds = array<i64: 1, 256>}, {transform_indices = @transform_11, window_bounds = array<i64: 2, 16, 256>}]} {
    %c0 = arith.constant 0 : index
    %c0_0 = arith.constant 0 : index
    %c0_1 = arith.constant 0 : index
    %0 = vector.load %arg1[%c0, %c0_0, %c0_1] : memref<2x16x256xf32, #tpu.memory_space<vmem>>, vector<2x16x256xf32>
    %1 = vector.shape_cast %0 : vector<2x16x256xf32> to vector<32x256xf32>
    %c0_2 = arith.constant 0 : index
    %c0_3 = arith.constant 0 : index
    %2 = vector.load %arg2[%c0_2, %c0_3] : memref<256x128xf32, #tpu.memory_space<vmem>>, vector<256x128xf32>
    %cst = arith.constant dense<0.000000e+00> : vector<32x128xf32>
    %3 = tpu.matmul %1, %2, %cst {dimension_numbers = #tpu.dot_dimension_numbers<[1], [0], [0], [1], [0, 0, 1, 1], [], []>} : vector<32x256xf32>, vector<256x128xf32>, vector<32x128xf32> -> vector<32x128xf32>
    %c0_4 = arith.constant 0 : index
    %c0_5 = arith.constant 0 : index
    %4 = vector.load %arg3[%c0_4, %c0_5] : memref<1x128xf32, #tpu.memory_space<vmem>>, vector<1x128xf32>
    %5 = vector.broadcast %4 : vector<1x128xf32> to vector<32x128xf32>
    %6 = arith.addf %3, %5 : vector<32x128xf32>
    %cst_6 = arith.constant 0.000000e+00 : f32
    %7 = vector.broadcast %cst_6 : f32 to vector<32x128xf32>
    %8 = arith.maximumf %6, %7 : vector<32x128xf32>
    %cst_7 = arith.constant 0.000000e+00 : f32
    %9 = vector.broadcast %cst_7 : f32 to vector<2x2x128xf32>
    %c0_8 = arith.constant 0 : index
    %c0_9 = arith.constant 0 : index
    %c0_10 = arith.constant 0 : index
    %10 = vector.load %arg13[%c0_8, %c0_9, %c0_10] : memref<2x20x128xf32, #tpu.memory_space<vmem>>, vector<2x2x128xf32>
    tpu.vector_store %arg13[%c0_8, %c0_9, %c0_10], %9 {strides = array<i32>} : memref<2x20x128xf32, #tpu.memory_space<vmem>>, vector<2x2x128xf32>,
    %c0_11 = arith.constant 0 : index
    %c18 = arith.constant 18 : index
    %c0_12 = arith.constant 0 : index
    %11 = vector.load %arg13[%c0_11, %c18, %c0_12] : memref<2x20x128xf32, #tpu.memory_space<vmem>>, vector<2x2x128xf32>
    tpu.vector_store %arg13[%c0_11, %c18, %c0_12], %9 {strides = array<i32>} : memref<2x20x128xf32, #tpu.memory_space<vmem>>, vector<2x2x128xf32>,
    %12 = vector.shape_cast %8 : vector<32x128xf32> to vector<2x16x128xf32>
    %c0_13 = arith.constant 0 : index
    %c2 = arith.constant 2 : index
    %c0_14 = arith.constant 0 : index
    %13 = vector.load %arg13[%c0_13, %c2, %c0_14] : memref<2x20x128xf32, #tpu.memory_space<vmem>>, vector<2x16x128xf32>
    tpu.vector_store %arg13[%c0_13, %c2, %c0_14], %12 {strides = array<i32>} : memref<2x20x128xf32, #tpu.memory_space<vmem>>, vector<2x16x128xf32>,
    %c0_15 = arith.constant 0 : index
    %c0_16 = arith.constant 0 : index
    %14 = vector.load %arg5[%c0_15, %c0_16] : memref<25x128xf32, #tpu.memory_space<vmem>>, vector<1x128xf32>
    %c1 = arith.constant 1 : index
    %c0_17 = arith.constant 0 : index
    %15 = vector.load %arg5[%c1, %c0_17] : memref<25x128xf32, #tpu.memory_space<vmem>>, vector<1x128xf32>
    %c2_18 = arith.constant 2 : index
    %c0_19 = arith.constant 0 : index
    %16 = vector.load %arg5[%c2_18, %c0_19] : memref<25x128xf32, #tpu.memory_space<vmem>>, vector<1x128xf32>
    %c3 = arith.constant 3 : index
    %c0_20 = arith.constant 0 : index
    %17 = vector.load %arg5[%c3, %c0_20] : memref<25x128xf32, #tpu.memory_space<vmem>>, vector<1x128xf32>
    %c4 = arith.constant 4 : index
    %c0_21 = arith.constant 0 : index
    %18 = vector.load %arg5[%c4, %c0_21] : memref<25x128xf32, #tpu.memory_space<vmem>>, vector<1x128xf32>
    %c5 = arith.constant 5 : index
    %c0_22 = arith.constant 0 : index
    %19 = vector.load %arg5[%c5, %c0_22] : memref<25x128xf32, #tpu.memory_space<vmem>>, vector<1x128xf32>
    %c6 = arith.constant 6 : index
    %c0_23 = arith.constant 0 : index
    %20 = vector.load %arg5[%c6, %c0_23] : memref<25x128xf32, #tpu.memory_space<vmem>>, vector<1x128xf32>
    %c7 = arith.constant 7 : index
    %c0_24 = arith.constant 0 : index
    %21 = vector.load %arg5[%c7, %c0_24] : memref<25x128xf32, #tpu.memory_space<vmem>>, vector<1x128xf32>
    %c8 = arith.constant 8 : index
    %c0_25 = arith.constant 0 : index
    %22 = vector.load %arg5[%c8, %c0_25] : memref<25x128xf32, #tpu.memory_space<vmem>>, vector<1x128xf32>
    %c9 = arith.constant 9 : index
    %c0_26 = arith.constant 0 : index
    %23 = vector.load %arg5[%c9, %c0_26] : memref<25x128xf32, #tpu.memory_space<vmem>>, vector<1x128xf32>
    %c10 = arith.constant 10 : index
    %c0_27 = arith.constant 0 : index
    %24 = vector.load %arg5[%c10, %c0_27] : memref<25x128xf32, #tpu.memory_space<vmem>>, vector<1x128xf32>
    %c11 = arith.constant 11 : index
    %c0_28 = arith.constant 0 : index
    %25 = vector.load %arg5[%c11, %c0_28] : memref<25x128xf32, #tpu.memory_space<vmem>>, vector<1x128xf32>
    %c12 = arith.constant 12 : index
    %c0_29 = arith.constant 0 : index
    %26 = vector.load %arg5[%c12, %c0_29] : memref<25x128xf32, #tpu.memory_space<vmem>>, vector<1x128xf32>
    %c13 = arith.constant 13 : index
    %c0_30 = arith.constant 0 : index
    %27 = vector.load %arg5[%c13, %c0_30] : memref<25x128xf32, #tpu.memory_space<vmem>>, vector<1x128xf32>
    %c14 = arith.constant 14 : index
    %c0_31 = arith.constant 0 : index
    %28 = vector.load %arg5[%c14, %c0_31] : memref<25x128xf32, #tpu.memory_space<vmem>>, vector<1x128xf32>
    %c15 = arith.constant 15 : index
    %c0_32 = arith.constant 0 : index
    %29 = vector.load %arg5[%c15, %c0_32] : memref<25x128xf32, #tpu.memory_space<vmem>>, vector<1x128xf32>
    %c16 = arith.constant 16 : index
    %c0_33 = arith.constant 0 : index
    %30 = vector.load %arg5[%c16, %c0_33] : memref<25x128xf32, #tpu.memory_space<vmem>>, vector<1x128xf32>
    %c17 = arith.constant 17 : index
    %c0_34 = arith.constant 0 : index
    %31 = vector.load %arg5[%c17, %c0_34] : memref<25x128xf32, #tpu.memory_space<vmem>>, vector<1x128xf32>
    %c18_35 = arith.constant 18 : index
    %c0_36 = arith.constant 0 : index
    %32 = vector.load %arg5[%c18_35, %c0_36] : memref<25x128xf32, #tpu.memory_space<vmem>>, vector<1x128xf32>
    %c19 = arith.constant 19 : index
    %c0_37 = arith.constant 0 : index
    %33 = vector.load %arg5[%c19, %c0_37] : memref<25x128xf32, #tpu.memory_space<vmem>>, vector<1x128xf32>
    %c20 = arith.constant 20 : index
    %c0_38 = arith.constant 0 : index
    %34 = vector.load %arg5[%c20, %c0_38] : memref<25x128xf32, #tpu.memory_space<vmem>>, vector<1x128xf32>
    %c21 = arith.constant 21 : index
    %c0_39 = arith.constant 0 : index
    %35 = vector.load %arg5[%c21, %c0_39] : memref<25x128xf32, #tpu.memory_space<vmem>>, vector<1x128xf32>
    %c22 = arith.constant 22 : index
    %c0_40 = arith.constant 0 : index
    %36 = vector.load %arg5[%c22, %c0_40] : memref<25x128xf32, #tpu.memory_space<vmem>>, vector<1x128xf32>
    %c23 = arith.constant 23 : index
    %c0_41 = arith.constant 0 : index
    %37 = vector.load %arg5[%c23, %c0_41] : memref<25x128xf32, #tpu.memory_space<vmem>>, vector<1x128xf32>
    %c24 = arith.constant 24 : index
    %c0_42 = arith.constant 0 : index
    %38 = vector.load %arg5[%c24, %c0_42] : memref<25x128xf32, #tpu.memory_space<vmem>>, vector<1x128xf32>
    %c0_43 = arith.constant 0 : index
    %c0_44 = arith.constant 0 : index
    %c0_45 = arith.constant 0 : index
    %39 = vector.load %arg13[%c0_43, %c0_44, %c0_45] : memref<2x20x128xf32, #tpu.memory_space<vmem>>, vector<2x16x128xf32>
    %40 = vector.shape_cast %39 : vector<2x16x128xf32> to vector<32x128xf32>
    %c16_i32 = arith.constant 16 : i32
    %41 = tpu.dynamic_rotate %40 by %c16_i32 dim 1 : vector<32x128xf32>, i32 -> vector<32x128xf32>
    %42 = vector.broadcast %14 : vector<1x128xf32> to vector<32x128xf32>
    %43 = arith.mulf %41, %42 : vector<32x128xf32>
    %c8_i32 = arith.constant 8 : i32
    %44 = tpu.dynamic_rotate %40 by %c8_i32 dim 1 : vector<32x128xf32>, i32 -> vector<32x128xf32>
    %45 = vector.broadcast %15 : vector<1x128xf32> to vector<32x128xf32>
    %46 = arith.mulf %44, %45 : vector<32x128xf32>
    %47 = arith.addf %43, %46 : vector<32x128xf32>
    %48 = vector.broadcast %16 : vector<1x128xf32> to vector<32x128xf32>
    %49 = arith.mulf %40, %48 : vector<32x128xf32>
    %50 = arith.addf %47, %49 : vector<32x128xf32>
    %c120_i32 = arith.constant 120 : i32
    %51 = tpu.dynamic_rotate %40 by %c120_i32 dim 1 : vector<32x128xf32>, i32 -> vector<32x128xf32>
    %52 = vector.broadcast %17 : vector<1x128xf32> to vector<32x128xf32>
    %53 = arith.mulf %51, %52 : vector<32x128xf32>
    %54 = arith.addf %50, %53 : vector<32x128xf32>
    %c112_i32 = arith.constant 112 : i32
    %55 = tpu.dynamic_rotate %40 by %c112_i32 dim 1 : vector<32x128xf32>, i32 -> vector<32x128xf32>
    %56 = vector.broadcast %18 : vector<1x128xf32> to vector<32x128xf32>
    %57 = arith.mulf %55, %56 : vector<32x128xf32>
    %58 = arith.addf %54, %57 : vector<32x128xf32>
    %c0_46 = arith.constant 0 : index
    %c1_47 = arith.constant 1 : index
    %c0_48 = arith.constant 0 : index
    %59 = vector.load %arg13[%c0_46, %c1_47, %c0_48] : memref<2x20x128xf32, #tpu.memory_space<vmem>>, vector<2x16x128xf32>
    %60 = vector.shape_cast %59 : vector<2x16x128xf32> to vector<32x128xf32>
    %c16_i32_49 = arith.constant 16 : i32
    %61 = tpu.dynamic_rotate %60 by %c16_i32_49 dim 1 : vector<32x128xf32>, i32 -> vector<32x128xf32>
    %62 = vector.broadcast %19 : vector<1x128xf32> to vector<32x128xf32>
    %63 = arith.mulf %61, %62 : vector<32x128xf32>
    %c8_i32_50 = arith.constant 8 : i32
    %64 = tpu.dynamic_rotate %60 by %c8_i32_50 dim 1 : vector<32x128xf32>, i32 -> vector<32x128xf32>
    %65 = vector.broadcast %20 : vector<1x128xf32> to vector<32x128xf32>
    %66 = arith.mulf %64, %65 : vector<32x128xf32>
    %67 = arith.addf %63, %66 : vector<32x128xf32>
    %68 = vector.broadcast %21 : vector<1x128xf32> to vector<32x128xf32>
    %69 = arith.mulf %60, %68 : vector<32x128xf32>
    %70 = arith.addf %67, %69 : vector<32x128xf32>
    %c120_i32_51 = arith.constant 120 : i32
    %71 = tpu.dynamic_rotate %60 by %c120_i32_51 dim 1 : vector<32x128xf32>, i32 -> vector<32x128xf32>
    %72 = vector.broadcast %22 : vector<1x128xf32> to vector<32x128xf32>
    %73 = arith.mulf %71, %72 : vector<32x128xf32>
    %74 = arith.addf %70, %73 : vector<32x128xf32>
    %c112_i32_52 = arith.constant 112 : i32
    %75 = tpu.dynamic_rotate %60 by %c112_i32_52 dim 1 : vector<32x128xf32>, i32 -> vector<32x128xf32>
    %76 = vector.broadcast %23 : vector<1x128xf32> to vector<32x128xf32>
    %77 = arith.mulf %75, %76 : vector<32x128xf32>
    %78 = arith.addf %74, %77 : vector<32x128xf32>
    %c0_53 = arith.constant 0 : index
    %c2_54 = arith.constant 2 : index
    %c0_55 = arith.constant 0 : index
    %79 = vector.load %arg13[%c0_53, %c2_54, %c0_55] : memref<2x20x128xf32, #tpu.memory_space<vmem>>, vector<2x16x128xf32>
    %80 = vector.shape_cast %79 : vector<2x16x128xf32> to vector<32x128xf32>
    %c16_i32_56 = arith.constant 16 : i32
    %81 = tpu.dynamic_rotate %80 by %c16_i32_56 dim 1 : vector<32x128xf32>, i32 -> vector<32x128xf32>
    %82 = vector.broadcast %24 : vector<1x128xf32> to vector<32x128xf32>
    %83 = arith.mulf %81, %82 : vector<32x128xf32>
    %c8_i32_57 = arith.constant 8 : i32
    %84 = tpu.dynamic_rotate %80 by %c8_i32_57 dim 1 : vector<32x128xf32>, i32 -> vector<32x128xf32>
    %85 = vector.broadcast %25 : vector<1x128xf32> to vector<32x128xf32>
    %86 = arith.mulf %84, %85 : vector<32x128xf32>
    %87 = arith.addf %83, %86 : vector<32x128xf32>
    %88 = vector.broadcast %26 : vector<1x128xf32> to vector<32x128xf32>
    %89 = arith.mulf %80, %88 : vector<32x128xf32>
    %90 = arith.addf %87, %89 : vector<32x128xf32>
    %c120_i32_58 = arith.constant 120 : i32
    %91 = tpu.dynamic_rotate %80 by %c120_i32_58 dim 1 : vector<32x128xf32>, i32 -> vector<32x128xf32>
    %92 = vector.broadcast %27 : vector<1x128xf32> to vector<32x128xf32>
    %93 = arith.mulf %91, %92 : vector<32x128xf32>
    %94 = arith.addf %90, %93 : vector<32x128xf32>
    %c112_i32_59 = arith.constant 112 : i32
    %95 = tpu.dynamic_rotate %80 by %c112_i32_59 dim 1 : vector<32x128xf32>, i32 -> vector<32x128xf32>
    %96 = vector.broadcast %28 : vector<1x128xf32> to vector<32x128xf32>
    %97 = arith.mulf %95, %96 : vector<32x128xf32>
    %98 = arith.addf %94, %97 : vector<32x128xf32>
    %c0_60 = arith.constant 0 : index
    %c3_61 = arith.constant 3 : index
    %c0_62 = arith.constant 0 : index
    %99 = vector.load %arg13[%c0_60, %c3_61, %c0_62] : memref<2x20x128xf32, #tpu.memory_space<vmem>>, vector<2x16x128xf32>
    %100 = vector.shape_cast %99 : vector<2x16x128xf32> to vector<32x128xf32>
    %c16_i32_63 = arith.constant 16 : i32
    %101 = tpu.dynamic_rotate %100 by %c16_i32_63 dim 1 : vector<32x128xf32>, i32 -> vector<32x128xf32>
    %102 = vector.broadcast %29 : vector<1x128xf32> to vector<32x128xf32>
    %103 = arith.mulf %101, %102 : vector<32x128xf32>
    %c8_i32_64 = arith.constant 8 : i32
    %104 = tpu.dynamic_rotate %100 by %c8_i32_64 dim 1 : vector<32x128xf32>, i32 -> vector<32x128xf32>
    %105 = vector.broadcast %30 : vector<1x128xf32> to vector<32x128xf32>
    %106 = arith.mulf %104, %105 : vector<32x128xf32>
    %107 = arith.addf %103, %106 : vector<32x128xf32>
    %108 = vector.broadcast %31 : vector<1x128xf32> to vector<32x128xf32>
    %109 = arith.mulf %100, %108 : vector<32x128xf32>
    %110 = arith.addf %107, %109 : vector<32x128xf32>
    %c120_i32_65 = arith.constant 120 : i32
    %111 = tpu.dynamic_rotate %100 by %c120_i32_65 dim 1 : vector<32x128xf32>, i32 -> vector<32x128xf32>
    %112 = vector.broadcast %32 : vector<1x128xf32> to vector<32x128xf32>
    %113 = arith.mulf %111, %112 : vector<32x128xf32>
    %114 = arith.addf %110, %113 : vector<32x128xf32>
    %c112_i32_66 = arith.constant 112 : i32
    %115 = tpu.dynamic_rotate %100 by %c112_i32_66 dim 1 : vector<32x128xf32>, i32 -> vector<32x128xf32>
    %116 = vector.broadcast %33 : vector<1x128xf32> to vector<32x128xf32>
    %117 = arith.mulf %115, %116 : vector<32x128xf32>
    %118 = arith.addf %114, %117 : vector<32x128xf32>
    %c0_67 = arith.constant 0 : index
    %c4_68 = arith.constant 4 : index
    %c0_69 = arith.constant 0 : index
    %119 = vector.load %arg13[%c0_67, %c4_68, %c0_69] : memref<2x20x128xf32, #tpu.memory_space<vmem>>, vector<2x16x128xf32>
    %120 = vector.shape_cast %119 : vector<2x16x128xf32> to vector<32x128xf32>
    %c16_i32_70 = arith.constant 16 : i32
    %121 = tpu.dynamic_rotate %120 by %c16_i32_70 dim 1 : vector<32x128xf32>, i32 -> vector<32x128xf32>
    %122 = vector.broadcast %34 : vector<1x128xf32> to vector<32x128xf32>
    %123 = arith.mulf %121, %122 : vector<32x128xf32>
    %c8_i32_71 = arith.constant 8 : i32
    %124 = tpu.dynamic_rotate %120 by %c8_i32_71 dim 1 : vector<32x128xf32>, i32 -> vector<32x128xf32>
    %125 = vector.broadcast %35 : vector<1x128xf32> to vector<32x128xf32>
    %126 = arith.mulf %124, %125 : vector<32x128xf32>
    %127 = arith.addf %123, %126 : vector<32x128xf32>
    %128 = vector.broadcast %36 : vector<1x128xf32> to vector<32x128xf32>
    %129 = arith.mulf %120, %128 : vector<32x128xf32>
    %130 = arith.addf %127, %129 : vector<32x128xf32>
    %c120_i32_72 = arith.constant 120 : i32
    %131 = tpu.dynamic_rotate %120 by %c120_i32_72 dim 1 : vector<32x128xf32>, i32 -> vector<32x128xf32>
    %132 = vector.broadcast %37 : vector<1x128xf32> to vector<32x128xf32>
    %133 = arith.mulf %131, %132 : vector<32x128xf32>
    %134 = arith.addf %130, %133 : vector<32x128xf32>
    %c112_i32_73 = arith.constant 112 : i32
    %135 = tpu.dynamic_rotate %120 by %c112_i32_73 dim 1 : vector<32x128xf32>, i32 -> vector<32x128xf32>
    %136 = vector.broadcast %38 : vector<1x128xf32> to vector<32x128xf32>
    %137 = arith.mulf %135, %136 : vector<32x128xf32>
    %138 = arith.addf %134, %137 : vector<32x128xf32>
    %139 = arith.addf %58, %78 : vector<32x128xf32>
    %140 = arith.addf %98, %118 : vector<32x128xf32>
    %141 = arith.addf %139, %140 : vector<32x128xf32>
    %142 = arith.addf %141, %138 : vector<32x128xf32>
    %c0_74 = arith.constant 0 : index
    %c0_75 = arith.constant 0 : index
    %143 = vector.load %arg6[%c0_74, %c0_75] : memref<1x128xf32, #tpu.memory_space<vmem>>, vector<1x128xf32>
    %144 = vector.broadcast %143 : vector<1x128xf32> to vector<32x128xf32>
    %145 = arith.addf %142, %144 : vector<32x128xf32>
    %cst_76 = arith.constant 0.000000e+00 : f32
    %146 = vector.broadcast %cst_76 : f32 to vector<32x128xf32>
    %147 = arith.maximumf %145, %146 : vector<32x128xf32>
    %c0_77 = arith.constant 0 : index
    %c0_78 = arith.constant 0 : index
    %148 = vector.load %arg4[%c0_77, %c0_78] : memref<1x128xf32, #tpu.memory_space<vmem>>, vector<1x128xf32>
    %149 = vector.broadcast %148 : vector<1x128xf32> to vector<32x128xf32>
    %150 = arith.mulf %8, %149 : vector<32x128xf32>
    %151 = arith.addf %150, %147 : vector<32x128xf32>
    %c0_79 = arith.constant 0 : index
    %c0_80 = arith.constant 0 : index
    %152 = vector.load %arg7[%c0_79, %c0_80] : memref<128x256xf32, #tpu.memory_space<vmem>>, vector<128x256xf32>
    %cst_81 = arith.constant dense<0.000000e+00> : vector<32x256xf32>
    %153 = tpu.matmul %151, %152, %cst_81 {dimension_numbers = #tpu.dot_dimension_numbers<[1], [0], [0], [1], [0, 0, 1, 1], [], []>} : vector<32x128xf32>, vector<128x256xf32>, vector<32x256xf32> -> vector<32x256xf32>
    %c0_82 = arith.constant 0 : index
    %c0_83 = arith.constant 0 : index
    %154 = vector.load %arg8[%c0_82, %c0_83] : memref<1x256xf32, #tpu.memory_space<vmem>>, vector<1x256xf32>
    %155 = vector.broadcast %154 : vector<1x256xf32> to vector<32x256xf32>
    %156 = arith.addf %153, %155 : vector<32x256xf32>
    %cst_84 = arith.constant 0.000000e+00 : f32
    %157 = vector.broadcast %cst_84 : f32 to vector<2x2x256xf32>
    %c0_85 = arith.constant 0 : index
    %c0_86 = arith.constant 0 : index
    %c0_87 = arith.constant 0 : index
    %158 = vector.load %arg14[%c0_85, %c0_86, %c0_87] : memref<2x20x256xf32, #tpu.memory_space<vmem>>, vector<2x2x256xf32>
    tpu.vector_store %arg14[%c0_85, %c0_86, %c0_87], %157 {strides = array<i32>} : memref<2x20x256xf32, #tpu.memory_space<vmem>>, vector<2x2x256xf32>,
    %c0_88 = arith.constant 0 : index
    %c18_89 = arith.constant 18 : index
    %c0_90 = arith.constant 0 : index
    %159 = vector.load %arg14[%c0_88, %c18_89, %c0_90] : memref<2x20x256xf32, #tpu.memory_space<vmem>>, vector<2x2x256xf32>
    tpu.vector_store %arg14[%c0_88, %c18_89, %c0_90], %157 {strides = array<i32>} : memref<2x20x256xf32, #tpu.memory_space<vmem>>, vector<2x2x256xf32>,
    %160 = vector.shape_cast %156 : vector<32x256xf32> to vector<2x16x256xf32>
    %c0_91 = arith.constant 0 : index
    %c2_92 = arith.constant 2 : index
    %c0_93 = arith.constant 0 : index
    %161 = vector.load %arg14[%c0_91, %c2_92, %c0_93] : memref<2x20x256xf32, #tpu.memory_space<vmem>>, vector<2x16x256xf32>
    tpu.vector_store %arg14[%c0_91, %c2_92, %c0_93], %160 {strides = array<i32>} : memref<2x20x256xf32, #tpu.memory_space<vmem>>, vector<2x16x256xf32>,
    %c0_94 = arith.constant 0 : index
    %c0_95 = arith.constant 0 : index
    %162 = vector.load %arg10[%c0_94, %c0_95] : memref<25x256xf32, #tpu.memory_space<vmem>>, vector<1x256xf32>
    %c1_96 = arith.constant 1 : index
    %c0_97 = arith.constant 0 : index
    %163 = vector.load %arg10[%c1_96, %c0_97] : memref<25x256xf32, #tpu.memory_space<vmem>>, vector<1x256xf32>
    %c2_98 = arith.constant 2 : index
    %c0_99 = arith.constant 0 : index
    %164 = vector.load %arg10[%c2_98, %c0_99] : memref<25x256xf32, #tpu.memory_space<vmem>>, vector<1x256xf32>
    %c3_100 = arith.constant 3 : index
    %c0_101 = arith.constant 0 : index
    %165 = vector.load %arg10[%c3_100, %c0_101] : memref<25x256xf32, #tpu.memory_space<vmem>>, vector<1x256xf32>
    %c4_102 = arith.constant 4 : index
    %c0_103 = arith.constant 0 : index
    %166 = vector.load %arg10[%c4_102, %c0_103] : memref<25x256xf32, #tpu.memory_space<vmem>>, vector<1x256xf32>
    %c5_104 = arith.constant 5 : index
    %c0_105 = arith.constant 0 : index
    %167 = vector.load %arg10[%c5_104, %c0_105] : memref<25x256xf32, #tpu.memory_space<vmem>>, vector<1x256xf32>
    %c6_106 = arith.constant 6 : index
    %c0_107 = arith.constant 0 : index
    %168 = vector.load %arg10[%c6_106, %c0_107] : memref<25x256xf32, #tpu.memory_space<vmem>>, vector<1x256xf32>
    %c7_108 = arith.constant 7 : index
    %c0_109 = arith.constant 0 : index
    %169 = vector.load %arg10[%c7_108, %c0_109] : memref<25x256xf32, #tpu.memory_space<vmem>>, vector<1x256xf32>
    %c8_110 = arith.constant 8 : index
    %c0_111 = arith.constant 0 : index
    %170 = vector.load %arg10[%c8_110, %c0_111] : memref<25x256xf32, #tpu.memory_space<vmem>>, vector<1x256xf32>
    %c9_112 = arith.constant 9 : index
    %c0_113 = arith.constant 0 : index
    %171 = vector.load %arg10[%c9_112, %c0_113] : memref<25x256xf32, #tpu.memory_space<vmem>>, vector<1x256xf32>
    %c10_114 = arith.constant 10 : index
    %c0_115 = arith.constant 0 : index
    %172 = vector.load %arg10[%c10_114, %c0_115] : memref<25x256xf32, #tpu.memory_space<vmem>>, vector<1x256xf32>
    %c11_116 = arith.constant 11 : index
    %c0_117 = arith.constant 0 : index
    %173 = vector.load %arg10[%c11_116, %c0_117] : memref<25x256xf32, #tpu.memory_space<vmem>>, vector<1x256xf32>
    %c12_118 = arith.constant 12 : index
    %c0_119 = arith.constant 0 : index
    %174 = vector.load %arg10[%c12_118, %c0_119] : memref<25x256xf32, #tpu.memory_space<vmem>>, vector<1x256xf32>
    %c13_120 = arith.constant 13 : index
    %c0_121 = arith.constant 0 : index
    %175 = vector.load %arg10[%c13_120, %c0_121] : memref<25x256xf32, #tpu.memory_space<vmem>>, vector<1x256xf32>
    %c14_122 = arith.constant 14 : index
    %c0_123 = arith.constant 0 : index
    %176 = vector.load %arg10[%c14_122, %c0_123] : memref<25x256xf32, #tpu.memory_space<vmem>>, vector<1x256xf32>
    %c15_124 = arith.constant 15 : index
    %c0_125 = arith.constant 0 : index
    %177 = vector.load %arg10[%c15_124, %c0_125] : memref<25x256xf32, #tpu.memory_space<vmem>>, vector<1x256xf32>
    %c16_126 = arith.constant 16 : index
    %c0_127 = arith.constant 0 : index
    %178 = vector.load %arg10[%c16_126, %c0_127] : memref<25x256xf32, #tpu.memory_space<vmem>>, vector<1x256xf32>
    %c17_128 = arith.constant 17 : index
    %c0_129 = arith.constant 0 : index
    %179 = vector.load %arg10[%c17_128, %c0_129] : memref<25x256xf32, #tpu.memory_space<vmem>>, vector<1x256xf32>
    %c18_130 = arith.constant 18 : index
    %c0_131 = arith.constant 0 : index
    %180 = vector.load %arg10[%c18_130, %c0_131] : memref<25x256xf32, #tpu.memory_space<vmem>>, vector<1x256xf32>
    %c19_132 = arith.constant 19 : index
    %c0_133 = arith.constant 0 : index
    %181 = vector.load %arg10[%c19_132, %c0_133] : memref<25x256xf32, #tpu.memory_space<vmem>>, vector<1x256xf32>
    %c20_134 = arith.constant 20 : index
    %c0_135 = arith.constant 0 : index
    %182 = vector.load %arg10[%c20_134, %c0_135] : memref<25x256xf32, #tpu.memory_space<vmem>>, vector<1x256xf32>
    %c21_136 = arith.constant 21 : index
    %c0_137 = arith.constant 0 : index
    %183 = vector.load %arg10[%c21_136, %c0_137] : memref<25x256xf32, #tpu.memory_space<vmem>>, vector<1x256xf32>
    %c22_138 = arith.constant 22 : index
    %c0_139 = arith.constant 0 : index
    %184 = vector.load %arg10[%c22_138, %c0_139] : memref<25x256xf32, #tpu.memory_space<vmem>>, vector<1x256xf32>
    %c23_140 = arith.constant 23 : index
    %c0_141 = arith.constant 0 : index
    %185 = vector.load %arg10[%c23_140, %c0_141] : memref<25x256xf32, #tpu.memory_space<vmem>>, vector<1x256xf32>
    %c24_142 = arith.constant 24 : index
    %c0_143 = arith.constant 0 : index
    %186 = vector.load %arg10[%c24_142, %c0_143] : memref<25x256xf32, #tpu.memory_space<vmem>>, vector<1x256xf32>
    %c0_144 = arith.constant 0 : index
    %c0_145 = arith.constant 0 : index
    %c0_146 = arith.constant 0 : index
    %187 = vector.load %arg14[%c0_144, %c0_145, %c0_146] : memref<2x20x256xf32, #tpu.memory_space<vmem>>, vector<2x16x256xf32>
    %188 = vector.shape_cast %187 : vector<2x16x256xf32> to vector<32x256xf32>
    %c32_i32 = arith.constant 32 : i32
    %189 = tpu.dynamic_rotate %188 by %c32_i32 dim 1 : vector<32x256xf32>, i32 -> vector<32x256xf32>
    %190 = vector.broadcast %162 : vector<1x256xf32> to vector<32x256xf32>
    %191 = arith.mulf %189, %190 : vector<32x256xf32>
    %c16_i32_147 = arith.constant 16 : i32
    %192 = tpu.dynamic_rotate %188 by %c16_i32_147 dim 1 : vector<32x256xf32>, i32 -> vector<32x256xf32>
    %193 = vector.broadcast %163 : vector<1x256xf32> to vector<32x256xf32>
    %194 = arith.mulf %192, %193 : vector<32x256xf32>
    %195 = arith.addf %191, %194 : vector<32x256xf32>
    %196 = vector.broadcast %164 : vector<1x256xf32> to vector<32x256xf32>
    %197 = arith.mulf %188, %196 : vector<32x256xf32>
    %198 = arith.addf %195, %197 : vector<32x256xf32>
    %c240_i32 = arith.constant 240 : i32
    %199 = tpu.dynamic_rotate %188 by %c240_i32 dim 1 : vector<32x256xf32>, i32 -> vector<32x256xf32>
    %200 = vector.broadcast %165 : vector<1x256xf32> to vector<32x256xf32>
    %201 = arith.mulf %199, %200 : vector<32x256xf32>
    %202 = arith.addf %198, %201 : vector<32x256xf32>
    %c224_i32 = arith.constant 224 : i32
    %203 = tpu.dynamic_rotate %188 by %c224_i32 dim 1 : vector<32x256xf32>, i32 -> vector<32x256xf32>
    %204 = vector.broadcast %166 : vector<1x256xf32> to vector<32x256xf32>
    %205 = arith.mulf %203, %204 : vector<32x256xf32>
    %206 = arith.addf %202, %205 : vector<32x256xf32>
    %c0_148 = arith.constant 0 : index
    %c1_149 = arith.constant 1 : index
    %c0_150 = arith.constant 0 : index
    %207 = vector.load %arg14[%c0_148, %c1_149, %c0_150] : memref<2x20x256xf32, #tpu.memory_space<vmem>>, vector<2x16x256xf32>
    %208 = vector.shape_cast %207 : vector<2x16x256xf32> to vector<32x256xf32>
    %c32_i32_151 = arith.constant 32 : i32
    %209 = tpu.dynamic_rotate %208 by %c32_i32_151 dim 1 : vector<32x256xf32>, i32 -> vector<32x256xf32>
    %210 = vector.broadcast %167 : vector<1x256xf32> to vector<32x256xf32>
    %211 = arith.mulf %209, %210 : vector<32x256xf32>
    %c16_i32_152 = arith.constant 16 : i32
    %212 = tpu.dynamic_rotate %208 by %c16_i32_152 dim 1 : vector<32x256xf32>, i32 -> vector<32x256xf32>
    %213 = vector.broadcast %168 : vector<1x256xf32> to vector<32x256xf32>
    %214 = arith.mulf %212, %213 : vector<32x256xf32>
    %215 = arith.addf %211, %214 : vector<32x256xf32>
    %216 = vector.broadcast %169 : vector<1x256xf32> to vector<32x256xf32>
    %217 = arith.mulf %208, %216 : vector<32x256xf32>
    %218 = arith.addf %215, %217 : vector<32x256xf32>
    %c240_i32_153 = arith.constant 240 : i32
    %219 = tpu.dynamic_rotate %208 by %c240_i32_153 dim 1 : vector<32x256xf32>, i32 -> vector<32x256xf32>
    %220 = vector.broadcast %170 : vector<1x256xf32> to vector<32x256xf32>
    %221 = arith.mulf %219, %220 : vector<32x256xf32>
    %222 = arith.addf %218, %221 : vector<32x256xf32>
    %c224_i32_154 = arith.constant 224 : i32
    %223 = tpu.dynamic_rotate %208 by %c224_i32_154 dim 1 : vector<32x256xf32>, i32 -> vector<32x256xf32>
    %224 = vector.broadcast %171 : vector<1x256xf32> to vector<32x256xf32>
    %225 = arith.mulf %223, %224 : vector<32x256xf32>
    %226 = arith.addf %222, %225 : vector<32x256xf32>
    %c0_155 = arith.constant 0 : index
    %c2_156 = arith.constant 2 : index
    %c0_157 = arith.constant 0 : index
    %227 = vector.load %arg14[%c0_155, %c2_156, %c0_157] : memref<2x20x256xf32, #tpu.memory_space<vmem>>, vector<2x16x256xf32>
    %228 = vector.shape_cast %227 : vector<2x16x256xf32> to vector<32x256xf32>
    %c32_i32_158 = arith.constant 32 : i32
    %229 = tpu.dynamic_rotate %228 by %c32_i32_158 dim 1 : vector<32x256xf32>, i32 -> vector<32x256xf32>
    %230 = vector.broadcast %172 : vector<1x256xf32> to vector<32x256xf32>
    %231 = arith.mulf %229, %230 : vector<32x256xf32>
    %c16_i32_159 = arith.constant 16 : i32
    %232 = tpu.dynamic_rotate %228 by %c16_i32_159 dim 1 : vector<32x256xf32>, i32 -> vector<32x256xf32>
    %233 = vector.broadcast %173 : vector<1x256xf32> to vector<32x256xf32>
    %234 = arith.mulf %232, %233 : vector<32x256xf32>
    %235 = arith.addf %231, %234 : vector<32x256xf32>
    %236 = vector.broadcast %174 : vector<1x256xf32> to vector<32x256xf32>
    %237 = arith.mulf %228, %236 : vector<32x256xf32>
    %238 = arith.addf %235, %237 : vector<32x256xf32>
    %c240_i32_160 = arith.constant 240 : i32
    %239 = tpu.dynamic_rotate %228 by %c240_i32_160 dim 1 : vector<32x256xf32>, i32 -> vector<32x256xf32>
    %240 = vector.broadcast %175 : vector<1x256xf32> to vector<32x256xf32>
    %241 = arith.mulf %239, %240 : vector<32x256xf32>
    %242 = arith.addf %238, %241 : vector<32x256xf32>
    %c224_i32_161 = arith.constant 224 : i32
    %243 = tpu.dynamic_rotate %228 by %c224_i32_161 dim 1 : vector<32x256xf32>, i32 -> vector<32x256xf32>
    %244 = vector.broadcast %176 : vector<1x256xf32> to vector<32x256xf32>
    %245 = arith.mulf %243, %244 : vector<32x256xf32>
    %246 = arith.addf %242, %245 : vector<32x256xf32>
    %c0_162 = arith.constant 0 : index
    %c3_163 = arith.constant 3 : index
    %c0_164 = arith.constant 0 : index
    %247 = vector.load %arg14[%c0_162, %c3_163, %c0_164] : memref<2x20x256xf32, #tpu.memory_space<vmem>>, vector<2x16x256xf32>
    %248 = vector.shape_cast %247 : vector<2x16x256xf32> to vector<32x256xf32>
    %c32_i32_165 = arith.constant 32 : i32
    %249 = tpu.dynamic_rotate %248 by %c32_i32_165 dim 1 : vector<32x256xf32>, i32 -> vector<32x256xf32>
    %250 = vector.broadcast %177 : vector<1x256xf32> to vector<32x256xf32>
    %251 = arith.mulf %249, %250 : vector<32x256xf32>
    %c16_i32_166 = arith.constant 16 : i32
    %252 = tpu.dynamic_rotate %248 by %c16_i32_166 dim 1 : vector<32x256xf32>, i32 -> vector<32x256xf32>
    %253 = vector.broadcast %178 : vector<1x256xf32> to vector<32x256xf32>
    %254 = arith.mulf %252, %253 : vector<32x256xf32>
    %255 = arith.addf %251, %254 : vector<32x256xf32>
    %256 = vector.broadcast %179 : vector<1x256xf32> to vector<32x256xf32>
    %257 = arith.mulf %248, %256 : vector<32x256xf32>
    %258 = arith.addf %255, %257 : vector<32x256xf32>
    %c240_i32_167 = arith.constant 240 : i32
    %259 = tpu.dynamic_rotate %248 by %c240_i32_167 dim 1 : vector<32x256xf32>, i32 -> vector<32x256xf32>
    %260 = vector.broadcast %180 : vector<1x256xf32> to vector<32x256xf32>
    %261 = arith.mulf %259, %260 : vector<32x256xf32>
    %262 = arith.addf %258, %261 : vector<32x256xf32>
    %c224_i32_168 = arith.constant 224 : i32
    %263 = tpu.dynamic_rotate %248 by %c224_i32_168 dim 1 : vector<32x256xf32>, i32 -> vector<32x256xf32>
    %264 = vector.broadcast %181 : vector<1x256xf32> to vector<32x256xf32>
    %265 = arith.mulf %263, %264 : vector<32x256xf32>
    %266 = arith.addf %262, %265 : vector<32x256xf32>
    %c0_169 = arith.constant 0 : index
    %c4_170 = arith.constant 4 : index
    %c0_171 = arith.constant 0 : index
    %267 = vector.load %arg14[%c0_169, %c4_170, %c0_171] : memref<2x20x256xf32, #tpu.memory_space<vmem>>, vector<2x16x256xf32>
    %268 = vector.shape_cast %267 : vector<2x16x256xf32> to vector<32x256xf32>
    %c32_i32_172 = arith.constant 32 : i32
    %269 = tpu.dynamic_rotate %268 by %c32_i32_172 dim 1 : vector<32x256xf32>, i32 -> vector<32x256xf32>
    %270 = vector.broadcast %182 : vector<1x256xf32> to vector<32x256xf32>
    %271 = arith.mulf %269, %270 : vector<32x256xf32>
    %c16_i32_173 = arith.constant 16 : i32
    %272 = tpu.dynamic_rotate %268 by %c16_i32_173 dim 1 : vector<32x256xf32>, i32 -> vector<32x256xf32>
    %273 = vector.broadcast %183 : vector<1x256xf32> to vector<32x256xf32>
    %274 = arith.mulf %272, %273 : vector<32x256xf32>
    %275 = arith.addf %271, %274 : vector<32x256xf32>
    %276 = vector.broadcast %184 : vector<1x256xf32> to vector<32x256xf32>
    %277 = arith.mulf %268, %276 : vector<32x256xf32>
    %278 = arith.addf %275, %277 : vector<32x256xf32>
    %c240_i32_174 = arith.constant 240 : i32
    %279 = tpu.dynamic_rotate %268 by %c240_i32_174 dim 1 : vector<32x256xf32>, i32 -> vector<32x256xf32>
    %280 = vector.broadcast %185 : vector<1x256xf32> to vector<32x256xf32>
    %281 = arith.mulf %279, %280 : vector<32x256xf32>
    %282 = arith.addf %278, %281 : vector<32x256xf32>
    %c224_i32_175 = arith.constant 224 : i32
    %283 = tpu.dynamic_rotate %268 by %c224_i32_175 dim 1 : vector<32x256xf32>, i32 -> vector<32x256xf32>
    %284 = vector.broadcast %186 : vector<1x256xf32> to vector<32x256xf32>
    %285 = arith.mulf %283, %284 : vector<32x256xf32>
    %286 = arith.addf %282, %285 : vector<32x256xf32>
    %287 = arith.addf %206, %226 : vector<32x256xf32>
    %288 = arith.addf %246, %266 : vector<32x256xf32>
    %289 = arith.addf %287, %288 : vector<32x256xf32>
    %290 = arith.addf %289, %286 : vector<32x256xf32>
    %c0_176 = arith.constant 0 : index
    %c0_177 = arith.constant 0 : index
    %291 = vector.load %arg11[%c0_176, %c0_177] : memref<1x256xf32, #tpu.memory_space<vmem>>, vector<1x256xf32>
    %292 = vector.broadcast %291 : vector<1x256xf32> to vector<32x256xf32>
    %293 = arith.addf %290, %292 : vector<32x256xf32>
    %c0_178 = arith.constant 0 : index
    %c0_179 = arith.constant 0 : index
    %294 = vector.load %arg9[%c0_178, %c0_179] : memref<1x256xf32, #tpu.memory_space<vmem>>, vector<1x256xf32>
    %295 = vector.broadcast %294 : vector<1x256xf32> to vector<32x256xf32>
    %296 = arith.mulf %156, %295 : vector<32x256xf32>
    %297 = arith.addf %296, %293 : vector<32x256xf32>
    %298 = vector.shape_cast %297 : vector<32x256xf32> to vector<2x16x256xf32>
    %299 = arith.addf %298, %0 : vector<2x16x256xf32>
    %c0_180 = arith.constant 0 : index
    %c0_181 = arith.constant 0 : index
    %c0_182 = arith.constant 0 : index
    %300 = vector.load %arg12[%c0_180, %c0_181, %c0_182] : memref<2x16x256xf32, #tpu.memory_space<vmem>>, vector<2x16x256xf32>
    tpu.vector_store %arg12[%c0_180, %c0_181, %c0_182], %299 {strides = array<i32>} : memref<2x16x256xf32, #tpu.memory_space<vmem>>, vector<2x16x256xf32>,
    return
  }
  func.func @transform_0(%arg0: i32) -> (i32, i32, i32) {
    %c0_i32 = arith.constant 0 : i32
    %c0_i32_0 = arith.constant 0 : i32
    %c0_i32_1 = arith.constant 0 : i32
    return %arg0, %c0_i32, %c0_i32_0 : i32, i32, i32
  }
  func.func @transform_1(%arg0: i32) -> (i32, i32) {
    %c0_i32 = arith.constant 0 : i32
    %c0_i32_0 = arith.constant 0 : i32
    %c0_i32_1 = arith.constant 0 : i32
    return %c0_i32, %c0_i32_0 : i32, i32
  }
  func.func @transform_2(%arg0: i32) -> (i32, i32) {
    %c0_i32 = arith.constant 0 : i32
    %c0_i32_0 = arith.constant 0 : i32
    %c0_i32_1 = arith.constant 0 : i32
    return %c0_i32, %c0_i32_0 : i32, i32
  }
  func.func @transform_3(%arg0: i32) -> (i32, i32) {
    %c0_i32 = arith.constant 0 : i32
    %c0_i32_0 = arith.constant 0 : i32
    %c0_i32_1 = arith.constant 0 : i32
    return %c0_i32, %c0_i32_0 : i32, i32
  }
  func.func @transform_4(%arg0: i32) -> (i32, i32) {
    %c0_i32 = arith.constant 0 : i32
    %c0_i32_0 = arith.constant 0 : i32
    %c0_i32_1 = arith.constant 0 : i32
    return %c0_i32, %c0_i32_0 : i32, i32
  }
  func.func @transform_5(%arg0: i32) -> (i32, i32) {
    %c0_i32 = arith.constant 0 : i32
    %c0_i32_0 = arith.constant 0 : i32
    %c0_i32_1 = arith.constant 0 : i32
    return %c0_i32, %c0_i32_0 : i32, i32
  }
  func.func @transform_6(%arg0: i32) -> (i32, i32) {
    %c0_i32 = arith.constant 0 : i32
    %c0_i32_0 = arith.constant 0 : i32
    %c0_i32_1 = arith.constant 0 : i32
    return %c0_i32, %c0_i32_0 : i32, i32
  }
  func.func @transform_7(%arg0: i32) -> (i32, i32) {
    %c0_i32 = arith.constant 0 : i32
    %c0_i32_0 = arith.constant 0 : i32
    %c0_i32_1 = arith.constant 0 : i32
    return %c0_i32, %c0_i32_0 : i32, i32
  }
  func.func @transform_8(%arg0: i32) -> (i32, i32) {
    %c0_i32 = arith.constant 0 : i32
    %c0_i32_0 = arith.constant 0 : i32
    %c0_i32_1 = arith.constant 0 : i32
    return %c0_i32, %c0_i32_0 : i32, i32
  }
  func.func @transform_9(%arg0: i32) -> (i32, i32) {
    %c0_i32 = arith.constant 0 : i32
    %c0_i32_0 = arith.constant 0 : i32
    %c0_i32_1 = arith.constant 0 : i32
    return %c0_i32, %c0_i32_0 : i32, i32
  }
  func.func @transform_10(%arg0: i32) -> (i32, i32) {
    %c0_i32 = arith.constant 0 : i32
    %c0_i32_0 = arith.constant 0 : i32
    %c0_i32_1 = arith.constant 0 : i32
    return %c0_i32, %c0_i32_0 : i32, i32
  }
  func.func @transform_11(%arg0: i32) -> (i32, i32, i32) {
    %c0_i32 = arith.constant 0 : i32
    %c0_i32_0 = arith.constant 0 : i32
    %c0_i32_1 = arith.constant 0 : i32
    return %arg0, %c0_i32, %c0_i32_0 : i32, i32, i32
  }
}

module attributes {stable_mosaic.version = 11 : i64} {
  func.func @kernel(%arg0: i32, %arg1: memref<2x16x256xf32, #tpu.memory_space<vmem>>, %arg2: memref<256x128xf32, #tpu.memory_space<vmem>>, %arg3: memref<1x128xf32, #tpu.memory_space<vmem>>, %arg4: memref<1x128xf32, #tpu.memory_space<vmem>>, %arg5: memref<25x128xf32, #tpu.memory_space<vmem>>, %arg6: memref<1x128xf32, #tpu.memory_space<vmem>>, %arg7: memref<128x256xf32, #tpu.memory_space<vmem>>, %arg8: memref<1x256xf32, #tpu.memory_space<vmem>>, %arg9: memref<1x256xf32, #tpu.memory_space<vmem>>, %arg10: memref<25x256xf32, #tpu.memory_space<vmem>>, %arg11: memref<1x256xf32, #tpu.memory_space<vmem>>, %arg12: memref<2x16x256xf32, #tpu.memory_space<vmem>>, %arg13: memref<2x20x128xf32, #tpu.memory_space<vmem>>, %arg14: memref<2x20x256xf32, #tpu.memory_space<vmem>>) attributes {dimension_semantics = [#tpu.dimension_semantics<parallel>], iteration_bounds = array<i64: 2>, scalar_prefetch = 0 : i64, scratch_operands = 2 : i64, tpu.core_type = #tpu.core_type<tc>, window_params = [{transform_indices = @transform_0, window_bounds = array<i64: 2, 16, 256>}, {pipeline_mode = #tpu.pipeline_mode<synchronous>, transform_indices = @transform_1, window_bounds = array<i64: 256, 128>}, {pipeline_mode = #tpu.pipeline_mode<synchronous>, transform_indices = @transform_2, window_bounds = array<i64: 1, 128>}, {pipeline_mode = #tpu.pipeline_mode<synchronous>, transform_indices = @transform_3, window_bounds = array<i64: 1, 128>}, {pipeline_mode = #tpu.pipeline_mode<synchronous>, transform_indices = @transform_4, window_bounds = array<i64: 25, 128>}, {pipeline_mode = #tpu.pipeline_mode<synchronous>, transform_indices = @transform_5, window_bounds = array<i64: 1, 128>}, {pipeline_mode = #tpu.pipeline_mode<synchronous>, transform_indices = @transform_6, window_bounds = array<i64: 128, 256>}, {pipeline_mode = #tpu.pipeline_mode<synchronous>, transform_indices = @transform_7, window_bounds = array<i64: 1, 256>}, {pipeline_mode = #tpu.pipeline_mode<synchronous>, transform_indices = @transform_8, window_bounds = array<i64: 1, 256>}, {pipeline_mode = #tpu.pipeline_mode<synchronous>, transform_indices = @transform_9, window_bounds = array<i64: 25, 256>}, {pipeline_mode = #tpu.pipeline_mode<synchronous>, transform_indices = @transform_10, window_bounds = array<i64: 1, 256>}, {transform_indices = @transform_11, window_bounds = array<i64: 2, 16, 256>}]} {
    %c0 = arith.constant 0 : index
    %c0_0 = arith.constant 0 : index
    %c0_1 = arith.constant 0 : index
    %0 = vector.load %arg1[%c0, %c0_0, %c0_1] : memref<2x16x256xf32, #tpu.memory_space<vmem>>, vector<2x16x256xf32>
    %1 = vector.shape_cast %0 : vector<2x16x256xf32> to vector<32x256xf32>
    %c0_2 = arith.constant 0 : index
    %c0_3 = arith.constant 0 : index
    %2 = vector.load %arg2[%c0_2, %c0_3] : memref<256x128xf32, #tpu.memory_space<vmem>>, vector<256x128xf32>
    %cst = arith.constant dense<0.000000e+00> : vector<32x128xf32>
    %3 = tpu.matmul %1, %2, %cst {dimension_numbers = #tpu.dot_dimension_numbers<[1], [0], [0], [1], [0, 0, 1, 1], [], []>} : vector<32x256xf32>, vector<256x128xf32>, vector<32x128xf32> -> vector<32x128xf32>
    %c0_4 = arith.constant 0 : index
    %c0_5 = arith.constant 0 : index
    %4 = vector.load %arg3[%c0_4, %c0_5] : memref<1x128xf32, #tpu.memory_space<vmem>>, vector<1x128xf32>
    %5 = vector.broadcast %4 : vector<1x128xf32> to vector<32x128xf32>
    %6 = arith.addf %3, %5 : vector<32x128xf32>
    %cst_6 = arith.constant 0.000000e+00 : f32
    %7 = vector.broadcast %cst_6 : f32 to vector<32x128xf32>
    %8 = arith.maximumf %6, %7 : vector<32x128xf32>
    %cst_7 = arith.constant 0.000000e+00 : f32
    %9 = vector.broadcast %cst_7 : f32 to vector<2x2x128xf32>
    %c0_8 = arith.constant 0 : index
    %c0_9 = arith.constant 0 : index
    %c0_10 = arith.constant 0 : index
    %10 = vector.load %arg13[%c0_8, %c0_9, %c0_10] : memref<2x20x128xf32, #tpu.memory_space<vmem>>, vector<2x2x128xf32>
    tpu.vector_store %arg13[%c0_8, %c0_9, %c0_10], %9 {strides = array<i32>} : memref<2x20x128xf32, #tpu.memory_space<vmem>>, vector<2x2x128xf32>,
    %c0_11 = arith.constant 0 : index
    %c18 = arith.constant 18 : index
    %c0_12 = arith.constant 0 : index
    %11 = vector.load %arg13[%c0_11, %c18, %c0_12] : memref<2x20x128xf32, #tpu.memory_space<vmem>>, vector<2x2x128xf32>
    tpu.vector_store %arg13[%c0_11, %c18, %c0_12], %9 {strides = array<i32>} : memref<2x20x128xf32, #tpu.memory_space<vmem>>, vector<2x2x128xf32>,
    %12 = vector.shape_cast %8 : vector<32x128xf32> to vector<2x16x128xf32>
    %c0_13 = arith.constant 0 : index
    %c2 = arith.constant 2 : index
    %c0_14 = arith.constant 0 : index
    %13 = vector.load %arg13[%c0_13, %c2, %c0_14] : memref<2x20x128xf32, #tpu.memory_space<vmem>>, vector<2x16x128xf32>
    tpu.vector_store %arg13[%c0_13, %c2, %c0_14], %12 {strides = array<i32>} : memref<2x20x128xf32, #tpu.memory_space<vmem>>, vector<2x16x128xf32>,
    %c0_15 = arith.constant 0 : index
    %c0_16 = arith.constant 0 : index
    %14 = vector.load %arg5[%c0_15, %c0_16] : memref<25x128xf32, #tpu.memory_space<vmem>>, vector<1x128xf32>
    %c1 = arith.constant 1 : index
    %c0_17 = arith.constant 0 : index
    %15 = vector.load %arg5[%c1, %c0_17] : memref<25x128xf32, #tpu.memory_space<vmem>>, vector<1x128xf32>
    %c2_18 = arith.constant 2 : index
    %c0_19 = arith.constant 0 : index
    %16 = vector.load %arg5[%c2_18, %c0_19] : memref<25x128xf32, #tpu.memory_space<vmem>>, vector<1x128xf32>
    %c3 = arith.constant 3 : index
    %c0_20 = arith.constant 0 : index
    %17 = vector.load %arg5[%c3, %c0_20] : memref<25x128xf32, #tpu.memory_space<vmem>>, vector<1x128xf32>
    %c4 = arith.constant 4 : index
    %c0_21 = arith.constant 0 : index
    %18 = vector.load %arg5[%c4, %c0_21] : memref<25x128xf32, #tpu.memory_space<vmem>>, vector<1x128xf32>
    %c5 = arith.constant 5 : index
    %c0_22 = arith.constant 0 : index
    %19 = vector.load %arg5[%c5, %c0_22] : memref<25x128xf32, #tpu.memory_space<vmem>>, vector<1x128xf32>
    %c6 = arith.constant 6 : index
    %c0_23 = arith.constant 0 : index
    %20 = vector.load %arg5[%c6, %c0_23] : memref<25x128xf32, #tpu.memory_space<vmem>>, vector<1x128xf32>
    %c7 = arith.constant 7 : index
    %c0_24 = arith.constant 0 : index
    %21 = vector.load %arg5[%c7, %c0_24] : memref<25x128xf32, #tpu.memory_space<vmem>>, vector<1x128xf32>
    %c8 = arith.constant 8 : index
    %c0_25 = arith.constant 0 : index
    %22 = vector.load %arg5[%c8, %c0_25] : memref<25x128xf32, #tpu.memory_space<vmem>>, vector<1x128xf32>
    %c9 = arith.constant 9 : index
    %c0_26 = arith.constant 0 : index
    %23 = vector.load %arg5[%c9, %c0_26] : memref<25x128xf32, #tpu.memory_space<vmem>>, vector<1x128xf32>
    %c10 = arith.constant 10 : index
    %c0_27 = arith.constant 0 : index
    %24 = vector.load %arg5[%c10, %c0_27] : memref<25x128xf32, #tpu.memory_space<vmem>>, vector<1x128xf32>
    %c11 = arith.constant 11 : index
    %c0_28 = arith.constant 0 : index
    %25 = vector.load %arg5[%c11, %c0_28] : memref<25x128xf32, #tpu.memory_space<vmem>>, vector<1x128xf32>
    %c12 = arith.constant 12 : index
    %c0_29 = arith.constant 0 : index
    %26 = vector.load %arg5[%c12, %c0_29] : memref<25x128xf32, #tpu.memory_space<vmem>>, vector<1x128xf32>
    %c13 = arith.constant 13 : index
    %c0_30 = arith.constant 0 : index
    %27 = vector.load %arg5[%c13, %c0_30] : memref<25x128xf32, #tpu.memory_space<vmem>>, vector<1x128xf32>
    %c14 = arith.constant 14 : index
    %c0_31 = arith.constant 0 : index
    %28 = vector.load %arg5[%c14, %c0_31] : memref<25x128xf32, #tpu.memory_space<vmem>>, vector<1x128xf32>
    %c15 = arith.constant 15 : index
    %c0_32 = arith.constant 0 : index
    %29 = vector.load %arg5[%c15, %c0_32] : memref<25x128xf32, #tpu.memory_space<vmem>>, vector<1x128xf32>
    %c16 = arith.constant 16 : index
    %c0_33 = arith.constant 0 : index
    %30 = vector.load %arg5[%c16, %c0_33] : memref<25x128xf32, #tpu.memory_space<vmem>>, vector<1x128xf32>
    %c17 = arith.constant 17 : index
    %c0_34 = arith.constant 0 : index
    %31 = vector.load %arg5[%c17, %c0_34] : memref<25x128xf32, #tpu.memory_space<vmem>>, vector<1x128xf32>
    %c18_35 = arith.constant 18 : index
    %c0_36 = arith.constant 0 : index
    %32 = vector.load %arg5[%c18_35, %c0_36] : memref<25x128xf32, #tpu.memory_space<vmem>>, vector<1x128xf32>
    %c19 = arith.constant 19 : index
    %c0_37 = arith.constant 0 : index
    %33 = vector.load %arg5[%c19, %c0_37] : memref<25x128xf32, #tpu.memory_space<vmem>>, vector<1x128xf32>
    %c20 = arith.constant 20 : index
    %c0_38 = arith.constant 0 : index
    %34 = vector.load %arg5[%c20, %c0_38] : memref<25x128xf32, #tpu.memory_space<vmem>>, vector<1x128xf32>
    %c21 = arith.constant 21 : index
    %c0_39 = arith.constant 0 : index
    %35 = vector.load %arg5[%c21, %c0_39] : memref<25x128xf32, #tpu.memory_space<vmem>>, vector<1x128xf32>
    %c22 = arith.constant 22 : index
    %c0_40 = arith.constant 0 : index
    %36 = vector.load %arg5[%c22, %c0_40] : memref<25x128xf32, #tpu.memory_space<vmem>>, vector<1x128xf32>
    %c23 = arith.constant 23 : index
    %c0_41 = arith.constant 0 : index
    %37 = vector.load %arg5[%c23, %c0_41] : memref<25x128xf32, #tpu.memory_space<vmem>>, vector<1x128xf32>
    %c24 = arith.constant 24 : index
    %c0_42 = arith.constant 0 : index
    %38 = vector.load %arg5[%c24, %c0_42] : memref<25x128xf32, #tpu.memory_space<vmem>>, vector<1x128xf32>
    %c0_43 = arith.constant 0 : index
    %c0_44 = arith.constant 0 : index
    %c0_45 = arith.constant 0 : index
    %39 = vector.load %arg13[%c0_43, %c0_44, %c0_45] : memref<2x20x128xf32, #tpu.memory_space<vmem>>, vector<2x16x128xf32>
    %40 = vector.shape_cast %39 : vector<2x16x128xf32> to vector<32x128xf32>
    %c16_i32 = arith.constant 16 : i32
    %41 = tpu.dynamic_rotate %40 by %c16_i32 dim 1 : vector<32x128xf32>, i32 -> vector<32x128xf32>
    %42 = vector.broadcast %14 : vector<1x128xf32> to vector<32x128xf32>
    %43 = arith.mulf %41, %42 : vector<32x128xf32>
    %c8_i32 = arith.constant 8 : i32
    %44 = tpu.dynamic_rotate %40 by %c8_i32 dim 1 : vector<32x128xf32>, i32 -> vector<32x128xf32>
    %45 = vector.broadcast %15 : vector<1x128xf32> to vector<32x128xf32>
    %46 = arith.mulf %44, %45 : vector<32x128xf32>
    %47 = arith.addf %43, %46 : vector<32x128xf32>
    %48 = vector.broadcast %16 : vector<1x128xf32> to vector<32x128xf32>
    %49 = arith.mulf %40, %48 : vector<32x128xf32>
    %50 = arith.addf %47, %49 : vector<32x128xf32>
    %c120_i32 = arith.constant 120 : i32
    %51 = tpu.dynamic_rotate %40 by %c120_i32 dim 1 : vector<32x128xf32>, i32 -> vector<32x128xf32>
    %52 = vector.broadcast %17 : vector<1x128xf32> to vector<32x128xf32>
    %53 = arith.mulf %51, %52 : vector<32x128xf32>
    %54 = arith.addf %50, %53 : vector<32x128xf32>
    %c112_i32 = arith.constant 112 : i32
    %55 = tpu.dynamic_rotate %40 by %c112_i32 dim 1 : vector<32x128xf32>, i32 -> vector<32x128xf32>
    %56 = vector.broadcast %18 : vector<1x128xf32> to vector<32x128xf32>
    %57 = arith.mulf %55, %56 : vector<32x128xf32>
    %58 = arith.addf %54, %57 : vector<32x128xf32>
    %c0_46 = arith.constant 0 : index
    %c1_47 = arith.constant 1 : index
    %c0_48 = arith.constant 0 : index
    %59 = vector.load %arg13[%c0_46, %c1_47, %c0_48] : memref<2x20x128xf32, #tpu.memory_space<vmem>>, vector<2x16x128xf32>
    %60 = vector.shape_cast %59 : vector<2x16x128xf32> to vector<32x128xf32>
    %c16_i32_49 = arith.constant 16 : i32
    %61 = tpu.dynamic_rotate %60 by %c16_i32_49 dim 1 : vector<32x128xf32>, i32 -> vector<32x128xf32>
    %62 = vector.broadcast %19 : vector<1x128xf32> to vector<32x128xf32>
    %63 = arith.mulf %61, %62 : vector<32x128xf32>
    %c8_i32_50 = arith.constant 8 : i32
    %64 = tpu.dynamic_rotate %60 by %c8_i32_50 dim 1 : vector<32x128xf32>, i32 -> vector<32x128xf32>
    %65 = vector.broadcast %20 : vector<1x128xf32> to vector<32x128xf32>
    %66 = arith.mulf %64, %65 : vector<32x128xf32>
    %67 = arith.addf %63, %66 : vector<32x128xf32>
    %68 = vector.broadcast %21 : vector<1x128xf32> to vector<32x128xf32>
    %69 = arith.mulf %60, %68 : vector<32x128xf32>
    %70 = arith.addf %67, %69 : vector<32x128xf32>
    %c120_i32_51 = arith.constant 120 : i32
    %71 = tpu.dynamic_rotate %60 by %c120_i32_51 dim 1 : vector<32x128xf32>, i32 -> vector<32x128xf32>
    %72 = vector.broadcast %22 : vector<1x128xf32> to vector<32x128xf32>
    %73 = arith.mulf %71, %72 : vector<32x128xf32>
    %74 = arith.addf %70, %73 : vector<32x128xf32>
    %c112_i32_52 = arith.constant 112 : i32
    %75 = tpu.dynamic_rotate %60 by %c112_i32_52 dim 1 : vector<32x128xf32>, i32 -> vector<32x128xf32>
    %76 = vector.broadcast %23 : vector<1x128xf32> to vector<32x128xf32>
    %77 = arith.mulf %75, %76 : vector<32x128xf32>
    %78 = arith.addf %74, %77 : vector<32x128xf32>
    %c0_53 = arith.constant 0 : index
    %c2_54 = arith.constant 2 : index
    %c0_55 = arith.constant 0 : index
    %79 = vector.load %arg13[%c0_53, %c2_54, %c0_55] : memref<2x20x128xf32, #tpu.memory_space<vmem>>, vector<2x16x128xf32>
    %80 = vector.shape_cast %79 : vector<2x16x128xf32> to vector<32x128xf32>
    %c16_i32_56 = arith.constant 16 : i32
    %81 = tpu.dynamic_rotate %80 by %c16_i32_56 dim 1 : vector<32x128xf32>, i32 -> vector<32x128xf32>
    %82 = vector.broadcast %24 : vector<1x128xf32> to vector<32x128xf32>
    %83 = arith.mulf %81, %82 : vector<32x128xf32>
    %c8_i32_57 = arith.constant 8 : i32
    %84 = tpu.dynamic_rotate %80 by %c8_i32_57 dim 1 : vector<32x128xf32>, i32 -> vector<32x128xf32>
    %85 = vector.broadcast %25 : vector<1x128xf32> to vector<32x128xf32>
    %86 = arith.mulf %84, %85 : vector<32x128xf32>
    %87 = arith.addf %83, %86 : vector<32x128xf32>
    %88 = vector.broadcast %26 : vector<1x128xf32> to vector<32x128xf32>
    %89 = arith.mulf %80, %88 : vector<32x128xf32>
    %90 = arith.addf %87, %89 : vector<32x128xf32>
    %c120_i32_58 = arith.constant 120 : i32
    %91 = tpu.dynamic_rotate %80 by %c120_i32_58 dim 1 : vector<32x128xf32>, i32 -> vector<32x128xf32>
    %92 = vector.broadcast %27 : vector<1x128xf32> to vector<32x128xf32>
    %93 = arith.mulf %91, %92 : vector<32x128xf32>
    %94 = arith.addf %90, %93 : vector<32x128xf32>
    %c112_i32_59 = arith.constant 112 : i32
    %95 = tpu.dynamic_rotate %80 by %c112_i32_59 dim 1 : vector<32x128xf32>, i32 -> vector<32x128xf32>
    %96 = vector.broadcast %28 : vector<1x128xf32> to vector<32x128xf32>
    %97 = arith.mulf %95, %96 : vector<32x128xf32>
    %98 = arith.addf %94, %97 : vector<32x128xf32>
    %c0_60 = arith.constant 0 : index
    %c3_61 = arith.constant 3 : index
    %c0_62 = arith.constant 0 : index
    %99 = vector.load %arg13[%c0_60, %c3_61, %c0_62] : memref<2x20x128xf32, #tpu.memory_space<vmem>>, vector<2x16x128xf32>
    %100 = vector.shape_cast %99 : vector<2x16x128xf32> to vector<32x128xf32>
    %c16_i32_63 = arith.constant 16 : i32
    %101 = tpu.dynamic_rotate %100 by %c16_i32_63 dim 1 : vector<32x128xf32>, i32 -> vector<32x128xf32>
    %102 = vector.broadcast %29 : vector<1x128xf32> to vector<32x128xf32>
    %103 = arith.mulf %101, %102 : vector<32x128xf32>
    %c8_i32_64 = arith.constant 8 : i32
    %104 = tpu.dynamic_rotate %100 by %c8_i32_64 dim 1 : vector<32x128xf32>, i32 -> vector<32x128xf32>
    %105 = vector.broadcast %30 : vector<1x128xf32> to vector<32x128xf32>
    %106 = arith.mulf %104, %105 : vector<32x128xf32>
    %107 = arith.addf %103, %106 : vector<32x128xf32>
    %108 = vector.broadcast %31 : vector<1x128xf32> to vector<32x128xf32>
    %109 = arith.mulf %100, %108 : vector<32x128xf32>
    %110 = arith.addf %107, %109 : vector<32x128xf32>
    %c120_i32_65 = arith.constant 120 : i32
    %111 = tpu.dynamic_rotate %100 by %c120_i32_65 dim 1 : vector<32x128xf32>, i32 -> vector<32x128xf32>
    %112 = vector.broadcast %32 : vector<1x128xf32> to vector<32x128xf32>
    %113 = arith.mulf %111, %112 : vector<32x128xf32>
    %114 = arith.addf %110, %113 : vector<32x128xf32>
    %c112_i32_66 = arith.constant 112 : i32
    %115 = tpu.dynamic_rotate %100 by %c112_i32_66 dim 1 : vector<32x128xf32>, i32 -> vector<32x128xf32>
    %116 = vector.broadcast %33 : vector<1x128xf32> to vector<32x128xf32>
    %117 = arith.mulf %115, %116 : vector<32x128xf32>
    %118 = arith.addf %114, %117 : vector<32x128xf32>
    %c0_67 = arith.constant 0 : index
    %c4_68 = arith.constant 4 : index
    %c0_69 = arith.constant 0 : index
    %119 = vector.load %arg13[%c0_67, %c4_68, %c0_69] : memref<2x20x128xf32, #tpu.memory_space<vmem>>, vector<2x16x128xf32>
    %120 = vector.shape_cast %119 : vector<2x16x128xf32> to vector<32x128xf32>
    %c16_i32_70 = arith.constant 16 : i32
    %121 = tpu.dynamic_rotate %120 by %c16_i32_70 dim 1 : vector<32x128xf32>, i32 -> vector<32x128xf32>
    %122 = vector.broadcast %34 : vector<1x128xf32> to vector<32x128xf32>
    %123 = arith.mulf %121, %122 : vector<32x128xf32>
    %c8_i32_71 = arith.constant 8 : i32
    %124 = tpu.dynamic_rotate %120 by %c8_i32_71 dim 1 : vector<32x128xf32>, i32 -> vector<32x128xf32>
    %125 = vector.broadcast %35 : vector<1x128xf32> to vector<32x128xf32>
    %126 = arith.mulf %124, %125 : vector<32x128xf32>
    %127 = arith.addf %123, %126 : vector<32x128xf32>
    %128 = vector.broadcast %36 : vector<1x128xf32> to vector<32x128xf32>
    %129 = arith.mulf %120, %128 : vector<32x128xf32>
    %130 = arith.addf %127, %129 : vector<32x128xf32>
    %c120_i32_72 = arith.constant 120 : i32
    %131 = tpu.dynamic_rotate %120 by %c120_i32_72 dim 1 : vector<32x128xf32>, i32 -> vector<32x128xf32>
    %132 = vector.broadcast %37 : vector<1x128xf32> to vector<32x128xf32>
    %133 = arith.mulf %131, %132 : vector<32x128xf32>
    %134 = arith.addf %130, %133 : vector<32x128xf32>
    %c112_i32_73 = arith.constant 112 : i32
    %135 = tpu.dynamic_rotate %120 by %c112_i32_73 dim 1 : vector<32x128xf32>, i32 -> vector<32x128xf32>
    %136 = vector.broadcast %38 : vector<1x128xf32> to vector<32x128xf32>
    %137 = arith.mulf %135, %136 : vector<32x128xf32>
    %138 = arith.addf %134, %137 : vector<32x128xf32>
    %139 = arith.addf %58, %78 : vector<32x128xf32>
    %140 = arith.addf %98, %118 : vector<32x128xf32>
    %141 = arith.addf %139, %140 : vector<32x128xf32>
    %142 = arith.addf %141, %138 : vector<32x128xf32>
    %c0_74 = arith.constant 0 : index
    %c0_75 = arith.constant 0 : index
    %143 = vector.load %arg6[%c0_74, %c0_75] : memref<1x128xf32, #tpu.memory_space<vmem>>, vector<1x128xf32>
    %144 = vector.broadcast %143 : vector<1x128xf32> to vector<32x128xf32>
    %145 = arith.addf %142, %144 : vector<32x128xf32>
    %cst_76 = arith.constant 0.000000e+00 : f32
    %146 = vector.broadcast %cst_76 : f32 to vector<32x128xf32>
    %147 = arith.maximumf %145, %146 : vector<32x128xf32>
    %c0_77 = arith.constant 0 : index
    %c0_78 = arith.constant 0 : index
    %148 = vector.load %arg4[%c0_77, %c0_78] : memref<1x128xf32, #tpu.memory_space<vmem>>, vector<1x128xf32>
    %149 = vector.broadcast %148 : vector<1x128xf32> to vector<32x128xf32>
    %150 = arith.mulf %8, %149 : vector<32x128xf32>
    %151 = arith.addf %150, %147 : vector<32x128xf32>
    %c0_79 = arith.constant 0 : index
    %c0_80 = arith.constant 0 : index
    %152 = vector.load %arg7[%c0_79, %c0_80] : memref<128x256xf32, #tpu.memory_space<vmem>>, vector<128x256xf32>
    %cst_81 = arith.constant dense<0.000000e+00> : vector<32x256xf32>
    %153 = tpu.matmul %151, %152, %cst_81 {dimension_numbers = #tpu.dot_dimension_numbers<[1], [0], [0], [1], [0, 0, 1, 1], [], []>} : vector<32x128xf32>, vector<128x256xf32>, vector<32x256xf32> -> vector<32x256xf32>
    %c0_82 = arith.constant 0 : index
    %c0_83 = arith.constant 0 : index
    %154 = vector.load %arg8[%c0_82, %c0_83] : memref<1x256xf32, #tpu.memory_space<vmem>>, vector<1x256xf32>
    %155 = vector.broadcast %154 : vector<1x256xf32> to vector<32x256xf32>
    %156 = arith.addf %153, %155 : vector<32x256xf32>
    %cst_84 = arith.constant 0.000000e+00 : f32
    %157 = vector.broadcast %cst_84 : f32 to vector<2x2x256xf32>
    %c0_85 = arith.constant 0 : index
    %c0_86 = arith.constant 0 : index
    %c0_87 = arith.constant 0 : index
    %158 = vector.load %arg14[%c0_85, %c0_86, %c0_87] : memref<2x20x256xf32, #tpu.memory_space<vmem>>, vector<2x2x256xf32>
    tpu.vector_store %arg14[%c0_85, %c0_86, %c0_87], %157 {strides = array<i32>} : memref<2x20x256xf32, #tpu.memory_space<vmem>>, vector<2x2x256xf32>,
    %c0_88 = arith.constant 0 : index
    %c18_89 = arith.constant 18 : index
    %c0_90 = arith.constant 0 : index
    %159 = vector.load %arg14[%c0_88, %c18_89, %c0_90] : memref<2x20x256xf32, #tpu.memory_space<vmem>>, vector<2x2x256xf32>
    tpu.vector_store %arg14[%c0_88, %c18_89, %c0_90], %157 {strides = array<i32>} : memref<2x20x256xf32, #tpu.memory_space<vmem>>, vector<2x2x256xf32>,
    %160 = vector.shape_cast %156 : vector<32x256xf32> to vector<2x16x256xf32>
    %c0_91 = arith.constant 0 : index
    %c2_92 = arith.constant 2 : index
    %c0_93 = arith.constant 0 : index
    %161 = vector.load %arg14[%c0_91, %c2_92, %c0_93] : memref<2x20x256xf32, #tpu.memory_space<vmem>>, vector<2x16x256xf32>
    tpu.vector_store %arg14[%c0_91, %c2_92, %c0_93], %160 {strides = array<i32>} : memref<2x20x256xf32, #tpu.memory_space<vmem>>, vector<2x16x256xf32>,
    %c0_94 = arith.constant 0 : index
    %c0_95 = arith.constant 0 : index
    %162 = vector.load %arg10[%c0_94, %c0_95] : memref<25x256xf32, #tpu.memory_space<vmem>>, vector<1x256xf32>
    %c1_96 = arith.constant 1 : index
    %c0_97 = arith.constant 0 : index
    %163 = vector.load %arg10[%c1_96, %c0_97] : memref<25x256xf32, #tpu.memory_space<vmem>>, vector<1x256xf32>
    %c2_98 = arith.constant 2 : index
    %c0_99 = arith.constant 0 : index
    %164 = vector.load %arg10[%c2_98, %c0_99] : memref<25x256xf32, #tpu.memory_space<vmem>>, vector<1x256xf32>
    %c3_100 = arith.constant 3 : index
    %c0_101 = arith.constant 0 : index
    %165 = vector.load %arg10[%c3_100, %c0_101] : memref<25x256xf32, #tpu.memory_space<vmem>>, vector<1x256xf32>
    %c4_102 = arith.constant 4 : index
    %c0_103 = arith.constant 0 : index
    %166 = vector.load %arg10[%c4_102, %c0_103] : memref<25x256xf32, #tpu.memory_space<vmem>>, vector<1x256xf32>
    %c5_104 = arith.constant 5 : index
    %c0_105 = arith.constant 0 : index
    %167 = vector.load %arg10[%c5_104, %c0_105] : memref<25x256xf32, #tpu.memory_space<vmem>>, vector<1x256xf32>
    %c6_106 = arith.constant 6 : index
    %c0_107 = arith.constant 0 : index
    %168 = vector.load %arg10[%c6_106, %c0_107] : memref<25x256xf32, #tpu.memory_space<vmem>>, vector<1x256xf32>
    %c7_108 = arith.constant 7 : index
    %c0_109 = arith.constant 0 : index
    %169 = vector.load %arg10[%c7_108, %c0_109] : memref<25x256xf32, #tpu.memory_space<vmem>>, vector<1x256xf32>
    %c8_110 = arith.constant 8 : index
    %c0_111 = arith.constant 0 : index
    %170 = vector.load %arg10[%c8_110, %c0_111] : memref<25x256xf32, #tpu.memory_space<vmem>>, vector<1x256xf32>
    %c9_112 = arith.constant 9 : index
    %c0_113 = arith.constant 0 : index
    %171 = vector.load %arg10[%c9_112, %c0_113] : memref<25x256xf32, #tpu.memory_space<vmem>>, vector<1x256xf32>
    %c10_114 = arith.constant 10 : index
    %c0_115 = arith.constant 0 : index
    %172 = vector.load %arg10[%c10_114, %c0_115] : memref<25x256xf32, #tpu.memory_space<vmem>>, vector<1x256xf32>
    %c11_116 = arith.constant 11 : index
    %c0_117 = arith.constant 0 : index
    %173 = vector.load %arg10[%c11_116, %c0_117] : memref<25x256xf32, #tpu.memory_space<vmem>>, vector<1x256xf32>
    %c12_118 = arith.constant 12 : index
    %c0_119 = arith.constant 0 : index
    %174 = vector.load %arg10[%c12_118, %c0_119] : memref<25x256xf32, #tpu.memory_space<vmem>>, vector<1x256xf32>
    %c13_120 = arith.constant 13 : index
    %c0_121 = arith.constant 0 : index
    %175 = vector.load %arg10[%c13_120, %c0_121] : memref<25x256xf32, #tpu.memory_space<vmem>>, vector<1x256xf32>
    %c14_122 = arith.constant 14 : index
    %c0_123 = arith.constant 0 : index
    %176 = vector.load %arg10[%c14_122, %c0_123] : memref<25x256xf32, #tpu.memory_space<vmem>>, vector<1x256xf32>
    %c15_124 = arith.constant 15 : index
    %c0_125 = arith.constant 0 : index
    %177 = vector.load %arg10[%c15_124, %c0_125] : memref<25x256xf32, #tpu.memory_space<vmem>>, vector<1x256xf32>
    %c16_126 = arith.constant 16 : index
    %c0_127 = arith.constant 0 : index
    %178 = vector.load %arg10[%c16_126, %c0_127] : memref<25x256xf32, #tpu.memory_space<vmem>>, vector<1x256xf32>
    %c17_128 = arith.constant 17 : index
    %c0_129 = arith.constant 0 : index
    %179 = vector.load %arg10[%c17_128, %c0_129] : memref<25x256xf32, #tpu.memory_space<vmem>>, vector<1x256xf32>
    %c18_130 = arith.constant 18 : index
    %c0_131 = arith.constant 0 : index
    %180 = vector.load %arg10[%c18_130, %c0_131] : memref<25x256xf32, #tpu.memory_space<vmem>>, vector<1x256xf32>
    %c19_132 = arith.constant 19 : index
    %c0_133 = arith.constant 0 : index
    %181 = vector.load %arg10[%c19_132, %c0_133] : memref<25x256xf32, #tpu.memory_space<vmem>>, vector<1x256xf32>
    %c20_134 = arith.constant 20 : index
    %c0_135 = arith.constant 0 : index
    %182 = vector.load %arg10[%c20_134, %c0_135] : memref<25x256xf32, #tpu.memory_space<vmem>>, vector<1x256xf32>
    %c21_136 = arith.constant 21 : index
    %c0_137 = arith.constant 0 : index
    %183 = vector.load %arg10[%c21_136, %c0_137] : memref<25x256xf32, #tpu.memory_space<vmem>>, vector<1x256xf32>
    %c22_138 = arith.constant 22 : index
    %c0_139 = arith.constant 0 : index
    %184 = vector.load %arg10[%c22_138, %c0_139] : memref<25x256xf32, #tpu.memory_space<vmem>>, vector<1x256xf32>
    %c23_140 = arith.constant 23 : index
    %c0_141 = arith.constant 0 : index
    %185 = vector.load %arg10[%c23_140, %c0_141] : memref<25x256xf32, #tpu.memory_space<vmem>>, vector<1x256xf32>
    %c24_142 = arith.constant 24 : index
    %c0_143 = arith.constant 0 : index
    %186 = vector.load %arg10[%c24_142, %c0_143] : memref<25x256xf32, #tpu.memory_space<vmem>>, vector<1x256xf32>
    %c0_144 = arith.constant 0 : index
    %c0_145 = arith.constant 0 : index
    %c0_146 = arith.constant 0 : index
    %187 = vector.load %arg14[%c0_144, %c0_145, %c0_146] : memref<2x20x256xf32, #tpu.memory_space<vmem>>, vector<2x16x256xf32>
    %188 = vector.shape_cast %187 : vector<2x16x256xf32> to vector<32x256xf32>
    %c32_i32 = arith.constant 32 : i32
    %189 = tpu.dynamic_rotate %188 by %c32_i32 dim 1 : vector<32x256xf32>, i32 -> vector<32x256xf32>
    %190 = vector.broadcast %162 : vector<1x256xf32> to vector<32x256xf32>
    %191 = arith.mulf %189, %190 : vector<32x256xf32>
    %c16_i32_147 = arith.constant 16 : i32
    %192 = tpu.dynamic_rotate %188 by %c16_i32_147 dim 1 : vector<32x256xf32>, i32 -> vector<32x256xf32>
    %193 = vector.broadcast %163 : vector<1x256xf32> to vector<32x256xf32>
    %194 = arith.mulf %192, %193 : vector<32x256xf32>
    %195 = arith.addf %191, %194 : vector<32x256xf32>
    %196 = vector.broadcast %164 : vector<1x256xf32> to vector<32x256xf32>
    %197 = arith.mulf %188, %196 : vector<32x256xf32>
    %198 = arith.addf %195, %197 : vector<32x256xf32>
    %c240_i32 = arith.constant 240 : i32
    %199 = tpu.dynamic_rotate %188 by %c240_i32 dim 1 : vector<32x256xf32>, i32 -> vector<32x256xf32>
    %200 = vector.broadcast %165 : vector<1x256xf32> to vector<32x256xf32>
    %201 = arith.mulf %199, %200 : vector<32x256xf32>
    %202 = arith.addf %198, %201 : vector<32x256xf32>
    %c224_i32 = arith.constant 224 : i32
    %203 = tpu.dynamic_rotate %188 by %c224_i32 dim 1 : vector<32x256xf32>, i32 -> vector<32x256xf32>
    %204 = vector.broadcast %166 : vector<1x256xf32> to vector<32x256xf32>
    %205 = arith.mulf %203, %204 : vector<32x256xf32>
    %206 = arith.addf %202, %205 : vector<32x256xf32>
    %c0_148 = arith.constant 0 : index
    %c1_149 = arith.constant 1 : index
    %c0_150 = arith.constant 0 : index
    %207 = vector.load %arg14[%c0_148, %c1_149, %c0_150] : memref<2x20x256xf32, #tpu.memory_space<vmem>>, vector<2x16x256xf32>
    %208 = vector.shape_cast %207 : vector<2x16x256xf32> to vector<32x256xf32>
    %c32_i32_151 = arith.constant 32 : i32
    %209 = tpu.dynamic_rotate %208 by %c32_i32_151 dim 1 : vector<32x256xf32>, i32 -> vector<32x256xf32>
    %210 = vector.broadcast %167 : vector<1x256xf32> to vector<32x256xf32>
    %211 = arith.mulf %209, %210 : vector<32x256xf32>
    %c16_i32_152 = arith.constant 16 : i32
    %212 = tpu.dynamic_rotate %208 by %c16_i32_152 dim 1 : vector<32x256xf32>, i32 -> vector<32x256xf32>
    %213 = vector.broadcast %168 : vector<1x256xf32> to vector<32x256xf32>
    %214 = arith.mulf %212, %213 : vector<32x256xf32>
    %215 = arith.addf %211, %214 : vector<32x256xf32>
    %216 = vector.broadcast %169 : vector<1x256xf32> to vector<32x256xf32>
    %217 = arith.mulf %208, %216 : vector<32x256xf32>
    %218 = arith.addf %215, %217 : vector<32x256xf32>
    %c240_i32_153 = arith.constant 240 : i32
    %219 = tpu.dynamic_rotate %208 by %c240_i32_153 dim 1 : vector<32x256xf32>, i32 -> vector<32x256xf32>
    %220 = vector.broadcast %170 : vector<1x256xf32> to vector<32x256xf32>
    %221 = arith.mulf %219, %220 : vector<32x256xf32>
    %222 = arith.addf %218, %221 : vector<32x256xf32>
    %c224_i32_154 = arith.constant 224 : i32
    %223 = tpu.dynamic_rotate %208 by %c224_i32_154 dim 1 : vector<32x256xf32>, i32 -> vector<32x256xf32>
    %224 = vector.broadcast %171 : vector<1x256xf32> to vector<32x256xf32>
    %225 = arith.mulf %223, %224 : vector<32x256xf32>
    %226 = arith.addf %222, %225 : vector<32x256xf32>
    %c0_155 = arith.constant 0 : index
    %c2_156 = arith.constant 2 : index
    %c0_157 = arith.constant 0 : index
    %227 = vector.load %arg14[%c0_155, %c2_156, %c0_157] : memref<2x20x256xf32, #tpu.memory_space<vmem>>, vector<2x16x256xf32>
    %228 = vector.shape_cast %227 : vector<2x16x256xf32> to vector<32x256xf32>
    %c32_i32_158 = arith.constant 32 : i32
    %229 = tpu.dynamic_rotate %228 by %c32_i32_158 dim 1 : vector<32x256xf32>, i32 -> vector<32x256xf32>
    %230 = vector.broadcast %172 : vector<1x256xf32> to vector<32x256xf32>
    %231 = arith.mulf %229, %230 : vector<32x256xf32>
    %c16_i32_159 = arith.constant 16 : i32
    %232 = tpu.dynamic_rotate %228 by %c16_i32_159 dim 1 : vector<32x256xf32>, i32 -> vector<32x256xf32>
    %233 = vector.broadcast %173 : vector<1x256xf32> to vector<32x256xf32>
    %234 = arith.mulf %232, %233 : vector<32x256xf32>
    %235 = arith.addf %231, %234 : vector<32x256xf32>
    %236 = vector.broadcast %174 : vector<1x256xf32> to vector<32x256xf32>
    %237 = arith.mulf %228, %236 : vector<32x256xf32>
    %238 = arith.addf %235, %237 : vector<32x256xf32>
    %c240_i32_160 = arith.constant 240 : i32
    %239 = tpu.dynamic_rotate %228 by %c240_i32_160 dim 1 : vector<32x256xf32>, i32 -> vector<32x256xf32>
    %240 = vector.broadcast %175 : vector<1x256xf32> to vector<32x256xf32>
    %241 = arith.mulf %239, %240 : vector<32x256xf32>
    %242 = arith.addf %238, %241 : vector<32x256xf32>
    %c224_i32_161 = arith.constant 224 : i32
    %243 = tpu.dynamic_rotate %228 by %c224_i32_161 dim 1 : vector<32x256xf32>, i32 -> vector<32x256xf32>
    %244 = vector.broadcast %176 : vector<1x256xf32> to vector<32x256xf32>
    %245 = arith.mulf %243, %244 : vector<32x256xf32>
    %246 = arith.addf %242, %245 : vector<32x256xf32>
    %c0_162 = arith.constant 0 : index
    %c3_163 = arith.constant 3 : index
    %c0_164 = arith.constant 0 : index
    %247 = vector.load %arg14[%c0_162, %c3_163, %c0_164] : memref<2x20x256xf32, #tpu.memory_space<vmem>>, vector<2x16x256xf32>
    %248 = vector.shape_cast %247 : vector<2x16x256xf32> to vector<32x256xf32>
    %c32_i32_165 = arith.constant 32 : i32
    %249 = tpu.dynamic_rotate %248 by %c32_i32_165 dim 1 : vector<32x256xf32>, i32 -> vector<32x256xf32>
    %250 = vector.broadcast %177 : vector<1x256xf32> to vector<32x256xf32>
    %251 = arith.mulf %249, %250 : vector<32x256xf32>
    %c16_i32_166 = arith.constant 16 : i32
    %252 = tpu.dynamic_rotate %248 by %c16_i32_166 dim 1 : vector<32x256xf32>, i32 -> vector<32x256xf32>
    %253 = vector.broadcast %178 : vector<1x256xf32> to vector<32x256xf32>
    %254 = arith.mulf %252, %253 : vector<32x256xf32>
    %255 = arith.addf %251, %254 : vector<32x256xf32>
    %256 = vector.broadcast %179 : vector<1x256xf32> to vector<32x256xf32>
    %257 = arith.mulf %248, %256 : vector<32x256xf32>
    %258 = arith.addf %255, %257 : vector<32x256xf32>
    %c240_i32_167 = arith.constant 240 : i32
    %259 = tpu.dynamic_rotate %248 by %c240_i32_167 dim 1 : vector<32x256xf32>, i32 -> vector<32x256xf32>
    %260 = vector.broadcast %180 : vector<1x256xf32> to vector<32x256xf32>
    %261 = arith.mulf %259, %260 : vector<32x256xf32>
    %262 = arith.addf %258, %261 : vector<32x256xf32>
    %c224_i32_168 = arith.constant 224 : i32
    %263 = tpu.dynamic_rotate %248 by %c224_i32_168 dim 1 : vector<32x256xf32>, i32 -> vector<32x256xf32>
    %264 = vector.broadcast %181 : vector<1x256xf32> to vector<32x256xf32>
    %265 = arith.mulf %263, %264 : vector<32x256xf32>
    %266 = arith.addf %262, %265 : vector<32x256xf32>
    %c0_169 = arith.constant 0 : index
    %c4_170 = arith.constant 4 : index
    %c0_171 = arith.constant 0 : index
    %267 = vector.load %arg14[%c0_169, %c4_170, %c0_171] : memref<2x20x256xf32, #tpu.memory_space<vmem>>, vector<2x16x256xf32>
    %268 = vector.shape_cast %267 : vector<2x16x256xf32> to vector<32x256xf32>
    %c32_i32_172 = arith.constant 32 : i32
    %269 = tpu.dynamic_rotate %268 by %c32_i32_172 dim 1 : vector<32x256xf32>, i32 -> vector<32x256xf32>
    %270 = vector.broadcast %182 : vector<1x256xf32> to vector<32x256xf32>
    %271 = arith.mulf %269, %270 : vector<32x256xf32>
    %c16_i32_173 = arith.constant 16 : i32
    %272 = tpu.dynamic_rotate %268 by %c16_i32_173 dim 1 : vector<32x256xf32>, i32 -> vector<32x256xf32>
    %273 = vector.broadcast %183 : vector<1x256xf32> to vector<32x256xf32>
    %274 = arith.mulf %272, %273 : vector<32x256xf32>
    %275 = arith.addf %271, %274 : vector<32x256xf32>
    %276 = vector.broadcast %184 : vector<1x256xf32> to vector<32x256xf32>
    %277 = arith.mulf %268, %276 : vector<32x256xf32>
    %278 = arith.addf %275, %277 : vector<32x256xf32>
    %c240_i32_174 = arith.constant 240 : i32
    %279 = tpu.dynamic_rotate %268 by %c240_i32_174 dim 1 : vector<32x256xf32>, i32 -> vector<32x256xf32>
    %280 = vector.broadcast %185 : vector<1x256xf32> to vector<32x256xf32>
    %281 = arith.mulf %279, %280 : vector<32x256xf32>
    %282 = arith.addf %278, %281 : vector<32x256xf32>
    %c224_i32_175 = arith.constant 224 : i32
    %283 = tpu.dynamic_rotate %268 by %c224_i32_175 dim 1 : vector<32x256xf32>, i32 -> vector<32x256xf32>
    %284 = vector.broadcast %186 : vector<1x256xf32> to vector<32x256xf32>
    %285 = arith.mulf %283, %284 : vector<32x256xf32>
    %286 = arith.addf %282, %285 : vector<32x256xf32>
    %287 = arith.addf %206, %226 : vector<32x256xf32>
    %288 = arith.addf %246, %266 : vector<32x256xf32>
    %289 = arith.addf %287, %288 : vector<32x256xf32>
    %290 = arith.addf %289, %286 : vector<32x256xf32>
    %c0_176 = arith.constant 0 : index
    %c0_177 = arith.constant 0 : index
    %291 = vector.load %arg11[%c0_176, %c0_177] : memref<1x256xf32, #tpu.memory_space<vmem>>, vector<1x256xf32>
    %292 = vector.broadcast %291 : vector<1x256xf32> to vector<32x256xf32>
    %293 = arith.addf %290, %292 : vector<32x256xf32>
    %c0_178 = arith.constant 0 : index
    %c0_179 = arith.constant 0 : index
    %294 = vector.load %arg9[%c0_178, %c0_179] : memref<1x256xf32, #tpu.memory_space<vmem>>, vector<1x256xf32>
    %295 = vector.broadcast %294 : vector<1x256xf32> to vector<32x256xf32>
    %296 = arith.mulf %156, %295 : vector<32x256xf32>
    %297 = arith.addf %296, %293 : vector<32x256xf32>
    %298 = vector.shape_cast %297 : vector<32x256xf32> to vector<2x16x256xf32>
    %299 = arith.addf %298, %0 : vector<2x16x256xf32>
    %c0_180 = arith.constant 0 : index
    %c0_181 = arith.constant 0 : index
    %c0_182 = arith.constant 0 : index
    %300 = vector.load %arg12[%c0_180, %c0_181, %c0_182] : memref<2x16x256xf32, #tpu.memory_space<vmem>>, vector<2x16x256xf32>
    tpu.vector_store %arg12[%c0_180, %c0_181, %c0_182], %299 {strides = array<i32>} : memref<2x16x256xf32, #tpu.memory_space<vmem>>, vector<2x16x256xf32>,
    return
  }
  func.func @transform_0(%arg0: i32) -> (i32, i32, i32) {
    %c0_i32 = arith.constant 0 : i32
    %c0_i32_0 = arith.constant 0 : i32
    %c0_i32_1 = arith.constant 0 : i32
    return %arg0, %c0_i32, %c0_i32_0 : i32, i32, i32
  }
  func.func @transform_1(%arg0: i32) -> (i32, i32) {
    %c0_i32 = arith.constant 0 : i32
    %c0_i32_0 = arith.constant 0 : i32
    %c0_i32_1 = arith.constant 0 : i32
    return %c0_i32, %c0_i32_0 : i32, i32
  }
  func.func @transform_2(%arg0: i32) -> (i32, i32) {
    %c0_i32 = arith.constant 0 : i32
    %c0_i32_0 = arith.constant 0 : i32
    %c0_i32_1 = arith.constant 0 : i32
    return %c0_i32, %c0_i32_0 : i32, i32
  }
  func.func @transform_3(%arg0: i32) -> (i32, i32) {
    %c0_i32 = arith.constant 0 : i32
    %c0_i32_0 = arith.constant 0 : i32
    %c0_i32_1 = arith.constant 0 : i32
    return %c0_i32, %c0_i32_0 : i32, i32
  }
  func.func @transform_4(%arg0: i32) -> (i32, i32) {
    %c0_i32 = arith.constant 0 : i32
    %c0_i32_0 = arith.constant 0 : i32
    %c0_i32_1 = arith.constant 0 : i32
    return %c0_i32, %c0_i32_0 : i32, i32
  }
  func.func @transform_5(%arg0: i32) -> (i32, i32) {
    %c0_i32 = arith.constant 0 : i32
    %c0_i32_0 = arith.constant 0 : i32
    %c0_i32_1 = arith.constant 0 : i32
    return %c0_i32, %c0_i32_0 : i32, i32
  }
  func.func @transform_6(%arg0: i32) -> (i32, i32) {
    %c0_i32 = arith.constant 0 : i32
    %c0_i32_0 = arith.constant 0 : i32
    %c0_i32_1 = arith.constant 0 : i32
    return %c0_i32, %c0_i32_0 : i32, i32
  }
  func.func @transform_7(%arg0: i32) -> (i32, i32) {
    %c0_i32 = arith.constant 0 : i32
    %c0_i32_0 = arith.constant 0 : i32
    %c0_i32_1 = arith.constant 0 : i32
    return %c0_i32, %c0_i32_0 : i32, i32
  }
  func.func @transform_8(%arg0: i32) -> (i32, i32) {
    %c0_i32 = arith.constant 0 : i32
    %c0_i32_0 = arith.constant 0 : i32
    %c0_i32_1 = arith.constant 0 : i32
    return %c0_i32, %c0_i32_0 : i32, i32
  }
  func.func @transform_9(%arg0: i32) -> (i32, i32) {
    %c0_i32 = arith.constant 0 : i32
    %c0_i32_0 = arith.constant 0 : i32
    %c0_i32_1 = arith.constant 0 : i32
    return %c0_i32, %c0_i32_0 : i32, i32
  }
  func.func @transform_10(%arg0: i32) -> (i32, i32) {
    %c0_i32 = arith.constant 0 : i32
    %c0_i32_0 = arith.constant 0 : i32
    %c0_i32_1 = arith.constant 0 : i32
    return %c0_i32, %c0_i32_0 : i32, i32
  }
  func.func @transform_11(%arg0: i32) -> (i32, i32, i32) {
    %c0_i32 = arith.constant 0 : i32
    %c0_i32_0 = arith.constant 0 : i32
    %c0_i32_1 = arith.constant 0 : i32
    return %arg0, %c0_i32, %c0_i32_0 : i32, i32, i32
  }
}

</mosaic_0001>

<llo_original>
// kernel: tpu_custom_call.1
$region0: #{tpu_custom_call.1}
  #allocation0 [shape = 'u32[]', space=smem, size = 0x4, offset = 0x4, fixed_abs, tag = 'smem constant byte address 0x4 - core index']
  #allocation1 [shape = 'u32[72,128]{1,0:T(1,128)}', space=vmem, size = 0x9000, scoped, tag = 'internal scratch']
  #allocation2 [shape = 'f32[2,20,128]{2,1,0:T(8,128)}', space=vmem, size = 0x6000, scoped, tag = 'scratch operand']
  #allocation3 [shape = 'f32[2,20,256]{2,1,0:T(8,128)}', space=vmem, size = 0xc000, scoped, tag = 'scratch operand']
  %s0 = inlined_call_operand.hbm [shape: f32[4,16,256], index: 0, kind: input, shape index: {}]
  %s1 = inlined_call_operand.hbm [shape: f32[256,128], index: 1, kind: input, shape index: {}]
  %s2 = inlined_call_operand.hbm [shape: f32[1,128], index: 2, kind: input, shape index: {}]
  %s3 = inlined_call_operand.hbm [shape: f32[1,128], index: 3, kind: input, shape index: {}]
  %s4 = inlined_call_operand.hbm [shape: f32[25,128], index: 4, kind: input, shape index: {}]
  %s5 = inlined_call_operand.hbm [shape: f32[1,128], index: 5, kind: input, shape index: {}]
  %s6 = inlined_call_operand.hbm [shape: f32[128,256], index: 6, kind: input, shape index: {}]
  %s7 = inlined_call_operand.vmem [shape: f32[1,256], index: 7, kind: input, shape index: {}]
  %s8 = inlined_call_operand.vmem [shape: f32[1,256], index: 8, kind: input, shape index: {}]
  %s9 = inlined_call_operand.hbm [shape: f32[25,256], index: 9, kind: input, shape index: {}]
  %s10 = inlined_call_operand.vmem [shape: f32[1,256], index: 10, kind: input, shape index: {}]
  %s11 = inlined_call_operand.hbm [shape: f32[4,16,256], index: 11, kind: output, shape index: {}]
  %s12 = sld [smem:[#allocation0]]
  $region109: #{tpu_custom_call.1} parent=0
    _
  %s14 = ssub.s32 1, %s12
  %s15 = scalar_select 0, %s14, %s12
  $region1: #{tpu_custom_call.1} parent=0
    #allocation4 [shape = 'u8[65536]{0}', space=vmem, size = 0x10000, scoped, tag = 'input window, operand 0']
    #allocation5 [shape = 's32[2]{0}', space=sflag, size = 0x8, scoped, tag = 'scoped memory for tpu_custom_call.1']
    #allocation6 [shape = 's32[2]{0}', space=sflag, size = 0x8, scoped, tag = 'scoped memory for tpu_custom_call.1']
    #allocation7 [shape = 'u8[131072]{0}', space=vmem, size = 0x20000, scoped, tag = 'input window, operand 1, single buffered']
    #allocation8 [shape = 's32[1]{0}', space=sflag, size = 0x4, scoped, tag = 'scoped memory for tpu_custom_call.1']
    #allocation9 [shape = 'u8[512]{0}', space=vmem, size = 0x400, scoped, tag = 'input window, operand 2, single buffered']
    #allocation10 [shape = 'u8[512]{0}', space=vmem, size = 0x400, scoped, tag = 'input window, operand 3, single buffered']
    #allocation11 [shape = 's32[1]{0}', space=sflag, size = 0x4, scoped, tag = 'scoped memory for tpu_custom_call.1']
    #allocation12 [shape = 'u8[16384]{0}', space=vmem, size = 0x4000, scoped, tag = 'input window, operand 4, single buffered']
    #allocation13 [shape = 'u8[512]{0}', space=vmem, size = 0x400, scoped, tag = 'input window, operand 5, single buffered']
    #allocation14 [shape = 's32[1]{0}', space=sflag, size = 0x4, scoped, tag = 'scoped memory for tpu_custom_call.1']
    #allocation15 [shape = 'u8[131072]{0}', space=vmem, size = 0x20000, scoped, tag = 'input window, operand 6, single buffered']
    #allocation16 [shape = 'u8[32768]{0}', space=vmem, size = 0x8000, scoped, tag = 'input window, operand 9, single buffered']
    #allocation17 [shape = 's32[1]{0}', space=sflag, size = 0x4, scoped, tag = 'scoped memory for tpu_custom_call.1']
    #allocation18 [shape = 'u8[65536]{0}', space=vmem, size = 0x10000, scoped, tag = 'output window, operand 0']
    %16 = vsyncpa [#allocation5], 0
    %s17 = scalar_lea.sflag [#allocation5], 1
    %18 = vsyncpa %s17, 0
    %19 = vsyncpa [#allocation8], 0
    %20 = vsyncpa [#allocation11], 0
    %21 = vsyncpa [#allocation14], 0
    %22 = vsyncpa [#allocation17], 0
    %23 = vsyncpa [#allocation6], 0
    %s24 = scalar_lea.sflag [#allocation6], 1
    %25 = vsyncpa %s24, 0
    loop: start=0, step=1, limit=4
    $region2: #{tpu_custom_call.1} parent=1 // loop_pre_header
      _
    $region3: #{tpu_custom_call.1} parent=1 // loop_header
      %s27 = sphi 0, %s31
      %p28 = scmp.ge.s32.totalorder %s27, 4
      %s37 = sphi 0, %s39
      %s40 = sphi 0, %s37
      %s41 = sphi 0, %s40
      %s57 = sphi 0, %s41
      %s61 = sphi 0, %s61
      %s63 = sphi 0, %s61
      %s64 = sphi 0, %s63
      %s78 = sphi 0, %s64
      %s82 = sphi 0, %s82
      %s84 = sphi 0, %s82
      %s85 = sphi 0, %s84
      %s99 = sphi 0, %s85
      %s103 = sphi 0, %s103
      %s105 = sphi 0, %s103
      %s106 = sphi 0, %s105
      %s120 = sphi 0, %s106
      %s124 = sphi 0, %s124
      %s126 = sphi 0, %s124
      %s127 = sphi 0, %s126
      %s141 = sphi 0, %s127
      %s145 = sphi 0, %s145
      %s147 = sphi 0, %s145
      %s148 = sphi 0, %s147
      %s162 = sphi 0, %s148
      %s166 = sphi 0, %s166
      %s168 = sphi 0, %s166
      %s169 = sphi 0, %s168
      %s183 = sphi 0, %s169
      %s187 = sphi 0, %s187
      %s189 = sphi 0, %s187
      %s190 = sphi 0, %s189
      %s204 = sphi 0, %s190
      %s208 = sphi 0, %s208
      %s210 = sphi 0, %s208
      %s211 = sphi 0, %s210
      %s225 = sphi 0, %s211
      %s229 = sphi 0, %s229
      %s231 = sphi 0, %s229
      %s232 = sphi 0, %s231
      %s246 = sphi 0, %s232
      %s250 = sphi 0, %s250
      %s252 = sphi 0, %s250
      %s253 = sphi 0, %s252
      %s267 = sphi 0, %s253
      %s273 = sphi 0, %s275
      %s276 = sphi 0, %s273
      %s277 = sphi 0, %s276
      %s293 = sphi 0, %s277
    $region4: #{tpu_custom_call.1} parent=1 // loop_header_branch
      %30 = sbr.rel (%p28) target = $region8
    $region5: #{tpu_custom_call.1} parent=1 // loop_body
      %s32 = ssub.s32 %s27, 1
      %s33 = ssub.s32 %s27, 2
      %s34 = sadd.s32 %s27, 1
      %s35 = ssub.s32 %s27, %s34
      %p36 = scmp.eq.s32.totalorder %s35, 0
      %s38 = sadd.s32 %s37, 1
      %s39 = scalar_select %p36, %s37, %s38
      %p42 = pneg %p36
      %p43 = scmp.eq.s32.totalorder %s27, 1
      %p44 = por %p42, %p43
      %p45 = scmp.ne.s32.totalorder %s37, %s40
      %p46 = scmp.eq.s32.totalorder %s27, 0
      %p47 = por %p45, %p46
      %p48 = scmp.ne.s32.totalorder %s37, %s40
      %p49 = scmp.eq.s32.totalorder %s32, 1
      %p50 = por %p48, %p49
      %p51 = scmp.ne.s32.totalorder %s40, %s41
      %p52 = scmp.eq.s32.totalorder %s32, 0
      %p53 = por %p51, %p52
      %p54 = scmp.ne.s32.totalorder %s40, %s41
      %p55 = scmp.eq.s32.totalorder %s33, 1
      %p56 = por %p54, %p55
      %p58 = scmp.ne.s32.totalorder %s41, %s57
      %p59 = scmp.eq.s32.totalorder %s33, 0
      %p60 = por %p58, %p59
      %s62 = sadd.s32 %s61, 1
      %p65 = scmp.eq.s32.totalorder %s27, 1
      %p66 = scmp.ne.s32.totalorder %s61, %s63
      %p67 = scmp.eq.s32.totalorder %s27, 0
      %p68 = por %p66, %p67
      %p69 = scmp.ne.s32.totalorder %s61, %s63
      %p70 = scmp.eq.s32.totalorder %s32, 1
      %p71 = por %p69, %p70
      %p72 = scmp.ne.s32.totalorder %s63, %s64
      %p73 = scmp.eq.s32.totalorder %s32, 0
      %p74 = por %p72, %p73
      %p75 = scmp.ne.s32.totalorder %s63, %s64
      %p76 = scmp.eq.s32.totalorder %s33, 1
      %p77 = por %p75, %p76
      %p79 = scmp.ne.s32.totalorder %s64, %s78
      %p80 = scmp.eq.s32.totalorder %s33, 0
      %p81 = por %p79, %p80
      %s83 = sadd.s32 %s82, 1
      %p86 = scmp.eq.s32.totalorder %s27, 1
      %p87 = scmp.ne.s32.totalorder %s82, %s84
      %p88 = scmp.eq.s32.totalorder %s27, 0
      %p89 = por %p87, %p88
      %p90 = scmp.ne.s32.totalorder %s82, %s84
      %p91 = scmp.eq.s32.totalorder %s32, 1
      %p92 = por %p90, %p91
      %p93 = scmp.ne.s32.totalorder %s84, %s85
      %p94 = scmp.eq.s32.totalorder %s32, 0
      %p95 = por %p93, %p94
      %p96 = scmp.ne.s32.totalorder %s84, %s85
      %p97 = scmp.eq.s32.totalorder %s33, 1
      %p98 = por %p96, %p97
      %p100 = scmp.ne.s32.totalorder %s85, %s99
      %p101 = scmp.eq.s32.totalorder %s33, 0
      %p102 = por %p100, %p101
      %s104 = sadd.s32 %s103, 1
      %p107 = scmp.eq.s32.totalorder %s27, 1
      %p108 = scmp.ne.s32.totalorder %s103, %s105
      %p109 = scmp.eq.s32.totalorder %s27, 0
      %p110 = por %p108, %p109
      %p111 = scmp.ne.s32.totalorder %s103, %s105
      %p112 = scmp.eq.s32.totalorder %s32, 1
      %p113 = por %p111, %p112
      %p114 = scmp.ne.s32.totalorder %s105, %s106
      %p115 = scmp.eq.s32.totalorder %s32, 0
      %p116 = por %p114, %p115
      %p117 = scmp.ne.s32.totalorder %s105, %s106
      %p118 = scmp.eq.s32.totalorder %s33, 1
      %p119 = por %p117, %p118
      %p121 = scmp.ne.s32.totalorder %s106, %s120
      %p122 = scmp.eq.s32.totalorder %s33, 0
      %p123 = por %p121, %p122
      %s125 = sadd.s32 %s124, 1
      %p128 = scmp.eq.s32.totalorder %s27, 1
      %p129 = scmp.ne.s32.totalorder %s124, %s126
      %p130 = scmp.eq.s32.totalorder %s27, 0
      %p131 = por %p129, %p130
      %p132 = scmp.ne.s32.totalorder %s124, %s126
      %p133 = scmp.eq.s32.totalorder %s32, 1
      %p134 = por %p132, %p133
      %p135 = scmp.ne.s32.totalorder %s126, %s127
      %p136 = scmp.eq.s32.totalorder %s32, 0
      %p137 = por %p135, %p136
      %p138 = scmp.ne.s32.totalorder %s126, %s127
      %p139 = scmp.eq.s32.totalorder %s33, 1
      %p140 = por %p138, %p139
      %p142 = scmp.ne.s32.totalorder %s127, %s141
      %p143 = scmp.eq.s32.totalorder %s33, 0
      %p144 = por %p142, %p143
      %s146 = sadd.s32 %s145, 1
      %p149 = scmp.eq.s32.totalorder %s27, 1
      %p150 = scmp.ne.s32.totalorder %s145, %s147
      %p151 = scmp.eq.s32.totalorder %s27, 0
      %p152 = por %p150, %p151
      %p153 = scmp.ne.s32.totalorder %s145, %s147
      %p154 = scmp.eq.s32.totalorder %s32, 1
      %p155 = por %p153, %p154
      %p156 = scmp.ne.s32.totalorder %s147, %s148
      %p157 = scmp.eq.s32.totalorder %s32, 0
      %p158 = por %p156, %p157
      %p159 = scmp.ne.s32.totalorder %s147, %s148
      %p160 = scmp.eq.s32.totalorder %s33, 1
      %p161 = por %p159, %p160
      %p163 = scmp.ne.s32.totalorder %s148, %s162
      %p164 = scmp.eq.s32.totalorder %s33, 0
      %p165 = por %p163, %p164
      %s167 = sadd.s32 %s166, 1
      %p170 = scmp.eq.s32.totalorder %s27, 1
      %p171 = scmp.ne.s32.totalorder %s166, %s168
      %p172 = scmp.eq.s32.totalorder %s27, 0
      %p173 = por %p171, %p172
      %p174 = scmp.ne.s32.totalorder %s166, %s168
      %p175 = scmp.eq.s32.totalorder %s32, 1
      %p176 = por %p174, %p175
      %p177 = scmp.ne.s32.totalorder %s168, %s169
      %p178 = scmp.eq.s32.totalorder %s32, 0
      %p179 = por %p177, %p178
      %p180 = scmp.ne.s32.totalorder %s168, %s169
      %p181 = scmp.eq.s32.totalorder %s33, 1
      %p182 = por %p180, %p181
      %p184 = scmp.ne.s32.totalorder %s169, %s183
      %p185 = scmp.eq.s32.totalorder %s33, 0
      %p186 = por %p184, %p185
      %s188 = sadd.s32 %s187, 1
      %p191 = scmp.eq.s32.totalorder %s27, 1
      %p192 = scmp.ne.s32.totalorder %s187, %s189
      %p193 = scmp.eq.s32.totalorder %s27, 0
      %p194 = por %p192, %p193
      %p195 = scmp.ne.s32.totalorder %s187, %s189
      %p196 = scmp.eq.s32.totalorder %s32, 1
      %p197 = por %p195, %p196
      %p198 = scmp.ne.s32.totalorder %s189, %s190
      %p199 = scmp.eq.s32.totalorder %s32, 0
      %p200 = por %p198, %p199
      %p201 = scmp.ne.s32.totalorder %s189, %s190
      %p202 = scmp.eq.s32.totalorder %s33, 1
      %p203 = por %p201, %p202
      %p205 = scmp.ne.s32.totalorder %s190, %s204
      %p206 = scmp.eq.s32.totalorder %s33, 0
      %p207 = por %p205, %p206
      %s209 = sadd.s32 %s208, 1
      %p212 = scmp.eq.s32.totalorder %s27, 1
      %p213 = scmp.ne.s32.totalorder %s208, %s210
      %p214 = scmp.eq.s32.totalorder %s27, 0
      %p215 = por %p213, %p214
      %p216 = scmp.ne.s32.totalorder %s208, %s210
      %p217 = scmp.eq.s32.totalorder %s32, 1
      %p218 = por %p216, %p217
      %p219 = scmp.ne.s32.totalorder %s210, %s211
      %p220 = scmp.eq.s32.totalorder %s32, 0
      %p221 = por %p219, %p220
      %p222 = scmp.ne.s32.totalorder %s210, %s211
      %p223 = scmp.eq.s32.totalorder %s33, 1
      %p224 = por %p222, %p223
      %p226 = scmp.ne.s32.totalorder %s211, %s225
      %p227 = scmp.eq.s32.totalorder %s33, 0
      %p228 = por %p226, %p227
      %s230 = sadd.s32 %s229, 1
      %p233 = scmp.eq.s32.totalorder %s27, 1
      %p234 = scmp.ne.s32.totalorder %s229, %s231
      %p235 = scmp.eq.s32.totalorder %s27, 0
      %p236 = por %p234, %p235
      %p237 = scmp.ne.s32.totalorder %s229, %s231
      %p238 = scmp.eq.s32.totalorder %s32, 1
      %p239 = por %p237, %p238
      %p240 = scmp.ne.s32.totalorder %s231, %s232
      %p241 = scmp.eq.s32.totalorder %s32, 0
      %p242 = por %p240, %p241
      %p243 = scmp.ne.s32.totalorder %s231, %s232
      %p244 = scmp.eq.s32.totalorder %s33, 1
      %p245 = por %p243, %p244
      %p247 = scmp.ne.s32.totalorder %s232, %s246
      %p248 = scmp.eq.s32.totalorder %s33, 0
      %p249 = por %p247, %p248
      %s251 = sadd.s32 %s250, 1
      %p254 = scmp.eq.s32.totalorder %s27, 1
      %p255 = scmp.ne.s32.totalorder %s250, %s252
      %p256 = scmp.eq.s32.totalorder %s27, 0
      %p257 = por %p255, %p256
      %p258 = scmp.ne.s32.totalorder %s250, %s252
      %p259 = scmp.eq.s32.totalorder %s32, 1
      %p260 = por %p258, %p259
      %p261 = scmp.ne.s32.totalorder %s252, %s253
      %p262 = scmp.eq.s32.totalorder %s32, 0
      %p263 = por %p261, %p262
      %p264 = scmp.ne.s32.totalorder %s252, %s253
      %p265 = scmp.eq.s32.totalorder %s33, 1
      %p266 = por %p264, %p265
      %p268 = scmp.ne.s32.totalorder %s253, %s267
      %p269 = scmp.eq.s32.totalorder %s33, 0
      %p270 = por %p268, %p269
      %s271 = ssub.s32 %s27, %s34
      %p272 = scmp.eq.s32.totalorder %s271, 0
      %s274 = sadd.s32 %s273, 1
      %s275 = scalar_select %p272, %s273, %s274
      %p278 = pneg %p272
      %p279 = scmp.eq.s32.totalorder %s27, 1
      %p280 = por %p278, %p279
      %p281 = scmp.ne.s32.totalorder %s273, %s276
      %p282 = scmp.eq.s32.totalorder %s27, 0
      %p283 = por %p281, %p282
      %p284 = scmp.ne.s32.totalorder %s273, %s276
      %p285 = scmp.eq.s32.totalorder %s32, 1
      %p286 = por %p284, %p285
      %p287 = scmp.ne.s32.totalorder %s276, %s277
      %p288 = scmp.eq.s32.totalorder %s32, 0
      %p289 = por %p287, %p288
      %p290 = scmp.ne.s32.totalorder %s276, %s277
      %p291 = scmp.eq.s32.totalorder %s33, 1
      %p292 = por %p290, %p291
      %p294 = scmp.ne.s32.totalorder %s277, %s293
      %p295 = scmp.eq.s32.totalorder %s33, 0
      %p296 = por %p294, %p295
      %p297 = scmp.le.s32.totalorder 1, %s27
      %p298 = scmp.lt.s32.totalorder %s27, 3
      %p299 = pnand %p297, %p298
      %p300 = pneg %p299
      // Predicated region
      $region9: #{tpu_custom_call.1} parent=5 // pred_check
        _
      $region10: #{tpu_custom_call.1} parent=5 // pred_check_branch
        %302 = sbr.rel (%p299) target = $region12
      $region11: #{tpu_custom_call.1} parent=5 // pred_region
        %s303 = ssub.s32 %s27, 1
        // Predicated region
        $region13: #{tpu_custom_call.1} parent=11 // pred_check
          %p304 = pneg %p74
        $region14: #{tpu_custom_call.1} parent=11 // pred_check_branch
          %306 = sbr.rel (%p304) target = $region16
        $region15: #{tpu_custom_call.1} parent=11 // pred_region
          %308 = vsyncadd [#allocation8], 0
          %s309 = sshll.u32 %s1, 4
          %s310 = int_to_ptr.hbm [resolvable:$true] %s309
          %s311 = sshll.u32 [#allocation7], 4
          %s312 = int_to_ptr.vmem [resolvable:$true] %s311
          %317 = dma.hbm_to_vmem [thread:$0]  %s310, 4096, %s312, [#allocation8], 128, 128, 8
        $region16: #{tpu_custom_call.1} parent=11 // pred_fallthru
          _
        // Predicated region
        $region17: #{tpu_custom_call.1} parent=11 // pred_check
          %p318 = pneg %p95
        $region18: #{tpu_custom_call.1} parent=11 // pred_check_branch
          %320 = sbr.rel (%p318) target = $region20
        $region19: #{tpu_custom_call.1} parent=11 // pred_region
          %322 = vsyncadd [#allocation8], 0
          %s324 = sshll.u32 %s2, 4
          %s325 = int_to_ptr.hbm [resolvable:$true] %s324
          %s326 = sshll.u32 [#allocation9], 4
          %s327 = int_to_ptr.vmem [resolvable:$true] %s326
          %329 = dma.hbm_to_vmem [thread:$0]  %s325, 16, %s327, [#allocation8]
        $region20: #{tpu_custom_call.1} parent=11 // pred_fallthru
          _
        // Predicated region
        $region21: #{tpu_custom_call.1} parent=11 // pred_check
          %p330 = pneg %p116
        $region22: #{tpu_custom_call.1} parent=11 // pred_check_branch
          %332 = sbr.rel (%p330) target = $region24
        $region23: #{tpu_custom_call.1} parent=11 // pred_region
          %334 = vsyncadd [#allocation11], 0
          %s336 = sshll.u32 %s3, 4
          %s337 = int_to_ptr.hbm [resolvable:$true] %s336
          %s338 = sshll.u32 [#allocation10], 4
          %s339 = int_to_ptr.vmem [resolvable:$true] %s338
          %341 = dma.hbm_to_vmem [thread:$0]  %s337, 16, %s339, [#allocation11]
        $region24: #{tpu_custom_call.1} parent=11 // pred_fallthru
          _
        // Predicated region
        $region25: #{tpu_custom_call.1} parent=11 // pred_check
          %p342 = pneg %p137
        $region26: #{tpu_custom_call.1} parent=11 // pred_check_branch
          %344 = sbr.rel (%p342) target = $region28
        $region27: #{tpu_custom_call.1} parent=11 // pred_region
          %346 = vsyncadd [#allocation11], 0
          %s347 = sshll.u32 %s4, 4
          %s348 = int_to_ptr.hbm [resolvable:$true] %s347
          %s349 = sshll.u32 [#allocation12], 4
          %s350 = int_to_ptr.vmem [resolvable:$true] %s349
          %355 = dma.hbm_to_vmem [thread:$0]  %s348, 512, %s350, [#allocation11], 128, 128, 8
        $region28: #{tpu_custom_call.1} parent=11 // pred_fallthru
          _
        // Predicated region
        $region29: #{tpu_custom_call.1} parent=11 // pred_check
          %p356 = pneg %p158
        $region30: #{tpu_custom_call.1} parent=11 // pred_check_branch
          %358 = sbr.rel (%p356) target = $region32
        $region31: #{tpu_custom_call.1} parent=11 // pred_region
          %360 = vsyncadd [#allocation14], 0
          %s362 = sshll.u32 %s5, 4
          %s363 = int_to_ptr.hbm [resolvable:$true] %s362
          %s364 = sshll.u32 [#allocation13], 4
          %s365 = int_to_ptr.vmem [resolvable:$true] %s364
          %367 = dma.hbm_to_vmem [thread:$0]  %s363, 16, %s365, [#allocation14]
        $region32: #{tpu_custom_call.1} parent=11 // pred_fallthru
          _
        // Predicated region
        $region33: #{tpu_custom_call.1} parent=11 // pred_check
          %p368 = pneg %p179
        $region34: #{tpu_custom_call.1} parent=11 // pred_check_branch
          %370 = sbr.rel (%p368) target = $region36
        $region35: #{tpu_custom_call.1} parent=11 // pred_region
          %372 = vsyncadd [#allocation14], 0
          %s373 = sshll.u32 %s6, 4
          %s374 = int_to_ptr.hbm [resolvable:$true] %s373
          %s375 = sshll.u32 [#allocation15], 4
          %s376 = int_to_ptr.vmem [resolvable:$true] %s375
          %381 = dma.hbm_to_vmem [thread:$0]  %s374, 4096, %s376, [#allocation14], 256, 256, 16
        $region36: #{tpu_custom_call.1} parent=11 // pred_fallthru
          _
        // Predicated region
        $region37: #{tpu_custom_call.1} parent=11 // pred_check
          %p382 = pneg %p200
        $region38: #{tpu_custom_call.1} parent=11 // pred_check_branch
          %384 = sbr.rel (%p382) target = $region40
        $region39: #{tpu_custom_call.1} parent=11 // pred_region
          _
        $region40: #{tpu_custom_call.1} parent=11 // pred_fallthru
          _
        // Predicated region
        $region41: #{tpu_custom_call.1} parent=11 // pred_check
          %p385 = pneg %p221
        $region42: #{tpu_custom_call.1} parent=11 // pred_check_branch
          %387 = sbr.rel (%p385) target = $region44
        $region43: #{tpu_custom_call.1} parent=11 // pred_region
          _
        $region44: #{tpu_custom_call.1} parent=11 // pred_fallthru
          _
        // Predicated region
        $region45: #{tpu_custom_call.1} parent=11 // pred_check
          %p388 = pneg %p242
        $region46: #{tpu_custom_call.1} parent=11 // pred_check_branch
          %390 = sbr.rel (%p388) target = $region48
        $region47: #{tpu_custom_call.1} parent=11 // pred_region
          %392 = vsyncadd [#allocation17], 0
          %s393 = sshll.u32 %s9, 4
          %s394 = int_to_ptr.hbm [resolvable:$true] %s393
          %s395 = sshll.u32 [#allocation16], 4
          %s396 = int_to_ptr.vmem [resolvable:$true] %s395
          %401 = dma.hbm_to_vmem [thread:$0]  %s394, 1024, %s396, [#allocation17], 256, 256, 16
        $region48: #{tpu_custom_call.1} parent=11 // pred_fallthru
          _
        // Predicated region
        $region49: #{tpu_custom_call.1} parent=11 // pred_check
          %p402 = pneg %p263
        $region50: #{tpu_custom_call.1} parent=11 // pred_check_branch
          %404 = sbr.rel (%p402) target = $region52
        $region51: #{tpu_custom_call.1} parent=11 // pred_region
          _
        $region52: #{tpu_custom_call.1} parent=11 // pred_fallthru
          _
      $region12: #{tpu_custom_call.1} parent=5 // pred_fallthru
        _
      %p405 = scmp.lt.s32.totalorder %s27, 2
      // Predicated region
      $region53: #{tpu_custom_call.1} parent=5 // pred_check
        %p406 = pneg %p405
      $region54: #{tpu_custom_call.1} parent=5 // pred_check_branch
        %408 = sbr.rel (%p406) target = $region56
      $region55: #{tpu_custom_call.1} parent=5 // pred_region
        // Predicated region
        $region57: #{tpu_custom_call.1} parent=55 // pred_check
          %p409 = pneg %p47
        $region58: #{tpu_custom_call.1} parent=55 // pred_check_branch
          %411 = sbr.rel (%p409) target = $region60
        $region59: #{tpu_custom_call.1} parent=55 // pred_region
          %s412 = sand.u32 %s37, 1
          %s413 = scalar_lea.sflag [#allocation5], %s412
          %s414 = sand.u32 %s37, 1
          %s415 = smul.addr %s414, 64
          %s416 = scalar_lea.vmem [#allocation4], %s415
          %s417 = smul.u32 2, %s27
          %419 = vsyncadd %s413, 0
          %s420 = smul.addr %s417, 4
          %s421 = smul.addr %s420, 8
          %s422 = scalar_lea.hbm %s0, %s421
          %s423 = sshll.u32 %s422, 4
          %s424 = int_to_ptr.hbm [resolvable:$true] %s423
          %s425 = sshll.u32 %s416, 4
          %s426 = int_to_ptr.vmem [resolvable:$true] %s425
          %431 = dma.hbm_to_vmem [thread:$0]  %s424, 1024, %s426, %s413, 256, 256, 16
        $region60: #{tpu_custom_call.1} parent=55 // pred_fallthru
          _
      $region56: #{tpu_custom_call.1} parent=5 // pred_fallthru
        _
      %p432 = scmp.le.s32.totalorder 1, %s27
      %p433 = scmp.lt.s32.totalorder %s27, 3
      %p434 = pnand %p432, %p433
      %p435 = pneg %p434
      // Predicated region
      $region61: #{tpu_custom_call.1} parent=5 // pred_check
        _
      $region62: #{tpu_custom_call.1} parent=5 // pred_check_branch
        %437 = sbr.rel (%p434) target = $region64
      $region63: #{tpu_custom_call.1} parent=5 // pred_region
        %s438 = ssub.s32 %s27, 1
        %s439 = sand.u32 %s40, 1
        %s440 = scalar_lea.sflag [#allocation5], %s439
        %s441 = sand.u32 %s40, 1
        %s442 = smul.addr %s441, 64
        %s443 = scalar_lea.vmem [#allocation4], %s442
        // Predicated region
        $region65: #{tpu_custom_call.1} parent=63 // pred_check
          %p444 = pneg %p53
        $region66: #{tpu_custom_call.1} parent=63 // pred_check_branch
          %446 = sbr.rel (%p444) target = $region68
        $region67: #{tpu_custom_call.1} parent=63 // pred_region
          %448 = dma.done %s440, 1024
        $region68: #{tpu_custom_call.1} parent=63 // pred_fallthru
          _
        // Predicated region
        $region69: #{tpu_custom_call.1} parent=63 // pred_check
          %p449 = pneg %p74
        $region70: #{tpu_custom_call.1} parent=63 // pred_check_branch
          %451 = sbr.rel (%p449) target = $region72
        $region71: #{tpu_custom_call.1} parent=63 // pred_region
          %453 = dma.done [#allocation8], 4096
        $region72: #{tpu_custom_call.1} parent=63 // pred_fallthru
          _
        // Predicated region
        $region73: #{tpu_custom_call.1} parent=63 // pred_check
          %p454 = pneg %p95
        $region74: #{tpu_custom_call.1} parent=63 // pred_check_branch
          %456 = sbr.rel (%p454) target = $region76
        $region75: #{tpu_custom_call.1} parent=63 // pred_region
          %458 = dma.done [#allocation8], 16
        $region76: #{tpu_custom_call.1} parent=63 // pred_fallthru
          _
        // Predicated region
        $region77: #{tpu_custom_call.1} parent=63 // pred_check
          %p459 = pneg %p116
        $region78: #{tpu_custom_call.1} parent=63 // pred_check_branch
          %461 = sbr.rel (%p459) target = $region80
        $region79: #{tpu_custom_call.1} parent=63 // pred_region
          %463 = dma.done [#allocation11], 16
        $region80: #{tpu_custom_call.1} parent=63 // pred_fallthru
          _
        // Predicated region
        $region81: #{tpu_custom_call.1} parent=63 // pred_check
          %p464 = pneg %p137
        $region82: #{tpu_custom_call.1} parent=63 // pred_check_branch
          %466 = sbr.rel (%p464) target = $region84
        $region83: #{tpu_custom_call.1} parent=63 // pred_region
          %468 = dma.done [#allocation11], 512
        $region84: #{tpu_custom_call.1} parent=63 // pred_fallthru
          _
        // Predicated region
        $region85: #{tpu_custom_call.1} parent=63 // pred_check
          %p469 = pneg %p158
        $region86: #{tpu_custom_call.1} parent=63 // pred_check_branch
          %471 = sbr.rel (%p469) target = $region88
        $region87: #{tpu_custom_call.1} parent=63 // pred_region
          %473 = dma.done [#allocation14], 16
        $region88: #{tpu_custom_call.1} parent=63 // pred_fallthru
          _
        // Predicated region
        $region89: #{tpu_custom_call.1} parent=63 // pred_check
          %p474 = pneg %p179
        $region90: #{tpu_custom_call.1} parent=63 // pred_check_branch
          %476 = sbr.rel (%p474) target = $region92
        $region91: #{tpu_custom_call.1} parent=63 // pred_region
          %478 = dma.done [#allocation14], 4096
        $region92: #{tpu_custom_call.1} parent=63 // pred_fallthru
          _
        // Predicated region
        $region93: #{tpu_custom_call.1} parent=63 // pred_check
          %p479 = pneg %p242
        $region94: #{tpu_custom_call.1} parent=63 // pred_check_branch
          %481 = sbr.rel (%p479) target = $region96
        $region95: #{tpu_custom_call.1} parent=63 // pred_region
          %483 = dma.done [#allocation17], 1024
        $region96: #{tpu_custom_call.1} parent=63 // pred_fallthru
          _
        %s484 = sand.u32 %s40, 1
        %s485 = scalar_lea.sflag [#allocation5], %s484
        %s486 = sand.u32 %s40, 1
        %s487 = smul.addr %s486, 64
        %s488 = scalar_lea.vmem [#allocation4], %s487
        %p489 = pneg %p53
        %p490 = pneg %p50
        %p491 = pneg %p74
        %p492 = pneg %p71
        %p493 = pneg %p95
        %p494 = pneg %p92
        %p495 = pneg %p116
        %p496 = pneg %p113
        %p497 = pneg %p137
        %p498 = pneg %p134
        %p499 = pneg %p158
        %p500 = pneg %p155
        %p501 = pneg %p179
        %p502 = pneg %p176
        %p503 = pneg %p200
        %p504 = pneg %p197
        %p505 = pneg %p221
        %p506 = pneg %p218
        %p507 = pneg %p242
        %p508 = pneg %p239
        %p509 = pneg %p263
        %p510 = pneg %p260
        %p511 = pneg %p289
        %p512 = pneg %p286
        %s513 = sand.u32 %s276, 1
        %s514 = scalar_lea.sflag [#allocation6], %s513
        %s515 = sand.u32 %s276, 1
        %s516 = smul.addr %s515, 64
        %s517 = scalar_lea.vmem [#allocation18], %s516
        %s518 = smul.u32 2, %s32
        %s519 = smul.u32 2, %s32
        %v520 = vld [vmem:[%s443] sm:$0xff]
        %v521 = vld [vmem:[%s443 + $0x8] sm:$0xff]
        %v522 = vld [vmem:[%s443 + $0x10] sm:$0xff]
        %v523 = vld [vmem:[%s443 + $0x18] sm:$0xff]
        %v524 = vld [vmem:[%s443 + $0x20] sm:$0xff]
        %v525 = vld [vmem:[%s443 + $0x28] sm:$0xff]
        %v526 = vld [vmem:[%s443 + $0x30] sm:$0xff]
        %v527 = vld [vmem:[%s443 + $0x38] sm:$0xff]
        %v528 = vld [vmem:[#allocation7] sm:$0xff]
        %v529 = vld [vmem:[#allocation7 + $0x8] sm:$0xff]
        %v530 = vld [vmem:[#allocation7 + $0x10] sm:$0xff]
        %v531 = vld [vmem:[#allocation7 + $0x18] sm:$0xff]
        %v532 = vld [vmem:[#allocation7 + $0x20] sm:$0xff]
        %v533 = vld [vmem:[#allocation7 + $0x28] sm:$0xff]
        %v534 = vld [vmem:[#allocation7 + $0x30] sm:$0xff]
        %v535 = vld [vmem:[#allocation7 + $0x38] sm:$0xff]
        %v536 = vld [vmem:[#allocation7 + $0x40] sm:$0xff]
        %v537 = vld [vmem:[#allocation7 + $0x48] sm:$0xff]
        %v538 = vld [vmem:[#allocation7 + $0x50] sm:$0xff]
        %v539 = vld [vmem:[#allocation7 + $0x58] sm:$0xff]
        %v540 = vld [vmem:[#allocation7 + $0x60] sm:$0xff]
        %v541 = vld [vmem:[#allocation7 + $0x68] sm:$0xff]
        %v542 = vld [vmem:[#allocation7 + $0x70] sm:$0xff]
        %v543 = vld [vmem:[#allocation7 + $0x78] sm:$0xff]
        %v544 = vld [vmem:[#allocation7 + $0x80] sm:$0xff]
        %v545 = vld [vmem:[#allocation7 + $0x88] sm:$0xff]
        %v546 = vld [vmem:[#allocation7 + $0x90] sm:$0xff]
        %v547 = vld [vmem:[#allocation7 + $0x98] sm:$0xff]
        %v548 = vld [vmem:[#allocation7 + $0xa0] sm:$0xff]
        %v549 = vld [vmem:[#allocation7 + $0xa8] sm:$0xff]
        %v550 = vld [vmem:[#allocation7 + $0xb0] sm:$0xff]
        %v551 = vld [vmem:[#allocation7 + $0xb8] sm:$0xff]
        %v552 = vld [vmem:[#allocation7 + $0xc0] sm:$0xff]
        %v553 = vld [vmem:[#allocation7 + $0xc8] sm:$0xff]
        %v554 = vld [vmem:[#allocation7 + $0xd0] sm:$0xff]
        %v555 = vld [vmem:[#allocation7 + $0xd8] sm:$0xff]
        %v556 = vld [vmem:[#allocation7 + $0xe0] sm:$0xff]
        %v557 = vld [vmem:[#allocation7 + $0xe8] sm:$0xff]
        %v558 = vld [vmem:[#allocation7 + $0xf0] sm:$0xff]
        %v559 = vld [vmem:[#allocation7 + $0xf8] sm:$0xff]
        %v560 = vld [vmem:[#allocation9] sm:$0x1]
        %v562 = vperm.slane %v560, 0
        %564 = vmatpush.msra.mxu0 %v543
        %565 = vmatpush.msra.mxu0 %v542
        %566 = vmatpush.msra.mxu0 %v541
        %567 = vmatpush.msra.mxu0 %v540
        %568 = vmatpush.msra.mxu0 %v539
        %569 = vmatpush.msra.mxu0 %v538
        %570 = vmatpush.msra.mxu0 %v537
        %571 = vmatpush.msra.mxu0 %v536
        %572 = vmatpush.msra.mxu0 %v535
        %573 = vmatpush.msra.mxu0 %v534
        %574 = vmatpush.msra.mxu0 %v533
        %575 = vmatpush.msra.mxu0 %v532
        %576 = vmatpush.msra.mxu0 %v531
        %577 = vmatpush.msra.mxu0 %v530
        %578 = vmatpush.msra.mxu0 %v529
        %579 = vmatpush.msra.mxu0 %v528
        %580 = vmatmul.f32.gmra.mxu0 %v520
        %v581 = vpop.f32.mrf.mxu0
        %v582 = vadd.f32 %v562, %v581
        %583 = vmatmul.f32.gmra.mxu0 %v522
        %v584 = vpop.f32.mrf.mxu0
        %v585 = vadd.f32 %v562, %v584
        %586 = vmatmul.f32.gmra.mxu0 %v524
        %v587 = vpop.f32.mrf.mxu0
        %v588 = vadd.f32 %v562, %v587
        %589 = vmatmul.f32.gmra.mxu0 %v526
        %v590 = vpop.f32.mrf.mxu0
        %v591 = vadd.f32 %v562, %v590
        %592 = vdwg.mxu0
        %593 = vmatpush.msra.mxu0 %v559
        %594 = vmatpush.msra.mxu0 %v558
        %595 = vmatpush.msra.mxu0 %v557
        %596 = vmatpush.msra.mxu0 %v556
        %597 = vmatpush.msra.mxu0 %v555
        %598 = vmatpush.msra.mxu0 %v554
        %599 = vmatpush.msra.mxu0 %v553
        %600 = vmatpush.msra.mxu0 %v552
        %601 = vmatpush.msra.mxu0 %v551
        %602 = vmatpush.msra.mxu0 %v550
        %603 = vmatpush.msra.mxu0 %v549
        %604 = vmatpush.msra.mxu0 %v548
        %605 = vmatpush.msra.mxu0 %v547
        %606 = vmatpush.msra.mxu0 %v546
        %607 = vmatpush.msra.mxu0 %v545
        %608 = vmatpush.msra.mxu0 %v544
        %609 = vmatmul.f32.gmra.mxu0 %v521
        %v610 = vpop.f32.mrf.mxu0
        %v611 = vadd.f32 %v582, %v610
        %612 = vmatmul.f32.gmra.mxu0 %v523
        %v613 = vpop.f32.mrf.mxu0
        %v614 = vadd.f32 %v585, %v613
        %615 = vmatmul.f32.gmra.mxu0 %v525
        %v616 = vpop.f32.mrf.mxu0
        %v617 = vadd.f32 %v588, %v616
        %618 = vmatmul.f32.gmra.mxu0 %v527
        %v619 = vpop.f32.mrf.mxu0
        %v620 = vadd.f32 %v591, %v619
        %621 = vdwg.mxu0
        %v622 = vmax.f32 %v611, 0.0
        %v623 = vmax.f32 %v614, 0.0
        %v624 = vmax.f32 %v617, 0.0
        %v625 = vmax.f32 %v620, 0.0
        %626 = vst [vmem:[#allocation2] sm:$0x3] 0.0
        %627 = vst [vmem:[#allocation2 + $0x18] sm:$0x3] 0.0
        %628 = vst [vmem:[#allocation2 + $0x12] sm:$0x3] 0.0
        %629 = vst [vmem:[#allocation2 + $0x2a] sm:$0x3] 0.0
        %630 = vst [vmem:[#allocation2 + $0x2] sm:$0xff] %v622
        %631 = vst [vmem:[#allocation2 + $0xa] sm:$0xff] %v623
        %632 = vst [vmem:[#allocation2 + $0x1a] sm:$0xff] %v624
        %633 = vst [vmem:[#allocation2 + $0x22] sm:$0xff] %v625
        %v634 = vld [vmem:[#allocation12] sm:$0x1]
        %v635 = vld [vmem:[#allocation12 + $0x1] sm:$0x1]
        %v636 = vld [vmem:[#allocation12 + $0x2] sm:$0x1]
        %v637 = vld [vmem:[#allocation12 + $0x3] sm:$0x1]
        %v638 = vld [vmem:[#allocation12 + $0x4] sm:$0x1]
        %v639 = vld [vmem:[#allocation12 + $0x5] sm:$0x1]
        %v640 = vld [vmem:[#allocation12 + $0x6] sm:$0x1]
        %v641 = vld [vmem:[#allocation12 + $0x7] sm:$0x1]
        %v642 = vld [vmem:[#allocation12 + $0x8] sm:$0x1]
        %v643 = vld [vmem:[#allocation12 + $0x9] sm:$0x1]
        %v644 = vld [vmem:[#allocation12 + $0xa] sm:$0x1]
        %v645 = vld [vmem:[#allocation12 + $0xb] sm:$0x1]
        %v646 = vld [vmem:[#allocation12 + $0xc] sm:$0x1]
        %v647 = vld [vmem:[#allocation12 + $0xd] sm:$0x1]
        %v648 = vld [vmem:[#allocation12 + $0xe] sm:$0x1]
        %v649 = vld [vmem:[#allocation12 + $0xf] sm:$0x1]
        %v650 = vld [vmem:[#allocation12 + $0x10] sm:$0x1]
        %v651 = vld [vmem:[#allocation12 + $0x11] sm:$0x1]
        %v652 = vld [vmem:[#allocation12 + $0x12] sm:$0x1]
        %v653 = vld [vmem:[#allocation12 + $0x13] sm:$0x1]
        %v654 = vld [vmem:[#allocation12 + $0x14] sm:$0x1]
        %v655 = vld [vmem:[#allocation12 + $0x15] sm:$0x1]
        %v656 = vld [vmem:[#allocation12 + $0x16] sm:$0x1]
        %v657 = vld [vmem:[#allocation12 + $0x17] sm:$0x1]
        %v658 = vld [vmem:[#allocation12 + $0x18] sm:$0x1]
        %v659 = vld [vmem:[#allocation2] sm:$0xff]
        %v660 = vld [vmem:[#allocation2 + $0x8] sm:$0xff]
        %v661 = vld [vmem:[#allocation2 + $0x18] sm:$0xff]
        %v662 = vld [vmem:[#allocation2 + $0x20] sm:$0xff]
        %663 = vrot.lane.b32.xlu0 %v659, 16
        %v664 = vpop.permute.xlu0 %663
        %665 = vrot.lane.b32.xlu0 %v660, 16
        %v666 = vpop.permute.xlu0 %665
        %667 = vrot.lane.b32.xlu0 %v661, 16
        %v668 = vpop.permute.xlu0 %667
        %669 = vrot.lane.b32.xlu0 %v662, 16
        %v670 = vpop.permute.xlu0 %669
        %v671 = vperm.slane %v634, 0
        %v672 = vmul.f32 %v664, %v671
        %v673 = vmul.f32 %v666, %v671
        %v674 = vmul.f32 %v668, %v671
        %v675 = vmul.f32 %v670, %v671
        %676 = vrot.lane.b32.xlu0 %v659, 8
        %v677 = vpop.permute.xlu0 %676
        %678 = vrot.lane.b32.xlu0 %v660, 8
        %v679 = vpop.permute.xlu0 %678
        %680 = vrot.lane.b32.xlu0 %v661, 8
        %v681 = vpop.permute.xlu0 %680
        %682 = vrot.lane.b32.xlu0 %v662, 8
        %v683 = vpop.permute.xlu0 %682
        %v684 = vperm.slane %v635, 0
        %v685 = vmul.f32 %v677, %v684
        %v686 = vmul.f32 %v679, %v684
        %v687 = vmul.f32 %v681, %v684
        %v688 = vmul.f32 %v683, %v684
        %v689 = vadd.f32 %v672, %v685
        %v690 = vadd.f32 %v673, %v686
        %v691 = vadd.f32 %v674, %v687
        %v692 = vadd.f32 %v675, %v688
        %v693 = vperm.slane %v636, 0
        %v694 = vmul.f32 %v659, %v693
        %v695 = vmul.f32 %v660, %v693
        %v696 = vmul.f32 %v661, %v693
        %v697 = vmul.f32 %v662, %v693
        %v698 = vadd.f32 %v689, %v694
        %v699 = vadd.f32 %v690, %v695
        %v700 = vadd.f32 %v691, %v696
        %v701 = vadd.f32 %v692, %v697
        %702 = vrot.lane.b32.xlu0 %v659, 120
        %v703 = vpop.permute.xlu0 %702
        %704 = vrot.lane.b32.xlu0 %v660, 120
        %v705 = vpop.permute.xlu0 %704
        %706 = vrot.lane.b32.xlu0 %v661, 120
        %v707 = vpop.permute.xlu0 %706
        %708 = vrot.lane.b32.xlu0 %v662, 120
        %v709 = vpop.permute.xlu0 %708
        %v710 = vperm.slane %v637, 0
        %v711 = vmul.f32 %v703, %v710
        %v712 = vmul.f32 %v705, %v710
        %v713 = vmul.f32 %v707, %v710
        %v714 = vmul.f32 %v709, %v710
        %v715 = vadd.f32 %v698, %v711
        %v716 = vadd.f32 %v699, %v712
        %v717 = vadd.f32 %v700, %v713
        %v718 = vadd.f32 %v701, %v714
        %719 = vrot.lane.b32.xlu0 %v659, 112
        %v720 = vpop.permute.xlu0 %719
        %721 = vrot.lane.b32.xlu0 %v660, 112
        %v722 = vpop.permute.xlu0 %721
        %723 = vrot.lane.b32.xlu0 %v661, 112
        %v724 = vpop.permute.xlu0 %723
        %725 = vrot.lane.b32.xlu0 %v662, 112
        %v726 = vpop.permute.xlu0 %725
        %v727 = vperm.slane %v638, 0
        %v728 = vmul.f32 %v720, %v727
        %v729 = vmul.f32 %v722, %v727
        %v730 = vmul.f32 %v724, %v727
        %v731 = vmul.f32 %v726, %v727
        %v732 = vadd.f32 %v715, %v728
        %v733 = vadd.f32 %v716, %v729
        %v734 = vadd.f32 %v717, %v730
        %v735 = vadd.f32 %v718, %v731
        %v736 = vld [vmem:[#allocation2 + $0x1] sm:$0xff]
        %v737 = vld [vmem:[#allocation2 + $0x9] sm:$0xff]
        %v738 = vld [vmem:[#allocation2 + $0x19] sm:$0xff]
        %v739 = vld [vmem:[#allocation2 + $0x21] sm:$0xff]
        %740 = vrot.lane.b32.xlu0 %v736, 16
        %v741 = vpop.permute.xlu0 %740
        %742 = vrot.lane.b32.xlu0 %v737, 16
        %v743 = vpop.permute.xlu0 %742
        %744 = vrot.lane.b32.xlu0 %v738, 16
        %v745 = vpop.permute.xlu0 %744
        %746 = vrot.lane.b32.xlu0 %v739, 16
        %v747 = vpop.permute.xlu0 %746
        %v748 = vperm.slane %v639, 0
        %v749 = vmul.f32 %v741, %v748
        %v750 = vmul.f32 %v743, %v748
        %v751 = vmul.f32 %v745, %v748
        %v752 = vmul.f32 %v747, %v748
        %753 = vrot.lane.b32.xlu0 %v736, 8
        %v754 = vpop.permute.xlu0 %753
        %755 = vrot.lane.b32.xlu0 %v737, 8
        %v756 = vpop.permute.xlu0 %755
        %757 = vrot.lane.b32.xlu0 %v738, 8
        %v758 = vpop.permute.xlu0 %757
        %759 = vrot.lane.b32.xlu0 %v739, 8
        %v760 = vpop.permute.xlu0 %759
        %v761 = vperm.slane %v640, 0
        %v762 = vmul.f32 %v754, %v761
        %v763 = vmul.f32 %v756, %v761
        %v764 = vmul.f32 %v758, %v761
        %v765 = vmul.f32 %v760, %v761
        %v766 = vadd.f32 %v749, %v762
        %v767 = vadd.f32 %v750, %v763
        %v768 = vadd.f32 %v751, %v764
        %v769 = vadd.f32 %v752, %v765
        %v770 = vperm.slane %v641, 0
        %v771 = vmul.f32 %v736, %v770
        %v772 = vmul.f32 %v737, %v770
        %v773 = vmul.f32 %v738, %v770
        %v774 = vmul.f32 %v739, %v770
        %v775 = vadd.f32 %v766, %v771
        %v776 = vadd.f32 %v767, %v772
        %v777 = vadd.f32 %v768, %v773
        %v778 = vadd.f32 %v769, %v774
        %779 = vrot.lane.b32.xlu0 %v736, 120
        %v780 = vpop.permute.xlu0 %779
        %781 = vrot.lane.b32.xlu0 %v737, 120
        %v782 = vpop.permute.xlu0 %781
        %783 = vrot.lane.b32.xlu0 %v738, 120
        %v784 = vpop.permute.xlu0 %783
        %785 = vrot.lane.b32.xlu0 %v739, 120
        %v786 = vpop.permute.xlu0 %785
        %v787 = vperm.slane %v642, 0
        %v788 = vmul.f32 %v780, %v787
        %v789 = vmul.f32 %v782, %v787
        %v790 = vmul.f32 %v784, %v787
        %v791 = vmul.f32 %v786, %v787
        %v792 = vadd.f32 %v775, %v788
        %v793 = vadd.f32 %v776, %v789
        %v794 = vadd.f32 %v777, %v790
        %v795 = vadd.f32 %v778, %v791
        %796 = vrot.lane.b32.xlu0 %v736, 112
        %v797 = vpop.permute.xlu0 %796
        %798 = vrot.lane.b32.xlu0 %v737, 112
        %v799 = vpop.permute.xlu0 %798
        %800 = vrot.lane.b32.xlu0 %v738, 112
        %v801 = vpop.permute.xlu0 %800
        %802 = vrot.lane.b32.xlu0 %v739, 112
        %v803 = vpop.permute.xlu0 %802
        %v804 = vperm.slane %v643, 0
        %v805 = vmul.f32 %v797, %v804
        %v806 = vmul.f32 %v799, %v804
        %v807 = vmul.f32 %v801, %v804
        %v808 = vmul.f32 %v803, %v804
        %v809 = vadd.f32 %v792, %v805
        %v810 = vadd.f32 %v793, %v806
        %v811 = vadd.f32 %v794, %v807
        %v812 = vadd.f32 %v795, %v808
        %v813 = vld [vmem:[#allocation2 + $0x2] sm:$0xff]
        %v814 = vld [vmem:[#allocation2 + $0xa] sm:$0xff]
        %v815 = vld [vmem:[#allocation2 + $0x1a] sm:$0xff]
        %v816 = vld [vmem:[#allocation2 + $0x22] sm:$0xff]
        %817 = vrot.lane.b32.xlu0 %v813, 16
        %v818 = vpop.permute.xlu0 %817
        %819 = vrot.lane.b32.xlu0 %v814, 16
        %v820 = vpop.permute.xlu0 %819
        %821 = vrot.lane.b32.xlu0 %v815, 16
        %v822 = vpop.permute.xlu0 %821
        %823 = vrot.lane.b32.xlu0 %v816, 16
        %v824 = vpop.permute.xlu0 %823
        %v825 = vperm.slane %v644, 0
        %v826 = vmul.f32 %v818, %v825
        %v827 = vmul.f32 %v820, %v825
        %v828 = vmul.f32 %v822, %v825
        %v829 = vmul.f32 %v824, %v825
        %830 = vrot.lane.b32.xlu0 %v813, 8
        %v831 = vpop.permute.xlu0 %830
        %832 = vrot.lane.b32.xlu0 %v814, 8
        %v833 = vpop.permute.xlu0 %832
        %834 = vrot.lane.b32.xlu0 %v815, 8
        %v835 = vpop.permute.xlu0 %834
        %836 = vrot.lane.b32.xlu0 %v816, 8
        %v837 = vpop.permute.xlu0 %836
        %v838 = vperm.slane %v645, 0
        %v839 = vmul.f32 %v831, %v838
        %v840 = vmul.f32 %v833, %v838
        %v841 = vmul.f32 %v835, %v838
        %v842 = vmul.f32 %v837, %v838
        %v843 = vadd.f32 %v826, %v839
        %v844 = vadd.f32 %v827, %v840
        %v845 = vadd.f32 %v828, %v841
        %v846 = vadd.f32 %v829, %v842
        %v847 = vperm.slane %v646, 0
        %v848 = vmul.f32 %v813, %v847
        %v849 = vmul.f32 %v814, %v847
        %v850 = vmul.f32 %v815, %v847
        %v851 = vmul.f32 %v816, %v847
        %v852 = vadd.f32 %v843, %v848
        %v853 = vadd.f32 %v844, %v849
        %v854 = vadd.f32 %v845, %v850
        %v855 = vadd.f32 %v846, %v851
        %856 = vrot.lane.b32.xlu0 %v813, 120
        %v857 = vpop.permute.xlu0 %856
        %858 = vrot.lane.b32.xlu0 %v814, 120
        %v859 = vpop.permute.xlu0 %858
        %860 = vrot.lane.b32.xlu0 %v815, 120
        %v861 = vpop.permute.xlu0 %860
        %862 = vrot.lane.b32.xlu0 %v816, 120
        %v863 = vpop.permute.xlu0 %862
        %v864 = vperm.slane %v647, 0
        %v865 = vmul.f32 %v857, %v864
        %v866 = vmul.f32 %v859, %v864
        %v867 = vmul.f32 %v861, %v864
        %v868 = vmul.f32 %v863, %v864
        %v869 = vadd.f32 %v852, %v865
        %v870 = vadd.f32 %v853, %v866
        %v871 = vadd.f32 %v854, %v867
        %v872 = vadd.f32 %v855, %v868
        %873 = vrot.lane.b32.xlu0 %v813, 112
        %v874 = vpop.permute.xlu0 %873
        %875 = vrot.lane.b32.xlu0 %v814, 112
        %v876 = vpop.permute.xlu0 %875
        %877 = vrot.lane.b32.xlu0 %v815, 112
        %v878 = vpop.permute.xlu0 %877
        %879 = vrot.lane.b32.xlu0 %v816, 112
        %v880 = vpop.permute.xlu0 %879
        %v881 = vperm.slane %v648, 0
        %v882 = vmul.f32 %v874, %v881
        %v883 = vmul.f32 %v876, %v881
        %v884 = vmul.f32 %v878, %v881
        %v885 = vmul.f32 %v880, %v881
        %v886 = vadd.f32 %v869, %v882
        %v887 = vadd.f32 %v870, %v883
        %v888 = vadd.f32 %v871, %v884
        %v889 = vadd.f32 %v872, %v885
        %v890 = vld [vmem:[#allocation2 + $0x3] sm:$0xff]
        %v891 = vld [vmem:[#allocation2 + $0xb] sm:$0xff]
        %v892 = vld [vmem:[#allocation2 + $0x1b] sm:$0xff]
        %v893 = vld [vmem:[#allocation2 + $0x23] sm:$0xff]
        %894 = vrot.lane.b32.xlu0 %v890, 16
        %v895 = vpop.permute.xlu0 %894
        %896 = vrot.lane.b32.xlu0 %v891, 16
        %v897 = vpop.permute.xlu0 %896
        %898 = vrot.lane.b32.xlu0 %v892, 16
        %v899 = vpop.permute.xlu0 %898
        %900 = vrot.lane.b32.xlu0 %v893, 16
        %v901 = vpop.permute.xlu0 %900
        %v902 = vperm.slane %v649, 0
        %v903 = vmul.f32 %v895, %v902
        %v904 = vmul.f32 %v897, %v902
        %v905 = vmul.f32 %v899, %v902
        %v906 = vmul.f32 %v901, %v902
        %907 = vrot.lane.b32.xlu0 %v890, 8
        %v908 = vpop.permute.xlu0 %907
        %909 = vrot.lane.b32.xlu0 %v891, 8
        %v910 = vpop.permute.xlu0 %909
        %911 = vrot.lane.b32.xlu0 %v892, 8
        %v912 = vpop.permute.xlu0 %911
        %913 = vrot.lane.b32.xlu0 %v893, 8
        %v914 = vpop.permute.xlu0 %913
        %v915 = vperm.slane %v650, 0
        %v916 = vmul.f32 %v908, %v915
        %v917 = vmul.f32 %v910, %v915
        %v918 = vmul.f32 %v912, %v915
        %v919 = vmul.f32 %v914, %v915
        %v920 = vadd.f32 %v903, %v916
        %v921 = vadd.f32 %v904, %v917
        %v922 = vadd.f32 %v905, %v918
        %v923 = vadd.f32 %v906, %v919
        %v924 = vperm.slane %v651, 0
        %v925 = vmul.f32 %v890, %v924
        %v926 = vmul.f32 %v891, %v924
        %v927 = vmul.f32 %v892, %v924
        %v928 = vmul.f32 %v893, %v924
        %v929 = vadd.f32 %v920, %v925
        %v930 = vadd.f32 %v921, %v926
        %v931 = vadd.f32 %v922, %v927
        %v932 = vadd.f32 %v923, %v928
        %933 = vrot.lane.b32.xlu0 %v890, 120
        %v934 = vpop.permute.xlu0 %933
        %935 = vrot.lane.b32.xlu0 %v891, 120
        %v936 = vpop.permute.xlu0 %935
        %937 = vrot.lane.b32.xlu0 %v892, 120
        %v938 = vpop.permute.xlu0 %937
        %939 = vrot.lane.b32.xlu0 %v893, 120
        %v940 = vpop.permute.xlu0 %939
        %v941 = vperm.slane %v652, 0
        %v942 = vmul.f32 %v934, %v941
        %v943 = vmul.f32 %v936, %v941
        %v944 = vmul.f32 %v938, %v941
        %v945 = vmul.f32 %v940, %v941
        %v946 = vadd.f32 %v929, %v942
        %v947 = vadd.f32 %v930, %v943
        %v948 = vadd.f32 %v931, %v944
        %v949 = vadd.f32 %v932, %v945
        %950 = vrot.lane.b32.xlu0 %v890, 112
        %v951 = vpop.permute.xlu0 %950
        %952 = vrot.lane.b32.xlu0 %v891, 112
        %v953 = vpop.permute.xlu0 %952
        %954 = vrot.lane.b32.xlu0 %v892, 112
        %v955 = vpop.permute.xlu0 %954
        %956 = vrot.lane.b32.xlu0 %v893, 112
        %v957 = vpop.permute.xlu0 %956
        %v958 = vperm.slane %v653, 0
        %v959 = vmul.f32 %v951, %v958
        %v960 = vmul.f32 %v953, %v958
        %v961 = vmul.f32 %v955, %v958
        %v962 = vmul.f32 %v957, %v958
        %v963 = vadd.f32 %v946, %v959
        %v964 = vadd.f32 %v947, %v960
        %v965 = vadd.f32 %v948, %v961
        %v966 = vadd.f32 %v949, %v962
        %v967 = vld [vmem:[#allocation2 + $0x4] sm:$0xff]
        %v968 = vld [vmem:[#allocation2 + $0xc] sm:$0xff]
        %v969 = vld [vmem:[#allocation2 + $0x1c] sm:$0xff]
        %v970 = vld [vmem:[#allocation2 + $0x24] sm:$0xff]
        %971 = vrot.lane.b32.xlu0 %v967, 16
        %v972 = vpop.permute.xlu0 %971
        %973 = vrot.lane.b32.xlu0 %v968, 16
        %v974 = vpop.permute.xlu0 %973
        %975 = vrot.lane.b32.xlu0 %v969, 16
        %v976 = vpop.permute.xlu0 %975
        %977 = vrot.lane.b32.xlu0 %v970, 16
        %v978 = vpop.permute.xlu0 %977
        %v979 = vperm.slane %v654, 0
        %v980 = vmul.f32 %v972, %v979
        %v981 = vmul.f32 %v974, %v979
        %v982 = vmul.f32 %v976, %v979
        %v983 = vmul.f32 %v978, %v979
        %984 = vrot.lane.b32.xlu0 %v967, 8
        %v985 = vpop.permute.xlu0 %984
        %986 = vrot.lane.b32.xlu0 %v968, 8
        %v987 = vpop.permute.xlu0 %986
        %988 = vrot.lane.b32.xlu0 %v969, 8
        %v989 = vpop.permute.xlu0 %988
        %990 = vrot.lane.b32.xlu0 %v970, 8
        %v991 = vpop.permute.xlu0 %990
        %v992 = vperm.slane %v655, 0
        %v993 = vmul.f32 %v985, %v992
        %v994 = vmul.f32 %v987, %v992
        %v995 = vmul.f32 %v989, %v992
        %v996 = vmul.f32 %v991, %v992
        %v997 = vadd.f32 %v980, %v993
        %v998 = vadd.f32 %v981, %v994
        %v999 = vadd.f32 %v982, %v995
        %v1000 = vadd.f32 %v983, %v996
        %v1001 = vperm.slane %v656, 0
        %v1002 = vmul.f32 %v967, %v1001
        %v1003 = vmul.f32 %v968, %v1001
        %v1004 = vmul.f32 %v969, %v1001
        %v1005 = vmul.f32 %v970, %v1001
        %v1006 = vadd.f32 %v997, %v1002
        %v1007 = vadd.f32 %v998, %v1003
        %v1008 = vadd.f32 %v999, %v1004
        %v1009 = vadd.f32 %v1000, %v1005
        %1010 = vrot.lane.b32.xlu0 %v967, 120
        %v1011 = vpop.permute.xlu0 %1010
        %1012 = vrot.lane.b32.xlu0 %v968, 120
        %v1013 = vpop.permute.xlu0 %1012
        %1014 = vrot.lane.b32.xlu0 %v969, 120
        %v1015 = vpop.permute.xlu0 %1014
        %1016 = vrot.lane.b32.xlu0 %v970, 120
        %v1017 = vpop.permute.xlu0 %1016
        %v1018 = vperm.slane %v657, 0
        %v1019 = vmul.f32 %v1011, %v1018
        %v1020 = vmul.f32 %v1013, %v1018
        %v1021 = vmul.f32 %v1015, %v1018
        %v1022 = vmul.f32 %v1017, %v1018
        %v1023 = vadd.f32 %v1006, %v1019
        %v1024 = vadd.f32 %v1007, %v1020
        %v1025 = vadd.f32 %v1008, %v1021
        %v1026 = vadd.f32 %v1009, %v1022
        %1027 = vrot.lane.b32.xlu0 %v967, 112
        %v1028 = vpop.permute.xlu0 %1027
        %1029 = vrot.lane.b32.xlu0 %v968, 112
        %v1030 = vpop.permute.xlu0 %1029
        %1031 = vrot.lane.b32.xlu0 %v969, 112
        %v1032 = vpop.permute.xlu0 %1031
        %1033 = vrot.lane.b32.xlu0 %v970, 112
        %v1034 = vpop.permute.xlu0 %1033
        %v1035 = vperm.slane %v658, 0
        %v1036 = vmul.f32 %v1028, %v1035
        %v1037 = vmul.f32 %v1030, %v1035
        %v1038 = vmul.f32 %v1032, %v1035
        %v1039 = vmul.f32 %v1034, %v1035
        %v1040 = vadd.f32 %v1023, %v1036
        %v1041 = vadd.f32 %v1024, %v1037
        %v1042 = vadd.f32 %v1025, %v1038
        %v1043 = vadd.f32 %v1026, %v1039
        %v1044 = vadd.f32 %v732, %v809
        %v1045 = vadd.f32 %v733, %v810
        %v1046 = vadd.f32 %v734, %v811
        %v1047 = vadd.f32 %v735, %v812
        %v1048 = vadd.f32 %v886, %v963
        %v1049 = vadd.f32 %v887, %v964
        %v1050 = vadd.f32 %v888, %v965
        %v1051 = vadd.f32 %v889, %v966
        %v1052 = vadd.f32 %v1044, %v1048
        %v1053 = vadd.f32 %v1045, %v1049
        %v1054 = vadd.f32 %v1046, %v1050
        %v1055 = vadd.f32 %v1047, %v1051
        %v1056 = vadd.f32 %v1052, %v1040
        %v1057 = vadd.f32 %v1053, %v1041
        %v1058 = vadd.f32 %v1054, %v1042
        %v1059 = vadd.f32 %v1055, %v1043
        %v1060 = vld [vmem:[#allocation13] sm:$0x1]
        %v1062 = vperm.slane %v1060, 0
        %v1064 = vadd.f32 %v1056, %v1062
        %v1065 = vadd.f32 %v1057, %v1062
        %v1066 = vadd.f32 %v1058, %v1062
        %v1067 = vadd.f32 %v1059, %v1062
        %v1068 = vmax.f32 %v1064, 0.0
        %v1069 = vmax.f32 %v1065, 0.0
        %v1070 = vmax.f32 %v1066, 0.0
        %v1071 = vmax.f32 %v1067, 0.0
        %v1072 = vld [vmem:[#allocation10] sm:$0x1]
        %v1074 = vperm.slane %v1072, 0
        %v1076 = vmul.f32 %v622, %v1074
        %v1077 = vmul.f32 %v623, %v1074
        %v1078 = vmul.f32 %v624, %v1074
        %v1079 = vmul.f32 %v625, %v1074
        %v1080 = vadd.f32 %v1076, %v1068
        %v1081 = vadd.f32 %v1077, %v1069
        %v1082 = vadd.f32 %v1078, %v1070
        %v1083 = vadd.f32 %v1079, %v1071
        %v1084 = vld [vmem:[#allocation15] sm:$0xff]
        %v1085 = vld [vmem:[#allocation15 + $0x8] sm:$0xff]
        %v1086 = vld [vmem:[#allocation15 + $0x10] sm:$0xff]
        %v1087 = vld [vmem:[#allocation15 + $0x18] sm:$0xff]
        %v1088 = vld [vmem:[#allocation15 + $0x20] sm:$0xff]
        %v1089 = vld [vmem:[#allocation15 + $0x28] sm:$0xff]
        %v1090 = vld [vmem:[#allocation15 + $0x30] sm:$0xff]
        %v1091 = vld [vmem:[#allocation15 + $0x38] sm:$0xff]
        %v1092 = vld [vmem:[#allocation15 + $0x40] sm:$0xff]
        %v1093 = vld [vmem:[#allocation15 + $0x48] sm:$0xff]
        %v1094 = vld [vmem:[#allocation15 + $0x50] sm:$0xff]
        %v1095 = vld [vmem:[#allocation15 + $0x58] sm:$0xff]
        %v1096 = vld [vmem:[#allocation15 + $0x60] sm:$0xff]
        %v1097 = vld [vmem:[#allocation15 + $0x68] sm:$0xff]
        %v1098 = vld [vmem:[#allocation15 + $0x70] sm:$0xff]
        %v1099 = vld [vmem:[#allocation15 + $0x78] sm:$0xff]
        %v1100 = vld [vmem:[#allocation15 + $0x80] sm:$0xff]
        %v1101 = vld [vmem:[#allocation15 + $0x88] sm:$0xff]
        %v1102 = vld [vmem:[#allocation15 + $0x90] sm:$0xff]
        %v1103 = vld [vmem:[#allocation15 + $0x98] sm:$0xff]
        %v1104 = vld [vmem:[#allocation15 + $0xa0] sm:$0xff]
        %v1105 = vld [vmem:[#allocation15 + $0xa8] sm:$0xff]
        %v1106 = vld [vmem:[#allocation15 + $0xb0] sm:$0xff]
        %v1107 = vld [vmem:[#allocation15 + $0xb8] sm:$0xff]
        %v1108 = vld [vmem:[#allocation15 + $0xc0] sm:$0xff]
        %v1109 = vld [vmem:[#allocation15 + $0xc8] sm:$0xff]
        %v1110 = vld [vmem:[#allocation15 + $0xd0] sm:$0xff]
        %v1111 = vld [vmem:[#allocation15 + $0xd8] sm:$0xff]
        %v1112 = vld [vmem:[#allocation15 + $0xe0] sm:$0xff]
        %v1113 = vld [vmem:[#allocation15 + $0xe8] sm:$0xff]
        %v1114 = vld [vmem:[#allocation15 + $0xf0] sm:$0xff]
        %v1115 = vld [vmem:[#allocation15 + $0xf8] sm:$0xff]
        %v1116 = vld [vmem:[%s7] sm:$0x3]
        %v1118 = vperm.slane %v1116, 0
        %v1119 = vperm.slane %v1116, 1
        %1122 = vmatpush.msra.mxu0 %v1114
        %1123 = vmatpush.msra.mxu0 %v1112
        %1124 = vmatpush.msra.mxu0 %v1110
        %1125 = vmatpush.msra.mxu0 %v1108
        %1126 = vmatpush.msra.mxu0 %v1106
        %1127 = vmatpush.msra.mxu0 %v1104
        %1128 = vmatpush.msra.mxu0 %v1102
        %1129 = vmatpush.msra.mxu0 %v1100
        %1130 = vmatpush.msra.mxu0 %v1098
        %1131 = vmatpush.msra.mxu0 %v1096
        %1132 = vmatpush.msra.mxu0 %v1094
        %1133 = vmatpush.msra.mxu0 %v1092
        %1134 = vmatpush.msra.mxu0 %v1090
        %1135 = vmatpush.msra.mxu0 %v1088
        %1136 = vmatpush.msra.mxu0 %v1086
        %1137 = vmatpush.msra.mxu0 %v1084
        %1138 = vmatmul.f32.gmra.mxu0 %v1080
        %v1139 = vpop.f32.mrf.mxu0
        %v1140 = vadd.f32 %v1118, %v1139
        %1141 = vmatmul.f32.gmra.mxu0 %v1081
        %v1142 = vpop.f32.mrf.mxu0
        %v1143 = vadd.f32 %v1118, %v1142
        %1144 = vmatmul.f32.gmra.mxu0 %v1082
        %v1145 = vpop.f32.mrf.mxu0
        %v1146 = vadd.f32 %v1118, %v1145
        %1147 = vmatmul.f32.gmra.mxu0 %v1083
        %v1148 = vpop.f32.mrf.mxu0
        %v1149 = vadd.f32 %v1118, %v1148
        %1150 = vdwg.mxu0
        %1151 = vmatpush.msra.mxu0 %v1115
        %1152 = vmatpush.msra.mxu0 %v1113
        %1153 = vmatpush.msra.mxu0 %v1111
        %1154 = vmatpush.msra.mxu0 %v1109
        %1155 = vmatpush.msra.mxu0 %v1107
        %1156 = vmatpush.msra.mxu0 %v1105
        %1157 = vmatpush.msra.mxu0 %v1103
        %1158 = vmatpush.msra.mxu0 %v1101
        %1159 = vmatpush.msra.mxu0 %v1099
        %1160 = vmatpush.msra.mxu0 %v1097
        %1161 = vmatpush.msra.mxu0 %v1095
        %1162 = vmatpush.msra.mxu0 %v1093
        %1163 = vmatpush.msra.mxu0 %v1091
        %1164 = vmatpush.msra.mxu0 %v1089
        %1165 = vmatpush.msra.mxu0 %v1087
        %1166 = vmatpush.msra.mxu0 %v1085
        %1167 = vmatmul.f32.gmra.mxu0 %v1080
        %v1168 = vpop.f32.mrf.mxu0
        %v1169 = vadd.f32 %v1119, %v1168
        %1170 = vmatmul.f32.gmra.mxu0 %v1081
        %v1171 = vpop.f32.mrf.mxu0
        %v1172 = vadd.f32 %v1119, %v1171
        %1173 = vmatmul.f32.gmra.mxu0 %v1082
        %v1174 = vpop.f32.mrf.mxu0
        %v1175 = vadd.f32 %v1119, %v1174
        %1176 = vmatmul.f32.gmra.mxu0 %v1083
        %v1177 = vpop.f32.mrf.mxu0
        %v1178 = vadd.f32 %v1119, %v1177
        %1179 = vdwg.mxu0
        %1180 = vst [vmem:[#allocation3] sm:$0x3] 0.0
        %1181 = vst [vmem:[#allocation3 + $0x8] sm:$0x3] 0.0
        %1182 = vst [vmem:[#allocation3 + $0x30] sm:$0x3] 0.0
        %1183 = vst [vmem:[#allocation3 + $0x38] sm:$0x3] 0.0
        %1184 = vst [vmem:[#allocation3 + $0x20] sm:$0xc] 0.0
        %1185 = vst [vmem:[#allocation3 + $0x28] sm:$0xc] 0.0
        %1186 = vst [vmem:[#allocation3 + $0x50] sm:$0xc] 0.0
        %1187 = vst [vmem:[#allocation3 + $0x58] sm:$0xc] 0.0
        %vm1196 = vcmask 1041408
        %v1197 = vrot.slane %v1140, 6
        %v1198 = vrot.slane %v1169, 6
        %v1199 = vrot.slane %v1143, 6
        %v1200 = vsel %vm1196, %v1197, %v1199
        %v1201 = vrot.slane %v1172, 6
        %v1202 = vsel %vm1196, %v1198, %v1201
        %v1203 = vrot.slane %v1146, 6
        %v1204 = vrot.slane %v1175, 6
        %v1205 = vrot.slane %v1149, 6
        %v1206 = vsel %vm1196, %v1203, %v1205
        %v1207 = vrot.slane %v1178, 6
        %v1208 = vsel %vm1196, %v1204, %v1207
        %1221 = vst [vmem:[#allocation3] sm:$0xfc] %v1197
        %1222 = vst [vmem:[#allocation3 + $0x8] sm:$0xfc] %v1198
        %1223 = vst [vmem:[#allocation3 + $0x10] sm:$0xff] %v1200
        %1224 = vst [vmem:[#allocation3 + $0x18] sm:$0xff] %v1202
        %1225 = vst [vmem:[#allocation3 + $0x20] sm:$0x3] %v1199
        %1226 = vst [vmem:[#allocation3 + $0x28] sm:$0x3] %v1201
        %1227 = vst [vmem:[#allocation3 + $0x30] sm:$0xfc] %v1203
        %1228 = vst [vmem:[#allocation3 + $0x38] sm:$0xfc] %v1204
        %1229 = vst [vmem:[#allocation3 + $0x40] sm:$0xff] %v1206
        %1230 = vst [vmem:[#allocation3 + $0x48] sm:$0xff] %v1208
        %1231 = vst [vmem:[#allocation3 + $0x50] sm:$0x3] %v1205
        %1232 = vst [vmem:[#allocation3 + $0x58] sm:$0x3] %v1207
        %v1233 = vld [vmem:[#allocation16] ss:$8 sm:$0x3]
        %s1234 = scalar_lea.vmem [#allocation16], 1
        %v1235 = vld [vmem:[%s1234] ss:$8 sm:$0x3]
        %s1236 = scalar_lea.vmem [#allocation16], 2
        %v1237 = vld [vmem:[%s1236] ss:$8 sm:$0x3]
        %s1238 = scalar_lea.vmem [#allocation16], 3
        %v1239 = vld [vmem:[%s1238] ss:$8 sm:$0x3]
        %s1240 = scalar_lea.vmem [#allocation16], 4
        %v1241 = vld [vmem:[%s1240] ss:$8 sm:$0x3]
        %s1242 = scalar_lea.vmem [#allocation16], 5
        %v1243 = vld [vmem:[%s1242] ss:$8 sm:$0x3]
        %s1244 = scalar_lea.vmem [#allocation16], 6
        %v1245 = vld [vmem:[%s1244] ss:$8 sm:$0x3]
        %s1246 = scalar_lea.vmem [#allocation16], 7
        %v1247 = vld [vmem:[%s1246] ss:$8 sm:$0x3]
        %s1248 = scalar_lea.vmem [#allocation16], 16
        %v1249 = vld [vmem:[%s1248] ss:$8 sm:$0x3]
        %s1250 = scalar_lea.vmem [#allocation16], 17
        %v1251 = vld [vmem:[%s1250] ss:$8 sm:$0x3]
        %s1252 = scalar_lea.vmem [#allocation16], 18
        %v1253 = vld [vmem:[%s1252] ss:$8 sm:$0x3]
        %s1254 = scalar_lea.vmem [#allocation16], 19
        %v1255 = vld [vmem:[%s1254] ss:$8 sm:$0x3]
        %s1256 = scalar_lea.vmem [#allocation16], 20
        %v1257 = vld [vmem:[%s1256] ss:$8 sm:$0x3]
        %s1258 = scalar_lea.vmem [#allocation16], 21
        %v1259 = vld [vmem:[%s1258] ss:$8 sm:$0x3]
        %s1260 = scalar_lea.vmem [#allocation16], 22
        %v1261 = vld [vmem:[%s1260] ss:$8 sm:$0x3]
        %s1262 = scalar_lea.vmem [#allocation16], 23
        %v1263 = vld [vmem:[%s1262] ss:$8 sm:$0x3]
        %s1264 = scalar_lea.vmem [#allocation16], 32
        %v1265 = vld [vmem:[%s1264] ss:$8 sm:$0x3]
        %s1266 = scalar_lea.vmem [#allocation16], 33
        %v1267 = vld [vmem:[%s1266] ss:$8 sm:$0x3]
        %s1268 = scalar_lea.vmem [#allocation16], 34
        %v1269 = vld [vmem:[%s1268] ss:$8 sm:$0x3]
        %s1270 = scalar_lea.vmem [#allocation16], 35
        %v1271 = vld [vmem:[%s1270] ss:$8 sm:$0x3]
        %s1272 = scalar_lea.vmem [#allocation16], 36
        %v1273 = vld [vmem:[%s1272] ss:$8 sm:$0x3]
        %s1274 = scalar_lea.vmem [#allocation16], 37
        %v1275 = vld [vmem:[%s1274] ss:$8 sm:$0x3]
        %s1276 = scalar_lea.vmem [#allocation16], 38
        %v1277 = vld [vmem:[%s1276] ss:$8 sm:$0x3]
        %s1278 = scalar_lea.vmem [#allocation16], 39
        %v1279 = vld [vmem:[%s1278] ss:$8 sm:$0x3]
        %s1280 = scalar_lea.vmem [#allocation16], 48
        %v1281 = vld [vmem:[%s1280] ss:$8 sm:$0x3]
        %v1282 = vld [vmem:[#allocation3] sm:$0xff]
        %v1283 = vld [vmem:[#allocation3 + $0x8] sm:$0xff]
        %v1284 = vld [vmem:[#allocation3 + $0x10] sm:$0xff]
        %v1285 = vld [vmem:[#allocation3 + $0x18] sm:$0xff]
        %v1286 = vld [vmem:[#allocation3 + $0x30] sm:$0xff]
        %v1287 = vld [vmem:[#allocation3 + $0x38] sm:$0xff]
        %v1288 = vld [vmem:[#allocation3 + $0x40] sm:$0xff]
        %v1289 = vld [vmem:[#allocation3 + $0x48] sm:$0xff]
        %1290 = vrot.lane.b32.xlu0 %v1282, 32
        %v1291 = vpop.permute.xlu0 %1290
        %1292 = vrot.lane.b32.xlu0 %v1284, 32
        %v1293 = vpop.permute.xlu0 %1292
        %1294 = vrot.lane.b32.xlu0 %v1286, 32
        %v1295 = vpop.permute.xlu0 %1294
        %1296 = vrot.lane.b32.xlu0 %v1288, 32
        %v1297 = vpop.permute.xlu0 %1296
        %1298 = vrot.lane.b32.xlu0 %v1283, 32
        %v1299 = vpop.permute.xlu0 %1298
        %1300 = vrot.lane.b32.xlu0 %v1285, 32
        %v1301 = vpop.permute.xlu0 %1300
        %1302 = vrot.lane.b32.xlu0 %v1287, 32
        %v1303 = vpop.permute.xlu0 %1302
        %1304 = vrot.lane.b32.xlu0 %v1289, 32
        %v1305 = vpop.permute.xlu0 %1304
        %v1306 = vlaneseq
        %v1307 = vand.u32 %v1306, 127
        %vm1308 = vcmp.lt.s32.totalorder %v1307, 32
        %v1309 = vsel %vm1308, %v1291, %v1299
        %v1310 = vsel %vm1308, %v1293, %v1301
        %v1311 = vsel %vm1308, %v1295, %v1303
        %v1312 = vsel %vm1308, %v1297, %v1305
        %v1313 = vsel %vm1308, %v1299, %v1291
        %v1314 = vsel %vm1308, %v1301, %v1293
        %v1315 = vsel %vm1308, %v1303, %v1295
        %v1316 = vsel %vm1308, %v1305, %v1297
        %v1318 = vperm.slane %v1233, 0
        %v1319 = vperm.slane %v1233, 1
        %v1322 = vmul.f32 %v1313, %v1318
        %v1323 = vmul.f32 %v1309, %v1319
        %v1324 = vmul.f32 %v1314, %v1318
        %v1325 = vmul.f32 %v1310, %v1319
        %v1326 = vmul.f32 %v1315, %v1318
        %v1327 = vmul.f32 %v1311, %v1319
        %v1328 = vmul.f32 %v1316, %v1318
        %v1329 = vmul.f32 %v1312, %v1319
        %1330 = vrot.lane.b32.xlu0 %v1282, 16
        %v1331 = vpop.permute.xlu0 %1330
        %1332 = vrot.lane.b32.xlu0 %v1284, 16
        %v1333 = vpop.permute.xlu0 %1332
        %1334 = vrot.lane.b32.xlu0 %v1286, 16
        %v1335 = vpop.permute.xlu0 %1334
        %1336 = vrot.lane.b32.xlu0 %v1288, 16
        %v1337 = vpop.permute.xlu0 %1336
        %1338 = vrot.lane.b32.xlu0 %v1283, 16
        %v1339 = vpop.permute.xlu0 %1338
        %1340 = vrot.lane.b32.xlu0 %v1285, 16
        %v1341 = vpop.permute.xlu0 %1340
        %1342 = vrot.lane.b32.xlu0 %v1287, 16
        %v1343 = vpop.permute.xlu0 %1342
        %1344 = vrot.lane.b32.xlu0 %v1289, 16
        %v1345 = vpop.permute.xlu0 %1344
        %vm1346 = vcmp.lt.s32.totalorder %v1307, 16
        %v1347 = vsel %vm1346, %v1331, %v1339
        %v1348 = vsel %vm1346, %v1333, %v1341
        %v1349 = vsel %vm1346, %v1335, %v1343
        %v1350 = vsel %vm1346, %v1337, %v1345
        %v1351 = vsel %vm1346, %v1339, %v1331
        %v1352 = vsel %vm1346, %v1341, %v1333
        %v1353 = vsel %vm1346, %v1343, %v1335
        %v1354 = vsel %vm1346, %v1345, %v1337
        %v1356 = vperm.slane %v1235, 0
        %v1357 = vperm.slane %v1235, 1
        %v1360 = vmul.f32 %v1351, %v1356
        %v1361 = vmul.f32 %v1347, %v1357
        %v1362 = vmul.f32 %v1352, %v1356
        %v1363 = vmul.f32 %v1348, %v1357
        %v1364 = vmul.f32 %v1353, %v1356
        %v1365 = vmul.f32 %v1349, %v1357
        %v1366 = vmul.f32 %v1354, %v1356
        %v1367 = vmul.f32 %v1350, %v1357
        %v1368 = vadd.f32 %v1322, %v1360
        %v1369 = vadd.f32 %v1323, %v1361
        %v1370 = vadd.f32 %v1324, %v1362
        %v1371 = vadd.f32 %v1325, %v1363
        %v1372 = vadd.f32 %v1326, %v1364
        %v1373 = vadd.f32 %v1327, %v1365
        %v1374 = vadd.f32 %v1328, %v1366
        %v1375 = vadd.f32 %v1329, %v1367
        %v1377 = vperm.slane %v1237, 0
        %v1378 = vperm.slane %v1237, 1
        %v1381 = vmul.f32 %v1282, %v1377
        %v1382 = vmul.f32 %v1283, %v1378
        %v1383 = vmul.f32 %v1284, %v1377
        %v1384 = vmul.f32 %v1285, %v1378
        %v1385 = vmul.f32 %v1286, %v1377
        %v1386 = vmul.f32 %v1287, %v1378
        %v1387 = vmul.f32 %v1288, %v1377
        %v1388 = vmul.f32 %v1289, %v1378
        %v1389 = vadd.f32 %v1368, %v1381
        %v1390 = vadd.f32 %v1369, %v1382
        %v1391 = vadd.f32 %v1370, %v1383
        %v1392 = vadd.f32 %v1371, %v1384
        %v1393 = vadd.f32 %v1372, %v1385
        %v1394 = vadd.f32 %v1373, %v1386
        %v1395 = vadd.f32 %v1374, %v1387
        %v1396 = vadd.f32 %v1375, %v1388
        %1397 = vrot.lane.b32.xlu0 %v1282, 112
        %v1398 = vpop.permute.xlu0 %1397
        %1399 = vrot.lane.b32.xlu0 %v1284, 112
        %v1400 = vpop.permute.xlu0 %1399
        %1401 = vrot.lane.b32.xlu0 %v1286, 112
        %v1402 = vpop.permute.xlu0 %1401
        %1403 = vrot.lane.b32.xlu0 %v1288, 112
        %v1404 = vpop.permute.xlu0 %1403
        %1405 = vrot.lane.b32.xlu0 %v1283, 112
        %v1406 = vpop.permute.xlu0 %1405
        %1407 = vrot.lane.b32.xlu0 %v1285, 112
        %v1408 = vpop.permute.xlu0 %1407
        %1409 = vrot.lane.b32.xlu0 %v1287, 112
        %v1410 = vpop.permute.xlu0 %1409
        %1411 = vrot.lane.b32.xlu0 %v1289, 112
        %v1412 = vpop.permute.xlu0 %1411
        %vm1413 = vcmp.lt.s32.totalorder %v1307, 112
        %v1414 = vsel %vm1413, %v1398, %v1406
        %v1415 = vsel %vm1413, %v1400, %v1408
        %v1416 = vsel %vm1413, %v1402, %v1410
        %v1417 = vsel %vm1413, %v1404, %v1412
        %v1418 = vsel %vm1413, %v1406, %v1398
        %v1419 = vsel %vm1413, %v1408, %v1400
        %v1420 = vsel %vm1413, %v1410, %v1402
        %v1421 = vsel %vm1413, %v1412, %v1404
        %v1423 = vperm.slane %v1239, 0
        %v1424 = vperm.slane %v1239, 1
        %v1427 = vmul.f32 %v1414, %v1423
        %v1428 = vmul.f32 %v1418, %v1424
        %v1429 = vmul.f32 %v1415, %v1423
        %v1430 = vmul.f32 %v1419, %v1424
        %v1431 = vmul.f32 %v1416, %v1423
        %v1432 = vmul.f32 %v1420, %v1424
        %v1433 = vmul.f32 %v1417, %v1423
        %v1434 = vmul.f32 %v1421, %v1424
        %v1435 = vadd.f32 %v1389, %v1427
        %v1436 = vadd.f32 %v1390, %v1428
        %v1437 = vadd.f32 %v1391, %v1429
        %v1438 = vadd.f32 %v1392, %v1430
        %v1439 = vadd.f32 %v1393, %v1431
        %v1440 = vadd.f32 %v1394, %v1432
        %v1441 = vadd.f32 %v1395, %v1433
        %v1442 = vadd.f32 %v1396, %v1434
        %1443 = vrot.lane.b32.xlu0 %v1282, 96
        %v1444 = vpop.permute.xlu0 %1443
        %1445 = vrot.lane.b32.xlu0 %v1284, 96
        %v1446 = vpop.permute.xlu0 %1445
        %1447 = vrot.lane.b32.xlu0 %v1286, 96
        %v1448 = vpop.permute.xlu0 %1447
        %1449 = vrot.lane.b32.xlu0 %v1288, 96
        %v1450 = vpop.permute.xlu0 %1449
        %1451 = vrot.lane.b32.xlu0 %v1283, 96
        %v1452 = vpop.permute.xlu0 %1451
        %1453 = vrot.lane.b32.xlu0 %v1285, 96
        %v1454 = vpop.permute.xlu0 %1453
        %1455 = vrot.lane.b32.xlu0 %v1287, 96
        %v1456 = vpop.permute.xlu0 %1455
        %1457 = vrot.lane.b32.xlu0 %v1289, 96
        %v1458 = vpop.permute.xlu0 %1457
        %vm1459 = vcmp.lt.s32.totalorder %v1307, 96
        %v1460 = vsel %vm1459, %v1444, %v1452
        %v1461 = vsel %vm1459, %v1446, %v1454
        %v1462 = vsel %vm1459, %v1448, %v1456
        %v1463 = vsel %vm1459, %v1450, %v1458
        %v1464 = vsel %vm1459, %v1452, %v1444
        %v1465 = vsel %vm1459, %v1454, %v1446
        %v1466 = vsel %vm1459, %v1456, %v1448
        %v1467 = vsel %vm1459, %v1458, %v1450
        %v1469 = vperm.slane %v1241, 0
        %v1470 = vperm.slane %v1241, 1
        %v1473 = vmul.f32 %v1460, %v1469
        %v1474 = vmul.f32 %v1464, %v1470
        %v1475 = vmul.f32 %v1461, %v1469
        %v1476 = vmul.f32 %v1465, %v1470
        %v1477 = vmul.f32 %v1462, %v1469
        %v1478 = vmul.f32 %v1466, %v1470
        %v1479 = vmul.f32 %v1463, %v1469
        %v1480 = vmul.f32 %v1467, %v1470
        %v1481 = vadd.f32 %v1435, %v1473
        %v1482 = vadd.f32 %v1436, %v1474
        %v1483 = vadd.f32 %v1437, %v1475
        %v1484 = vadd.f32 %v1438, %v1476
        %v1485 = vadd.f32 %v1439, %v1477
        %v1486 = vadd.f32 %v1440, %v1478
        %v1487 = vadd.f32 %v1441, %v1479
        %v1488 = vadd.f32 %v1442, %v1480
        %v1489 = vld [vmem:[#allocation3] sm:$0xfe]
        %v1490 = vld [vmem:[#allocation3 + $0x8] sm:$0xfe]
        %v1491 = vld [vmem:[#allocation3 + $0x10] sm:$0xff]
        %v1492 = vld [vmem:[#allocation3 + $0x18] sm:$0xff]
        %v1493 = vld [vmem:[#allocation3 + $0x20] sm:$0x1]
        %v1494 = vld [vmem:[#allocation3 + $0x28] sm:$0x1]
        %v1495 = vld [vmem:[#allocation3 + $0x30] sm:$0xfe]
        %v1496 = vld [vmem:[#allocation3 + $0x38] sm:$0xfe]
        %v1497 = vld [vmem:[#allocation3 + $0x40] sm:$0xff]
        %v1498 = vld [vmem:[#allocation3 + $0x48] sm:$0xff]
        %v1499 = vld [vmem:[#allocation3 + $0x50] sm:$0x1]
        %v1500 = vld [vmem:[#allocation3 + $0x58] sm:$0x1]
        %vm1513 = vcmask 1046528
        %v1514 = vrot.slane %v1489, 1
        %v1515 = vrot.slane %v1491, 1
        %v1516 = vsel %vm1513, %v1514, %v1515
        %v1517 = vrot.slane %v1490, 1
        %v1518 = vrot.slane %v1492, 1
        %v1519 = vsel %vm1513, %v1517, %v1518
        %v1520 = vrot.slane %v1493, 1
        %v1521 = vsel %vm1513, %v1515, %v1520
        %v1522 = vrot.slane %v1494, 1
        %v1523 = vsel %vm1513, %v1518, %v1522
        %v1524 = vrot.slane %v1495, 1
        %v1525 = vrot.slane %v1497, 1
        %v1526 = vsel %vm1513, %v1524, %v1525
        %v1527 = vrot.slane %v1496, 1
        %v1528 = vrot.slane %v1498, 1
        %v1529 = vsel %vm1513, %v1527, %v1528
        %v1530 = vrot.slane %v1499, 1
        %v1531 = vsel %vm1513, %v1525, %v1530
        %v1532 = vrot.slane %v1500, 1
        %v1533 = vsel %vm1513, %v1528, %v1532
        %1542 = vrot.lane.b32.xlu0 %v1516, 32
        %v1543 = vpop.permute.xlu0 %1542
        %1544 = vrot.lane.b32.xlu0 %v1521, 32
        %v1545 = vpop.permute.xlu0 %1544
        %1546 = vrot.lane.b32.xlu0 %v1526, 32
        %v1547 = vpop.permute.xlu0 %1546
        %1548 = vrot.lane.b32.xlu0 %v1531, 32
        %v1549 = vpop.permute.xlu0 %1548
        %1550 = vrot.lane.b32.xlu0 %v1519, 32
        %v1551 = vpop.permute.xlu0 %1550
        %1552 = vrot.lane.b32.xlu0 %v1523, 32
        %v1553 = vpop.permute.xlu0 %1552
        %1554 = vrot.lane.b32.xlu0 %v1529, 32
        %v1555 = vpop.permute.xlu0 %1554
        %1556 = vrot.lane.b32.xlu0 %v1533, 32
        %v1557 = vpop.permute.xlu0 %1556
        %v1558 = vsel %vm1308, %v1543, %v1551
        %v1559 = vsel %vm1308, %v1545, %v1553
        %v1560 = vsel %vm1308, %v1547, %v1555
        %v1561 = vsel %vm1308, %v1549, %v1557
        %v1562 = vsel %vm1308, %v1551, %v1543
        %v1563 = vsel %vm1308, %v1553, %v1545
        %v1564 = vsel %vm1308, %v1555, %v1547
        %v1565 = vsel %vm1308, %v1557, %v1549
        %v1567 = vperm.slane %v1243, 0
        %v1568 = vperm.slane %v1243, 1
        %v1571 = vmul.f32 %v1562, %v1567
        %v1572 = vmul.f32 %v1558, %v1568
        %v1573 = vmul.f32 %v1563, %v1567
        %v1574 = vmul.f32 %v1559, %v1568
        %v1575 = vmul.f32 %v1564, %v1567
        %v1576 = vmul.f32 %v1560, %v1568
        %v1577 = vmul.f32 %v1565, %v1567
        %v1578 = vmul.f32 %v1561, %v1568
        %1579 = vrot.lane.b32.xlu0 %v1516, 16
        %v1580 = vpop.permute.xlu0 %1579
        %1581 = vrot.lane.b32.xlu0 %v1521, 16
        %v1582 = vpop.permute.xlu0 %1581
        %1583 = vrot.lane.b32.xlu0 %v1526, 16
        %v1584 = vpop.permute.xlu0 %1583
        %1585 = vrot.lane.b32.xlu0 %v1531, 16
        %v1586 = vpop.permute.xlu0 %1585
        %1587 = vrot.lane.b32.xlu0 %v1519, 16
        %v1588 = vpop.permute.xlu0 %1587
        %1589 = vrot.lane.b32.xlu0 %v1523, 16
        %v1590 = vpop.permute.xlu0 %1589
        %1591 = vrot.lane.b32.xlu0 %v1529, 16
        %v1592 = vpop.permute.xlu0 %1591
        %1593 = vrot.lane.b32.xlu0 %v1533, 16
        %v1594 = vpop.permute.xlu0 %1593
        %v1595 = vsel %vm1346, %v1580, %v1588
        %v1596 = vsel %vm1346, %v1582, %v1590
        %v1597 = vsel %vm1346, %v1584, %v1592
        %v1598 = vsel %vm1346, %v1586, %v1594
        %v1599 = vsel %vm1346, %v1588, %v1580
        %v1600 = vsel %vm1346, %v1590, %v1582
        %v1601 = vsel %vm1346, %v1592, %v1584
        %v1602 = vsel %vm1346, %v1594, %v1586
        %v1604 = vperm.slane %v1245, 0
        %v1605 = vperm.slane %v1245, 1
        %v1608 = vmul.f32 %v1599, %v1604
        %v1609 = vmul.f32 %v1595, %v1605
        %v1610 = vmul.f32 %v1600, %v1604
        %v1611 = vmul.f32 %v1596, %v1605
        %v1612 = vmul.f32 %v1601, %v1604
        %v1613 = vmul.f32 %v1597, %v1605
        %v1614 = vmul.f32 %v1602, %v1604
        %v1615 = vmul.f32 %v1598, %v1605
        %v1616 = vadd.f32 %v1571, %v1608
        %v1617 = vadd.f32 %v1572, %v1609
        %v1618 = vadd.f32 %v1573, %v1610
        %v1619 = vadd.f32 %v1574, %v1611
        %v1620 = vadd.f32 %v1575, %v1612
        %v1621 = vadd.f32 %v1576, %v1613
        %v1622 = vadd.f32 %v1577, %v1614
        %v1623 = vadd.f32 %v1578, %v1615
        %v1625 = vperm.slane %v1247, 0
        %v1626 = vperm.slane %v1247, 1
        %v1629 = vmul.f32 %v1516, %v1625
        %v1630 = vmul.f32 %v1519, %v1626
        %v1631 = vmul.f32 %v1521, %v1625
        %v1632 = vmul.f32 %v1523, %v1626
        %v1633 = vmul.f32 %v1526, %v1625
        %v1634 = vmul.f32 %v1529, %v1626
        %v1635 = vmul.f32 %v1531, %v1625
        %v1636 = vmul.f32 %v1533, %v1626
        %v1637 = vadd.f32 %v1616, %v1629
        %v1638 = vadd.f32 %v1617, %v1630
        %v1639 = vadd.f32 %v1618, %v1631
        %v1640 = vadd.f32 %v1619, %v1632
        %v1641 = vadd.f32 %v1620, %v1633
        %v1642 = vadd.f32 %v1621, %v1634
        %v1643 = vadd.f32 %v1622, %v1635
        %v1644 = vadd.f32 %v1623, %v1636
        %1645 = vrot.lane.b32.xlu0 %v1516, 112
        %v1646 = vpop.permute.xlu0 %1645
        %1647 = vrot.lane.b32.xlu0 %v1521, 112
        %v1648 = vpop.permute.xlu0 %1647
        %1649 = vrot.lane.b32.xlu0 %v1526, 112
        %v1650 = vpop.permute.xlu0 %1649
        %1651 = vrot.lane.b32.xlu0 %v1531, 112
        %v1652 = vpop.permute.xlu0 %1651
        %1653 = vrot.lane.b32.xlu0 %v1519, 112
        %v1654 = vpop.permute.xlu0 %1653
        %1655 = vrot.lane.b32.xlu0 %v1523, 112
        %v1656 = vpop.permute.xlu0 %1655
        %1657 = vrot.lane.b32.xlu0 %v1529, 112
        %v1658 = vpop.permute.xlu0 %1657
        %1659 = vrot.lane.b32.xlu0 %v1533, 112
        %v1660 = vpop.permute.xlu0 %1659
        %v1661 = vsel %vm1413, %v1646, %v1654
        %v1662 = vsel %vm1413, %v1648, %v1656
        %v1663 = vsel %vm1413, %v1650, %v1658
        %v1664 = vsel %vm1413, %v1652, %v1660
        %v1665 = vsel %vm1413, %v1654, %v1646
        %v1666 = vsel %vm1413, %v1656, %v1648
        %v1667 = vsel %vm1413, %v1658, %v1650
        %v1668 = vsel %vm1413, %v1660, %v1652
        %v1670 = vperm.slane %v1249, 0
        %v1671 = vperm.slane %v1249, 1
        %v1674 = vmul.f32 %v1661, %v1670
        %v1675 = vmul.f32 %v1665, %v1671
        %v1676 = vmul.f32 %v1662, %v1670
        %v1677 = vmul.f32 %v1666, %v1671
        %v1678 = vmul.f32 %v1663, %v1670
        %v1679 = vmul.f32 %v1667, %v1671
        %v1680 = vmul.f32 %v1664, %v1670
        %v1681 = vmul.f32 %v1668, %v1671
        %v1682 = vadd.f32 %v1637, %v1674
        %v1683 = vadd.f32 %v1638, %v1675
        %v1684 = vadd.f32 %v1639, %v1676
        %v1685 = vadd.f32 %v1640, %v1677
        %v1686 = vadd.f32 %v1641, %v1678
        %v1687 = vadd.f32 %v1642, %v1679
        %v1688 = vadd.f32 %v1643, %v1680
        %v1689 = vadd.f32 %v1644, %v1681
        %1690 = vrot.lane.b32.xlu0 %v1516, 96
        %v1691 = vpop.permute.xlu0 %1690
        %1692 = vrot.lane.b32.xlu0 %v1521, 96
        %v1693 = vpop.permute.xlu0 %1692
        %1694 = vrot.lane.b32.xlu0 %v1526, 96
        %v1695 = vpop.permute.xlu0 %1694
        %1696 = vrot.lane.b32.xlu0 %v1531, 96
        %v1697 = vpop.permute.xlu0 %1696
        %1698 = vrot.lane.b32.xlu0 %v1519, 96
        %v1699 = vpop.permute.xlu0 %1698
        %1700 = vrot.lane.b32.xlu0 %v1523, 96
        %v1701 = vpop.permute.xlu0 %1700
        %1702 = vrot.lane.b32.xlu0 %v1529, 96
        %v1703 = vpop.permute.xlu0 %1702
        %1704 = vrot.lane.b32.xlu0 %v1533, 96
        %v1705 = vpop.permute.xlu0 %1704
        %v1706 = vsel %vm1459, %v1691, %v1699
        %v1707 = vsel %vm1459, %v1693, %v1701
        %v1708 = vsel %vm1459, %v1695, %v1703
        %v1709 = vsel %vm1459, %v1697, %v1705
        %v1710 = vsel %vm1459, %v1699, %v1691
        %v1711 = vsel %vm1459, %v1701, %v1693
        %v1712 = vsel %vm1459, %v1703, %v1695
        %v1713 = vsel %vm1459, %v1705, %v1697
        %v1715 = vperm.slane %v1251, 0
        %v1716 = vperm.slane %v1251, 1
        %v1719 = vmul.f32 %v1706, %v1715
        %v1720 = vmul.f32 %v1710, %v1716
        %v1721 = vmul.f32 %v1707, %v1715
        %v1722 = vmul.f32 %v1711, %v1716
        %v1723 = vmul.f32 %v1708, %v1715
        %v1724 = vmul.f32 %v1712, %v1716
        %v1725 = vmul.f32 %v1709, %v1715
        %v1726 = vmul.f32 %v1713, %v1716
        %v1727 = vadd.f32 %v1682, %v1719
        %v1728 = vadd.f32 %v1683, %v1720
        %v1729 = vadd.f32 %v1684, %v1721
        %v1730 = vadd.f32 %v1685, %v1722
        %v1731 = vadd.f32 %v1686, %v1723
        %v1732 = vadd.f32 %v1687, %v1724
        %v1733 = vadd.f32 %v1688, %v1725
        %v1734 = vadd.f32 %v1689, %v1726
        %v1735 = vld [vmem:[#allocation3] sm:$0xfc]
        %v1736 = vld [vmem:[#allocation3 + $0x8] sm:$0xfc]
        %v1737 = vld [vmem:[#allocation3 + $0x20] sm:$0x3]
        %v1738 = vld [vmem:[#allocation3 + $0x28] sm:$0x3]
        %v1739 = vld [vmem:[#allocation3 + $0x30] sm:$0xfc]
        %v1740 = vld [vmem:[#allocation3 + $0x38] sm:$0xfc]
        %v1741 = vld [vmem:[#allocation3 + $0x50] sm:$0x3]
        %v1742 = vld [vmem:[#allocation3 + $0x58] sm:$0x3]
        %vm1751 = vcmask 1045504
        %v1752 = vrot.slane %v1735, 2
        %v1753 = vrot.slane %v1491, 2
        %v1754 = vsel %vm1751, %v1752, %v1753
        %v1755 = vrot.slane %v1736, 2
        %v1756 = vrot.slane %v1492, 2
        %v1757 = vsel %vm1751, %v1755, %v1756
        %v1758 = vrot.slane %v1737, 2
        %v1759 = vsel %vm1751, %v1753, %v1758
        %v1760 = vrot.slane %v1738, 2
        %v1761 = vsel %vm1751, %v1756, %v1760
        %v1762 = vrot.slane %v1739, 2
        %v1763 = vrot.slane %v1497, 2
        %v1764 = vsel %vm1751, %v1762, %v1763
        %v1765 = vrot.slane %v1740, 2
        %v1766 = vrot.slane %v1498, 2
        %v1767 = vsel %vm1751, %v1765, %v1766
        %v1768 = vrot.slane %v1741, 2
        %v1769 = vsel %vm1751, %v1763, %v1768
        %v1770 = vrot.slane %v1742, 2
        %v1771 = vsel %vm1751, %v1766, %v1770
        %1780 = vrot.lane.b32.xlu0 %v1754, 32
        %v1781 = vpop.permute.xlu0 %1780
        %1782 = vrot.lane.b32.xlu0 %v1759, 32
        %v1783 = vpop.permute.xlu0 %1782
        %1784 = vrot.lane.b32.xlu0 %v1764, 32
        %v1785 = vpop.permute.xlu0 %1784
        %1786 = vrot.lane.b32.xlu0 %v1769, 32
        %v1787 = vpop.permute.xlu0 %1786
        %1788 = vrot.lane.b32.xlu0 %v1757, 32
        %v1789 = vpop.permute.xlu0 %1788
        %1790 = vrot.lane.b32.xlu0 %v1761, 32
        %v1791 = vpop.permute.xlu0 %1790
        %1792 = vrot.lane.b32.xlu0 %v1767, 32
        %v1793 = vpop.permute.xlu0 %1792
        %1794 = vrot.lane.b32.xlu0 %v1771, 32
        %v1795 = vpop.permute.xlu0 %1794
        %v1796 = vsel %vm1308, %v1781, %v1789
        %v1797 = vsel %vm1308, %v1783, %v1791
        %v1798 = vsel %vm1308, %v1785, %v1793
        %v1799 = vsel %vm1308, %v1787, %v1795
        %v1800 = vsel %vm1308, %v1789, %v1781
        %v1801 = vsel %vm1308, %v1791, %v1783
        %v1802 = vsel %vm1308, %v1793, %v1785
        %v1803 = vsel %vm1308, %v1795, %v1787
        %v1805 = vperm.slane %v1253, 0
        %v1806 = vperm.slane %v1253, 1
        %v1809 = vmul.f32 %v1800, %v1805
        %v1810 = vmul.f32 %v1796, %v1806
        %v1811 = vmul.f32 %v1801, %v1805
        %v1812 = vmul.f32 %v1797, %v1806
        %v1813 = vmul.f32 %v1802, %v1805
        %v1814 = vmul.f32 %v1798, %v1806
        %v1815 = vmul.f32 %v1803, %v1805
        %v1816 = vmul.f32 %v1799, %v1806
        %1817 = vrot.lane.b32.xlu0 %v1754, 16
        %v1818 = vpop.permute.xlu0 %1817
        %1819 = vrot.lane.b32.xlu0 %v1759, 16
        %v1820 = vpop.permute.xlu0 %1819
        %1821 = vrot.lane.b32.xlu0 %v1764, 16
        %v1822 = vpop.permute.xlu0 %1821
        %1823 = vrot.lane.b32.xlu0 %v1769, 16
        %v1824 = vpop.permute.xlu0 %1823
        %1825 = vrot.lane.b32.xlu0 %v1757, 16
        %v1826 = vpop.permute.xlu0 %1825
        %1827 = vrot.lane.b32.xlu0 %v1761, 16
        %v1828 = vpop.permute.xlu0 %1827
        %1829 = vrot.lane.b32.xlu0 %v1767, 16
        %v1830 = vpop.permute.xlu0 %1829
        %1831 = vrot.lane.b32.xlu0 %v1771, 16
        %v1832 = vpop.permute.xlu0 %1831
        %v1833 = vsel %vm1346, %v1818, %v1826
        %v1834 = vsel %vm1346, %v1820, %v1828
        %v1835 = vsel %vm1346, %v1822, %v1830
        %v1836 = vsel %vm1346, %v1824, %v1832
        %v1837 = vsel %vm1346, %v1826, %v1818
        %v1838 = vsel %vm1346, %v1828, %v1820
        %v1839 = vsel %vm1346, %v1830, %v1822
        %v1840 = vsel %vm1346, %v1832, %v1824
        %v1842 = vperm.slane %v1255, 0
        %v1843 = vperm.slane %v1255, 1
        %v1846 = vmul.f32 %v1837, %v1842
        %v1847 = vmul.f32 %v1833, %v1843
        %v1848 = vmul.f32 %v1838, %v1842
        %v1849 = vmul.f32 %v1834, %v1843
        %v1850 = vmul.f32 %v1839, %v1842
        %v1851 = vmul.f32 %v1835, %v1843
        %v1852 = vmul.f32 %v1840, %v1842
        %v1853 = vmul.f32 %v1836, %v1843
        %v1854 = vadd.f32 %v1809, %v1846
        %v1855 = vadd.f32 %v1810, %v1847
        %v1856 = vadd.f32 %v1811, %v1848
        %v1857 = vadd.f32 %v1812, %v1849
        %v1858 = vadd.f32 %v1813, %v1850
        %v1859 = vadd.f32 %v1814, %v1851
        %v1860 = vadd.f32 %v1815, %v1852
        %v1861 = vadd.f32 %v1816, %v1853
        %v1863 = vperm.slane %v1257, 0
        %v1864 = vperm.slane %v1257, 1
        %v1867 = vmul.f32 %v1754, %v1863
        %v1868 = vmul.f32 %v1757, %v1864
        %v1869 = vmul.f32 %v1759, %v1863
        %v1870 = vmul.f32 %v1761, %v1864
        %v1871 = vmul.f32 %v1764, %v1863
        %v1872 = vmul.f32 %v1767, %v1864
        %v1873 = vmul.f32 %v1769, %v1863
        %v1874 = vmul.f32 %v1771, %v1864
        %v1875 = vadd.f32 %v1854, %v1867
        %v1876 = vadd.f32 %v1855, %v1868
        %v1877 = vadd.f32 %v1856, %v1869
        %v1878 = vadd.f32 %v1857, %v1870
        %v1879 = vadd.f32 %v1858, %v1871
        %v1880 = vadd.f32 %v1859, %v1872
        %v1881 = vadd.f32 %v1860, %v1873
        %v1882 = vadd.f32 %v1861, %v1874
        %1883 = vrot.lane.b32.xlu0 %v1754, 112
        %v1884 = vpop.permute.xlu0 %1883
        %1885 = vrot.lane.b32.xlu0 %v1759, 112
        %v1886 = vpop.permute.xlu0 %1885
        %1887 = vrot.lane.b32.xlu0 %v1764, 112
        %v1888 = vpop.permute.xlu0 %1887
        %1889 = vrot.lane.b32.xlu0 %v1769, 112
        %v1890 = vpop.permute.xlu0 %1889
        %1891 = vrot.lane.b32.xlu0 %v1757, 112
        %v1892 = vpop.permute.xlu0 %1891
        %1893 = vrot.lane.b32.xlu0 %v1761, 112
        %v1894 = vpop.permute.xlu0 %1893
        %1895 = vrot.lane.b32.xlu0 %v1767, 112
        %v1896 = vpop.permute.xlu0 %1895
        %1897 = vrot.lane.b32.xlu0 %v1771, 112
        %v1898 = vpop.permute.xlu0 %1897
        %v1899 = vsel %vm1413, %v1884, %v1892
        %v1900 = vsel %vm1413, %v1886, %v1894
        %v1901 = vsel %vm1413, %v1888, %v1896
        %v1902 = vsel %vm1413, %v1890, %v1898
        %v1903 = vsel %vm1413, %v1892, %v1884
        %v1904 = vsel %vm1413, %v1894, %v1886
        %v1905 = vsel %vm1413, %v1896, %v1888
        %v1906 = vsel %vm1413, %v1898, %v1890
        %v1908 = vperm.slane %v1259, 0
        %v1909 = vperm.slane %v1259, 1
        %v1912 = vmul.f32 %v1899, %v1908
        %v1913 = vmul.f32 %v1903, %v1909
        %v1914 = vmul.f32 %v1900, %v1908
        %v1915 = vmul.f32 %v1904, %v1909
        %v1916 = vmul.f32 %v1901, %v1908
        %v1917 = vmul.f32 %v1905, %v1909
        %v1918 = vmul.f32 %v1902, %v1908
        %v1919 = vmul.f32 %v1906, %v1909
        %v1920 = vadd.f32 %v1875, %v1912
        %v1921 = vadd.f32 %v1876, %v1913
        %v1922 = vadd.f32 %v1877, %v1914
        %v1923 = vadd.f32 %v1878, %v1915
        %v1924 = vadd.f32 %v1879, %v1916
        %v1925 = vadd.f32 %v1880, %v1917
        %v1926 = vadd.f32 %v1881, %v1918
        %v1927 = vadd.f32 %v1882, %v1919
        %1928 = vrot.lane.b32.xlu0 %v1754, 96
        %v1929 = vpop.permute.xlu0 %1928
        %1930 = vrot.lane.b32.xlu0 %v1759, 96
        %v1931 = vpop.permute.xlu0 %1930
        %1932 = vrot.lane.b32.xlu0 %v1764, 96
        %v1933 = vpop.permute.xlu0 %1932
        %1934 = vrot.lane.b32.xlu0 %v1769, 96
        %v1935 = vpop.permute.xlu0 %1934
        %1936 = vrot.lane.b32.xlu0 %v1757, 96
        %v1937 = vpop.permute.xlu0 %1936
        %1938 = vrot.lane.b32.xlu0 %v1761, 96
        %v1939 = vpop.permute.xlu0 %1938
        %1940 = vrot.lane.b32.xlu0 %v1767, 96
        %v1941 = vpop.permute.xlu0 %1940
        %1942 = vrot.lane.b32.xlu0 %v1771, 96
        %v1943 = vpop.permute.xlu0 %1942
        %v1944 = vsel %vm1459, %v1929, %v1937
        %v1945 = vsel %vm1459, %v1931, %v1939
        %v1946 = vsel %vm1459, %v1933, %v1941
        %v1947 = vsel %vm1459, %v1935, %v1943
        %v1948 = vsel %vm1459, %v1937, %v1929
        %v1949 = vsel %vm1459, %v1939, %v1931
        %v1950 = vsel %vm1459, %v1941, %v1933
        %v1951 = vsel %vm1459, %v1943, %v1935
        %v1953 = vperm.slane %v1261, 0
        %v1954 = vperm.slane %v1261, 1
        %v1957 = vmul.f32 %v1944, %v1953
        %v1958 = vmul.f32 %v1948, %v1954
        %v1959 = vmul.f32 %v1945, %v1953
        %v1960 = vmul.f32 %v1949, %v1954
        %v1961 = vmul.f32 %v1946, %v1953
        %v1962 = vmul.f32 %v1950, %v1954
        %v1963 = vmul.f32 %v1947, %v1953
        %v1964 = vmul.f32 %v1951, %v1954
        %v1965 = vadd.f32 %v1920, %v1957
        %v1966 = vadd.f32 %v1921, %v1958
        %v1967 = vadd.f32 %v1922, %v1959
        %v1968 = vadd.f32 %v1923, %v1960
        %v1969 = vadd.f32 %v1924, %v1961
        %v1970 = vadd.f32 %v1925, %v1962
        %v1971 = vadd.f32 %v1926, %v1963
        %v1972 = vadd.f32 %v1927, %v1964
        %v1973 = vld [vmem:[#allocation3] sm:$0xf8]
        %v1974 = vld [vmem:[#allocation3 + $0x8] sm:$0xf8]
        %v1975 = vld [vmem:[#allocation3 + $0x20] sm:$0x7]
        %v1976 = vld [vmem:[#allocation3 + $0x28] sm:$0x7]
        %v1977 = vld [vmem:[#allocation3 + $0x30] sm:$0xf8]
        %v1978 = vld [vmem:[#allocation3 + $0x38] sm:$0xf8]
        %v1979 = vld [vmem:[#allocation3 + $0x50] sm:$0x7]
        %v1980 = vld [vmem:[#allocation3 + $0x58] sm:$0x7]
        %vm1989 = vcmask 1044480
        %v1990 = vrot.slane %v1973, 3
        %v1991 = vrot.slane %v1491, 3
        %v1992 = vsel %vm1989, %v1990, %v1991
        %v1993 = vrot.slane %v1974, 3
        %v1994 = vrot.slane %v1492, 3
        %v1995 = vsel %vm1989, %v1993, %v1994
        %v1996 = vrot.slane %v1975, 3
        %v1997 = vsel %vm1989, %v1991, %v1996
        %v1998 = vrot.slane %v1976, 3
        %v1999 = vsel %vm1989, %v1994, %v1998
        %v2000 = vrot.slane %v1977, 3
        %v2001 = vrot.slane %v1497, 3
        %v2002 = vsel %vm1989, %v2000, %v2001
        %v2003 = vrot.slane %v1978, 3
        %v2004 = vrot.slane %v1498, 3
        %v2005 = vsel %vm1989, %v2003, %v2004
        %v2006 = vrot.slane %v1979, 3
        %v2007 = vsel %vm1989, %v2001, %v2006
        %v2008 = vrot.slane %v1980, 3
        %v2009 = vsel %vm1989, %v2004, %v2008
        %2018 = vrot.lane.b32.xlu0 %v1992, 32
        %v2019 = vpop.permute.xlu0 %2018
        %2020 = vrot.lane.b32.xlu0 %v1997, 32
        %v2021 = vpop.permute.xlu0 %2020
        %2022 = vrot.lane.b32.xlu0 %v2002, 32
        %v2023 = vpop.permute.xlu0 %2022
        %2024 = vrot.lane.b32.xlu0 %v2007, 32
        %v2025 = vpop.permute.xlu0 %2024
        %2026 = vrot.lane.b32.xlu0 %v1995, 32
        %v2027 = vpop.permute.xlu0 %2026
        %2028 = vrot.lane.b32.xlu0 %v1999, 32
        %v2029 = vpop.permute.xlu0 %2028
        %2030 = vrot.lane.b32.xlu0 %v2005, 32
        %v2031 = vpop.permute.xlu0 %2030
        %2032 = vrot.lane.b32.xlu0 %v2009, 32
        %v2033 = vpop.permute.xlu0 %2032
        %v2034 = vsel %vm1308, %v2019, %v2027
        %v2035 = vsel %vm1308, %v2021, %v2029
        %v2036 = vsel %vm1308, %v2023, %v2031
        %v2037 = vsel %vm1308, %v2025, %v2033
        %v2038 = vsel %vm1308, %v2027, %v2019
        %v2039 = vsel %vm1308, %v2029, %v2021
        %v2040 = vsel %vm1308, %v2031, %v2023
        %v2041 = vsel %vm1308, %v2033, %v2025
        %v2043 = vperm.slane %v1263, 0
        %v2044 = vperm.slane %v1263, 1
        %v2047 = vmul.f32 %v2038, %v2043
        %v2048 = vmul.f32 %v2034, %v2044
        %v2049 = vmul.f32 %v2039, %v2043
        %v2050 = vmul.f32 %v2035, %v2044
        %v2051 = vmul.f32 %v2040, %v2043
        %v2052 = vmul.f32 %v2036, %v2044
        %v2053 = vmul.f32 %v2041, %v2043
        %v2054 = vmul.f32 %v2037, %v2044
        %2055 = vrot.lane.b32.xlu0 %v1992, 16
        %v2056 = vpop.permute.xlu0 %2055
        %2057 = vrot.lane.b32.xlu0 %v1997, 16
        %v2058 = vpop.permute.xlu0 %2057
        %2059 = vrot.lane.b32.xlu0 %v2002, 16
        %v2060 = vpop.permute.xlu0 %2059
        %2061 = vrot.lane.b32.xlu0 %v2007, 16
        %v2062 = vpop.permute.xlu0 %2061
        %2063 = vrot.lane.b32.xlu0 %v1995, 16
        %v2064 = vpop.permute.xlu0 %2063
        %2065 = vrot.lane.b32.xlu0 %v1999, 16
        %v2066 = vpop.permute.xlu0 %2065
        %2067 = vrot.lane.b32.xlu0 %v2005, 16
        %v2068 = vpop.permute.xlu0 %2067
        %2069 = vrot.lane.b32.xlu0 %v2009, 16
        %v2070 = vpop.permute.xlu0 %2069
        %v2071 = vsel %vm1346, %v2056, %v2064
        %v2072 = vsel %vm1346, %v2058, %v2066
        %v2073 = vsel %vm1346, %v2060, %v2068
        %v2074 = vsel %vm1346, %v2062, %v2070
        %v2075 = vsel %vm1346, %v2064, %v2056
        %v2076 = vsel %vm1346, %v2066, %v2058
        %v2077 = vsel %vm1346, %v2068, %v2060
        %v2078 = vsel %vm1346, %v2070, %v2062
        %v2080 = vperm.slane %v1265, 0
        %v2081 = vperm.slane %v1265, 1
        %v2084 = vmul.f32 %v2075, %v2080
        %v2085 = vmul.f32 %v2071, %v2081
        %v2086 = vmul.f32 %v2076, %v2080
        %v2087 = vmul.f32 %v2072, %v2081
        %v2088 = vmul.f32 %v2077, %v2080
        %v2089 = vmul.f32 %v2073, %v2081
        %v2090 = vmul.f32 %v2078, %v2080
        %v2091 = vmul.f32 %v2074, %v2081
        %v2092 = vadd.f32 %v2047, %v2084
        %v2093 = vadd.f32 %v2048, %v2085
        %v2094 = vadd.f32 %v2049, %v2086
        %v2095 = vadd.f32 %v2050, %v2087
        %v2096 = vadd.f32 %v2051, %v2088
        %v2097 = vadd.f32 %v2052, %v2089
        %v2098 = vadd.f32 %v2053, %v2090
        %v2099 = vadd.f32 %v2054, %v2091
        %v2101 = vperm.slane %v1267, 0
        %v2102 = vperm.slane %v1267, 1
        %v2105 = vmul.f32 %v1992, %v2101
        %v2106 = vmul.f32 %v1995, %v2102
        %v2107 = vmul.f32 %v1997, %v2101
        %v2108 = vmul.f32 %v1999, %v2102
        %v2109 = vmul.f32 %v2002, %v2101
        %v2110 = vmul.f32 %v2005, %v2102
        %v2111 = vmul.f32 %v2007, %v2101
        %v2112 = vmul.f32 %v2009, %v2102
        %v2113 = vadd.f32 %v2092, %v2105
        %v2114 = vadd.f32 %v2093, %v2106
        %v2115 = vadd.f32 %v2094, %v2107
        %v2116 = vadd.f32 %v2095, %v2108
        %v2117 = vadd.f32 %v2096, %v2109
        %v2118 = vadd.f32 %v2097, %v2110
        %v2119 = vadd.f32 %v2098, %v2111
        %v2120 = vadd.f32 %v2099, %v2112
        %2121 = vrot.lane.b32.xlu0 %v1992, 112
        %v2122 = vpop.permute.xlu0 %2121
        %2123 = vrot.lane.b32.xlu0 %v1997, 112
        %v2124 = vpop.permute.xlu0 %2123
        %2125 = vrot.lane.b32.xlu0 %v2002, 112
        %v2126 = vpop.permute.xlu0 %2125
        %2127 = vrot.lane.b32.xlu0 %v2007, 112
        %v2128 = vpop.permute.xlu0 %2127
        %2129 = vrot.lane.b32.xlu0 %v1995, 112
        %v2130 = vpop.permute.xlu0 %2129
        %2131 = vrot.lane.b32.xlu0 %v1999, 112
        %v2132 = vpop.permute.xlu0 %2131
        %2133 = vrot.lane.b32.xlu0 %v2005, 112
        %v2134 = vpop.permute.xlu0 %2133
        %2135 = vrot.lane.b32.xlu0 %v2009, 112
        %v2136 = vpop.permute.xlu0 %2135
        %v2137 = vsel %vm1413, %v2122, %v2130
        %v2138 = vsel %vm1413, %v2124, %v2132
        %v2139 = vsel %vm1413, %v2126, %v2134
        %v2140 = vsel %vm1413, %v2128, %v2136
        %v2141 = vsel %vm1413, %v2130, %v2122
        %v2142 = vsel %vm1413, %v2132, %v2124
        %v2143 = vsel %vm1413, %v2134, %v2126
        %v2144 = vsel %vm1413, %v2136, %v2128
        %v2146 = vperm.slane %v1269, 0
        %v2147 = vperm.slane %v1269, 1
        %v2150 = vmul.f32 %v2137, %v2146
        %v2151 = vmul.f32 %v2141, %v2147
        %v2152 = vmul.f32 %v2138, %v2146
        %v2153 = vmul.f32 %v2142, %v2147
        %v2154 = vmul.f32 %v2139, %v2146
        %v2155 = vmul.f32 %v2143, %v2147
        %v2156 = vmul.f32 %v2140, %v2146
        %v2157 = vmul.f32 %v2144, %v2147
        %v2158 = vadd.f32 %v2113, %v2150
        %v2159 = vadd.f32 %v2114, %v2151
        %v2160 = vadd.f32 %v2115, %v2152
        %v2161 = vadd.f32 %v2116, %v2153
        %v2162 = vadd.f32 %v2117, %v2154
        %v2163 = vadd.f32 %v2118, %v2155
        %v2164 = vadd.f32 %v2119, %v2156
        %v2165 = vadd.f32 %v2120, %v2157
        %2166 = vrot.lane.b32.xlu0 %v1992, 96
        %v2167 = vpop.permute.xlu0 %2166
        %2168 = vrot.lane.b32.xlu0 %v1997, 96
        %v2169 = vpop.permute.xlu0 %2168
        %2170 = vrot.lane.b32.xlu0 %v2002, 96
        %v2171 = vpop.permute.xlu0 %2170
        %2172 = vrot.lane.b32.xlu0 %v2007, 96
        %v2173 = vpop.permute.xlu0 %2172
        %2174 = vrot.lane.b32.xlu0 %v1995, 96
        %v2175 = vpop.permute.xlu0 %2174
        %2176 = vrot.lane.b32.xlu0 %v1999, 96
        %v2177 = vpop.permute.xlu0 %2176
        %2178 = vrot.lane.b32.xlu0 %v2005, 96
        %v2179 = vpop.permute.xlu0 %2178
        %2180 = vrot.lane.b32.xlu0 %v2009, 96
        %v2181 = vpop.permute.xlu0 %2180
        %v2182 = vsel %vm1459, %v2167, %v2175
        %v2183 = vsel %vm1459, %v2169, %v2177
        %v2184 = vsel %vm1459, %v2171, %v2179
        %v2185 = vsel %vm1459, %v2173, %v2181
        %v2186 = vsel %vm1459, %v2175, %v2167
        %v2187 = vsel %vm1459, %v2177, %v2169
        %v2188 = vsel %vm1459, %v2179, %v2171
        %v2189 = vsel %vm1459, %v2181, %v2173
        %v2191 = vperm.slane %v1271, 0
        %v2192 = vperm.slane %v1271, 1
        %v2195 = vmul.f32 %v2182, %v2191
        %v2196 = vmul.f32 %v2186, %v2192
        %v2197 = vmul.f32 %v2183, %v2191
        %v2198 = vmul.f32 %v2187, %v2192
        %v2199 = vmul.f32 %v2184, %v2191
        %v2200 = vmul.f32 %v2188, %v2192
        %v2201 = vmul.f32 %v2185, %v2191
        %v2202 = vmul.f32 %v2189, %v2192
        %v2203 = vadd.f32 %v2158, %v2195
        %v2204 = vadd.f32 %v2159, %v2196
        %v2205 = vadd.f32 %v2160, %v2197
        %v2206 = vadd.f32 %v2161, %v2198
        %v2207 = vadd.f32 %v2162, %v2199
        %v2208 = vadd.f32 %v2163, %v2200
        %v2209 = vadd.f32 %v2164, %v2201
        %v2210 = vadd.f32 %v2165, %v2202
        %v2211 = vld [vmem:[#allocation3] sm:$0xf0]
        %v2212 = vld [vmem:[#allocation3 + $0x8] sm:$0xf0]
        %v2213 = vld [vmem:[#allocation3 + $0x20] sm:$0xf]
        %v2214 = vld [vmem:[#allocation3 + $0x28] sm:$0xf]
        %v2215 = vld [vmem:[#allocation3 + $0x30] sm:$0xf0]
        %v2216 = vld [vmem:[#allocation3 + $0x38] sm:$0xf0]
        %v2217 = vld [vmem:[#allocation3 + $0x50] sm:$0xf]
        %v2218 = vld [vmem:[#allocation3 + $0x58] sm:$0xf]
        %vm2227 = vcmask 1043456
        %v2228 = vrot.slane %v2211, 4
        %v2229 = vrot.slane %v1491, 4
        %v2230 = vsel %vm2227, %v2228, %v2229
        %v2231 = vrot.slane %v2212, 4
        %v2232 = vrot.slane %v1492, 4
        %v2233 = vsel %vm2227, %v2231, %v2232
        %v2234 = vrot.slane %v2213, 4
        %v2235 = vsel %vm2227, %v2229, %v2234
        %v2236 = vrot.slane %v2214, 4
        %v2237 = vsel %vm2227, %v2232, %v2236
        %v2238 = vrot.slane %v2215, 4
        %v2239 = vrot.slane %v1497, 4
        %v2240 = vsel %vm2227, %v2238, %v2239
        %v2241 = vrot.slane %v2216, 4
        %v2242 = vrot.slane %v1498, 4
        %v2243 = vsel %vm2227, %v2241, %v2242
        %v2244 = vrot.slane %v2217, 4
        %v2245 = vsel %vm2227, %v2239, %v2244
        %v2246 = vrot.slane %v2218, 4
        %v2247 = vsel %vm2227, %v2242, %v2246
        %2256 = vrot.lane.b32.xlu0 %v2230, 32
        %v2257 = vpop.permute.xlu0 %2256
        %2258 = vrot.lane.b32.xlu0 %v2235, 32
        %v2259 = vpop.permute.xlu0 %2258
        %2260 = vrot.lane.b32.xlu0 %v2240, 32
        %v2261 = vpop.permute.xlu0 %2260
        %2262 = vrot.lane.b32.xlu0 %v2245, 32
        %v2263 = vpop.permute.xlu0 %2262
        %2264 = vrot.lane.b32.xlu0 %v2233, 32
        %v2265 = vpop.permute.xlu0 %2264
        %2266 = vrot.lane.b32.xlu0 %v2237, 32
        %v2267 = vpop.permute.xlu0 %2266
        %2268 = vrot.lane.b32.xlu0 %v2243, 32
        %v2269 = vpop.permute.xlu0 %2268
        %2270 = vrot.lane.b32.xlu0 %v2247, 32
        %v2271 = vpop.permute.xlu0 %2270
        %v2272 = vsel %vm1308, %v2257, %v2265
        %v2273 = vsel %vm1308, %v2259, %v2267
        %v2274 = vsel %vm1308, %v2261, %v2269
        %v2275 = vsel %vm1308, %v2263, %v2271
        %v2276 = vsel %vm1308, %v2265, %v2257
        %v2277 = vsel %vm1308, %v2267, %v2259
        %v2278 = vsel %vm1308, %v2269, %v2261
        %v2279 = vsel %vm1308, %v2271, %v2263
        %v2281 = vperm.slane %v1273, 0
        %v2282 = vperm.slane %v1273, 1
        %v2285 = vmul.f32 %v2276, %v2281
        %v2286 = vmul.f32 %v2272, %v2282
        %v2287 = vmul.f32 %v2277, %v2281
        %v2288 = vmul.f32 %v2273, %v2282
        %v2289 = vmul.f32 %v2278, %v2281
        %v2290 = vmul.f32 %v2274, %v2282
        %v2291 = vmul.f32 %v2279, %v2281
        %v2292 = vmul.f32 %v2275, %v2282
        %2293 = vrot.lane.b32.xlu0 %v2230, 16
        %v2294 = vpop.permute.xlu0 %2293
        %2295 = vrot.lane.b32.xlu0 %v2235, 16
        %v2296 = vpop.permute.xlu0 %2295
        %2297 = vrot.lane.b32.xlu0 %v2240, 16
        %v2298 = vpop.permute.xlu0 %2297
        %2299 = vrot.lane.b32.xlu0 %v2245, 16
        %v2300 = vpop.permute.xlu0 %2299
        %2301 = vrot.lane.b32.xlu0 %v2233, 16
        %v2302 = vpop.permute.xlu0 %2301
        %2303 = vrot.lane.b32.xlu0 %v2237, 16
        %v2304 = vpop.permute.xlu0 %2303
        %2305 = vrot.lane.b32.xlu0 %v2243, 16
        %v2306 = vpop.permute.xlu0 %2305
        %2307 = vrot.lane.b32.xlu0 %v2247, 16
        %v2308 = vpop.permute.xlu0 %2307
        %v2309 = vsel %vm1346, %v2294, %v2302
        %v2310 = vsel %vm1346, %v2296, %v2304
        %v2311 = vsel %vm1346, %v2298, %v2306
        %v2312 = vsel %vm1346, %v2300, %v2308
        %v2313 = vsel %vm1346, %v2302, %v2294
        %v2314 = vsel %vm1346, %v2304, %v2296
        %v2315 = vsel %vm1346, %v2306, %v2298
        %v2316 = vsel %vm1346, %v2308, %v2300
        %v2318 = vperm.slane %v1275, 0
        %v2319 = vperm.slane %v1275, 1
        %v2322 = vmul.f32 %v2313, %v2318
        %v2323 = vmul.f32 %v2309, %v2319
        %v2324 = vmul.f32 %v2314, %v2318
        %v2325 = vmul.f32 %v2310, %v2319
        %v2326 = vmul.f32 %v2315, %v2318
        %v2327 = vmul.f32 %v2311, %v2319
        %v2328 = vmul.f32 %v2316, %v2318
        %v2329 = vmul.f32 %v2312, %v2319
        %v2330 = vadd.f32 %v2285, %v2322
        %v2331 = vadd.f32 %v2286, %v2323
        %v2332 = vadd.f32 %v2287, %v2324
        %v2333 = vadd.f32 %v2288, %v2325
        %v2334 = vadd.f32 %v2289, %v2326
        %v2335 = vadd.f32 %v2290, %v2327
        %v2336 = vadd.f32 %v2291, %v2328
        %v2337 = vadd.f32 %v2292, %v2329
        %v2339 = vperm.slane %v1277, 0
        %v2340 = vperm.slane %v1277, 1
        %v2343 = vmul.f32 %v2230, %v2339
        %v2344 = vmul.f32 %v2233, %v2340
        %v2345 = vmul.f32 %v2235, %v2339
        %v2346 = vmul.f32 %v2237, %v2340
        %v2347 = vmul.f32 %v2240, %v2339
        %v2348 = vmul.f32 %v2243, %v2340
        %v2349 = vmul.f32 %v2245, %v2339
        %v2350 = vmul.f32 %v2247, %v2340
        %v2351 = vadd.f32 %v2330, %v2343
        %v2352 = vadd.f32 %v2331, %v2344
        %v2353 = vadd.f32 %v2332, %v2345
        %v2354 = vadd.f32 %v2333, %v2346
        %v2355 = vadd.f32 %v2334, %v2347
        %v2356 = vadd.f32 %v2335, %v2348
        %v2357 = vadd.f32 %v2336, %v2349
        %v2358 = vadd.f32 %v2337, %v2350
        %2359 = vrot.lane.b32.xlu0 %v2230, 112
        %v2360 = vpop.permute.xlu0 %2359
        %2361 = vrot.lane.b32.xlu0 %v2235, 112
        %v2362 = vpop.permute.xlu0 %2361
        %2363 = vrot.lane.b32.xlu0 %v2240, 112
        %v2364 = vpop.permute.xlu0 %2363
        %2365 = vrot.lane.b32.xlu0 %v2245, 112
        %v2366 = vpop.permute.xlu0 %2365
        %2367 = vrot.lane.b32.xlu0 %v2233, 112
        %v2368 = vpop.permute.xlu0 %2367
        %2369 = vrot.lane.b32.xlu0 %v2237, 112
        %v2370 = vpop.permute.xlu0 %2369
        %2371 = vrot.lane.b32.xlu0 %v2243, 112
        %v2372 = vpop.permute.xlu0 %2371
        %2373 = vrot.lane.b32.xlu0 %v2247, 112
        %v2374 = vpop.permute.xlu0 %2373
        %v2375 = vsel %vm1413, %v2360, %v2368
        %v2376 = vsel %vm1413, %v2362, %v2370
        %v2377 = vsel %vm1413, %v2364, %v2372
        %v2378 = vsel %vm1413, %v2366, %v2374
        %v2379 = vsel %vm1413, %v2368, %v2360
        %v2380 = vsel %vm1413, %v2370, %v2362
        %v2381 = vsel %vm1413, %v2372, %v2364
        %v2382 = vsel %vm1413, %v2374, %v2366
        %v2384 = vperm.slane %v1279, 0
        %v2385 = vperm.slane %v1279, 1
        %v2388 = vmul.f32 %v2375, %v2384
        %v2389 = vmul.f32 %v2379, %v2385
        %v2390 = vmul.f32 %v2376, %v2384
        %v2391 = vmul.f32 %v2380, %v2385
        %v2392 = vmul.f32 %v2377, %v2384
        %v2393 = vmul.f32 %v2381, %v2385
        %v2394 = vmul.f32 %v2378, %v2384
        %v2395 = vmul.f32 %v2382, %v2385
        %v2396 = vadd.f32 %v2351, %v2388
        %v2397 = vadd.f32 %v2352, %v2389
        %v2398 = vadd.f32 %v2353, %v2390
        %v2399 = vadd.f32 %v2354, %v2391
        %v2400 = vadd.f32 %v2355, %v2392
        %v2401 = vadd.f32 %v2356, %v2393
        %v2402 = vadd.f32 %v2357, %v2394
        %v2403 = vadd.f32 %v2358, %v2395
        %2404 = vrot.lane.b32.xlu0 %v2230, 96
        %v2405 = vpop.permute.xlu0 %2404
        %2406 = vrot.lane.b32.xlu0 %v2235, 96
        %v2407 = vpop.permute.xlu0 %2406
        %2408 = vrot.lane.b32.xlu0 %v2240, 96
        %v2409 = vpop.permute.xlu0 %2408
        %2410 = vrot.lane.b32.xlu0 %v2245, 96
        %v2411 = vpop.permute.xlu0 %2410
        %2412 = vrot.lane.b32.xlu0 %v2233, 96
        %v2413 = vpop.permute.xlu0 %2412
        %2414 = vrot.lane.b32.xlu0 %v2237, 96
        %v2415 = vpop.permute.xlu0 %2414
        %2416 = vrot.lane.b32.xlu0 %v2243, 96
        %v2417 = vpop.permute.xlu0 %2416
        %2418 = vrot.lane.b32.xlu0 %v2247, 96
        %v2419 = vpop.permute.xlu0 %2418
        %v2420 = vsel %vm1459, %v2405, %v2413
        %v2421 = vsel %vm1459, %v2407, %v2415
        %v2422 = vsel %vm1459, %v2409, %v2417
        %v2423 = vsel %vm1459, %v2411, %v2419
        %v2424 = vsel %vm1459, %v2413, %v2405
        %v2425 = vsel %vm1459, %v2415, %v2407
        %v2426 = vsel %vm1459, %v2417, %v2409
        %v2427 = vsel %vm1459, %v2419, %v2411
        %v2429 = vperm.slane %v1281, 0
        %v2430 = vperm.slane %v1281, 1
        %v2433 = vmul.f32 %v2420, %v2429
        %v2434 = vmul.f32 %v2424, %v2430
        %v2435 = vmul.f32 %v2421, %v2429
        %v2436 = vmul.f32 %v2425, %v2430
        %v2437 = vmul.f32 %v2422, %v2429
        %v2438 = vmul.f32 %v2426, %v2430
        %v2439 = vmul.f32 %v2423, %v2429
        %v2440 = vmul.f32 %v2427, %v2430
        %v2441 = vadd.f32 %v2396, %v2433
        %v2442 = vadd.f32 %v2397, %v2434
        %v2443 = vadd.f32 %v2398, %v2435
        %v2444 = vadd.f32 %v2399, %v2436
        %v2445 = vadd.f32 %v2400, %v2437
        %v2446 = vadd.f32 %v2401, %v2438
        %v2447 = vadd.f32 %v2402, %v2439
        %v2448 = vadd.f32 %v2403, %v2440
        %v2449 = vadd.f32 %v1481, %v1727
        %v2450 = vadd.f32 %v1482, %v1728
        %v2451 = vadd.f32 %v1483, %v1729
        %v2452 = vadd.f32 %v1484, %v1730
        %v2453 = vadd.f32 %v1485, %v1731
        %v2454 = vadd.f32 %v1486, %v1732
        %v2455 = vadd.f32 %v1487, %v1733
        %v2456 = vadd.f32 %v1488, %v1734
        %v2457 = vadd.f32 %v1965, %v2203
        %v2458 = vadd.f32 %v1966, %v2204
        %v2459 = vadd.f32 %v1967, %v2205
        %v2460 = vadd.f32 %v1968, %v2206
        %v2461 = vadd.f32 %v1969, %v2207
        %v2462 = vadd.f32 %v1970, %v2208
        %v2463 = vadd.f32 %v1971, %v2209
        %v2464 = vadd.f32 %v1972, %v2210
        %v2465 = vadd.f32 %v2449, %v2457
        %v2466 = vadd.f32 %v2450, %v2458
        %v2467 = vadd.f32 %v2451, %v2459
        %v2468 = vadd.f32 %v2452, %v2460
        %v2469 = vadd.f32 %v2453, %v2461
        %v2470 = vadd.f32 %v2454, %v2462
        %v2471 = vadd.f32 %v2455, %v2463
        %v2472 = vadd.f32 %v2456, %v2464
        %v2473 = vadd.f32 %v2465, %v2441
        %v2474 = vadd.f32 %v2466, %v2442
        %v2475 = vadd.f32 %v2467, %v2443
        %v2476 = vadd.f32 %v2468, %v2444
        %v2477 = vadd.f32 %v2469, %v2445
        %v2478 = vadd.f32 %v2470, %v2446
        %v2479 = vadd.f32 %v2471, %v2447
        %v2480 = vadd.f32 %v2472, %v2448
        %v2481 = vld [vmem:[%s10] sm:$0x3]
        %v2483 = vperm.slane %v2481, 0
        %v2484 = vperm.slane %v2481, 1
        %v2487 = vadd.f32 %v2473, %v2483
        %v2488 = vadd.f32 %v2474, %v2484
        %v2489 = vadd.f32 %v2475, %v2483
        %v2490 = vadd.f32 %v2476, %v2484
        %v2491 = vadd.f32 %v2477, %v2483
        %v2492 = vadd.f32 %v2478, %v2484
        %v2493 = vadd.f32 %v2479, %v2483
        %v2494 = vadd.f32 %v2480, %v2484
        %v2495 = vld [vmem:[%s8] sm:$0x3]
        %v2497 = vperm.slane %v2495, 0
        %v2498 = vperm.slane %v2495, 1
        %v2501 = vmul.f32 %v1140, %v2497
        %v2502 = vmul.f32 %v1169, %v2498
        %v2503 = vmul.f32 %v1143, %v2497
        %v2504 = vmul.f32 %v1172, %v2498
        %v2505 = vmul.f32 %v1146, %v2497
        %v2506 = vmul.f32 %v1175, %v2498
        %v2507 = vmul.f32 %v1149, %v2497
        %v2508 = vmul.f32 %v1178, %v2498
        %v2509 = vadd.f32 %v2501, %v2487
        %v2510 = vadd.f32 %v2502, %v2488
        %v2511 = vadd.f32 %v2503, %v2489
        %v2512 = vadd.f32 %v2504, %v2490
        %v2513 = vadd.f32 %v2505, %v2491
        %v2514 = vadd.f32 %v2506, %v2492
        %v2515 = vadd.f32 %v2507, %v2493
        %v2516 = vadd.f32 %v2508, %v2494
        %v2517 = vadd.f32 %v2509, %v520
        %v2518 = vadd.f32 %v2510, %v521
        %v2519 = vadd.f32 %v2511, %v522
        %v2520 = vadd.f32 %v2512, %v523
        %v2521 = vadd.f32 %v2513, %v524
        %v2522 = vadd.f32 %v2514, %v525
        %v2523 = vadd.f32 %v2515, %v526
        %v2524 = vadd.f32 %v2516, %v527
        %2525 = vst [vmem:[%s517] sm:$0xff] %v2517
        %2526 = vst [vmem:[%s517 + $0x8] sm:$0xff] %v2518
        %2527 = vst [vmem:[%s517 + $0x10] sm:$0xff] %v2519
        %2528 = vst [vmem:[%s517 + $0x18] sm:$0xff] %v2520
        %2529 = vst [vmem:[%s517 + $0x20] sm:$0xff] %v2521
        %2530 = vst [vmem:[%s517 + $0x28] sm:$0xff] %v2522
        %2531 = vst [vmem:[%s517 + $0x30] sm:$0xff] %v2523
        %2532 = vst [vmem:[%s517 + $0x38] sm:$0xff] %v2524
        %s2533 = sand.u32 %s276, 1
        %s2534 = scalar_lea.sflag [#allocation6], %s2533
        %s2535 = sand.u32 %s276, 1
        %s2536 = smul.addr %s2535, 64
        %s2537 = scalar_lea.vmem [#allocation18], %s2536
        // Predicated region
        $region97: #{tpu_custom_call.1} parent=63 // pred_check
          %p2538 = pneg %p286
        $region98: #{tpu_custom_call.1} parent=63 // pred_check_branch
          %2540 = sbr.rel (%p2538) target = $region100
        $region99: #{tpu_custom_call.1} parent=63 // pred_region
          %s2541 = smul.u32 2, %s32
          %2543 = vsyncadd %s2534, 0
          %s2544 = smul.addr %s2541, 4
          %s2545 = smul.addr %s2544, 8
          %s2546 = scalar_lea.hbm %s11, %s2545
          %s2547 = sshll.u32 %s2537, 4
          %s2548 = int_to_ptr.vmem [resolvable:$true] %s2547
          %s2549 = sshll.u32 %s2546, 4
          %s2550 = int_to_ptr.hbm [resolvable:$true] %s2549
          %2555 = dma.vmem_to_hbm [thread:$0]  %s2548, 1024, %s2550, %s2534, 256, 256, 16
        $region100: #{tpu_custom_call.1} parent=63 // pred_fallthru
          _
      $region64: #{tpu_custom_call.1} parent=5 // pred_fallthru
        _
      %p2556 = scmp.le.s32.totalorder 2, %s27
      // Predicated region
      $region101: #{tpu_custom_call.1} parent=5 // pred_check
        %p2557 = pneg %p2556
      $region102: #{tpu_custom_call.1} parent=5 // pred_check_branch
        %2559 = sbr.rel (%p2557) target = $region104
      $region103: #{tpu_custom_call.1} parent=5 // pred_region
        %s2560 = ssub.s32 %s27, 2
        // Predicated region
        $region105: #{tpu_custom_call.1} parent=103 // pred_check
          %p2561 = pneg %p292
        $region106: #{tpu_custom_call.1} parent=103 // pred_check_branch
          %2563 = sbr.rel (%p2561) target = $region108
        $region107: #{tpu_custom_call.1} parent=103 // pred_region
          %s2564 = sand.u32 %s277, 1
          %s2565 = scalar_lea.sflag [#allocation6], %s2564
          %s2566 = sand.u32 %s277, 1
          %s2567 = smul.addr %s2566, 64
          %s2568 = scalar_lea.vmem [#allocation18], %s2567
          %2570 = dma.done %s2565, 1024
        $region108: #{tpu_custom_call.1} parent=103 // pred_fallthru
          _
      $region104: #{tpu_custom_call.1} parent=5 // pred_fallthru
        _
    $region6: #{tpu_custom_call.1} parent=1 // loop_footer
      %s31 = sadd.s32 1, %s27
    $region7: #{tpu_custom_call.1} parent=1 // loop_footer_branch
      %26 = sbr.rel target = $region3
    $region8: #{tpu_custom_call.1} parent=1 // loop_exit
      _
    %2571 = vsyncpa [#allocation5], 1
    %s2572 = scalar_lea.sflag [#allocation5], 1
    %2573 = vsyncpa %s2572, 1
    %2574 = vsyncpa [#allocation8], 1
    %2575 = vsyncpa [#allocation11], 1
    %2576 = vsyncpa [#allocation14], 1
    %2577 = vsyncpa [#allocation17], 1
    %2578 = vsyncpa [#allocation6], 1
    %s2579 = scalar_lea.sflag [#allocation6], 1
    %2580 = vsyncpa %s2579, 1

// kernel: tpu_custom_call.1
$region0: #{tpu_custom_call.1}
  #allocation0 [shape = 'u32[]', space=smem, size = 0x4, offset = 0x4, fixed_abs, tag = 'smem constant byte address 0x4 - core index']
  #allocation1 [shape = 'u32[72,128]{1,0:T(1,128)}', space=vmem, size = 0x9000, scoped, tag = 'internal scratch']
  #allocation2 [shape = 'f32[2,20,128]{2,1,0:T(8,128)}', space=vmem, size = 0x6000, scoped, tag = 'scratch operand']
  #allocation3 [shape = 'f32[2,20,256]{2,1,0:T(8,128)}', space=vmem, size = 0xc000, scoped, tag = 'scratch operand']
  %s0 = inlined_call_operand.hbm [shape: f32[4,16,256], index: 0, kind: input, shape index: {}]
  %s1 = inlined_call_operand.hbm [shape: f32[256,128], index: 1, kind: input, shape index: {}]
  %s2 = inlined_call_operand.hbm [shape: f32[1,128], index: 2, kind: input, shape index: {}]
  %s3 = inlined_call_operand.hbm [shape: f32[1,128], index: 3, kind: input, shape index: {}]
  %s4 = inlined_call_operand.hbm [shape: f32[25,128], index: 4, kind: input, shape index: {}]
  %s5 = inlined_call_operand.hbm [shape: f32[1,128], index: 5, kind: input, shape index: {}]
  %s6 = inlined_call_operand.hbm [shape: f32[128,256], index: 6, kind: input, shape index: {}]
  %s7 = inlined_call_operand.vmem [shape: f32[1,256], index: 7, kind: input, shape index: {}]
  %s8 = inlined_call_operand.vmem [shape: f32[1,256], index: 8, kind: input, shape index: {}]
  %s9 = inlined_call_operand.hbm [shape: f32[25,256], index: 9, kind: input, shape index: {}]
  %s10 = inlined_call_operand.vmem [shape: f32[1,256], index: 10, kind: input, shape index: {}]
  %s11 = inlined_call_operand.hbm [shape: f32[4,16,256], index: 11, kind: output, shape index: {}]
  %s12 = sld [smem:[#allocation0]]
  $region109: #{tpu_custom_call.1} parent=0
    _
  %s14 = ssub.s32 1, %s12
  %s15 = scalar_select 0, %s14, %s12
  $region1: #{tpu_custom_call.1} parent=0
    #allocation4 [shape = 'u8[65536]{0}', space=vmem, size = 0x10000, scoped, tag = 'input window, operand 0']
    #allocation5 [shape = 's32[2]{0}', space=sflag, size = 0x8, scoped, tag = 'scoped memory for tpu_custom_call.1']
    #allocation6 [shape = 's32[2]{0}', space=sflag, size = 0x8, scoped, tag = 'scoped memory for tpu_custom_call.1']
    #allocation7 [shape = 'u8[131072]{0}', space=vmem, size = 0x20000, scoped, tag = 'input window, operand 1, single buffered']
    #allocation8 [shape = 's32[1]{0}', space=sflag, size = 0x4, scoped, tag = 'scoped memory for tpu_custom_call.1']
    #allocation9 [shape = 'u8[512]{0}', space=vmem, size = 0x400, scoped, tag = 'input window, operand 2, single buffered']
    #allocation10 [shape = 'u8[512]{0}', space=vmem, size = 0x400, scoped, tag = 'input window, operand 3, single buffered']
    #allocation11 [shape = 's32[1]{0}', space=sflag, size = 0x4, scoped, tag = 'scoped memory for tpu_custom_call.1']
    #allocation12 [shape = 'u8[16384]{0}', space=vmem, size = 0x4000, scoped, tag = 'input window, operand 4, single buffered']
    #allocation13 [shape = 'u8[512]{0}', space=vmem, size = 0x400, scoped, tag = 'input window, operand 5, single buffered']
    #allocation14 [shape = 's32[1]{0}', space=sflag, size = 0x4, scoped, tag = 'scoped memory for tpu_custom_call.1']
    #allocation15 [shape = 'u8[131072]{0}', space=vmem, size = 0x20000, scoped, tag = 'input window, operand 6, single buffered']
    #allocation16 [shape = 'u8[32768]{0}', space=vmem, size = 0x8000, scoped, tag = 'input window, operand 9, single buffered']
    #allocation17 [shape = 's32[1]{0}', space=sflag, size = 0x4, scoped, tag = 'scoped memory for tpu_custom_call.1']
    #allocation18 [shape = 'u8[65536]{0}', space=vmem, size = 0x10000, scoped, tag = 'output window, operand 0']
    %16 = vsyncpa [#allocation5], 0
    %s17 = scalar_lea.sflag [#allocation5], 1
    %18 = vsyncpa %s17, 0
    %19 = vsyncpa [#allocation8], 0
    %20 = vsyncpa [#allocation11], 0
    %21 = vsyncpa [#allocation14], 0
    %22 = vsyncpa [#allocation17], 0
    %23 = vsyncpa [#allocation6], 0
    %s24 = scalar_lea.sflag [#allocation6], 1
    %25 = vsyncpa %s24, 0
    loop: start=0, step=1, limit=4
    $region2: #{tpu_custom_call.1} parent=1 // loop_pre_header
      _
    $region3: #{tpu_custom_call.1} parent=1 // loop_header
      %s27 = sphi 0, %s31
      %p28 = scmp.ge.s32.totalorder %s27, 4
      %s37 = sphi 0, %s39
      %s40 = sphi 0, %s37
      %s41 = sphi 0, %s40
      %s57 = sphi 0, %s41
      %s61 = sphi 0, %s61
      %s63 = sphi 0, %s61
      %s64 = sphi 0, %s63
      %s78 = sphi 0, %s64
      %s82 = sphi 0, %s82
      %s84 = sphi 0, %s82
      %s85 = sphi 0, %s84
      %s99 = sphi 0, %s85
      %s103 = sphi 0, %s103
      %s105 = sphi 0, %s103
      %s106 = sphi 0, %s105
      %s120 = sphi 0, %s106
      %s124 = sphi 0, %s124
      %s126 = sphi 0, %s124
      %s127 = sphi 0, %s126
      %s141 = sphi 0, %s127
      %s145 = sphi 0, %s145
      %s147 = sphi 0, %s145
      %s148 = sphi 0, %s147
      %s162 = sphi 0, %s148
      %s166 = sphi 0, %s166
      %s168 = sphi 0, %s166
      %s169 = sphi 0, %s168
      %s183 = sphi 0, %s169
      %s187 = sphi 0, %s187
      %s189 = sphi 0, %s187
      %s190 = sphi 0, %s189
      %s204 = sphi 0, %s190
      %s208 = sphi 0, %s208
      %s210 = sphi 0, %s208
      %s211 = sphi 0, %s210
      %s225 = sphi 0, %s211
      %s229 = sphi 0, %s229
      %s231 = sphi 0, %s229
      %s232 = sphi 0, %s231
      %s246 = sphi 0, %s232
      %s250 = sphi 0, %s250
      %s252 = sphi 0, %s250
      %s253 = sphi 0, %s252
      %s267 = sphi 0, %s253
      %s273 = sphi 0, %s275
      %s276 = sphi 0, %s273
      %s277 = sphi 0, %s276
      %s293 = sphi 0, %s277
    $region4: #{tpu_custom_call.1} parent=1 // loop_header_branch
      %30 = sbr.rel (%p28) target = $region8
    $region5: #{tpu_custom_call.1} parent=1 // loop_body
      %s32 = ssub.s32 %s27, 1
      %s33 = ssub.s32 %s27, 2
      %s34 = sadd.s32 %s27, 1
      %s35 = ssub.s32 %s27, %s34
      %p36 = scmp.eq.s32.totalorder %s35, 0
      %s38 = sadd.s32 %s37, 1
      %s39 = scalar_select %p36, %s37, %s38
      %p42 = pneg %p36
      %p43 = scmp.eq.s32.totalorder %s27, 1
      %p44 = por %p42, %p43
      %p45 = scmp.ne.s32.totalorder %s37, %s40
      %p46 = scmp.eq.s32.totalorder %s27, 0
      %p47 = por %p45, %p46
      %p48 = scmp.ne.s32.totalorder %s37, %s40
      %p49 = scmp.eq.s32.totalorder %s32, 1
      %p50 = por %p48, %p49
      %p51 = scmp.ne.s32.totalorder %s40, %s41
      %p52 = scmp.eq.s32.totalorder %s32, 0
      %p53 = por %p51, %p52
      %p54 = scmp.ne.s32.totalorder %s40, %s41
      %p55 = scmp.eq.s32.totalorder %s33, 1
      %p56 = por %p54, %p55
      %p58 = scmp.ne.s32.totalorder %s41, %s57
      %p59 = scmp.eq.s32.totalorder %s33, 0
      %p60 = por %p58, %p59
      %s62 = sadd.s32 %s61, 1
      %p65 = scmp.eq.s32.totalorder %s27, 1
      %p66 = scmp.ne.s32.totalorder %s61, %s63
      %p67 = scmp.eq.s32.totalorder %s27, 0
      %p68 = por %p66, %p67
      %p69 = scmp.ne.s32.totalorder %s61, %s63
      %p70 = scmp.eq.s32.totalorder %s32, 1
      %p71 = por %p69, %p70
      %p72 = scmp.ne.s32.totalorder %s63, %s64
      %p73 = scmp.eq.s32.totalorder %s32, 0
      %p74 = por %p72, %p73
      %p75 = scmp.ne.s32.totalorder %s63, %s64
      %p76 = scmp.eq.s32.totalorder %s33, 1
      %p77 = por %p75, %p76
      %p79 = scmp.ne.s32.totalorder %s64, %s78
      %p80 = scmp.eq.s32.totalorder %s33, 0
      %p81 = por %p79, %p80
      %s83 = sadd.s32 %s82, 1
      %p86 = scmp.eq.s32.totalorder %s27, 1
      %p87 = scmp.ne.s32.totalorder %s82, %s84
      %p88 = scmp.eq.s32.totalorder %s27, 0
      %p89 = por %p87, %p88
      %p90 = scmp.ne.s32.totalorder %s82, %s84
      %p91 = scmp.eq.s32.totalorder %s32, 1
      %p92 = por %p90, %p91
      %p93 = scmp.ne.s32.totalorder %s84, %s85
      %p94 = scmp.eq.s32.totalorder %s32, 0
      %p95 = por %p93, %p94
      %p96 = scmp.ne.s32.totalorder %s84, %s85
      %p97 = scmp.eq.s32.totalorder %s33, 1
      %p98 = por %p96, %p97
      %p100 = scmp.ne.s32.totalorder %s85, %s99
      %p101 = scmp.eq.s32.totalorder %s33, 0
      %p102 = por %p100, %p101
      %s104 = sadd.s32 %s103, 1
      %p107 = scmp.eq.s32.totalorder %s27, 1
      %p108 = scmp.ne.s32.totalorder %s103, %s105
      %p109 = scmp.eq.s32.totalorder %s27, 0
      %p110 = por %p108, %p109
      %p111 = scmp.ne.s32.totalorder %s103, %s105
      %p112 = scmp.eq.s32.totalorder %s32, 1
      %p113 = por %p111, %p112
      %p114 = scmp.ne.s32.totalorder %s105, %s106
      %p115 = scmp.eq.s32.totalorder %s32, 0
      %p116 = por %p114, %p115
      %p117 = scmp.ne.s32.totalorder %s105, %s106
      %p118 = scmp.eq.s32.totalorder %s33, 1
      %p119 = por %p117, %p118
      %p121 = scmp.ne.s32.totalorder %s106, %s120
      %p122 = scmp.eq.s32.totalorder %s33, 0
      %p123 = por %p121, %p122
      %s125 = sadd.s32 %s124, 1
      %p128 = scmp.eq.s32.totalorder %s27, 1
      %p129 = scmp.ne.s32.totalorder %s124, %s126
      %p130 = scmp.eq.s32.totalorder %s27, 0
      %p131 = por %p129, %p130
      %p132 = scmp.ne.s32.totalorder %s124, %s126
      %p133 = scmp.eq.s32.totalorder %s32, 1
      %p134 = por %p132, %p133
      %p135 = scmp.ne.s32.totalorder %s126, %s127
      %p136 = scmp.eq.s32.totalorder %s32, 0
      %p137 = por %p135, %p136
      %p138 = scmp.ne.s32.totalorder %s126, %s127
      %p139 = scmp.eq.s32.totalorder %s33, 1
      %p140 = por %p138, %p139
      %p142 = scmp.ne.s32.totalorder %s127, %s141
      %p143 = scmp.eq.s32.totalorder %s33, 0
      %p144 = por %p142, %p143
      %s146 = sadd.s32 %s145, 1
      %p149 = scmp.eq.s32.totalorder %s27, 1
      %p150 = scmp.ne.s32.totalorder %s145, %s147
      %p151 = scmp.eq.s32.totalorder %s27, 0
      %p152 = por %p150, %p151
      %p153 = scmp.ne.s32.totalorder %s145, %s147
      %p154 = scmp.eq.s32.totalorder %s32, 1
      %p155 = por %p153, %p154
      %p156 = scmp.ne.s32.totalorder %s147, %s148
      %p157 = scmp.eq.s32.totalorder %s32, 0
      %p158 = por %p156, %p157
      %p159 = scmp.ne.s32.totalorder %s147, %s148
      %p160 = scmp.eq.s32.totalorder %s33, 1
      %p161 = por %p159, %p160
      %p163 = scmp.ne.s32.totalorder %s148, %s162
      %p164 = scmp.eq.s32.totalorder %s33, 0
      %p165 = por %p163, %p164
      %s167 = sadd.s32 %s166, 1
      %p170 = scmp.eq.s32.totalorder %s27, 1
      %p171 = scmp.ne.s32.totalorder %s166, %s168
      %p172 = scmp.eq.s32.totalorder %s27, 0
      %p173 = por %p171, %p172
      %p174 = scmp.ne.s32.totalorder %s166, %s168
      %p175 = scmp.eq.s32.totalorder %s32, 1
      %p176 = por %p174, %p175
      %p177 = scmp.ne.s32.totalorder %s168, %s169
      %p178 = scmp.eq.s32.totalorder %s32, 0
      %p179 = por %p177, %p178
      %p180 = scmp.ne.s32.totalorder %s168, %s169
      %p181 = scmp.eq.s32.totalorder %s33, 1
      %p182 = por %p180, %p181
      %p184 = scmp.ne.s32.totalorder %s169, %s183
      %p185 = scmp.eq.s32.totalorder %s33, 0
      %p186 = por %p184, %p185
      %s188 = sadd.s32 %s187, 1
      %p191 = scmp.eq.s32.totalorder %s27, 1
      %p192 = scmp.ne.s32.totalorder %s187, %s189
      %p193 = scmp.eq.s32.totalorder %s27, 0
      %p194 = por %p192, %p193
      %p195 = scmp.ne.s32.totalorder %s187, %s189
      %p196 = scmp.eq.s32.totalorder %s32, 1
      %p197 = por %p195, %p196
      %p198 = scmp.ne.s32.totalorder %s189, %s190
      %p199 = scmp.eq.s32.totalorder %s32, 0
      %p200 = por %p198, %p199
      %p201 = scmp.ne.s32.totalorder %s189, %s190
      %p202 = scmp.eq.s32.totalorder %s33, 1
      %p203 = por %p201, %p202
      %p205 = scmp.ne.s32.totalorder %s190, %s204
      %p206 = scmp.eq.s32.totalorder %s33, 0
      %p207 = por %p205, %p206
      %s209 = sadd.s32 %s208, 1
      %p212 = scmp.eq.s32.totalorder %s27, 1
      %p213 = scmp.ne.s32.totalorder %s208, %s210
      %p214 = scmp.eq.s32.totalorder %s27, 0
      %p215 = por %p213, %p214
      %p216 = scmp.ne.s32.totalorder %s208, %s210
      %p217 = scmp.eq.s32.totalorder %s32, 1
      %p218 = por %p216, %p217
      %p219 = scmp.ne.s32.totalorder %s210, %s211
      %p220 = scmp.eq.s32.totalorder %s32, 0
      %p221 = por %p219, %p220
      %p222 = scmp.ne.s32.totalorder %s210, %s211
      %p223 = scmp.eq.s32.totalorder %s33, 1
      %p224 = por %p222, %p223
      %p226 = scmp.ne.s32.totalorder %s211, %s225
      %p227 = scmp.eq.s32.totalorder %s33, 0
      %p228 = por %p226, %p227
      %s230 = sadd.s32 %s229, 1
      %p233 = scmp.eq.s32.totalorder %s27, 1
      %p234 = scmp.ne.s32.totalorder %s229, %s231
      %p235 = scmp.eq.s32.totalorder %s27, 0
      %p236 = por %p234, %p235
      %p237 = scmp.ne.s32.totalorder %s229, %s231
      %p238 = scmp.eq.s32.totalorder %s32, 1
      %p239 = por %p237, %p238
      %p240 = scmp.ne.s32.totalorder %s231, %s232
      %p241 = scmp.eq.s32.totalorder %s32, 0
      %p242 = por %p240, %p241
      %p243 = scmp.ne.s32.totalorder %s231, %s232
      %p244 = scmp.eq.s32.totalorder %s33, 1
      %p245 = por %p243, %p244
      %p247 = scmp.ne.s32.totalorder %s232, %s246
      %p248 = scmp.eq.s32.totalorder %s33, 0
      %p249 = por %p247, %p248
      %s251 = sadd.s32 %s250, 1
      %p254 = scmp.eq.s32.totalorder %s27, 1
      %p255 = scmp.ne.s32.totalorder %s250, %s252
      %p256 = scmp.eq.s32.totalorder %s27, 0
      %p257 = por %p255, %p256
      %p258 = scmp.ne.s32.totalorder %s250, %s252
      %p259 = scmp.eq.s32.totalorder %s32, 1
      %p260 = por %p258, %p259
      %p261 = scmp.ne.s32.totalorder %s252, %s253
      %p262 = scmp.eq.s32.totalorder %s32, 0
      %p263 = por %p261, %p262
      %p264 = scmp.ne.s32.totalorder %s252, %s253
      %p265 = scmp.eq.s32.totalorder %s33, 1
      %p266 = por %p264, %p265
      %p268 = scmp.ne.s32.totalorder %s253, %s267
      %p269 = scmp.eq.s32.totalorder %s33, 0
      %p270 = por %p268, %p269
      %s271 = ssub.s32 %s27, %s34
      %p272 = scmp.eq.s32.totalorder %s271, 0
      %s274 = sadd.s32 %s273, 1
      %s275 = scalar_select %p272, %s273, %s274
      %p278 = pneg %p272
      %p279 = scmp.eq.s32.totalorder %s27, 1
      %p280 = por %p278, %p279
      %p281 = scmp.ne.s32.totalorder %s273, %s276
      %p282 = scmp.eq.s32.totalorder %s27, 0
      %p283 = por %p281, %p282
      %p284 = scmp.ne.s32.totalorder %s273, %s276
      %p285 = scmp.eq.s32.totalorder %s32, 1
      %p286 = por %p284, %p285
      %p287 = scmp.ne.s32.totalorder %s276, %s277
      %p288 = scmp.eq.s32.totalorder %s32, 0
      %p289 = por %p287, %p288
      %p290 = scmp.ne.s32.totalorder %s276, %s277
      %p291 = scmp.eq.s32.totalorder %s33, 1
      %p292 = por %p290, %p291
      %p294 = scmp.ne.s32.totalorder %s277, %s293
      %p295 = scmp.eq.s32.totalorder %s33, 0
      %p296 = por %p294, %p295
      %p297 = scmp.le.s32.totalorder 1, %s27
      %p298 = scmp.lt.s32.totalorder %s27, 3
      %p299 = pnand %p297, %p298
      %p300 = pneg %p299
      // Predicated region
      $region9: #{tpu_custom_call.1} parent=5 // pred_check
        _
      $region10: #{tpu_custom_call.1} parent=5 // pred_check_branch
        %302 = sbr.rel (%p299) target = $region12
      $region11: #{tpu_custom_call.1} parent=5 // pred_region
        %s303 = ssub.s32 %s27, 1
        // Predicated region
        $region13: #{tpu_custom_call.1} parent=11 // pred_check
          %p304 = pneg %p74
        $region14: #{tpu_custom_call.1} parent=11 // pred_check_branch
          %306 = sbr.rel (%p304) target = $region16
        $region15: #{tpu_custom_call.1} parent=11 // pred_region
          %308 = vsyncadd [#allocation8], 0
          %s309 = sshll.u32 %s1, 4
          %s310 = int_to_ptr.hbm [resolvable:$true] %s309
          %s311 = sshll.u32 [#allocation7], 4
          %s312 = int_to_ptr.vmem [resolvable:$true] %s311
          %317 = dma.hbm_to_vmem [thread:$0]  %s310, 4096, %s312, [#allocation8], 128, 128, 8
        $region16: #{tpu_custom_call.1} parent=11 // pred_fallthru
          _
        // Predicated region
        $region17: #{tpu_custom_call.1} parent=11 // pred_check
          %p318 = pneg %p95
        $region18: #{tpu_custom_call.1} parent=11 // pred_check_branch
          %320 = sbr.rel (%p318) target = $region20
        $region19: #{tpu_custom_call.1} parent=11 // pred_region
          %322 = vsyncadd [#allocation8], 0
          %s324 = sshll.u32 %s2, 4
          %s325 = int_to_ptr.hbm [resolvable:$true] %s324
          %s326 = sshll.u32 [#allocation9], 4
          %s327 = int_to_ptr.vmem [resolvable:$true] %s326
          %329 = dma.hbm_to_vmem [thread:$0]  %s325, 16, %s327, [#allocation8]
        $region20: #{tpu_custom_call.1} parent=11 // pred_fallthru
          _
        // Predicated region
        $region21: #{tpu_custom_call.1} parent=11 // pred_check
          %p330 = pneg %p116
        $region22: #{tpu_custom_call.1} parent=11 // pred_check_branch
          %332 = sbr.rel (%p330) target = $region24
        $region23: #{tpu_custom_call.1} parent=11 // pred_region
          %334 = vsyncadd [#allocation11], 0
          %s336 = sshll.u32 %s3, 4
          %s337 = int_to_ptr.hbm [resolvable:$true] %s336
          %s338 = sshll.u32 [#allocation10], 4
          %s339 = int_to_ptr.vmem [resolvable:$true] %s338
          %341 = dma.hbm_to_vmem [thread:$0]  %s337, 16, %s339, [#allocation11]
        $region24: #{tpu_custom_call.1} parent=11 // pred_fallthru
          _
        // Predicated region
        $region25: #{tpu_custom_call.1} parent=11 // pred_check
          %p342 = pneg %p137
        $region26: #{tpu_custom_call.1} parent=11 // pred_check_branch
          %344 = sbr.rel (%p342) target = $region28
        $region27: #{tpu_custom_call.1} parent=11 // pred_region
          %346 = vsyncadd [#allocation11], 0
          %s347 = sshll.u32 %s4, 4
          %s348 = int_to_ptr.hbm [resolvable:$true] %s347
          %s349 = sshll.u32 [#allocation12], 4
          %s350 = int_to_ptr.vmem [resolvable:$true] %s349
          %355 = dma.hbm_to_vmem [thread:$0]  %s348, 512, %s350, [#allocation11], 128, 128, 8
        $region28: #{tpu_custom_call.1} parent=11 // pred_fallthru
          _
        // Predicated region
        $region29: #{tpu_custom_call.1} parent=11 // pred_check
          %p356 = pneg %p158
        $region30: #{tpu_custom_call.1} parent=11 // pred_check_branch
          %358 = sbr.rel (%p356) target = $region32
        $region31: #{tpu_custom_call.1} parent=11 // pred_region
          %360 = vsyncadd [#allocation14], 0
          %s362 = sshll.u32 %s5, 4
          %s363 = int_to_ptr.hbm [resolvable:$true] %s362
          %s364 = sshll.u32 [#allocation13], 4
          %s365 = int_to_ptr.vmem [resolvable:$true] %s364
          %367 = dma.hbm_to_vmem [thread:$0]  %s363, 16, %s365, [#allocation14]
        $region32: #{tpu_custom_call.1} parent=11 // pred_fallthru
          _
        // Predicated region
        $region33: #{tpu_custom_call.1} parent=11 // pred_check
          %p368 = pneg %p179
        $region34: #{tpu_custom_call.1} parent=11 // pred_check_branch
          %370 = sbr.rel (%p368) target = $region36
        $region35: #{tpu_custom_call.1} parent=11 // pred_region
          %372 = vsyncadd [#allocation14], 0
          %s373 = sshll.u32 %s6, 4
          %s374 = int_to_ptr.hbm [resolvable:$true] %s373
          %s375 = sshll.u32 [#allocation15], 4
          %s376 = int_to_ptr.vmem [resolvable:$true] %s375
          %381 = dma.hbm_to_vmem [thread:$0]  %s374, 4096, %s376, [#allocation14], 256, 256, 16
        $region36: #{tpu_custom_call.1} parent=11 // pred_fallthru
          _
        // Predicated region
        $region37: #{tpu_custom_call.1} parent=11 // pred_check
          %p382 = pneg %p200
        $region38: #{tpu_custom_call.1} parent=11 // pred_check_branch
          %384 = sbr.rel (%p382) target = $region40
        $region39: #{tpu_custom_call.1} parent=11 // pred_region
          _
        $region40: #{tpu_custom_call.1} parent=11 // pred_fallthru
          _
        // Predicated region
        $region41: #{tpu_custom_call.1} parent=11 // pred_check
          %p385 = pneg %p221
        $region42: #{tpu_custom_call.1} parent=11 // pred_check_branch
          %387 = sbr.rel (%p385) target = $region44
        $region43: #{tpu_custom_call.1} parent=11 // pred_region
          _
        $region44: #{tpu_custom_call.1} parent=11 // pred_fallthru
          _
        // Predicated region
        $region45: #{tpu_custom_call.1} parent=11 // pred_check
          %p388 = pneg %p242
        $region46: #{tpu_custom_call.1} parent=11 // pred_check_branch
          %390 = sbr.rel (%p388) target = $region48
        $region47: #{tpu_custom_call.1} parent=11 // pred_region
          %392 = vsyncadd [#allocation17], 0
          %s393 = sshll.u32 %s9, 4
          %s394 = int_to_ptr.hbm [resolvable:$true] %s393
          %s395 = sshll.u32 [#allocation16], 4
          %s396 = int_to_ptr.vmem [resolvable:$true] %s395
          %401 = dma.hbm_to_vmem [thread:$0]  %s394, 1024, %s396, [#allocation17], 256, 256, 16
        $region48: #{tpu_custom_call.1} parent=11 // pred_fallthru
          _
        // Predicated region
        $region49: #{tpu_custom_call.1} parent=11 // pred_check
          %p402 = pneg %p263
        $region50: #{tpu_custom_call.1} parent=11 // pred_check_branch
          %404 = sbr.rel (%p402) target = $region52
        $region51: #{tpu_custom_call.1} parent=11 // pred_region
          _
        $region52: #{tpu_custom_call.1} parent=11 // pred_fallthru
          _
      $region12: #{tpu_custom_call.1} parent=5 // pred_fallthru
        _
      %p405 = scmp.lt.s32.totalorder %s27, 2
      // Predicated region
      $region53: #{tpu_custom_call.1} parent=5 // pred_check
        %p406 = pneg %p405
      $region54: #{tpu_custom_call.1} parent=5 // pred_check_branch
        %408 = sbr.rel (%p406) target = $region56
      $region55: #{tpu_custom_call.1} parent=5 // pred_region
        // Predicated region
        $region57: #{tpu_custom_call.1} parent=55 // pred_check
          %p409 = pneg %p47
        $region58: #{tpu_custom_call.1} parent=55 // pred_check_branch
          %411 = sbr.rel (%p409) target = $region60
        $region59: #{tpu_custom_call.1} parent=55 // pred_region
          %s412 = sand.u32 %s37, 1
          %s413 = scalar_lea.sflag [#allocation5], %s412
          %s414 = sand.u32 %s37, 1
          %s415 = smul.addr %s414, 64
          %s416 = scalar_lea.vmem [#allocation4], %s415
          %s417 = smul.u32 2, %s27
          %419 = vsyncadd %s413, 0
          %s420 = smul.addr %s417, 4
          %s421 = smul.addr %s420, 8
          %s422 = scalar_lea.hbm %s0, %s421
          %s423 = sshll.u32 %s422, 4
          %s424 = int_to_ptr.hbm [resolvable:$true] %s423
          %s425 = sshll.u32 %s416, 4
          %s426 = int_to_ptr.vmem [resolvable:$true] %s425
          %431 = dma.hbm_to_vmem [thread:$0]  %s424, 1024, %s426, %s413, 256, 256, 16
        $region60: #{tpu_custom_call.1} parent=55 // pred_fallthru
          _
      $region56: #{tpu_custom_call.1} parent=5 // pred_fallthru
        _
      %p432 = scmp.le.s32.totalorder 1, %s27
      %p433 = scmp.lt.s32.totalorder %s27, 3
      %p434 = pnand %p432, %p433
      %p435 = pneg %p434
      // Predicated region
      $region61: #{tpu_custom_call.1} parent=5 // pred_check
        _
      $region62: #{tpu_custom_call.1} parent=5 // pred_check_branch
        %437 = sbr.rel (%p434) target = $region64
      $region63: #{tpu_custom_call.1} parent=5 // pred_region
        %s438 = ssub.s32 %s27, 1
        %s439 = sand.u32 %s40, 1
        %s440 = scalar_lea.sflag [#allocation5], %s439
        %s441 = sand.u32 %s40, 1
        %s442 = smul.addr %s441, 64
        %s443 = scalar_lea.vmem [#allocation4], %s442
        // Predicated region
        $region65: #{tpu_custom_call.1} parent=63 // pred_check
          %p444 = pneg %p53
        $region66: #{tpu_custom_call.1} parent=63 // pred_check_branch
          %446 = sbr.rel (%p444) target = $region68
        $region67: #{tpu_custom_call.1} parent=63 // pred_region
          %448 = dma.done %s440, 1024
        $region68: #{tpu_custom_call.1} parent=63 // pred_fallthru
          _
        // Predicated region
        $region69: #{tpu_custom_call.1} parent=63 // pred_check
          %p449 = pneg %p74
        $region70: #{tpu_custom_call.1} parent=63 // pred_check_branch
          %451 = sbr.rel (%p449) target = $region72
        $region71: #{tpu_custom_call.1} parent=63 // pred_region
          %453 = dma.done [#allocation8], 4096
        $region72: #{tpu_custom_call.1} parent=63 // pred_fallthru
          _
        // Predicated region
        $region73: #{tpu_custom_call.1} parent=63 // pred_check
          %p454 = pneg %p95
        $region74: #{tpu_custom_call.1} parent=63 // pred_check_branch
          %456 = sbr.rel (%p454) target = $region76
        $region75: #{tpu_custom_call.1} parent=63 // pred_region
          %458 = dma.done [#allocation8], 16
        $region76: #{tpu_custom_call.1} parent=63 // pred_fallthru
          _
        // Predicated region
        $region77: #{tpu_custom_call.1} parent=63 // pred_check
          %p459 = pneg %p116
        $region78: #{tpu_custom_call.1} parent=63 // pred_check_branch
          %461 = sbr.rel (%p459) target = $region80
        $region79: #{tpu_custom_call.1} parent=63 // pred_region
          %463 = dma.done [#allocation11], 16
        $region80: #{tpu_custom_call.1} parent=63 // pred_fallthru
          _
        // Predicated region
        $region81: #{tpu_custom_call.1} parent=63 // pred_check
          %p464 = pneg %p137
        $region82: #{tpu_custom_call.1} parent=63 // pred_check_branch
          %466 = sbr.rel (%p464) target = $region84
        $region83: #{tpu_custom_call.1} parent=63 // pred_region
          %468 = dma.done [#allocation11], 512
        $region84: #{tpu_custom_call.1} parent=63 // pred_fallthru
          _
        // Predicated region
        $region85: #{tpu_custom_call.1} parent=63 // pred_check
          %p469 = pneg %p158
        $region86: #{tpu_custom_call.1} parent=63 // pred_check_branch
          %471 = sbr.rel (%p469) target = $region88
        $region87: #{tpu_custom_call.1} parent=63 // pred_region
          %473 = dma.done [#allocation14], 16
        $region88: #{tpu_custom_call.1} parent=63 // pred_fallthru
          _
        // Predicated region
        $region89: #{tpu_custom_call.1} parent=63 // pred_check
          %p474 = pneg %p179
        $region90: #{tpu_custom_call.1} parent=63 // pred_check_branch
          %476 = sbr.rel (%p474) target = $region92
        $region91: #{tpu_custom_call.1} parent=63 // pred_region
          %478 = dma.done [#allocation14], 4096
        $region92: #{tpu_custom_call.1} parent=63 // pred_fallthru
          _
        // Predicated region
        $region93: #{tpu_custom_call.1} parent=63 // pred_check
          %p479 = pneg %p242
        $region94: #{tpu_custom_call.1} parent=63 // pred_check_branch
          %481 = sbr.rel (%p479) target = $region96
        $region95: #{tpu_custom_call.1} parent=63 // pred_region
          %483 = dma.done [#allocation17], 1024
        $region96: #{tpu_custom_call.1} parent=63 // pred_fallthru
          _
        %s484 = sand.u32 %s40, 1
        %s485 = scalar_lea.sflag [#allocation5], %s484
        %s486 = sand.u32 %s40, 1
        %s487 = smul.addr %s486, 64
        %s488 = scalar_lea.vmem [#allocation4], %s487
        %p489 = pneg %p53
        %p490 = pneg %p50
        %p491 = pneg %p74
        %p492 = pneg %p71
        %p493 = pneg %p95
        %p494 = pneg %p92
        %p495 = pneg %p116
        %p496 = pneg %p113
        %p497 = pneg %p137
        %p498 = pneg %p134
        %p499 = pneg %p158
        %p500 = pneg %p155
        %p501 = pneg %p179
        %p502 = pneg %p176
        %p503 = pneg %p200
        %p504 = pneg %p197
        %p505 = pneg %p221
        %p506 = pneg %p218
        %p507 = pneg %p242
        %p508 = pneg %p239
        %p509 = pneg %p263
        %p510 = pneg %p260
        %p511 = pneg %p289
        %p512 = pneg %p286
        %s513 = sand.u32 %s276, 1
        %s514 = scalar_lea.sflag [#allocation6], %s513
        %s515 = sand.u32 %s276, 1
        %s516 = smul.addr %s515, 64
        %s517 = scalar_lea.vmem [#allocation18], %s516
        %s518 = smul.u32 2, %s32
        %s519 = smul.u32 2, %s32
        %v520 = vld [vmem:[%s443] sm:$0xff]
        %v521 = vld [vmem:[%s443 + $0x8] sm:$0xff]
        %v522 = vld [vmem:[%s443 + $0x10] sm:$0xff]
        %v523 = vld [vmem:[%s443 + $0x18] sm:$0xff]
        %v524 = vld [vmem:[%s443 + $0x20] sm:$0xff]
        %v525 = vld [vmem:[%s443 + $0x28] sm:$0xff]
        %v526 = vld [vmem:[%s443 + $0x30] sm:$0xff]
        %v527 = vld [vmem:[%s443 + $0x38] sm:$0xff]
        %v528 = vld [vmem:[#allocation7] sm:$0xff]
        %v529 = vld [vmem:[#allocation7 + $0x8] sm:$0xff]
        %v530 = vld [vmem:[#allocation7 + $0x10] sm:$0xff]
        %v531 = vld [vmem:[#allocation7 + $0x18] sm:$0xff]
        %v532 = vld [vmem:[#allocation7 + $0x20] sm:$0xff]
        %v533 = vld [vmem:[#allocation7 + $0x28] sm:$0xff]
        %v534 = vld [vmem:[#allocation7 + $0x30] sm:$0xff]
        %v535 = vld [vmem:[#allocation7 + $0x38] sm:$0xff]
        %v536 = vld [vmem:[#allocation7 + $0x40] sm:$0xff]
        %v537 = vld [vmem:[#allocation7 + $0x48] sm:$0xff]
        %v538 = vld [vmem:[#allocation7 + $0x50] sm:$0xff]
        %v539 = vld [vmem:[#allocation7 + $0x58] sm:$0xff]
        %v540 = vld [vmem:[#allocation7 + $0x60] sm:$0xff]
        %v541 = vld [vmem:[#allocation7 + $0x68] sm:$0xff]
        %v542 = vld [vmem:[#allocation7 + $0x70] sm:$0xff]
        %v543 = vld [vmem:[#allocation7 + $0x78] sm:$0xff]
        %v544 = vld [vmem:[#allocation7 + $0x80] sm:$0xff]
        %v545 = vld [vmem:[#allocation7 + $0x88] sm:$0xff]
        %v546 = vld [vmem:[#allocation7 + $0x90] sm:$0xff]
        %v547 = vld [vmem:[#allocation7 + $0x98] sm:$0xff]
        %v548 = vld [vmem:[#allocation7 + $0xa0] sm:$0xff]
        %v549 = vld [vmem:[#allocation7 + $0xa8] sm:$0xff]
        %v550 = vld [vmem:[#allocation7 + $0xb0] sm:$0xff]
        %v551 = vld [vmem:[#allocation7 + $0xb8] sm:$0xff]
        %v552 = vld [vmem:[#allocation7 + $0xc0] sm:$0xff]
        %v553 = vld [vmem:[#allocation7 + $0xc8] sm:$0xff]
        %v554 = vld [vmem:[#allocation7 + $0xd0] sm:$0xff]
        %v555 = vld [vmem:[#allocation7 + $0xd8] sm:$0xff]
        %v556 = vld [vmem:[#allocation7 + $0xe0] sm:$0xff]
        %v557 = vld [vmem:[#allocation7 + $0xe8] sm:$0xff]
        %v558 = vld [vmem:[#allocation7 + $0xf0] sm:$0xff]
        %v559 = vld [vmem:[#allocation7 + $0xf8] sm:$0xff]
        %v560 = vld [vmem:[#allocation9] sm:$0x1]
        %v562 = vperm.slane %v560, 0
        %564 = vmatpush.msra.mxu0 %v543
        %565 = vmatpush.msra.mxu0 %v542
        %566 = vmatpush.msra.mxu0 %v541
        %567 = vmatpush.msra.mxu0 %v540
        %568 = vmatpush.msra.mxu0 %v539
        %569 = vmatpush.msra.mxu0 %v538
        %570 = vmatpush.msra.mxu0 %v537
        %571 = vmatpush.msra.mxu0 %v536
        %572 = vmatpush.msra.mxu0 %v535
        %573 = vmatpush.msra.mxu0 %v534
        %574 = vmatpush.msra.mxu0 %v533
        %575 = vmatpush.msra.mxu0 %v532
        %576 = vmatpush.msra.mxu0 %v531
        %577 = vmatpush.msra.mxu0 %v530
        %578 = vmatpush.msra.mxu0 %v529
        %579 = vmatpush.msra.mxu0 %v528
        %580 = vmatmul.f32.gmra.mxu0 %v520
        %v581 = vpop.f32.mrf.mxu0
        %v582 = vadd.f32 %v562, %v581
        %583 = vmatmul.f32.gmra.mxu0 %v522
        %v584 = vpop.f32.mrf.mxu0
        %v585 = vadd.f32 %v562, %v584
        %586 = vmatmul.f32.gmra.mxu0 %v524
        %v587 = vpop.f32.mrf.mxu0
        %v588 = vadd.f32 %v562, %v587
        %589 = vmatmul.f32.gmra.mxu0 %v526
        %v590 = vpop.f32.mrf.mxu0
        %v591 = vadd.f32 %v562, %v590
        %592 = vdwg.mxu0
        %593 = vmatpush.msra.mxu0 %v559
        %594 = vmatpush.msra.mxu0 %v558
        %595 = vmatpush.msra.mxu0 %v557
        %596 = vmatpush.msra.mxu0 %v556
        %597 = vmatpush.msra.mxu0 %v555
        %598 = vmatpush.msra.mxu0 %v554
        %599 = vmatpush.msra.mxu0 %v553
        %600 = vmatpush.msra.mxu0 %v552
        %601 = vmatpush.msra.mxu0 %v551
        %602 = vmatpush.msra.mxu0 %v550
        %603 = vmatpush.msra.mxu0 %v549
        %604 = vmatpush.msra.mxu0 %v548
        %605 = vmatpush.msra.mxu0 %v547
        %606 = vmatpush.msra.mxu0 %v546
        %607 = vmatpush.msra.mxu0 %v545
        %608 = vmatpush.msra.mxu0 %v544
        %609 = vmatmul.f32.gmra.mxu0 %v521
        %v610 = vpop.f32.mrf.mxu0
        %v611 = vadd.f32 %v582, %v610
        %612 = vmatmul.f32.gmra.mxu0 %v523
        %v613 = vpop.f32.mrf.mxu0
        %v614 = vadd.f32 %v585, %v613
        %615 = vmatmul.f32.gmra.mxu0 %v525
        %v616 = vpop.f32.mrf.mxu0
        %v617 = vadd.f32 %v588, %v616
        %618 = vmatmul.f32.gmra.mxu0 %v527
        %v619 = vpop.f32.mrf.mxu0
        %v620 = vadd.f32 %v591, %v619
        %621 = vdwg.mxu0
        %v622 = vmax.f32 %v611, 0.0
        %v623 = vmax.f32 %v614, 0.0
        %v624 = vmax.f32 %v617, 0.0
        %v625 = vmax.f32 %v620, 0.0
        %626 = vst [vmem:[#allocation2] sm:$0x3] 0.0
        %627 = vst [vmem:[#allocation2 + $0x18] sm:$0x3] 0.0
        %628 = vst [vmem:[#allocation2 + $0x12] sm:$0x3] 0.0
        %629 = vst [vmem:[#allocation2 + $0x2a] sm:$0x3] 0.0
        %630 = vst [vmem:[#allocation2 + $0x2] sm:$0xff] %v622
        %631 = vst [vmem:[#allocation2 + $0xa] sm:$0xff] %v623
        %632 = vst [vmem:[#allocation2 + $0x1a] sm:$0xff] %v624
        %633 = vst [vmem:[#allocation2 + $0x22] sm:$0xff] %v625
        %v634 = vld [vmem:[#allocation12] sm:$0x1]
        %v635 = vld [vmem:[#allocation12 + $0x1] sm:$0x1]
        %v636 = vld [vmem:[#allocation12 + $0x2] sm:$0x1]
        %v637 = vld [vmem:[#allocation12 + $0x3] sm:$0x1]
        %v638 = vld [vmem:[#allocation12 + $0x4] sm:$0x1]
        %v639 = vld [vmem:[#allocation12 + $0x5] sm:$0x1]
        %v640 = vld [vmem:[#allocation12 + $0x6] sm:$0x1]
        %v641 = vld [vmem:[#allocation12 + $0x7] sm:$0x1]
        %v642 = vld [vmem:[#allocation12 + $0x8] sm:$0x1]
        %v643 = vld [vmem:[#allocation12 + $0x9] sm:$0x1]
        %v644 = vld [vmem:[#allocation12 + $0xa] sm:$0x1]
        %v645 = vld [vmem:[#allocation12 + $0xb] sm:$0x1]
        %v646 = vld [vmem:[#allocation12 + $0xc] sm:$0x1]
        %v647 = vld [vmem:[#allocation12 + $0xd] sm:$0x1]
        %v648 = vld [vmem:[#allocation12 + $0xe] sm:$0x1]
        %v649 = vld [vmem:[#allocation12 + $0xf] sm:$0x1]
        %v650 = vld [vmem:[#allocation12 + $0x10] sm:$0x1]
        %v651 = vld [vmem:[#allocation12 + $0x11] sm:$0x1]
        %v652 = vld [vmem:[#allocation12 + $0x12] sm:$0x1]
        %v653 = vld [vmem:[#allocation12 + $0x13] sm:$0x1]
        %v654 = vld [vmem:[#allocation12 + $0x14] sm:$0x1]
        %v655 = vld [vmem:[#allocation12 + $0x15] sm:$0x1]
        %v656 = vld [vmem:[#allocation12 + $0x16] sm:$0x1]
        %v657 = vld [vmem:[#allocation12 + $0x17] sm:$0x1]
        %v658 = vld [vmem:[#allocation12 + $0x18] sm:$0x1]
        %v659 = vld [vmem:[#allocation2] sm:$0xff]
        %v660 = vld [vmem:[#allocation2 + $0x8] sm:$0xff]
        %v661 = vld [vmem:[#allocation2 + $0x18] sm:$0xff]
        %v662 = vld [vmem:[#allocation2 + $0x20] sm:$0xff]
        %663 = vrot.lane.b32.xlu0 %v659, 16
        %v664 = vpop.permute.xlu0 %663
        %665 = vrot.lane.b32.xlu0 %v660, 16
        %v666 = vpop.permute.xlu0 %665
        %667 = vrot.lane.b32.xlu0 %v661, 16
        %v668 = vpop.permute.xlu0 %667
        %669 = vrot.lane.b32.xlu0 %v662, 16
        %v670 = vpop.permute.xlu0 %669
        %v671 = vperm.slane %v634, 0
        %v672 = vmul.f32 %v664, %v671
        %v673 = vmul.f32 %v666, %v671
        %v674 = vmul.f32 %v668, %v671
        %v675 = vmul.f32 %v670, %v671
        %676 = vrot.lane.b32.xlu0 %v659, 8
        %v677 = vpop.permute.xlu0 %676
        %678 = vrot.lane.b32.xlu0 %v660, 8
        %v679 = vpop.permute.xlu0 %678
        %680 = vrot.lane.b32.xlu0 %v661, 8
        %v681 = vpop.permute.xlu0 %680
        %682 = vrot.lane.b32.xlu0 %v662, 8
        %v683 = vpop.permute.xlu0 %682
        %v684 = vperm.slane %v635, 0
        %v685 = vmul.f32 %v677, %v684
        %v686 = vmul.f32 %v679, %v684
        %v687 = vmul.f32 %v681, %v684
        %v688 = vmul.f32 %v683, %v684
        %v689 = vadd.f32 %v672, %v685
        %v690 = vadd.f32 %v673, %v686
        %v691 = vadd.f32 %v674, %v687
        %v692 = vadd.f32 %v675, %v688
        %v693 = vperm.slane %v636, 0
        %v694 = vmul.f32 %v659, %v693
        %v695 = vmul.f32 %v660, %v693
        %v696 = vmul.f32 %v661, %v693
        %v697 = vmul.f32 %v662, %v693
        %v698 = vadd.f32 %v689, %v694
        %v699 = vadd.f32 %v690, %v695
        %v700 = vadd.f32 %v691, %v696
        %v701 = vadd.f32 %v692, %v697
        %702 = vrot.lane.b32.xlu0 %v659, 120
        %v703 = vpop.permute.xlu0 %702
        %704 = vrot.lane.b32.xlu0 %v660, 120
        %v705 = vpop.permute.xlu0 %704
        %706 = vrot.lane.b32.xlu0 %v661, 120
        %v707 = vpop.permute.xlu0 %706
        %708 = vrot.lane.b32.xlu0 %v662, 120
        %v709 = vpop.permute.xlu0 %708
        %v710 = vperm.slane %v637, 0
        %v711 = vmul.f32 %v703, %v710
        %v712 = vmul.f32 %v705, %v710
        %v713 = vmul.f32 %v707, %v710
        %v714 = vmul.f32 %v709, %v710
        %v715 = vadd.f32 %v698, %v711
        %v716 = vadd.f32 %v699, %v712
        %v717 = vadd.f32 %v700, %v713
        %v718 = vadd.f32 %v701, %v714
        %719 = vrot.lane.b32.xlu0 %v659, 112
        %v720 = vpop.permute.xlu0 %719
        %721 = vrot.lane.b32.xlu0 %v660, 112
        %v722 = vpop.permute.xlu0 %721
        %723 = vrot.lane.b32.xlu0 %v661, 112
        %v724 = vpop.permute.xlu0 %723
        %725 = vrot.lane.b32.xlu0 %v662, 112
        %v726 = vpop.permute.xlu0 %725
        %v727 = vperm.slane %v638, 0
        %v728 = vmul.f32 %v720, %v727
        %v729 = vmul.f32 %v722, %v727
        %v730 = vmul.f32 %v724, %v727
        %v731 = vmul.f32 %v726, %v727
        %v732 = vadd.f32 %v715, %v728
        %v733 = vadd.f32 %v716, %v729
        %v734 = vadd.f32 %v717, %v730
        %v735 = vadd.f32 %v718, %v731
        %v736 = vld [vmem:[#allocation2 + $0x1] sm:$0xff]
        %v737 = vld [vmem:[#allocation2 + $0x9] sm:$0xff]
        %v738 = vld [vmem:[#allocation2 + $0x19] sm:$0xff]
        %v739 = vld [vmem:[#allocation2 + $0x21] sm:$0xff]
        %740 = vrot.lane.b32.xlu0 %v736, 16
        %v741 = vpop.permute.xlu0 %740
        %742 = vrot.lane.b32.xlu0 %v737, 16
        %v743 = vpop.permute.xlu0 %742
        %744 = vrot.lane.b32.xlu0 %v738, 16
        %v745 = vpop.permute.xlu0 %744
        %746 = vrot.lane.b32.xlu0 %v739, 16
        %v747 = vpop.permute.xlu0 %746
        %v748 = vperm.slane %v639, 0
        %v749 = vmul.f32 %v741, %v748
        %v750 = vmul.f32 %v743, %v748
        %v751 = vmul.f32 %v745, %v748
        %v752 = vmul.f32 %v747, %v748
        %753 = vrot.lane.b32.xlu0 %v736, 8
        %v754 = vpop.permute.xlu0 %753
        %755 = vrot.lane.b32.xlu0 %v737, 8
        %v756 = vpop.permute.xlu0 %755
        %757 = vrot.lane.b32.xlu0 %v738, 8
        %v758 = vpop.permute.xlu0 %757
        %759 = vrot.lane.b32.xlu0 %v739, 8
        %v760 = vpop.permute.xlu0 %759
        %v761 = vperm.slane %v640, 0
        %v762 = vmul.f32 %v754, %v761
        %v763 = vmul.f32 %v756, %v761
        %v764 = vmul.f32 %v758, %v761
        %v765 = vmul.f32 %v760, %v761
        %v766 = vadd.f32 %v749, %v762
        %v767 = vadd.f32 %v750, %v763
        %v768 = vadd.f32 %v751, %v764
        %v769 = vadd.f32 %v752, %v765
        %v770 = vperm.slane %v641, 0
        %v771 = vmul.f32 %v736, %v770
        %v772 = vmul.f32 %v737, %v770
        %v773 = vmul.f32 %v738, %v770
        %v774 = vmul.f32 %v739, %v770
        %v775 = vadd.f32 %v766, %v771
        %v776 = vadd.f32 %v767, %v772
        %v777 = vadd.f32 %v768, %v773
        %v778 = vadd.f32 %v769, %v774
        %779 = vrot.lane.b32.xlu0 %v736, 120
        %v780 = vpop.permute.xlu0 %779
        %781 = vrot.lane.b32.xlu0 %v737, 120
        %v782 = vpop.permute.xlu0 %781
        %783 = vrot.lane.b32.xlu0 %v738, 120
        %v784 = vpop.permute.xlu0 %783
        %785 = vrot.lane.b32.xlu0 %v739, 120
        %v786 = vpop.permute.xlu0 %785
        %v787 = vperm.slane %v642, 0
        %v788 = vmul.f32 %v780, %v787
        %v789 = vmul.f32 %v782, %v787
        %v790 = vmul.f32 %v784, %v787
        %v791 = vmul.f32 %v786, %v787
        %v792 = vadd.f32 %v775, %v788
        %v793 = vadd.f32 %v776, %v789
        %v794 = vadd.f32 %v777, %v790
        %v795 = vadd.f32 %v778, %v791
        %796 = vrot.lane.b32.xlu0 %v736, 112
        %v797 = vpop.permute.xlu0 %796
        %798 = vrot.lane.b32.xlu0 %v737, 112
        %v799 = vpop.permute.xlu0 %798
        %800 = vrot.lane.b32.xlu0 %v738, 112
        %v801 = vpop.permute.xlu0 %800
        %802 = vrot.lane.b32.xlu0 %v739, 112
        %v803 = vpop.permute.xlu0 %802
        %v804 = vperm.slane %v643, 0
        %v805 = vmul.f32 %v797, %v804
        %v806 = vmul.f32 %v799, %v804
        %v807 = vmul.f32 %v801, %v804
        %v808 = vmul.f32 %v803, %v804
        %v809 = vadd.f32 %v792, %v805
        %v810 = vadd.f32 %v793, %v806
        %v811 = vadd.f32 %v794, %v807
        %v812 = vadd.f32 %v795, %v808
        %v813 = vld [vmem:[#allocation2 + $0x2] sm:$0xff]
        %v814 = vld [vmem:[#allocation2 + $0xa] sm:$0xff]
        %v815 = vld [vmem:[#allocation2 + $0x1a] sm:$0xff]
        %v816 = vld [vmem:[#allocation2 + $0x22] sm:$0xff]
        %817 = vrot.lane.b32.xlu0 %v813, 16
        %v818 = vpop.permute.xlu0 %817
        %819 = vrot.lane.b32.xlu0 %v814, 16
        %v820 = vpop.permute.xlu0 %819
        %821 = vrot.lane.b32.xlu0 %v815, 16
        %v822 = vpop.permute.xlu0 %821
        %823 = vrot.lane.b32.xlu0 %v816, 16
        %v824 = vpop.permute.xlu0 %823
        %v825 = vperm.slane %v644, 0
        %v826 = vmul.f32 %v818, %v825
        %v827 = vmul.f32 %v820, %v825
        %v828 = vmul.f32 %v822, %v825
        %v829 = vmul.f32 %v824, %v825
        %830 = vrot.lane.b32.xlu0 %v813, 8
        %v831 = vpop.permute.xlu0 %830
        %832 = vrot.lane.b32.xlu0 %v814, 8
        %v833 = vpop.permute.xlu0 %832
        %834 = vrot.lane.b32.xlu0 %v815, 8
        %v835 = vpop.permute.xlu0 %834
        %836 = vrot.lane.b32.xlu0 %v816, 8
        %v837 = vpop.permute.xlu0 %836
        %v838 = vperm.slane %v645, 0
        %v839 = vmul.f32 %v831, %v838
        %v840 = vmul.f32 %v833, %v838
        %v841 = vmul.f32 %v835, %v838
        %v842 = vmul.f32 %v837, %v838
        %v843 = vadd.f32 %v826, %v839
        %v844 = vadd.f32 %v827, %v840
        %v845 = vadd.f32 %v828, %v841
        %v846 = vadd.f32 %v829, %v842
        %v847 = vperm.slane %v646, 0
        %v848 = vmul.f32 %v813, %v847
        %v849 = vmul.f32 %v814, %v847
        %v850 = vmul.f32 %v815, %v847
        %v851 = vmul.f32 %v816, %v847
        %v852 = vadd.f32 %v843, %v848
        %v853 = vadd.f32 %v844, %v849
        %v854 = vadd.f32 %v845, %v850
        %v855 = vadd.f32 %v846, %v851
        %856 = vrot.lane.b32.xlu0 %v813, 120
        %v857 = vpop.permute.xlu0 %856
        %858 = vrot.lane.b32.xlu0 %v814, 120
        %v859 = vpop.permute.xlu0 %858
        %860 = vrot.lane.b32.xlu0 %v815, 120
        %v861 = vpop.permute.xlu0 %860
        %862 = vrot.lane.b32.xlu0 %v816, 120
        %v863 = vpop.permute.xlu0 %862
        %v864 = vperm.slane %v647, 0
        %v865 = vmul.f32 %v857, %v864
        %v866 = vmul.f32 %v859, %v864
        %v867 = vmul.f32 %v861, %v864
        %v868 = vmul.f32 %v863, %v864
        %v869 = vadd.f32 %v852, %v865
        %v870 = vadd.f32 %v853, %v866
        %v871 = vadd.f32 %v854, %v867
        %v872 = vadd.f32 %v855, %v868
        %873 = vrot.lane.b32.xlu0 %v813, 112
        %v874 = vpop.permute.xlu0 %873
        %875 = vrot.lane.b32.xlu0 %v814, 112
        %v876 = vpop.permute.xlu0 %875
        %877 = vrot.lane.b32.xlu0 %v815, 112
        %v878 = vpop.permute.xlu0 %877
        %879 = vrot.lane.b32.xlu0 %v816, 112
        %v880 = vpop.permute.xlu0 %879
        %v881 = vperm.slane %v648, 0
        %v882 = vmul.f32 %v874, %v881
        %v883 = vmul.f32 %v876, %v881
        %v884 = vmul.f32 %v878, %v881
        %v885 = vmul.f32 %v880, %v881
        %v886 = vadd.f32 %v869, %v882
        %v887 = vadd.f32 %v870, %v883
        %v888 = vadd.f32 %v871, %v884
        %v889 = vadd.f32 %v872, %v885
        %v890 = vld [vmem:[#allocation2 + $0x3] sm:$0xff]
        %v891 = vld [vmem:[#allocation2 + $0xb] sm:$0xff]
        %v892 = vld [vmem:[#allocation2 + $0x1b] sm:$0xff]
        %v893 = vld [vmem:[#allocation2 + $0x23] sm:$0xff]
        %894 = vrot.lane.b32.xlu0 %v890, 16
        %v895 = vpop.permute.xlu0 %894
        %896 = vrot.lane.b32.xlu0 %v891, 16
        %v897 = vpop.permute.xlu0 %896
        %898 = vrot.lane.b32.xlu0 %v892, 16
        %v899 = vpop.permute.xlu0 %898
        %900 = vrot.lane.b32.xlu0 %v893, 16
        %v901 = vpop.permute.xlu0 %900
        %v902 = vperm.slane %v649, 0
        %v903 = vmul.f32 %v895, %v902
        %v904 = vmul.f32 %v897, %v902
        %v905 = vmul.f32 %v899, %v902
        %v906 = vmul.f32 %v901, %v902
        %907 = vrot.lane.b32.xlu0 %v890, 8
        %v908 = vpop.permute.xlu0 %907
        %909 = vrot.lane.b32.xlu0 %v891, 8
        %v910 = vpop.permute.xlu0 %909
        %911 = vrot.lane.b32.xlu0 %v892, 8
        %v912 = vpop.permute.xlu0 %911
        %913 = vrot.lane.b32.xlu0 %v893, 8
        %v914 = vpop.permute.xlu0 %913
        %v915 = vperm.slane %v650, 0
        %v916 = vmul.f32 %v908, %v915
        %v917 = vmul.f32 %v910, %v915
        %v918 = vmul.f32 %v912, %v915
        %v919 = vmul.f32 %v914, %v915
        %v920 = vadd.f32 %v903, %v916
        %v921 = vadd.f32 %v904, %v917
        %v922 = vadd.f32 %v905, %v918
        %v923 = vadd.f32 %v906, %v919
        %v924 = vperm.slane %v651, 0
        %v925 = vmul.f32 %v890, %v924
        %v926 = vmul.f32 %v891, %v924
        %v927 = vmul.f32 %v892, %v924
        %v928 = vmul.f32 %v893, %v924
        %v929 = vadd.f32 %v920, %v925
        %v930 = vadd.f32 %v921, %v926
        %v931 = vadd.f32 %v922, %v927
        %v932 = vadd.f32 %v923, %v928
        %933 = vrot.lane.b32.xlu0 %v890, 120
        %v934 = vpop.permute.xlu0 %933
        %935 = vrot.lane.b32.xlu0 %v891, 120
        %v936 = vpop.permute.xlu0 %935
        %937 = vrot.lane.b32.xlu0 %v892, 120
        %v938 = vpop.permute.xlu0 %937
        %939 = vrot.lane.b32.xlu0 %v893, 120
        %v940 = vpop.permute.xlu0 %939
        %v941 = vperm.slane %v652, 0
        %v942 = vmul.f32 %v934, %v941
        %v943 = vmul.f32 %v936, %v941
        %v944 = vmul.f32 %v938, %v941
        %v945 = vmul.f32 %v940, %v941
        %v946 = vadd.f32 %v929, %v942
        %v947 = vadd.f32 %v930, %v943
        %v948 = vadd.f32 %v931, %v944
        %v949 = vadd.f32 %v932, %v945
        %950 = vrot.lane.b32.xlu0 %v890, 112
        %v951 = vpop.permute.xlu0 %950
        %952 = vrot.lane.b32.xlu0 %v891, 112
        %v953 = vpop.permute.xlu0 %952
        %954 = vrot.lane.b32.xlu0 %v892, 112
        %v955 = vpop.permute.xlu0 %954
        %956 = vrot.lane.b32.xlu0 %v893, 112
        %v957 = vpop.permute.xlu0 %956
        %v958 = vperm.slane %v653, 0
        %v959 = vmul.f32 %v951, %v958
        %v960 = vmul.f32 %v953, %v958
        %v961 = vmul.f32 %v955, %v958
        %v962 = vmul.f32 %v957, %v958
        %v963 = vadd.f32 %v946, %v959
        %v964 = vadd.f32 %v947, %v960
        %v965 = vadd.f32 %v948, %v961
        %v966 = vadd.f32 %v949, %v962
        %v967 = vld [vmem:[#allocation2 + $0x4] sm:$0xff]
        %v968 = vld [vmem:[#allocation2 + $0xc] sm:$0xff]
        %v969 = vld [vmem:[#allocation2 + $0x1c] sm:$0xff]
        %v970 = vld [vmem:[#allocation2 + $0x24] sm:$0xff]
        %971 = vrot.lane.b32.xlu0 %v967, 16
        %v972 = vpop.permute.xlu0 %971
        %973 = vrot.lane.b32.xlu0 %v968, 16
        %v974 = vpop.permute.xlu0 %973
        %975 = vrot.lane.b32.xlu0 %v969, 16
        %v976 = vpop.permute.xlu0 %975
        %977 = vrot.lane.b32.xlu0 %v970, 16
        %v978 = vpop.permute.xlu0 %977
        %v979 = vperm.slane %v654, 0
        %v980 = vmul.f32 %v972, %v979
        %v981 = vmul.f32 %v974, %v979
        %v982 = vmul.f32 %v976, %v979
        %v983 = vmul.f32 %v978, %v979
        %984 = vrot.lane.b32.xlu0 %v967, 8
        %v985 = vpop.permute.xlu0 %984
        %986 = vrot.lane.b32.xlu0 %v968, 8
        %v987 = vpop.permute.xlu0 %986
        %988 = vrot.lane.b32.xlu0 %v969, 8
        %v989 = vpop.permute.xlu0 %988
        %990 = vrot.lane.b32.xlu0 %v970, 8
        %v991 = vpop.permute.xlu0 %990
        %v992 = vperm.slane %v655, 0
        %v993 = vmul.f32 %v985, %v992
        %v994 = vmul.f32 %v987, %v992
        %v995 = vmul.f32 %v989, %v992
        %v996 = vmul.f32 %v991, %v992
        %v997 = vadd.f32 %v980, %v993
        %v998 = vadd.f32 %v981, %v994
        %v999 = vadd.f32 %v982, %v995
        %v1000 = vadd.f32 %v983, %v996
        %v1001 = vperm.slane %v656, 0
        %v1002 = vmul.f32 %v967, %v1001
        %v1003 = vmul.f32 %v968, %v1001
        %v1004 = vmul.f32 %v969, %v1001
        %v1005 = vmul.f32 %v970, %v1001
        %v1006 = vadd.f32 %v997, %v1002
        %v1007 = vadd.f32 %v998, %v1003
        %v1008 = vadd.f32 %v999, %v1004
        %v1009 = vadd.f32 %v1000, %v1005
        %1010 = vrot.lane.b32.xlu0 %v967, 120
        %v1011 = vpop.permute.xlu0 %1010
        %1012 = vrot.lane.b32.xlu0 %v968, 120
        %v1013 = vpop.permute.xlu0 %1012
        %1014 = vrot.lane.b32.xlu0 %v969, 120
        %v1015 = vpop.permute.xlu0 %1014
        %1016 = vrot.lane.b32.xlu0 %v970, 120
        %v1017 = vpop.permute.xlu0 %1016
        %v1018 = vperm.slane %v657, 0
        %v1019 = vmul.f32 %v1011, %v1018
        %v1020 = vmul.f32 %v1013, %v1018
        %v1021 = vmul.f32 %v1015, %v1018
        %v1022 = vmul.f32 %v1017, %v1018
        %v1023 = vadd.f32 %v1006, %v1019
        %v1024 = vadd.f32 %v1007, %v1020
        %v1025 = vadd.f32 %v1008, %v1021
        %v1026 = vadd.f32 %v1009, %v1022
        %1027 = vrot.lane.b32.xlu0 %v967, 112
        %v1028 = vpop.permute.xlu0 %1027
        %1029 = vrot.lane.b32.xlu0 %v968, 112
        %v1030 = vpop.permute.xlu0 %1029
        %1031 = vrot.lane.b32.xlu0 %v969, 112
        %v1032 = vpop.permute.xlu0 %1031
        %1033 = vrot.lane.b32.xlu0 %v970, 112
        %v1034 = vpop.permute.xlu0 %1033
        %v1035 = vperm.slane %v658, 0
        %v1036 = vmul.f32 %v1028, %v1035
        %v1037 = vmul.f32 %v1030, %v1035
        %v1038 = vmul.f32 %v1032, %v1035
        %v1039 = vmul.f32 %v1034, %v1035
        %v1040 = vadd.f32 %v1023, %v1036
        %v1041 = vadd.f32 %v1024, %v1037
        %v1042 = vadd.f32 %v1025, %v1038
        %v1043 = vadd.f32 %v1026, %v1039
        %v1044 = vadd.f32 %v732, %v809
        %v1045 = vadd.f32 %v733, %v810
        %v1046 = vadd.f32 %v734, %v811
        %v1047 = vadd.f32 %v735, %v812
        %v1048 = vadd.f32 %v886, %v963
        %v1049 = vadd.f32 %v887, %v964
        %v1050 = vadd.f32 %v888, %v965
        %v1051 = vadd.f32 %v889, %v966
        %v1052 = vadd.f32 %v1044, %v1048
        %v1053 = vadd.f32 %v1045, %v1049
        %v1054 = vadd.f32 %v1046, %v1050
        %v1055 = vadd.f32 %v1047, %v1051
        %v1056 = vadd.f32 %v1052, %v1040
        %v1057 = vadd.f32 %v1053, %v1041
        %v1058 = vadd.f32 %v1054, %v1042
        %v1059 = vadd.f32 %v1055, %v1043
        %v1060 = vld [vmem:[#allocation13] sm:$0x1]
        %v1062 = vperm.slane %v1060, 0
        %v1064 = vadd.f32 %v1056, %v1062
        %v1065 = vadd.f32 %v1057, %v1062
        %v1066 = vadd.f32 %v1058, %v1062
        %v1067 = vadd.f32 %v1059, %v1062
        %v1068 = vmax.f32 %v1064, 0.0
        %v1069 = vmax.f32 %v1065, 0.0
        %v1070 = vmax.f32 %v1066, 0.0
        %v1071 = vmax.f32 %v1067, 0.0
        %v1072 = vld [vmem:[#allocation10] sm:$0x1]
        %v1074 = vperm.slane %v1072, 0
        %v1076 = vmul.f32 %v622, %v1074
        %v1077 = vmul.f32 %v623, %v1074
        %v1078 = vmul.f32 %v624, %v1074
        %v1079 = vmul.f32 %v625, %v1074
        %v1080 = vadd.f32 %v1076, %v1068
        %v1081 = vadd.f32 %v1077, %v1069
        %v1082 = vadd.f32 %v1078, %v1070
        %v1083 = vadd.f32 %v1079, %v1071
        %v1084 = vld [vmem:[#allocation15] sm:$0xff]
        %v1085 = vld [vmem:[#allocation15 + $0x8] sm:$0xff]
        %v1086 = vld [vmem:[#allocation15 + $0x10] sm:$0xff]
        %v1087 = vld [vmem:[#allocation15 + $0x18] sm:$0xff]
        %v1088 = vld [vmem:[#allocation15 + $0x20] sm:$0xff]
        %v1089 = vld [vmem:[#allocation15 + $0x28] sm:$0xff]
        %v1090 = vld [vmem:[#allocation15 + $0x30] sm:$0xff]
        %v1091 = vld [vmem:[#allocation15 + $0x38] sm:$0xff]
        %v1092 = vld [vmem:[#allocation15 + $0x40] sm:$0xff]
        %v1093 = vld [vmem:[#allocation15 + $0x48] sm:$0xff]
        %v1094 = vld [vmem:[#allocation15 + $0x50] sm:$0xff]
        %v1095 = vld [vmem:[#allocation15 + $0x58] sm:$0xff]
        %v1096 = vld [vmem:[#allocation15 + $0x60] sm:$0xff]
        %v1097 = vld [vmem:[#allocation15 + $0x68] sm:$0xff]
        %v1098 = vld [vmem:[#allocation15 + $0x70] sm:$0xff]
        %v1099 = vld [vmem:[#allocation15 + $0x78] sm:$0xff]
        %v1100 = vld [vmem:[#allocation15 + $0x80] sm:$0xff]
        %v1101 = vld [vmem:[#allocation15 + $0x88] sm:$0xff]
        %v1102 = vld [vmem:[#allocation15 + $0x90] sm:$0xff]
        %v1103 = vld [vmem:[#allocation15 + $0x98] sm:$0xff]
        %v1104 = vld [vmem:[#allocation15 + $0xa0] sm:$0xff]
        %v1105 = vld [vmem:[#allocation15 + $0xa8] sm:$0xff]
        %v1106 = vld [vmem:[#allocation15 + $0xb0] sm:$0xff]
        %v1107 = vld [vmem:[#allocation15 + $0xb8] sm:$0xff]
        %v1108 = vld [vmem:[#allocation15 + $0xc0] sm:$0xff]
        %v1109 = vld [vmem:[#allocation15 + $0xc8] sm:$0xff]
        %v1110 = vld [vmem:[#allocation15 + $0xd0] sm:$0xff]
        %v1111 = vld [vmem:[#allocation15 + $0xd8] sm:$0xff]
        %v1112 = vld [vmem:[#allocation15 + $0xe0] sm:$0xff]
        %v1113 = vld [vmem:[#allocation15 + $0xe8] sm:$0xff]
        %v1114 = vld [vmem:[#allocation15 + $0xf0] sm:$0xff]
        %v1115 = vld [vmem:[#allocation15 + $0xf8] sm:$0xff]
        %v1116 = vld [vmem:[%s7] sm:$0x3]
        %v1118 = vperm.slane %v1116, 0
        %v1119 = vperm.slane %v1116, 1
        %1122 = vmatpush.msra.mxu0 %v1114
        %1123 = vmatpush.msra.mxu0 %v1112
        %1124 = vmatpush.msra.mxu0 %v1110
        %1125 = vmatpush.msra.mxu0 %v1108
        %1126 = vmatpush.msra.mxu0 %v1106
        %1127 = vmatpush.msra.mxu0 %v1104
        %1128 = vmatpush.msra.mxu0 %v1102
        %1129 = vmatpush.msra.mxu0 %v1100
        %1130 = vmatpush.msra.mxu0 %v1098
        %1131 = vmatpush.msra.mxu0 %v1096
        %1132 = vmatpush.msra.mxu0 %v1094
        %1133 = vmatpush.msra.mxu0 %v1092
        %1134 = vmatpush.msra.mxu0 %v1090
        %1135 = vmatpush.msra.mxu0 %v1088
        %1136 = vmatpush.msra.mxu0 %v1086
        %1137 = vmatpush.msra.mxu0 %v1084
        %1138 = vmatmul.f32.gmra.mxu0 %v1080
        %v1139 = vpop.f32.mrf.mxu0
        %v1140 = vadd.f32 %v1118, %v1139
        %1141 = vmatmul.f32.gmra.mxu0 %v1081
        %v1142 = vpop.f32.mrf.mxu0
        %v1143 = vadd.f32 %v1118, %v1142
        %1144 = vmatmul.f32.gmra.mxu0 %v1082
        %v1145 = vpop.f32.mrf.mxu0
        %v1146 = vadd.f32 %v1118, %v1145
        %1147 = vmatmul.f32.gmra.mxu0 %v1083
        %v1148 = vpop.f32.mrf.mxu0
        %v1149 = vadd.f32 %v1118, %v1148
        %1150 = vdwg.mxu0
        %1151 = vmatpush.msra.mxu0 %v1115
        %1152 = vmatpush.msra.mxu0 %v1113
        %1153 = vmatpush.msra.mxu0 %v1111
        %1154 = vmatpush.msra.mxu0 %v1109
        %1155 = vmatpush.msra.mxu0 %v1107
        %1156 = vmatpush.msra.mxu0 %v1105
        %1157 = vmatpush.msra.mxu0 %v1103
        %1158 = vmatpush.msra.mxu0 %v1101
        %1159 = vmatpush.msra.mxu0 %v1099
        %1160 = vmatpush.msra.mxu0 %v1097
        %1161 = vmatpush.msra.mxu0 %v1095
        %1162 = vmatpush.msra.mxu0 %v1093
        %1163 = vmatpush.msra.mxu0 %v1091
        %1164 = vmatpush.msra.mxu0 %v1089
        %1165 = vmatpush.msra.mxu0 %v1087
        %1166 = vmatpush.msra.mxu0 %v1085
        %1167 = vmatmul.f32.gmra.mxu0 %v1080
        %v1168 = vpop.f32.mrf.mxu0
        %v1169 = vadd.f32 %v1119, %v1168
        %1170 = vmatmul.f32.gmra.mxu0 %v1081
        %v1171 = vpop.f32.mrf.mxu0
        %v1172 = vadd.f32 %v1119, %v1171
        %1173 = vmatmul.f32.gmra.mxu0 %v1082
        %v1174 = vpop.f32.mrf.mxu0
        %v1175 = vadd.f32 %v1119, %v1174
        %1176 = vmatmul.f32.gmra.mxu0 %v1083
        %v1177 = vpop.f32.mrf.mxu0
        %v1178 = vadd.f32 %v1119, %v1177
        %1179 = vdwg.mxu0
        %1180 = vst [vmem:[#allocation3] sm:$0x3] 0.0
        %1181 = vst [vmem:[#allocation3 + $0x8] sm:$0x3] 0.0
        %1182 = vst [vmem:[#allocation3 + $0x30] sm:$0x3] 0.0
        %1183 = vst [vmem:[#allocation3 + $0x38] sm:$0x3] 0.0
        %1184 = vst [vmem:[#allocation3 + $0x20] sm:$0xc] 0.0
        %1185 = vst [vmem:[#allocation3 + $0x28] sm:$0xc] 0.0
        %1186 = vst [vmem:[#allocation3 + $0x50] sm:$0xc] 0.0
        %1187 = vst [vmem:[#allocation3 + $0x58] sm:$0xc] 0.0
        %vm1196 = vcmask 1041408
        %v1197 = vrot.slane %v1140, 6
        %v1198 = vrot.slane %v1169, 6
        %v1199 = vrot.slane %v1143, 6
        %v1200 = vsel %vm1196, %v1197, %v1199
        %v1201 = vrot.slane %v1172, 6
        %v1202 = vsel %vm1196, %v1198, %v1201
        %v1203 = vrot.slane %v1146, 6
        %v1204 = vrot.slane %v1175, 6
        %v1205 = vrot.slane %v1149, 6
        %v1206 = vsel %vm1196, %v1203, %v1205
        %v1207 = vrot.slane %v1178, 6
        %v1208 = vsel %vm1196, %v1204, %v1207
        %1221 = vst [vmem:[#allocation3] sm:$0xfc] %v1197
        %1222 = vst [vmem:[#allocation3 + $0x8] sm:$0xfc] %v1198
        %1223 = vst [vmem:[#allocation3 + $0x10] sm:$0xff] %v1200
        %1224 = vst [vmem:[#allocation3 + $0x18] sm:$0xff] %v1202
        %1225 = vst [vmem:[#allocation3 + $0x20] sm:$0x3] %v1199
        %1226 = vst [vmem:[#allocation3 + $0x28] sm:$0x3] %v1201
        %1227 = vst [vmem:[#allocation3 + $0x30] sm:$0xfc] %v1203
        %1228 = vst [vmem:[#allocation3 + $0x38] sm:$0xfc] %v1204
        %1229 = vst [vmem:[#allocation3 + $0x40] sm:$0xff] %v1206
        %1230 = vst [vmem:[#allocation3 + $0x48] sm:$0xff] %v1208
        %1231 = vst [vmem:[#allocation3 + $0x50] sm:$0x3] %v1205
        %1232 = vst [vmem:[#allocation3 + $0x58] sm:$0x3] %v1207
        %v1233 = vld [vmem:[#allocation16] ss:$8 sm:$0x3]
        %s1234 = scalar_lea.vmem [#allocation16], 1
        %v1235 = vld [vmem:[%s1234] ss:$8 sm:$0x3]
        %s1236 = scalar_lea.vmem [#allocation16], 2
        %v1237 = vld [vmem:[%s1236] ss:$8 sm:$0x3]
        %s1238 = scalar_lea.vmem [#allocation16], 3
        %v1239 = vld [vmem:[%s1238] ss:$8 sm:$0x3]
        %s1240 = scalar_lea.vmem [#allocation16], 4
        %v1241 = vld [vmem:[%s1240] ss:$8 sm:$0x3]
        %s1242 = scalar_lea.vmem [#allocation16], 5
        %v1243 = vld [vmem:[%s1242] ss:$8 sm:$0x3]
        %s1244 = scalar_lea.vmem [#allocation16], 6
        %v1245 = vld [vmem:[%s1244] ss:$8 sm:$0x3]
        %s1246 = scalar_lea.vmem [#allocation16], 7
        %v1247 = vld [vmem:[%s1246] ss:$8 sm:$0x3]
        %s1248 = scalar_lea.vmem [#allocation16], 16
        %v1249 = vld [vmem:[%s1248] ss:$8 sm:$0x3]
        %s1250 = scalar_lea.vmem [#allocation16], 17
        %v1251 = vld [vmem:[%s1250] ss:$8 sm:$0x3]
        %s1252 = scalar_lea.vmem [#allocation16], 18
        %v1253 = vld [vmem:[%s1252] ss:$8 sm:$0x3]
        %s1254 = scalar_lea.vmem [#allocation16], 19
        %v1255 = vld [vmem:[%s1254] ss:$8 sm:$0x3]
        %s1256 = scalar_lea.vmem [#allocation16], 20
        %v1257 = vld [vmem:[%s1256] ss:$8 sm:$0x3]
        %s1258 = scalar_lea.vmem [#allocation16], 21
        %v1259 = vld [vmem:[%s1258] ss:$8 sm:$0x3]
        %s1260 = scalar_lea.vmem [#allocation16], 22
        %v1261 = vld [vmem:[%s1260] ss:$8 sm:$0x3]
        %s1262 = scalar_lea.vmem [#allocation16], 23
        %v1263 = vld [vmem:[%s1262] ss:$8 sm:$0x3]
        %s1264 = scalar_lea.vmem [#allocation16], 32
        %v1265 = vld [vmem:[%s1264] ss:$8 sm:$0x3]
        %s1266 = scalar_lea.vmem [#allocation16], 33
        %v1267 = vld [vmem:[%s1266] ss:$8 sm:$0x3]
        %s1268 = scalar_lea.vmem [#allocation16], 34
        %v1269 = vld [vmem:[%s1268] ss:$8 sm:$0x3]
        %s1270 = scalar_lea.vmem [#allocation16], 35
        %v1271 = vld [vmem:[%s1270] ss:$8 sm:$0x3]
        %s1272 = scalar_lea.vmem [#allocation16], 36
        %v1273 = vld [vmem:[%s1272] ss:$8 sm:$0x3]
        %s1274 = scalar_lea.vmem [#allocation16], 37
        %v1275 = vld [vmem:[%s1274] ss:$8 sm:$0x3]
        %s1276 = scalar_lea.vmem [#allocation16], 38
        %v1277 = vld [vmem:[%s1276] ss:$8 sm:$0x3]
        %s1278 = scalar_lea.vmem [#allocation16], 39
        %v1279 = vld [vmem:[%s1278] ss:$8 sm:$0x3]
        %s1280 = scalar_lea.vmem [#allocation16], 48
        %v1281 = vld [vmem:[%s1280] ss:$8 sm:$0x3]
        %v1282 = vld [vmem:[#allocation3] sm:$0xff]
        %v1283 = vld [vmem:[#allocation3 + $0x8] sm:$0xff]
        %v1284 = vld [vmem:[#allocation3 + $0x10] sm:$0xff]
        %v1285 = vld [vmem:[#allocation3 + $0x18] sm:$0xff]
        %v1286 = vld [vmem:[#allocation3 + $0x30] sm:$0xff]
        %v1287 = vld [vmem:[#allocation3 + $0x38] sm:$0xff]
        %v1288 = vld [vmem:[#allocation3 + $0x40] sm:$0xff]
        %v1289 = vld [vmem:[#allocation3 + $0x48] sm:$0xff]
        %1290 = vrot.lane.b32.xlu0 %v1282, 32
        %v1291 = vpop.permute.xlu0 %1290
        %1292 = vrot.lane.b32.xlu0 %v1284, 32
        %v1293 = vpop.permute.xlu0 %1292
        %1294 = vrot.lane.b32.xlu0 %v1286, 32
        %v1295 = vpop.permute.xlu0 %1294
        %1296 = vrot.lane.b32.xlu0 %v1288, 32
        %v1297 = vpop.permute.xlu0 %1296
        %1298 = vrot.lane.b32.xlu0 %v1283, 32
        %v1299 = vpop.permute.xlu0 %1298
        %1300 = vrot.lane.b32.xlu0 %v1285, 32
        %v1301 = vpop.permute.xlu0 %1300
        %1302 = vrot.lane.b32.xlu0 %v1287, 32
        %v1303 = vpop.permute.xlu0 %1302
        %1304 = vrot.lane.b32.xlu0 %v1289, 32
        %v1305 = vpop.permute.xlu0 %1304
        %v1306 = vlaneseq
        %v1307 = vand.u32 %v1306, 127
        %vm1308 = vcmp.lt.s32.totalorder %v1307, 32
        %v1309 = vsel %vm1308, %v1291, %v1299
        %v1310 = vsel %vm1308, %v1293, %v1301
        %v1311 = vsel %vm1308, %v1295, %v1303
        %v1312 = vsel %vm1308, %v1297, %v1305
        %v1313 = vsel %vm1308, %v1299, %v1291
        %v1314 = vsel %vm1308, %v1301, %v1293
        %v1315 = vsel %vm1308, %v1303, %v1295
        %v1316 = vsel %vm1308, %v1305, %v1297
        %v1318 = vperm.slane %v1233, 0
        %v1319 = vperm.slane %v1233, 1
        %v1322 = vmul.f32 %v1313, %v1318
        %v1323 = vmul.f32 %v1309, %v1319
        %v1324 = vmul.f32 %v1314, %v1318
        %v1325 = vmul.f32 %v1310, %v1319
        %v1326 = vmul.f32 %v1315, %v1318
        %v1327 = vmul.f32 %v1311, %v1319
        %v1328 = vmul.f32 %v1316, %v1318
        %v1329 = vmul.f32 %v1312, %v1319
        %1330 = vrot.lane.b32.xlu0 %v1282, 16
        %v1331 = vpop.permute.xlu0 %1330
        %1332 = vrot.lane.b32.xlu0 %v1284, 16
        %v1333 = vpop.permute.xlu0 %1332
        %1334 = vrot.lane.b32.xlu0 %v1286, 16
        %v1335 = vpop.permute.xlu0 %1334
        %1336 = vrot.lane.b32.xlu0 %v1288, 16
        %v1337 = vpop.permute.xlu0 %1336
        %1338 = vrot.lane.b32.xlu0 %v1283, 16
        %v1339 = vpop.permute.xlu0 %1338
        %1340 = vrot.lane.b32.xlu0 %v1285, 16
        %v1341 = vpop.permute.xlu0 %1340
        %1342 = vrot.lane.b32.xlu0 %v1287, 16
        %v1343 = vpop.permute.xlu0 %1342
        %1344 = vrot.lane.b32.xlu0 %v1289, 16
        %v1345 = vpop.permute.xlu0 %1344
        %vm1346 = vcmp.lt.s32.totalorder %v1307, 16
        %v1347 = vsel %vm1346, %v1331, %v1339
        %v1348 = vsel %vm1346, %v1333, %v1341
        %v1349 = vsel %vm1346, %v1335, %v1343
        %v1350 = vsel %vm1346, %v1337, %v1345
        %v1351 = vsel %vm1346, %v1339, %v1331
        %v1352 = vsel %vm1346, %v1341, %v1333
        %v1353 = vsel %vm1346, %v1343, %v1335
        %v1354 = vsel %vm1346, %v1345, %v1337
        %v1356 = vperm.slane %v1235, 0
        %v1357 = vperm.slane %v1235, 1
        %v1360 = vmul.f32 %v1351, %v1356
        %v1361 = vmul.f32 %v1347, %v1357
        %v1362 = vmul.f32 %v1352, %v1356
        %v1363 = vmul.f32 %v1348, %v1357
        %v1364 = vmul.f32 %v1353, %v1356
        %v1365 = vmul.f32 %v1349, %v1357
        %v1366 = vmul.f32 %v1354, %v1356
        %v1367 = vmul.f32 %v1350, %v1357
        %v1368 = vadd.f32 %v1322, %v1360
        %v1369 = vadd.f32 %v1323, %v1361
        %v1370 = vadd.f32 %v1324, %v1362
        %v1371 = vadd.f32 %v1325, %v1363
        %v1372 = vadd.f32 %v1326, %v1364
        %v1373 = vadd.f32 %v1327, %v1365
        %v1374 = vadd.f32 %v1328, %v1366
        %v1375 = vadd.f32 %v1329, %v1367
        %v1377 = vperm.slane %v1237, 0
        %v1378 = vperm.slane %v1237, 1
        %v1381 = vmul.f32 %v1282, %v1377
        %v1382 = vmul.f32 %v1283, %v1378
        %v1383 = vmul.f32 %v1284, %v1377
        %v1384 = vmul.f32 %v1285, %v1378
        %v1385 = vmul.f32 %v1286, %v1377
        %v1386 = vmul.f32 %v1287, %v1378
        %v1387 = vmul.f32 %v1288, %v1377
        %v1388 = vmul.f32 %v1289, %v1378
        %v1389 = vadd.f32 %v1368, %v1381
        %v1390 = vadd.f32 %v1369, %v1382
        %v1391 = vadd.f32 %v1370, %v1383
        %v1392 = vadd.f32 %v1371, %v1384
        %v1393 = vadd.f32 %v1372, %v1385
        %v1394 = vadd.f32 %v1373, %v1386
        %v1395 = vadd.f32 %v1374, %v1387
        %v1396 = vadd.f32 %v1375, %v1388
        %1397 = vrot.lane.b32.xlu0 %v1282, 112
        %v1398 = vpop.permute.xlu0 %1397
        %1399 = vrot.lane.b32.xlu0 %v1284, 112
        %v1400 = vpop.permute.xlu0 %1399
        %1401 = vrot.lane.b32.xlu0 %v1286, 112
        %v1402 = vpop.permute.xlu0 %1401
        %1403 = vrot.lane.b32.xlu0 %v1288, 112
        %v1404 = vpop.permute.xlu0 %1403
        %1405 = vrot.lane.b32.xlu0 %v1283, 112
        %v1406 = vpop.permute.xlu0 %1405
        %1407 = vrot.lane.b32.xlu0 %v1285, 112
        %v1408 = vpop.permute.xlu0 %1407
        %1409 = vrot.lane.b32.xlu0 %v1287, 112
        %v1410 = vpop.permute.xlu0 %1409
        %1411 = vrot.lane.b32.xlu0 %v1289, 112
        %v1412 = vpop.permute.xlu0 %1411
        %vm1413 = vcmp.lt.s32.totalorder %v1307, 112
        %v1414 = vsel %vm1413, %v1398, %v1406
        %v1415 = vsel %vm1413, %v1400, %v1408
        %v1416 = vsel %vm1413, %v1402, %v1410
        %v1417 = vsel %vm1413, %v1404, %v1412
        %v1418 = vsel %vm1413, %v1406, %v1398
        %v1419 = vsel %vm1413, %v1408, %v1400
        %v1420 = vsel %vm1413, %v1410, %v1402
        %v1421 = vsel %vm1413, %v1412, %v1404
        %v1423 = vperm.slane %v1239, 0
        %v1424 = vperm.slane %v1239, 1
        %v1427 = vmul.f32 %v1414, %v1423
        %v1428 = vmul.f32 %v1418, %v1424
        %v1429 = vmul.f32 %v1415, %v1423
        %v1430 = vmul.f32 %v1419, %v1424
        %v1431 = vmul.f32 %v1416, %v1423
        %v1432 = vmul.f32 %v1420, %v1424
        %v1433 = vmul.f32 %v1417, %v1423
        %v1434 = vmul.f32 %v1421, %v1424
        %v1435 = vadd.f32 %v1389, %v1427
        %v1436 = vadd.f32 %v1390, %v1428
        %v1437 = vadd.f32 %v1391, %v1429
        %v1438 = vadd.f32 %v1392, %v1430
        %v1439 = vadd.f32 %v1393, %v1431
        %v1440 = vadd.f32 %v1394, %v1432
        %v1441 = vadd.f32 %v1395, %v1433
        %v1442 = vadd.f32 %v1396, %v1434
        %1443 = vrot.lane.b32.xlu0 %v1282, 96
        %v1444 = vpop.permute.xlu0 %1443
        %1445 = vrot.lane.b32.xlu0 %v1284, 96
        %v1446 = vpop.permute.xlu0 %1445
        %1447 = vrot.lane.b32.xlu0 %v1286, 96
        %v1448 = vpop.permute.xlu0 %1447
        %1449 = vrot.lane.b32.xlu0 %v1288, 96
        %v1450 = vpop.permute.xlu0 %1449
        %1451 = vrot.lane.b32.xlu0 %v1283, 96
        %v1452 = vpop.permute.xlu0 %1451
        %1453 = vrot.lane.b32.xlu0 %v1285, 96
        %v1454 = vpop.permute.xlu0 %1453
        %1455 = vrot.lane.b32.xlu0 %v1287, 96
        %v1456 = vpop.permute.xlu0 %1455
        %1457 = vrot.lane.b32.xlu0 %v1289, 96
        %v1458 = vpop.permute.xlu0 %1457
        %vm1459 = vcmp.lt.s32.totalorder %v1307, 96
        %v1460 = vsel %vm1459, %v1444, %v1452
        %v1461 = vsel %vm1459, %v1446, %v1454
        %v1462 = vsel %vm1459, %v1448, %v1456
        %v1463 = vsel %vm1459, %v1450, %v1458
        %v1464 = vsel %vm1459, %v1452, %v1444
        %v1465 = vsel %vm1459, %v1454, %v1446
        %v1466 = vsel %vm1459, %v1456, %v1448
        %v1467 = vsel %vm1459, %v1458, %v1450
        %v1469 = vperm.slane %v1241, 0
        %v1470 = vperm.slane %v1241, 1
        %v1473 = vmul.f32 %v1460, %v1469
        %v1474 = vmul.f32 %v1464, %v1470
        %v1475 = vmul.f32 %v1461, %v1469
        %v1476 = vmul.f32 %v1465, %v1470
        %v1477 = vmul.f32 %v1462, %v1469
        %v1478 = vmul.f32 %v1466, %v1470
        %v1479 = vmul.f32 %v1463, %v1469
        %v1480 = vmul.f32 %v1467, %v1470
        %v1481 = vadd.f32 %v1435, %v1473
        %v1482 = vadd.f32 %v1436, %v1474
        %v1483 = vadd.f32 %v1437, %v1475
        %v1484 = vadd.f32 %v1438, %v1476
        %v1485 = vadd.f32 %v1439, %v1477
        %v1486 = vadd.f32 %v1440, %v1478
        %v1487 = vadd.f32 %v1441, %v1479
        %v1488 = vadd.f32 %v1442, %v1480
        %v1489 = vld [vmem:[#allocation3] sm:$0xfe]
        %v1490 = vld [vmem:[#allocation3 + $0x8] sm:$0xfe]
        %v1491 = vld [vmem:[#allocation3 + $0x10] sm:$0xff]
        %v1492 = vld [vmem:[#allocation3 + $0x18] sm:$0xff]
        %v1493 = vld [vmem:[#allocation3 + $0x20] sm:$0x1]
        %v1494 = vld [vmem:[#allocation3 + $0x28] sm:$0x1]
        %v1495 = vld [vmem:[#allocation3 + $0x30] sm:$0xfe]
        %v1496 = vld [vmem:[#allocation3 + $0x38] sm:$0xfe]
        %v1497 = vld [vmem:[#allocation3 + $0x40] sm:$0xff]
        %v1498 = vld [vmem:[#allocation3 + $0x48] sm:$0xff]
        %v1499 = vld [vmem:[#allocation3 + $0x50] sm:$0x1]
        %v1500 = vld [vmem:[#allocation3 + $0x58] sm:$0x1]
        %vm1513 = vcmask 1046528
        %v1514 = vrot.slane %v1489, 1
        %v1515 = vrot.slane %v1491, 1
        %v1516 = vsel %vm1513, %v1514, %v1515
        %v1517 = vrot.slane %v1490, 1
        %v1518 = vrot.slane %v1492, 1
        %v1519 = vsel %vm1513, %v1517, %v1518
        %v1520 = vrot.slane %v1493, 1
        %v1521 = vsel %vm1513, %v1515, %v1520
        %v1522 = vrot.slane %v1494, 1
        %v1523 = vsel %vm1513, %v1518, %v1522
        %v1524 = vrot.slane %v1495, 1
        %v1525 = vrot.slane %v1497, 1
        %v1526 = vsel %vm1513, %v1524, %v1525
        %v1527 = vrot.slane %v1496, 1
        %v1528 = vrot.slane %v1498, 1
        %v1529 = vsel %vm1513, %v1527, %v1528
        %v1530 = vrot.slane %v1499, 1
        %v1531 = vsel %vm1513, %v1525, %v1530
        %v1532 = vrot.slane %v1500, 1
        %v1533 = vsel %vm1513, %v1528, %v1532
        %1542 = vrot.lane.b32.xlu0 %v1516, 32
        %v1543 = vpop.permute.xlu0 %1542
        %1544 = vrot.lane.b32.xlu0 %v1521, 32
        %v1545 = vpop.permute.xlu0 %1544
        %1546 = vrot.lane.b32.xlu0 %v1526, 32
        %v1547 = vpop.permute.xlu0 %1546
        %1548 = vrot.lane.b32.xlu0 %v1531, 32
        %v1549 = vpop.permute.xlu0 %1548
        %1550 = vrot.lane.b32.xlu0 %v1519, 32
        %v1551 = vpop.permute.xlu0 %1550
        %1552 = vrot.lane.b32.xlu0 %v1523, 32
        %v1553 = vpop.permute.xlu0 %1552
        %1554 = vrot.lane.b32.xlu0 %v1529, 32
        %v1555 = vpop.permute.xlu0 %1554
        %1556 = vrot.lane.b32.xlu0 %v1533, 32
        %v1557 = vpop.permute.xlu0 %1556
        %v1558 = vsel %vm1308, %v1543, %v1551
        %v1559 = vsel %vm1308, %v1545, %v1553
        %v1560 = vsel %vm1308, %v1547, %v1555
        %v1561 = vsel %vm1308, %v1549, %v1557
        %v1562 = vsel %vm1308, %v1551, %v1543
        %v1563 = vsel %vm1308, %v1553, %v1545
        %v1564 = vsel %vm1308, %v1555, %v1547
        %v1565 = vsel %vm1308, %v1557, %v1549
        %v1567 = vperm.slane %v1243, 0
        %v1568 = vperm.slane %v1243, 1
        %v1571 = vmul.f32 %v1562, %v1567
        %v1572 = vmul.f32 %v1558, %v1568
        %v1573 = vmul.f32 %v1563, %v1567
        %v1574 = vmul.f32 %v1559, %v1568
        %v1575 = vmul.f32 %v1564, %v1567
        %v1576 = vmul.f32 %v1560, %v1568
        %v1577 = vmul.f32 %v1565, %v1567
        %v1578 = vmul.f32 %v1561, %v1568
        %1579 = vrot.lane.b32.xlu0 %v1516, 16
        %v1580 = vpop.permute.xlu0 %1579
        %1581 = vrot.lane.b32.xlu0 %v1521, 16
        %v1582 = vpop.permute.xlu0 %1581
        %1583 = vrot.lane.b32.xlu0 %v1526, 16
        %v1584 = vpop.permute.xlu0 %1583
        %1585 = vrot.lane.b32.xlu0 %v1531, 16
        %v1586 = vpop.permute.xlu0 %1585
        %1587 = vrot.lane.b32.xlu0 %v1519, 16
        %v1588 = vpop.permute.xlu0 %1587
        %1589 = vrot.lane.b32.xlu0 %v1523, 16
        %v1590 = vpop.permute.xlu0 %1589
        %1591 = vrot.lane.b32.xlu0 %v1529, 16
        %v1592 = vpop.permute.xlu0 %1591
        %1593 = vrot.lane.b32.xlu0 %v1533, 16
        %v1594 = vpop.permute.xlu0 %1593
        %v1595 = vsel %vm1346, %v1580, %v1588
        %v1596 = vsel %vm1346, %v1582, %v1590
        %v1597 = vsel %vm1346, %v1584, %v1592
        %v1598 = vsel %vm1346, %v1586, %v1594
        %v1599 = vsel %vm1346, %v1588, %v1580
        %v1600 = vsel %vm1346, %v1590, %v1582
        %v1601 = vsel %vm1346, %v1592, %v1584
        %v1602 = vsel %vm1346, %v1594, %v1586
        %v1604 = vperm.slane %v1245, 0
        %v1605 = vperm.slane %v1245, 1
        %v1608 = vmul.f32 %v1599, %v1604
        %v1609 = vmul.f32 %v1595, %v1605
        %v1610 = vmul.f32 %v1600, %v1604
        %v1611 = vmul.f32 %v1596, %v1605
        %v1612 = vmul.f32 %v1601, %v1604
        %v1613 = vmul.f32 %v1597, %v1605
        %v1614 = vmul.f32 %v1602, %v1604
        %v1615 = vmul.f32 %v1598, %v1605
        %v1616 = vadd.f32 %v1571, %v1608
        %v1617 = vadd.f32 %v1572, %v1609
        %v1618 = vadd.f32 %v1573, %v1610
        %v1619 = vadd.f32 %v1574, %v1611
        %v1620 = vadd.f32 %v1575, %v1612
        %v1621 = vadd.f32 %v1576, %v1613
        %v1622 = vadd.f32 %v1577, %v1614
        %v1623 = vadd.f32 %v1578, %v1615
        %v1625 = vperm.slane %v1247, 0
        %v1626 = vperm.slane %v1247, 1
        %v1629 = vmul.f32 %v1516, %v1625
        %v1630 = vmul.f32 %v1519, %v1626
        %v1631 = vmul.f32 %v1521, %v1625
        %v1632 = vmul.f32 %v1523, %v1626
        %v1633 = vmul.f32 %v1526, %v1625
        %v1634 = vmul.f32 %v1529, %v1626
        %v1635 = vmul.f32 %v1531, %v1625
        %v1636 = vmul.f32 %v1533, %v1626
        %v1637 = vadd.f32 %v1616, %v1629
        %v1638 = vadd.f32 %v1617, %v1630
        %v1639 = vadd.f32 %v1618, %v1631
        %v1640 = vadd.f32 %v1619, %v1632
        %v1641 = vadd.f32 %v1620, %v1633
        %v1642 = vadd.f32 %v1621, %v1634
        %v1643 = vadd.f32 %v1622, %v1635
        %v1644 = vadd.f32 %v1623, %v1636
        %1645 = vrot.lane.b32.xlu0 %v1516, 112
        %v1646 = vpop.permute.xlu0 %1645
        %1647 = vrot.lane.b32.xlu0 %v1521, 112
        %v1648 = vpop.permute.xlu0 %1647
        %1649 = vrot.lane.b32.xlu0 %v1526, 112
        %v1650 = vpop.permute.xlu0 %1649
        %1651 = vrot.lane.b32.xlu0 %v1531, 112
        %v1652 = vpop.permute.xlu0 %1651
        %1653 = vrot.lane.b32.xlu0 %v1519, 112
        %v1654 = vpop.permute.xlu0 %1653
        %1655 = vrot.lane.b32.xlu0 %v1523, 112
        %v1656 = vpop.permute.xlu0 %1655
        %1657 = vrot.lane.b32.xlu0 %v1529, 112
        %v1658 = vpop.permute.xlu0 %1657
        %1659 = vrot.lane.b32.xlu0 %v1533, 112
        %v1660 = vpop.permute.xlu0 %1659
        %v1661 = vsel %vm1413, %v1646, %v1654
        %v1662 = vsel %vm1413, %v1648, %v1656
        %v1663 = vsel %vm1413, %v1650, %v1658
        %v1664 = vsel %vm1413, %v1652, %v1660
        %v1665 = vsel %vm1413, %v1654, %v1646
        %v1666 = vsel %vm1413, %v1656, %v1648
        %v1667 = vsel %vm1413, %v1658, %v1650
        %v1668 = vsel %vm1413, %v1660, %v1652
        %v1670 = vperm.slane %v1249, 0
        %v1671 = vperm.slane %v1249, 1
        %v1674 = vmul.f32 %v1661, %v1670
        %v1675 = vmul.f32 %v1665, %v1671
        %v1676 = vmul.f32 %v1662, %v1670
        %v1677 = vmul.f32 %v1666, %v1671
        %v1678 = vmul.f32 %v1663, %v1670
        %v1679 = vmul.f32 %v1667, %v1671
        %v1680 = vmul.f32 %v1664, %v1670
        %v1681 = vmul.f32 %v1668, %v1671
        %v1682 = vadd.f32 %v1637, %v1674
        %v1683 = vadd.f32 %v1638, %v1675
        %v1684 = vadd.f32 %v1639, %v1676
        %v1685 = vadd.f32 %v1640, %v1677
        %v1686 = vadd.f32 %v1641, %v1678
        %v1687 = vadd.f32 %v1642, %v1679
        %v1688 = vadd.f32 %v1643, %v1680
        %v1689 = vadd.f32 %v1644, %v1681
        %1690 = vrot.lane.b32.xlu0 %v1516, 96
        %v1691 = vpop.permute.xlu0 %1690
        %1692 = vrot.lane.b32.xlu0 %v1521, 96
        %v1693 = vpop.permute.xlu0 %1692
        %1694 = vrot.lane.b32.xlu0 %v1526, 96
        %v1695 = vpop.permute.xlu0 %1694
        %1696 = vrot.lane.b32.xlu0 %v1531, 96
        %v1697 = vpop.permute.xlu0 %1696
        %1698 = vrot.lane.b32.xlu0 %v1519, 96
        %v1699 = vpop.permute.xlu0 %1698
        %1700 = vrot.lane.b32.xlu0 %v1523, 96
        %v1701 = vpop.permute.xlu0 %1700
        %1702 = vrot.lane.b32.xlu0 %v1529, 96
        %v1703 = vpop.permute.xlu0 %1702
        %1704 = vrot.lane.b32.xlu0 %v1533, 96
        %v1705 = vpop.permute.xlu0 %1704
        %v1706 = vsel %vm1459, %v1691, %v1699
        %v1707 = vsel %vm1459, %v1693, %v1701
        %v1708 = vsel %vm1459, %v1695, %v1703
        %v1709 = vsel %vm1459, %v1697, %v1705
        %v1710 = vsel %vm1459, %v1699, %v1691
        %v1711 = vsel %vm1459, %v1701, %v1693
        %v1712 = vsel %vm1459, %v1703, %v1695
        %v1713 = vsel %vm1459, %v1705, %v1697
        %v1715 = vperm.slane %v1251, 0
        %v1716 = vperm.slane %v1251, 1
        %v1719 = vmul.f32 %v1706, %v1715
        %v1720 = vmul.f32 %v1710, %v1716
        %v1721 = vmul.f32 %v1707, %v1715
        %v1722 = vmul.f32 %v1711, %v1716
        %v1723 = vmul.f32 %v1708, %v1715
        %v1724 = vmul.f32 %v1712, %v1716
        %v1725 = vmul.f32 %v1709, %v1715
        %v1726 = vmul.f32 %v1713, %v1716
        %v1727 = vadd.f32 %v1682, %v1719
        %v1728 = vadd.f32 %v1683, %v1720
        %v1729 = vadd.f32 %v1684, %v1721
        %v1730 = vadd.f32 %v1685, %v1722
        %v1731 = vadd.f32 %v1686, %v1723
        %v1732 = vadd.f32 %v1687, %v1724
        %v1733 = vadd.f32 %v1688, %v1725
        %v1734 = vadd.f32 %v1689, %v1726
        %v1735 = vld [vmem:[#allocation3] sm:$0xfc]
        %v1736 = vld [vmem:[#allocation3 + $0x8] sm:$0xfc]
        %v1737 = vld [vmem:[#allocation3 + $0x20] sm:$0x3]
        %v1738 = vld [vmem:[#allocation3 + $0x28] sm:$0x3]
        %v1739 = vld [vmem:[#allocation3 + $0x30] sm:$0xfc]
        %v1740 = vld [vmem:[#allocation3 + $0x38] sm:$0xfc]
        %v1741 = vld [vmem:[#allocation3 + $0x50] sm:$0x3]
        %v1742 = vld [vmem:[#allocation3 + $0x58] sm:$0x3]
        %vm1751 = vcmask 1045504
        %v1752 = vrot.slane %v1735, 2
        %v1753 = vrot.slane %v1491, 2
        %v1754 = vsel %vm1751, %v1752, %v1753
        %v1755 = vrot.slane %v1736, 2
        %v1756 = vrot.slane %v1492, 2
        %v1757 = vsel %vm1751, %v1755, %v1756
        %v1758 = vrot.slane %v1737, 2
        %v1759 = vsel %vm1751, %v1753, %v1758
        %v1760 = vrot.slane %v1738, 2
        %v1761 = vsel %vm1751, %v1756, %v1760
        %v1762 = vrot.slane %v1739, 2
        %v1763 = vrot.slane %v1497, 2
        %v1764 = vsel %vm1751, %v1762, %v1763
        %v1765 = vrot.slane %v1740, 2
        %v1766 = vrot.slane %v1498, 2
        %v1767 = vsel %vm1751, %v1765, %v1766
        %v1768 = vrot.slane %v1741, 2
        %v1769 = vsel %vm1751, %v1763, %v1768
        %v1770 = vrot.slane %v1742, 2
        %v1771 = vsel %vm1751, %v1766, %v1770
        %1780 = vrot.lane.b32.xlu0 %v1754, 32
        %v1781 = vpop.permute.xlu0 %1780
        %1782 = vrot.lane.b32.xlu0 %v1759, 32
        %v1783 = vpop.permute.xlu0 %1782
        %1784 = vrot.lane.b32.xlu0 %v1764, 32
        %v1785 = vpop.permute.xlu0 %1784
        %1786 = vrot.lane.b32.xlu0 %v1769, 32
        %v1787 = vpop.permute.xlu0 %1786
        %1788 = vrot.lane.b32.xlu0 %v1757, 32
        %v1789 = vpop.permute.xlu0 %1788
        %1790 = vrot.lane.b32.xlu0 %v1761, 32
        %v1791 = vpop.permute.xlu0 %1790
        %1792 = vrot.lane.b32.xlu0 %v1767, 32
        %v1793 = vpop.permute.xlu0 %1792
        %1794 = vrot.lane.b32.xlu0 %v1771, 32
        %v1795 = vpop.permute.xlu0 %1794
        %v1796 = vsel %vm1308, %v1781, %v1789
        %v1797 = vsel %vm1308, %v1783, %v1791
        %v1798 = vsel %vm1308, %v1785, %v1793
        %v1799 = vsel %vm1308, %v1787, %v1795
        %v1800 = vsel %vm1308, %v1789, %v1781
        %v1801 = vsel %vm1308, %v1791, %v1783
        %v1802 = vsel %vm1308, %v1793, %v1785
        %v1803 = vsel %vm1308, %v1795, %v1787
        %v1805 = vperm.slane %v1253, 0
        %v1806 = vperm.slane %v1253, 1
        %v1809 = vmul.f32 %v1800, %v1805
        %v1810 = vmul.f32 %v1796, %v1806
        %v1811 = vmul.f32 %v1801, %v1805
        %v1812 = vmul.f32 %v1797, %v1806
        %v1813 = vmul.f32 %v1802, %v1805
        %v1814 = vmul.f32 %v1798, %v1806
        %v1815 = vmul.f32 %v1803, %v1805
        %v1816 = vmul.f32 %v1799, %v1806
        %1817 = vrot.lane.b32.xlu0 %v1754, 16
        %v1818 = vpop.permute.xlu0 %1817
        %1819 = vrot.lane.b32.xlu0 %v1759, 16
        %v1820 = vpop.permute.xlu0 %1819
        %1821 = vrot.lane.b32.xlu0 %v1764, 16
        %v1822 = vpop.permute.xlu0 %1821
        %1823 = vrot.lane.b32.xlu0 %v1769, 16
        %v1824 = vpop.permute.xlu0 %1823
        %1825 = vrot.lane.b32.xlu0 %v1757, 16
        %v1826 = vpop.permute.xlu0 %1825
        %1827 = vrot.lane.b32.xlu0 %v1761, 16
        %v1828 = vpop.permute.xlu0 %1827
        %1829 = vrot.lane.b32.xlu0 %v1767, 16
        %v1830 = vpop.permute.xlu0 %1829
        %1831 = vrot.lane.b32.xlu0 %v1771, 16
        %v1832 = vpop.permute.xlu0 %1831
        %v1833 = vsel %vm1346, %v1818, %v1826
        %v1834 = vsel %vm1346, %v1820, %v1828
        %v1835 = vsel %vm1346, %v1822, %v1830
        %v1836 = vsel %vm1346, %v1824, %v1832
        %v1837 = vsel %vm1346, %v1826, %v1818
        %v1838 = vsel %vm1346, %v1828, %v1820
        %v1839 = vsel %vm1346, %v1830, %v1822
        %v1840 = vsel %vm1346, %v1832, %v1824
        %v1842 = vperm.slane %v1255, 0
        %v1843 = vperm.slane %v1255, 1
        %v1846 = vmul.f32 %v1837, %v1842
        %v1847 = vmul.f32 %v1833, %v1843
        %v1848 = vmul.f32 %v1838, %v1842
        %v1849 = vmul.f32 %v1834, %v1843
        %v1850 = vmul.f32 %v1839, %v1842
        %v1851 = vmul.f32 %v1835, %v1843
        %v1852 = vmul.f32 %v1840, %v1842
        %v1853 = vmul.f32 %v1836, %v1843
        %v1854 = vadd.f32 %v1809, %v1846
        %v1855 = vadd.f32 %v1810, %v1847
        %v1856 = vadd.f32 %v1811, %v1848
        %v1857 = vadd.f32 %v1812, %v1849
        %v1858 = vadd.f32 %v1813, %v1850
        %v1859 = vadd.f32 %v1814, %v1851
        %v1860 = vadd.f32 %v1815, %v1852
        %v1861 = vadd.f32 %v1816, %v1853
        %v1863 = vperm.slane %v1257, 0
        %v1864 = vperm.slane %v1257, 1
        %v1867 = vmul.f32 %v1754, %v1863
        %v1868 = vmul.f32 %v1757, %v1864
        %v1869 = vmul.f32 %v1759, %v1863
        %v1870 = vmul.f32 %v1761, %v1864
        %v1871 = vmul.f32 %v1764, %v1863
        %v1872 = vmul.f32 %v1767, %v1864
        %v1873 = vmul.f32 %v1769, %v1863
        %v1874 = vmul.f32 %v1771, %v1864
        %v1875 = vadd.f32 %v1854, %v1867
        %v1876 = vadd.f32 %v1855, %v1868
        %v1877 = vadd.f32 %v1856, %v1869
        %v1878 = vadd.f32 %v1857, %v1870
        %v1879 = vadd.f32 %v1858, %v1871
        %v1880 = vadd.f32 %v1859, %v1872
        %v1881 = vadd.f32 %v1860, %v1873
        %v1882 = vadd.f32 %v1861, %v1874
        %1883 = vrot.lane.b32.xlu0 %v1754, 112
        %v1884 = vpop.permute.xlu0 %1883
        %1885 = vrot.lane.b32.xlu0 %v1759, 112
        %v1886 = vpop.permute.xlu0 %1885
        %1887 = vrot.lane.b32.xlu0 %v1764, 112
        %v1888 = vpop.permute.xlu0 %1887
        %1889 = vrot.lane.b32.xlu0 %v1769, 112
        %v1890 = vpop.permute.xlu0 %1889
        %1891 = vrot.lane.b32.xlu0 %v1757, 112
        %v1892 = vpop.permute.xlu0 %1891
        %1893 = vrot.lane.b32.xlu0 %v1761, 112
        %v1894 = vpop.permute.xlu0 %1893
        %1895 = vrot.lane.b32.xlu0 %v1767, 112
        %v1896 = vpop.permute.xlu0 %1895
        %1897 = vrot.lane.b32.xlu0 %v1771, 112
        %v1898 = vpop.permute.xlu0 %1897
        %v1899 = vsel %vm1413, %v1884, %v1892
        %v1900 = vsel %vm1413, %v1886, %v1894
        %v1901 = vsel %vm1413, %v1888, %v1896
        %v1902 = vsel %vm1413, %v1890, %v1898
        %v1903 = vsel %vm1413, %v1892, %v1884
        %v1904 = vsel %vm1413, %v1894, %v1886
        %v1905 = vsel %vm1413, %v1896, %v1888
        %v1906 = vsel %vm1413, %v1898, %v1890
        %v1908 = vperm.slane %v1259, 0
        %v1909 = vperm.slane %v1259, 1
        %v1912 = vmul.f32 %v1899, %v1908
        %v1913 = vmul.f32 %v1903, %v1909
        %v1914 = vmul.f32 %v1900, %v1908
        %v1915 = vmul.f32 %v1904, %v1909
        %v1916 = vmul.f32 %v1901, %v1908
        %v1917 = vmul.f32 %v1905, %v1909
        %v1918 = vmul.f32 %v1902, %v1908
        %v1919 = vmul.f32 %v1906, %v1909
        %v1920 = vadd.f32 %v1875, %v1912
        %v1921 = vadd.f32 %v1876, %v1913
        %v1922 = vadd.f32 %v1877, %v1914
        %v1923 = vadd.f32 %v1878, %v1915
        %v1924 = vadd.f32 %v1879, %v1916
        %v1925 = vadd.f32 %v1880, %v1917
        %v1926 = vadd.f32 %v1881, %v1918
        %v1927 = vadd.f32 %v1882, %v1919
        %1928 = vrot.lane.b32.xlu0 %v1754, 96
        %v1929 = vpop.permute.xlu0 %1928
        %1930 = vrot.lane.b32.xlu0 %v1759, 96
        %v1931 = vpop.permute.xlu0 %1930
        %1932 = vrot.lane.b32.xlu0 %v1764, 96
        %v1933 = vpop.permute.xlu0 %1932
        %1934 = vrot.lane.b32.xlu0 %v1769, 96
        %v1935 = vpop.permute.xlu0 %1934
        %1936 = vrot.lane.b32.xlu0 %v1757, 96
        %v1937 = vpop.permute.xlu0 %1936
        %1938 = vrot.lane.b32.xlu0 %v1761, 96
        %v1939 = vpop.permute.xlu0 %1938
        %1940 = vrot.lane.b32.xlu0 %v1767, 96
        %v1941 = vpop.permute.xlu0 %1940
        %1942 = vrot.lane.b32.xlu0 %v1771, 96
        %v1943 = vpop.permute.xlu0 %1942
        %v1944 = vsel %vm1459, %v1929, %v1937
        %v1945 = vsel %vm1459, %v1931, %v1939
        %v1946 = vsel %vm1459, %v1933, %v1941
        %v1947 = vsel %vm1459, %v1935, %v1943
        %v1948 = vsel %vm1459, %v1937, %v1929
        %v1949 = vsel %vm1459, %v1939, %v1931
        %v1950 = vsel %vm1459, %v1941, %v1933
        %v1951 = vsel %vm1459, %v1943, %v1935
        %v1953 = vperm.slane %v1261, 0
        %v1954 = vperm.slane %v1261, 1
        %v1957 = vmul.f32 %v1944, %v1953
        %v1958 = vmul.f32 %v1948, %v1954
        %v1959 = vmul.f32 %v1945, %v1953
        %v1960 = vmul.f32 %v1949, %v1954
        %v1961 = vmul.f32 %v1946, %v1953
        %v1962 = vmul.f32 %v1950, %v1954
        %v1963 = vmul.f32 %v1947, %v1953
        %v1964 = vmul.f32 %v1951, %v1954
        %v1965 = vadd.f32 %v1920, %v1957
        %v1966 = vadd.f32 %v1921, %v1958
        %v1967 = vadd.f32 %v1922, %v1959
        %v1968 = vadd.f32 %v1923, %v1960
        %v1969 = vadd.f32 %v1924, %v1961
        %v1970 = vadd.f32 %v1925, %v1962
        %v1971 = vadd.f32 %v1926, %v1963
        %v1972 = vadd.f32 %v1927, %v1964
        %v1973 = vld [vmem:[#allocation3] sm:$0xf8]
        %v1974 = vld [vmem:[#allocation3 + $0x8] sm:$0xf8]
        %v1975 = vld [vmem:[#allocation3 + $0x20] sm:$0x7]
        %v1976 = vld [vmem:[#allocation3 + $0x28] sm:$0x7]
        %v1977 = vld [vmem:[#allocation3 + $0x30] sm:$0xf8]
        %v1978 = vld [vmem:[#allocation3 + $0x38] sm:$0xf8]
        %v1979 = vld [vmem:[#allocation3 + $0x50] sm:$0x7]
        %v1980 = vld [vmem:[#allocation3 + $0x58] sm:$0x7]
        %vm1989 = vcmask 1044480
        %v1990 = vrot.slane %v1973, 3
        %v1991 = vrot.slane %v1491, 3
        %v1992 = vsel %vm1989, %v1990, %v1991
        %v1993 = vrot.slane %v1974, 3
        %v1994 = vrot.slane %v1492, 3
        %v1995 = vsel %vm1989, %v1993, %v1994
        %v1996 = vrot.slane %v1975, 3
        %v1997 = vsel %vm1989, %v1991, %v1996
        %v1998 = vrot.slane %v1976, 3
        %v1999 = vsel %vm1989, %v1994, %v1998
        %v2000 = vrot.slane %v1977, 3
        %v2001 = vrot.slane %v1497, 3
        %v2002 = vsel %vm1989, %v2000, %v2001
        %v2003 = vrot.slane %v1978, 3
        %v2004 = vrot.slane %v1498, 3
        %v2005 = vsel %vm1989, %v2003, %v2004
        %v2006 = vrot.slane %v1979, 3
        %v2007 = vsel %vm1989, %v2001, %v2006
        %v2008 = vrot.slane %v1980, 3
        %v2009 = vsel %vm1989, %v2004, %v2008
        %2018 = vrot.lane.b32.xlu0 %v1992, 32
        %v2019 = vpop.permute.xlu0 %2018
        %2020 = vrot.lane.b32.xlu0 %v1997, 32
        %v2021 = vpop.permute.xlu0 %2020
        %2022 = vrot.lane.b32.xlu0 %v2002, 32
        %v2023 = vpop.permute.xlu0 %2022
        %2024 = vrot.lane.b32.xlu0 %v2007, 32
        %v2025 = vpop.permute.xlu0 %2024
        %2026 = vrot.lane.b32.xlu0 %v1995, 32
        %v2027 = vpop.permute.xlu0 %2026
        %2028 = vrot.lane.b32.xlu0 %v1999, 32
        %v2029 = vpop.permute.xlu0 %2028
        %2030 = vrot.lane.b32.xlu0 %v2005, 32
        %v2031 = vpop.permute.xlu0 %2030
        %2032 = vrot.lane.b32.xlu0 %v2009, 32
        %v2033 = vpop.permute.xlu0 %2032
        %v2034 = vsel %vm1308, %v2019, %v2027
        %v2035 = vsel %vm1308, %v2021, %v2029
        %v2036 = vsel %vm1308, %v2023, %v2031
        %v2037 = vsel %vm1308, %v2025, %v2033
        %v2038 = vsel %vm1308, %v2027, %v2019
        %v2039 = vsel %vm1308, %v2029, %v2021
        %v2040 = vsel %vm1308, %v2031, %v2023
        %v2041 = vsel %vm1308, %v2033, %v2025
        %v2043 = vperm.slane %v1263, 0
        %v2044 = vperm.slane %v1263, 1
        %v2047 = vmul.f32 %v2038, %v2043
        %v2048 = vmul.f32 %v2034, %v2044
        %v2049 = vmul.f32 %v2039, %v2043
        %v2050 = vmul.f32 %v2035, %v2044
        %v2051 = vmul.f32 %v2040, %v2043
        %v2052 = vmul.f32 %v2036, %v2044
        %v2053 = vmul.f32 %v2041, %v2043
        %v2054 = vmul.f32 %v2037, %v2044
        %2055 = vrot.lane.b32.xlu0 %v1992, 16
        %v2056 = vpop.permute.xlu0 %2055
        %2057 = vrot.lane.b32.xlu0 %v1997, 16
        %v2058 = vpop.permute.xlu0 %2057
        %2059 = vrot.lane.b32.xlu0 %v2002, 16
        %v2060 = vpop.permute.xlu0 %2059
        %2061 = vrot.lane.b32.xlu0 %v2007, 16
        %v2062 = vpop.permute.xlu0 %2061
        %2063 = vrot.lane.b32.xlu0 %v1995, 16
        %v2064 = vpop.permute.xlu0 %2063
        %2065 = vrot.lane.b32.xlu0 %v1999, 16
        %v2066 = vpop.permute.xlu0 %2065
        %2067 = vrot.lane.b32.xlu0 %v2005, 16
        %v2068 = vpop.permute.xlu0 %2067
        %2069 = vrot.lane.b32.xlu0 %v2009, 16
        %v2070 = vpop.permute.xlu0 %2069
        %v2071 = vsel %vm1346, %v2056, %v2064
        %v2072 = vsel %vm1346, %v2058, %v2066
        %v2073 = vsel %vm1346, %v2060, %v2068
        %v2074 = vsel %vm1346, %v2062, %v2070
        %v2075 = vsel %vm1346, %v2064, %v2056
        %v2076 = vsel %vm1346, %v2066, %v2058
        %v2077 = vsel %vm1346, %v2068, %v2060
        %v2078 = vsel %vm1346, %v2070, %v2062
        %v2080 = vperm.slane %v1265, 0
        %v2081 = vperm.slane %v1265, 1
        %v2084 = vmul.f32 %v2075, %v2080
        %v2085 = vmul.f32 %v2071, %v2081
        %v2086 = vmul.f32 %v2076, %v2080
        %v2087 = vmul.f32 %v2072, %v2081
        %v2088 = vmul.f32 %v2077, %v2080
        %v2089 = vmul.f32 %v2073, %v2081
        %v2090 = vmul.f32 %v2078, %v2080
        %v2091 = vmul.f32 %v2074, %v2081
        %v2092 = vadd.f32 %v2047, %v2084
        %v2093 = vadd.f32 %v2048, %v2085
        %v2094 = vadd.f32 %v2049, %v2086
        %v2095 = vadd.f32 %v2050, %v2087
        %v2096 = vadd.f32 %v2051, %v2088
        %v2097 = vadd.f32 %v2052, %v2089
        %v2098 = vadd.f32 %v2053, %v2090
        %v2099 = vadd.f32 %v2054, %v2091
        %v2101 = vperm.slane %v1267, 0
        %v2102 = vperm.slane %v1267, 1
        %v2105 = vmul.f32 %v1992, %v2101
        %v2106 = vmul.f32 %v1995, %v2102
        %v2107 = vmul.f32 %v1997, %v2101
        %v2108 = vmul.f32 %v1999, %v2102
        %v2109 = vmul.f32 %v2002, %v2101
        %v2110 = vmul.f32 %v2005, %v2102
        %v2111 = vmul.f32 %v2007, %v2101
        %v2112 = vmul.f32 %v2009, %v2102
        %v2113 = vadd.f32 %v2092, %v2105
        %v2114 = vadd.f32 %v2093, %v2106
        %v2115 = vadd.f32 %v2094, %v2107
        %v2116 = vadd.f32 %v2095, %v2108
        %v2117 = vadd.f32 %v2096, %v2109
        %v2118 = vadd.f32 %v2097, %v2110
        %v2119 = vadd.f32 %v2098, %v2111
        %v2120 = vadd.f32 %v2099, %v2112
        %2121 = vrot.lane.b32.xlu0 %v1992, 112
        %v2122 = vpop.permute.xlu0 %2121
        %2123 = vrot.lane.b32.xlu0 %v1997, 112
        %v2124 = vpop.permute.xlu0 %2123
        %2125 = vrot.lane.b32.xlu0 %v2002, 112
        %v2126 = vpop.permute.xlu0 %2125
        %2127 = vrot.lane.b32.xlu0 %v2007, 112
        %v2128 = vpop.permute.xlu0 %2127
        %2129 = vrot.lane.b32.xlu0 %v1995, 112
        %v2130 = vpop.permute.xlu0 %2129
        %2131 = vrot.lane.b32.xlu0 %v1999, 112
        %v2132 = vpop.permute.xlu0 %2131
        %2133 = vrot.lane.b32.xlu0 %v2005, 112
        %v2134 = vpop.permute.xlu0 %2133
        %2135 = vrot.lane.b32.xlu0 %v2009, 112
        %v2136 = vpop.permute.xlu0 %2135
        %v2137 = vsel %vm1413, %v2122, %v2130
        %v2138 = vsel %vm1413, %v2124, %v2132
        %v2139 = vsel %vm1413, %v2126, %v2134
        %v2140 = vsel %vm1413, %v2128, %v2136
        %v2141 = vsel %vm1413, %v2130, %v2122
        %v2142 = vsel %vm1413, %v2132, %v2124
        %v2143 = vsel %vm1413, %v2134, %v2126
        %v2144 = vsel %vm1413, %v2136, %v2128
        %v2146 = vperm.slane %v1269, 0
        %v2147 = vperm.slane %v1269, 1
        %v2150 = vmul.f32 %v2137, %v2146
        %v2151 = vmul.f32 %v2141, %v2147
        %v2152 = vmul.f32 %v2138, %v2146
        %v2153 = vmul.f32 %v2142, %v2147
        %v2154 = vmul.f32 %v2139, %v2146
        %v2155 = vmul.f32 %v2143, %v2147
        %v2156 = vmul.f32 %v2140, %v2146
        %v2157 = vmul.f32 %v2144, %v2147
        %v2158 = vadd.f32 %v2113, %v2150
        %v2159 = vadd.f32 %v2114, %v2151
        %v2160 = vadd.f32 %v2115, %v2152
        %v2161 = vadd.f32 %v2116, %v2153
        %v2162 = vadd.f32 %v2117, %v2154
        %v2163 = vadd.f32 %v2118, %v2155
        %v2164 = vadd.f32 %v2119, %v2156
        %v2165 = vadd.f32 %v2120, %v2157
        %2166 = vrot.lane.b32.xlu0 %v1992, 96
        %v2167 = vpop.permute.xlu0 %2166
        %2168 = vrot.lane.b32.xlu0 %v1997, 96
        %v2169 = vpop.permute.xlu0 %2168
        %2170 = vrot.lane.b32.xlu0 %v2002, 96
        %v2171 = vpop.permute.xlu0 %2170
        %2172 = vrot.lane.b32.xlu0 %v2007, 96
        %v2173 = vpop.permute.xlu0 %2172
        %2174 = vrot.lane.b32.xlu0 %v1995, 96
        %v2175 = vpop.permute.xlu0 %2174
        %2176 = vrot.lane.b32.xlu0 %v1999, 96
        %v2177 = vpop.permute.xlu0 %2176
        %2178 = vrot.lane.b32.xlu0 %v2005, 96
        %v2179 = vpop.permute.xlu0 %2178
        %2180 = vrot.lane.b32.xlu0 %v2009, 96
        %v2181 = vpop.permute.xlu0 %2180
        %v2182 = vsel %vm1459, %v2167, %v2175
        %v2183 = vsel %vm1459, %v2169, %v2177
        %v2184 = vsel %vm1459, %v2171, %v2179
        %v2185 = vsel %vm1459, %v2173, %v2181
        %v2186 = vsel %vm1459, %v2175, %v2167
        %v2187 = vsel %vm1459, %v2177, %v2169
        %v2188 = vsel %vm1459, %v2179, %v2171
        %v2189 = vsel %vm1459, %v2181, %v2173
        %v2191 = vperm.slane %v1271, 0
        %v2192 = vperm.slane %v1271, 1
        %v2195 = vmul.f32 %v2182, %v2191
        %v2196 = vmul.f32 %v2186, %v2192
        %v2197 = vmul.f32 %v2183, %v2191
        %v2198 = vmul.f32 %v2187, %v2192
        %v2199 = vmul.f32 %v2184, %v2191
        %v2200 = vmul.f32 %v2188, %v2192
        %v2201 = vmul.f32 %v2185, %v2191
        %v2202 = vmul.f32 %v2189, %v2192
        %v2203 = vadd.f32 %v2158, %v2195
        %v2204 = vadd.f32 %v2159, %v2196
        %v2205 = vadd.f32 %v2160, %v2197
        %v2206 = vadd.f32 %v2161, %v2198
        %v2207 = vadd.f32 %v2162, %v2199
        %v2208 = vadd.f32 %v2163, %v2200
        %v2209 = vadd.f32 %v2164, %v2201
        %v2210 = vadd.f32 %v2165, %v2202
        %v2211 = vld [vmem:[#allocation3] sm:$0xf0]
        %v2212 = vld [vmem:[#allocation3 + $0x8] sm:$0xf0]
        %v2213 = vld [vmem:[#allocation3 + $0x20] sm:$0xf]
        %v2214 = vld [vmem:[#allocation3 + $0x28] sm:$0xf]
        %v2215 = vld [vmem:[#allocation3 + $0x30] sm:$0xf0]
        %v2216 = vld [vmem:[#allocation3 + $0x38] sm:$0xf0]
        %v2217 = vld [vmem:[#allocation3 + $0x50] sm:$0xf]
        %v2218 = vld [vmem:[#allocation3 + $0x58] sm:$0xf]
        %vm2227 = vcmask 1043456
        %v2228 = vrot.slane %v2211, 4
        %v2229 = vrot.slane %v1491, 4
        %v2230 = vsel %vm2227, %v2228, %v2229
        %v2231 = vrot.slane %v2212, 4
        %v2232 = vrot.slane %v1492, 4
        %v2233 = vsel %vm2227, %v2231, %v2232
        %v2234 = vrot.slane %v2213, 4
        %v2235 = vsel %vm2227, %v2229, %v2234
        %v2236 = vrot.slane %v2214, 4
        %v2237 = vsel %vm2227, %v2232, %v2236
        %v2238 = vrot.slane %v2215, 4
        %v2239 = vrot.slane %v1497, 4
        %v2240 = vsel %vm2227, %v2238, %v2239
        %v2241 = vrot.slane %v2216, 4
        %v2242 = vrot.slane %v1498, 4
        %v2243 = vsel %vm2227, %v2241, %v2242
        %v2244 = vrot.slane %v2217, 4
        %v2245 = vsel %vm2227, %v2239, %v2244
        %v2246 = vrot.slane %v2218, 4
        %v2247 = vsel %vm2227, %v2242, %v2246
        %2256 = vrot.lane.b32.xlu0 %v2230, 32
        %v2257 = vpop.permute.xlu0 %2256
        %2258 = vrot.lane.b32.xlu0 %v2235, 32
        %v2259 = vpop.permute.xlu0 %2258
        %2260 = vrot.lane.b32.xlu0 %v2240, 32
        %v2261 = vpop.permute.xlu0 %2260
        %2262 = vrot.lane.b32.xlu0 %v2245, 32
        %v2263 = vpop.permute.xlu0 %2262
        %2264 = vrot.lane.b32.xlu0 %v2233, 32
        %v2265 = vpop.permute.xlu0 %2264
        %2266 = vrot.lane.b32.xlu0 %v2237, 32
        %v2267 = vpop.permute.xlu0 %2266
        %2268 = vrot.lane.b32.xlu0 %v2243, 32
        %v2269 = vpop.permute.xlu0 %2268
        %2270 = vrot.lane.b32.xlu0 %v2247, 32
        %v2271 = vpop.permute.xlu0 %2270
        %v2272 = vsel %vm1308, %v2257, %v2265
        %v2273 = vsel %vm1308, %v2259, %v2267
        %v2274 = vsel %vm1308, %v2261, %v2269
        %v2275 = vsel %vm1308, %v2263, %v2271
        %v2276 = vsel %vm1308, %v2265, %v2257
        %v2277 = vsel %vm1308, %v2267, %v2259
        %v2278 = vsel %vm1308, %v2269, %v2261
        %v2279 = vsel %vm1308, %v2271, %v2263
        %v2281 = vperm.slane %v1273, 0
        %v2282 = vperm.slane %v1273, 1
        %v2285 = vmul.f32 %v2276, %v2281
        %v2286 = vmul.f32 %v2272, %v2282
        %v2287 = vmul.f32 %v2277, %v2281
        %v2288 = vmul.f32 %v2273, %v2282
        %v2289 = vmul.f32 %v2278, %v2281
        %v2290 = vmul.f32 %v2274, %v2282
        %v2291 = vmul.f32 %v2279, %v2281
        %v2292 = vmul.f32 %v2275, %v2282
        %2293 = vrot.lane.b32.xlu0 %v2230, 16
        %v2294 = vpop.permute.xlu0 %2293
        %2295 = vrot.lane.b32.xlu0 %v2235, 16
        %v2296 = vpop.permute.xlu0 %2295
        %2297 = vrot.lane.b32.xlu0 %v2240, 16
        %v2298 = vpop.permute.xlu0 %2297
        %2299 = vrot.lane.b32.xlu0 %v2245, 16
        %v2300 = vpop.permute.xlu0 %2299
        %2301 = vrot.lane.b32.xlu0 %v2233, 16
        %v2302 = vpop.permute.xlu0 %2301
        %2303 = vrot.lane.b32.xlu0 %v2237, 16
        %v2304 = vpop.permute.xlu0 %2303
        %2305 = vrot.lane.b32.xlu0 %v2243, 16
        %v2306 = vpop.permute.xlu0 %2305
        %2307 = vrot.lane.b32.xlu0 %v2247, 16
        %v2308 = vpop.permute.xlu0 %2307
        %v2309 = vsel %vm1346, %v2294, %v2302
        %v2310 = vsel %vm1346, %v2296, %v2304
        %v2311 = vsel %vm1346, %v2298, %v2306
        %v2312 = vsel %vm1346, %v2300, %v2308
        %v2313 = vsel %vm1346, %v2302, %v2294
        %v2314 = vsel %vm1346, %v2304, %v2296
        %v2315 = vsel %vm1346, %v2306, %v2298
        %v2316 = vsel %vm1346, %v2308, %v2300
        %v2318 = vperm.slane %v1275, 0
        %v2319 = vperm.slane %v1275, 1
        %v2322 = vmul.f32 %v2313, %v2318
        %v2323 = vmul.f32 %v2309, %v2319
        %v2324 = vmul.f32 %v2314, %v2318
        %v2325 = vmul.f32 %v2310, %v2319
        %v2326 = vmul.f32 %v2315, %v2318
        %v2327 = vmul.f32 %v2311, %v2319
        %v2328 = vmul.f32 %v2316, %v2318
        %v2329 = vmul.f32 %v2312, %v2319
        %v2330 = vadd.f32 %v2285, %v2322
        %v2331 = vadd.f32 %v2286, %v2323
        %v2332 = vadd.f32 %v2287, %v2324
        %v2333 = vadd.f32 %v2288, %v2325
        %v2334 = vadd.f32 %v2289, %v2326
        %v2335 = vadd.f32 %v2290, %v2327
        %v2336 = vadd.f32 %v2291, %v2328
        %v2337 = vadd.f32 %v2292, %v2329
        %v2339 = vperm.slane %v1277, 0
        %v2340 = vperm.slane %v1277, 1
        %v2343 = vmul.f32 %v2230, %v2339
        %v2344 = vmul.f32 %v2233, %v2340
        %v2345 = vmul.f32 %v2235, %v2339
        %v2346 = vmul.f32 %v2237, %v2340
        %v2347 = vmul.f32 %v2240, %v2339
        %v2348 = vmul.f32 %v2243, %v2340
        %v2349 = vmul.f32 %v2245, %v2339
        %v2350 = vmul.f32 %v2247, %v2340
        %v2351 = vadd.f32 %v2330, %v2343
        %v2352 = vadd.f32 %v2331, %v2344
        %v2353 = vadd.f32 %v2332, %v2345
        %v2354 = vadd.f32 %v2333, %v2346
        %v2355 = vadd.f32 %v2334, %v2347
        %v2356 = vadd.f32 %v2335, %v2348
        %v2357 = vadd.f32 %v2336, %v2349
        %v2358 = vadd.f32 %v2337, %v2350
        %2359 = vrot.lane.b32.xlu0 %v2230, 112
        %v2360 = vpop.permute.xlu0 %2359
        %2361 = vrot.lane.b32.xlu0 %v2235, 112
        %v2362 = vpop.permute.xlu0 %2361
        %2363 = vrot.lane.b32.xlu0 %v2240, 112
        %v2364 = vpop.permute.xlu0 %2363
        %2365 = vrot.lane.b32.xlu0 %v2245, 112
        %v2366 = vpop.permute.xlu0 %2365
        %2367 = vrot.lane.b32.xlu0 %v2233, 112
        %v2368 = vpop.permute.xlu0 %2367
        %2369 = vrot.lane.b32.xlu0 %v2237, 112
        %v2370 = vpop.permute.xlu0 %2369
        %2371 = vrot.lane.b32.xlu0 %v2243, 112
        %v2372 = vpop.permute.xlu0 %2371
        %2373 = vrot.lane.b32.xlu0 %v2247, 112
        %v2374 = vpop.permute.xlu0 %2373
        %v2375 = vsel %vm1413, %v2360, %v2368
        %v2376 = vsel %vm1413, %v2362, %v2370
        %v2377 = vsel %vm1413, %v2364, %v2372
        %v2378 = vsel %vm1413, %v2366, %v2374
        %v2379 = vsel %vm1413, %v2368, %v2360
        %v2380 = vsel %vm1413, %v2370, %v2362
        %v2381 = vsel %vm1413, %v2372, %v2364
        %v2382 = vsel %vm1413, %v2374, %v2366
        %v2384 = vperm.slane %v1279, 0
        %v2385 = vperm.slane %v1279, 1
        %v2388 = vmul.f32 %v2375, %v2384
        %v2389 = vmul.f32 %v2379, %v2385
        %v2390 = vmul.f32 %v2376, %v2384
        %v2391 = vmul.f32 %v2380, %v2385
        %v2392 = vmul.f32 %v2377, %v2384
        %v2393 = vmul.f32 %v2381, %v2385
        %v2394 = vmul.f32 %v2378, %v2384
        %v2395 = vmul.f32 %v2382, %v2385
        %v2396 = vadd.f32 %v2351, %v2388
        %v2397 = vadd.f32 %v2352, %v2389
        %v2398 = vadd.f32 %v2353, %v2390
        %v2399 = vadd.f32 %v2354, %v2391
        %v2400 = vadd.f32 %v2355, %v2392
        %v2401 = vadd.f32 %v2356, %v2393
        %v2402 = vadd.f32 %v2357, %v2394
        %v2403 = vadd.f32 %v2358, %v2395
        %2404 = vrot.lane.b32.xlu0 %v2230, 96
        %v2405 = vpop.permute.xlu0 %2404
        %2406 = vrot.lane.b32.xlu0 %v2235, 96
        %v2407 = vpop.permute.xlu0 %2406
        %2408 = vrot.lane.b32.xlu0 %v2240, 96
        %v2409 = vpop.permute.xlu0 %2408
        %2410 = vrot.lane.b32.xlu0 %v2245, 96
        %v2411 = vpop.permute.xlu0 %2410
        %2412 = vrot.lane.b32.xlu0 %v2233, 96
        %v2413 = vpop.permute.xlu0 %2412
        %2414 = vrot.lane.b32.xlu0 %v2237, 96
        %v2415 = vpop.permute.xlu0 %2414
        %2416 = vrot.lane.b32.xlu0 %v2243, 96
        %v2417 = vpop.permute.xlu0 %2416
        %2418 = vrot.lane.b32.xlu0 %v2247, 96
        %v2419 = vpop.permute.xlu0 %2418
        %v2420 = vsel %vm1459, %v2405, %v2413
        %v2421 = vsel %vm1459, %v2407, %v2415
        %v2422 = vsel %vm1459, %v2409, %v2417
        %v2423 = vsel %vm1459, %v2411, %v2419
        %v2424 = vsel %vm1459, %v2413, %v2405
        %v2425 = vsel %vm1459, %v2415, %v2407
        %v2426 = vsel %vm1459, %v2417, %v2409
        %v2427 = vsel %vm1459, %v2419, %v2411
        %v2429 = vperm.slane %v1281, 0
        %v2430 = vperm.slane %v1281, 1
        %v2433 = vmul.f32 %v2420, %v2429
        %v2434 = vmul.f32 %v2424, %v2430
        %v2435 = vmul.f32 %v2421, %v2429
        %v2436 = vmul.f32 %v2425, %v2430
        %v2437 = vmul.f32 %v2422, %v2429
        %v2438 = vmul.f32 %v2426, %v2430
        %v2439 = vmul.f32 %v2423, %v2429
        %v2440 = vmul.f32 %v2427, %v2430
        %v2441 = vadd.f32 %v2396, %v2433
        %v2442 = vadd.f32 %v2397, %v2434
        %v2443 = vadd.f32 %v2398, %v2435
        %v2444 = vadd.f32 %v2399, %v2436
        %v2445 = vadd.f32 %v2400, %v2437
        %v2446 = vadd.f32 %v2401, %v2438
        %v2447 = vadd.f32 %v2402, %v2439
        %v2448 = vadd.f32 %v2403, %v2440
        %v2449 = vadd.f32 %v1481, %v1727
        %v2450 = vadd.f32 %v1482, %v1728
        %v2451 = vadd.f32 %v1483, %v1729
        %v2452 = vadd.f32 %v1484, %v1730
        %v2453 = vadd.f32 %v1485, %v1731
        %v2454 = vadd.f32 %v1486, %v1732
        %v2455 = vadd.f32 %v1487, %v1733
        %v2456 = vadd.f32 %v1488, %v1734
        %v2457 = vadd.f32 %v1965, %v2203
        %v2458 = vadd.f32 %v1966, %v2204
        %v2459 = vadd.f32 %v1967, %v2205
        %v2460 = vadd.f32 %v1968, %v2206
        %v2461 = vadd.f32 %v1969, %v2207
        %v2462 = vadd.f32 %v1970, %v2208
        %v2463 = vadd.f32 %v1971, %v2209
        %v2464 = vadd.f32 %v1972, %v2210
        %v2465 = vadd.f32 %v2449, %v2457
        %v2466 = vadd.f32 %v2450, %v2458
        %v2467 = vadd.f32 %v2451, %v2459
        %v2468 = vadd.f32 %v2452, %v2460
        %v2469 = vadd.f32 %v2453, %v2461
        %v2470 = vadd.f32 %v2454, %v2462
        %v2471 = vadd.f32 %v2455, %v2463
        %v2472 = vadd.f32 %v2456, %v2464
        %v2473 = vadd.f32 %v2465, %v2441
        %v2474 = vadd.f32 %v2466, %v2442
        %v2475 = vadd.f32 %v2467, %v2443
        %v2476 = vadd.f32 %v2468, %v2444
        %v2477 = vadd.f32 %v2469, %v2445
        %v2478 = vadd.f32 %v2470, %v2446
        %v2479 = vadd.f32 %v2471, %v2447
        %v2480 = vadd.f32 %v2472, %v2448
        %v2481 = vld [vmem:[%s10] sm:$0x3]
        %v2483 = vperm.slane %v2481, 0
        %v2484 = vperm.slane %v2481, 1
        %v2487 = vadd.f32 %v2473, %v2483
        %v2488 = vadd.f32 %v2474, %v2484
        %v2489 = vadd.f32 %v2475, %v2483
        %v2490 = vadd.f32 %v2476, %v2484
        %v2491 = vadd.f32 %v2477, %v2483
        %v2492 = vadd.f32 %v2478, %v2484
        %v2493 = vadd.f32 %v2479, %v2483
        %v2494 = vadd.f32 %v2480, %v2484
        %v2495 = vld [vmem:[%s8] sm:$0x3]
        %v2497 = vperm.slane %v2495, 0
        %v2498 = vperm.slane %v2495, 1
        %v2501 = vmul.f32 %v1140, %v2497
        %v2502 = vmul.f32 %v1169, %v2498
        %v2503 = vmul.f32 %v1143, %v2497
        %v2504 = vmul.f32 %v1172, %v2498
        %v2505 = vmul.f32 %v1146, %v2497
        %v2506 = vmul.f32 %v1175, %v2498
        %v2507 = vmul.f32 %v1149, %v2497
        %v2508 = vmul.f32 %v1178, %v2498
        %v2509 = vadd.f32 %v2501, %v2487
        %v2510 = vadd.f32 %v2502, %v2488
        %v2511 = vadd.f32 %v2503, %v2489
        %v2512 = vadd.f32 %v2504, %v2490
        %v2513 = vadd.f32 %v2505, %v2491
        %v2514 = vadd.f32 %v2506, %v2492
        %v2515 = vadd.f32 %v2507, %v2493
        %v2516 = vadd.f32 %v2508, %v2494
        %v2517 = vadd.f32 %v2509, %v520
        %v2518 = vadd.f32 %v2510, %v521
        %v2519 = vadd.f32 %v2511, %v522
        %v2520 = vadd.f32 %v2512, %v523
        %v2521 = vadd.f32 %v2513, %v524
        %v2522 = vadd.f32 %v2514, %v525
        %v2523 = vadd.f32 %v2515, %v526
        %v2524 = vadd.f32 %v2516, %v527
        %2525 = vst [vmem:[%s517] sm:$0xff] %v2517
        %2526 = vst [vmem:[%s517 + $0x8] sm:$0xff] %v2518
        %2527 = vst [vmem:[%s517 + $0x10] sm:$0xff] %v2519
        %2528 = vst [vmem:[%s517 + $0x18] sm:$0xff] %v2520
        %2529 = vst [vmem:[%s517 + $0x20] sm:$0xff] %v2521
        %2530 = vst [vmem:[%s517 + $0x28] sm:$0xff] %v2522
        %2531 = vst [vmem:[%s517 + $0x30] sm:$0xff] %v2523
        %2532 = vst [vmem:[%s517 + $0x38] sm:$0xff] %v2524
        %s2533 = sand.u32 %s276, 1
        %s2534 = scalar_lea.sflag [#allocation6], %s2533
        %s2535 = sand.u32 %s276, 1
        %s2536 = smul.addr %s2535, 64
        %s2537 = scalar_lea.vmem [#allocation18], %s2536
        // Predicated region
        $region97: #{tpu_custom_call.1} parent=63 // pred_check
          %p2538 = pneg %p286
        $region98: #{tpu_custom_call.1} parent=63 // pred_check_branch
          %2540 = sbr.rel (%p2538) target = $region100
        $region99: #{tpu_custom_call.1} parent=63 // pred_region
          %s2541 = smul.u32 2, %s32
          %2543 = vsyncadd %s2534, 0
          %s2544 = smul.addr %s2541, 4
          %s2545 = smul.addr %s2544, 8
          %s2546 = scalar_lea.hbm %s11, %s2545
          %s2547 = sshll.u32 %s2537, 4
          %s2548 = int_to_ptr.vmem [resolvable:$true] %s2547
          %s2549 = sshll.u32 %s2546, 4
          %s2550 = int_to_ptr.hbm [resolvable:$true] %s2549
          %2555 = dma.vmem_to_hbm [thread:$0]  %s2548, 1024, %s2550, %s2534, 256, 256, 16
        $region100: #{tpu_custom_call.1} parent=63 // pred_fallthru
          _
      $region64: #{tpu_custom_call.1} parent=5 // pred_fallthru
        _
      %p2556 = scmp.le.s32.totalorder 2, %s27
      // Predicated region
      $region101: #{tpu_custom_call.1} parent=5 // pred_check
        %p2557 = pneg %p2556
      $region102: #{tpu_custom_call.1} parent=5 // pred_check_branch
        %2559 = sbr.rel (%p2557) target = $region104
      $region103: #{tpu_custom_call.1} parent=5 // pred_region
        %s2560 = ssub.s32 %s27, 2
        // Predicated region
        $region105: #{tpu_custom_call.1} parent=103 // pred_check
          %p2561 = pneg %p292
        $region106: #{tpu_custom_call.1} parent=103 // pred_check_branch
          %2563 = sbr.rel (%p2561) target = $region108
        $region107: #{tpu_custom_call.1} parent=103 // pred_region
          %s2564 = sand.u32 %s277, 1
          %s2565 = scalar_lea.sflag [#allocation6], %s2564
          %s2566 = sand.u32 %s277, 1
          %s2567 = smul.addr %s2566, 64
          %s2568 = scalar_lea.vmem [#allocation18], %s2567
          %2570 = dma.done %s2565, 1024
        $region108: #{tpu_custom_call.1} parent=103 // pred_fallthru
          _
      $region104: #{tpu_custom_call.1} parent=5 // pred_fallthru
        _
    $region6: #{tpu_custom_call.1} parent=1 // loop_footer
      %s31 = sadd.s32 1, %s27
    $region7: #{tpu_custom_call.1} parent=1 // loop_footer_branch
      %26 = sbr.rel target = $region3
    $region8: #{tpu_custom_call.1} parent=1 // loop_exit
      _
    %2571 = vsyncpa [#allocation5], 1
    %s2572 = scalar_lea.sflag [#allocation5], 1
    %2573 = vsyncpa %s2572, 1
    %2574 = vsyncpa [#allocation8], 1
    %2575 = vsyncpa [#allocation11], 1
    %2576 = vsyncpa [#allocation14], 1
    %2577 = vsyncpa [#allocation17], 1
    %2578 = vsyncpa [#allocation6], 1
    %s2579 = scalar_lea.sflag [#allocation6], 1
    %2580 = vsyncpa %s2579, 1

</llo_original>
